<compile_context>
chip_gen: v7x
topology: tpu7x:2x2x1
jax: 0.10.0
libtpu: 0.0.40
codegen_flags: <defaults>
</compile_context>

<pallas_src>
import jax
import jax.numpy as jnp
from jax import lax
from jax.experimental import pallas as pl
from jax.experimental.pallas import tpu as pltpu

LANE = 128


def _round_up(x, m):
    return ((x + m - 1) // m) * m


def _pick_b_tile(batch):
    # Batch rides the 128-lane axis inside the kernel.  Small batches use a
    # single (lane-masked) tile; larger batches use full 128/256-lane tiles so
    # the lane-axis block obeys the minor-dim tiling rule and the parallel
    # grid has >= 2 steps (megacore / v7x dual-TC sharding).
    if batch <= LANE:
        return max(16, _round_up(batch, 16))
    if batch <= 4 * LANE:
        return LANE
    return 2 * LANE


def _pick_vmem_limit_bytes():
    cap = 128 * 1024 * 1024
    try:
        cap = int(pltpu.get_tpu_info().vmem_capacity_bytes)
    except Exception:
        pass
    # ~75% of physical with headroom: v5e/v6e (128 MiB) -> 96 MiB, v7x (64 MiB) -> 48 MiB.
    return int(max(32 * 1024 * 1024, min(cap * 3 // 4, 96 * 1024 * 1024)))


def make_lstm_kernel(num_layers):
    L = num_layers

    def kernel(*refs):
        x_ref = refs[0]                                # (T, 2H, Bt)  bf16
        w_ihT = refs[1:1 + L]                          # (4H, IN_l)   bf16
        w_hhT = refs[1 + L:1 + 2 * L]                  # (4H, H)      bf16
        b = refs[1 + 2 * L:1 + 3 * L]                  # (4H, 1)      f32
        fc1w_ref, fc1b_ref, fc2w_ref, fc2b_ref = refs[1 + 3 * L:5 + 3 * L]
        out_ref = refs[5 + 3 * L]                      # (Bt, 128)    f32
        xprojT_ref = refs[6 + 3 * L]                   # (T, 4H, Bt)  f32/bf16 scratch
        seqT_ref = refs[7 + 3 * L] if L > 1 else None  # (T, H, Bt)   bf16 scratch

        T, _, Bt = x_ref.shape
        H = w_hhT[0].shape[1]
        G = 4 * H
        unroll = max(1, min(T, 8))                     # bounded unroll: no vreg spills

        h = jnp.zeros((H, Bt), jnp.float32)
        for l in range(L):                             # static layer loop
            w_ih_l = w_ihT[l][...]                     # (4H, IN) bf16, loaded once
            w_hh_l = w_hhT[l][...]                     # (4H, H)  bf16, loaded once
            bias_l = jnp.broadcast_to(b[l][...], (G, Bt))   # hoisted lane-broadcast

            # Hoisted input projection (independent of the recurrent state):
            # gates_x[t] = w_ih^T @ x_t + (b_ih + b_hh), written directly in
            # the gates-on-sublanes / batch-on-lanes orientation.
            def proj(t, carry):
                x_t = x_ref[t] if l == 0 else seqT_ref[t]        # (IN, Bt) bf16
                xw = jnp.dot(w_ih_l, x_t,
                             preferred_element_type=jnp.float32) + bias_l
                xprojT_ref[t] = xw.astype(xprojT_ref.dtype)
                return carry

            lax.fori_loop(0, T, proj, 0, unroll=unroll)

            # Serial recurrence: only the small (4H,H)@(H,Bt) h-matmul, one
            # sigmoid + one tanh over the full (4H,Bt) gate block, and free
            # sublane gate slices (PyTorch gate order i, f, g, o).
            def step(t, carry):
                h_prev, c_prev = carry
                gates = (xprojT_ref[t].astype(jnp.float32)
                         + jnp.dot(w_hh_l, h_prev.astype(jnp.bfloat16),
                                   preferred_element_type=jnp.float32))  # (4H, Bt)
                sig = jax.nn.sigmoid(gates)
                th = jnp.tanh(gates)
                c_new = sig[H:2 * H, :] * c_prev + sig[0:H, :] * th[2 * H:3 * H, :]
                h_new = sig[3 * H:4 * H, :] * jnp.tanh(c_new)
                if l < L - 1:                          # feed next layer (bf16 store)
                    seqT_ref[t] = h_new.astype(jnp.bfloat16)
                return h_new, c_new

            h, _ = lax.fori_loop(
                0, T, step,
                (jnp.zeros((H, Bt), jnp.float32),
                 jnp.zeros((H, Bt), jnp.float32)),
                unroll=unroll)

        # TODO(synk): interleave 2+ independent batch-tile chains (or wavefront
        # layers) per grid step to hide per-step MXU/EUP latency; single chain
        # kept here for clarity.

        # Head on the last timestep: one small transpose (batch back onto
        # sublanes), then lane-dense 128-wide fc1 -> relu -> fc2.
        hT = h.T.astype(jnp.bfloat16)                  # (Bt, H)
        z = jnp.maximum(
            jnp.dot(hT, fc1w_ref[...],
                    preferred_element_type=jnp.float32) + fc1b_ref[...], 0.0)
        out_ref[...] = (jnp.dot(z.astype(jnp.bfloat16), fc2w_ref[...],
                                preferred_element_type=jnp.float32)
                        + fc2b_ref[...])

    return kernel


def init_params(key, num_classes, hidden_size, num_layers):
    H = hidden_size
    keys = jax.random.split(key, 6 + num_layers)
    params = {
        "emb_pos": jax.random.normal(keys[0], (num_classes, H), jnp.float32) * 0.1,
        "emb_grid": jax.random.normal(keys[1], (num_classes, H), jnp.float32) * 0.1,
        "w_ih": [], "w_hh": [], "b": [],
    }
    scale = float(H) ** -0.5
    for l in range(num_layers):
        in_size = 2 * H if l == 0 else H
        k1, k2, k3 = jax.random.split(keys[2 + l], 3)
        params["w_ih"].append(jax.random.normal(k1, (in_size, 4 * H), jnp.float32) * scale)
        params["w_hh"].append(jax.random.normal(k2, (H, 4 * H), jnp.float32) * scale)
        params["b"].append(jax.random.normal(k3, (1, 4 * H), jnp.float32) * 0.1)
    H2 = H // 2
    params["fc1_w"] = jax.random.normal(keys[2 + num_layers], (H, H2), jnp.float32) * 0.1
    params["fc1_b"] = jax.random.normal(keys[3 + num_layers], (1, H2), jnp.float32) * 0.1
    params["fc2_w"] = jax.random.normal(keys[4 + num_layers], (H2, num_classes), jnp.float32) * 0.1
    params["fc2_b"] = jax.random.normal(keys[5 + num_layers], (1, num_classes), jnp.float32) * 0.1
    return params


def lstm_forward(x_pos, x_grid, params):
    emb_pos, emb_grid = params["emb_pos"], params["emb_grid"]
    L = len(params["w_ih"])
    H = emb_pos.shape[1]
    H2 = params["fc1_w"].shape[1]
    C = params["fc2_w"].shape[1]

    # Embedding lookup + concat stay as JAX glue around the kernel.
    xp = jnp.take(emb_pos, x_pos, axis=0)        # (B, T, H)
    xg = jnp.take(emb_grid, x_grid, axis=0)      # (B, T, H)
    T = min(xp.shape[1], xg.shape[1])
    xp, xg = xp[:, :T], xg[:, :T]
    x = jnp.concatenate([xp, xg], axis=-1)       # (B, T, 2H)
    B = x.shape[0]

    bf16 = jnp.bfloat16
    B_TILE = _pick_b_tile(B)
    B_pad = _round_up(B, B_TILE)

    # Time-major, batch-on-lanes, bf16: (T, 2H, B_pad).
    x_t = jnp.transpose(x, (1, 2, 0)).astype(bf16)
    if B_pad != B:
        x_t = jnp.pad(x_t, ((0, 0), (0, 0), (0, B_pad - B)))

    # Lane-dense head: pad fc1 and fc2 output lanes to 128, zero-filled.
    H2_pad = _round_up(H2, LANE)
    C_pad = _round_up(C, LANE)
    fc1w = jnp.zeros((H, H2_pad), bf16).at[:, :H2].set(params["fc1_w"].astype(bf16))
    fc1b = jnp.zeros((1, H2_pad), jnp.float32).at[:, :H2].set(params["fc1_b"])
    fc2w = jnp.zeros((H2_pad, C_pad), bf16).at[:H2, :C].set(params["fc2_w"].astype(bf16))
    fc2b = jnp.zeros((1, C_pad), jnp.float32).at[:, :C].set(params["fc2_b"])

    inputs = ([x_t]
              + [w.T.astype(bf16) for w in params["w_ih"]]    # (4H, IN_l)
              + [w.T.astype(bf16) for w in params["w_hh"]]    # (4H, H)
              + [b.T for b in params["b"]]                    # (4H, 1) f32
              + [fc1w, fc1b, fc2w, fc2b])

    def full_spec(a):
        return pl.BlockSpec(a.shape, lambda i, n=a.ndim: (0,) * n)

    in_specs = ([pl.BlockSpec((T, 2 * H, B_TILE), lambda i: (0, 0, i))]
                + [full_spec(a) for a in inputs[1:]])

    # v7x VMEM budget: fall back to a bf16 x-projection scratch when the f32
    # scratch would get large (full-T residency); seq scratch is always bf16.
    xproj_f32_bytes = T * 4 * H * B_TILE * 4
    xproj_dtype = jnp.float32 if xproj_f32_bytes <= 8 * 1024 * 1024 else bf16
    scratch_shapes = [pltpu.VMEM((T, 4 * H, B_TILE), xproj_dtype)]
    if L > 1:
        scratch_shapes.append(pltpu.VMEM((T, H, B_TILE), bf16))
    # TODO(synk): for very long T on v7x, additionally chunk the hoisted
    # projection over time (emit_pipeline / extra grid axis) instead of
    # keeping full-T scratch residency.

    out = pl.pallas_call(
        make_lstm_kernel(L),
        out_shape=jax.ShapeDtypeStruct((B_pad, C_pad), jnp.float32),
        grid=(B_pad // B_TILE,),
        in_specs=in_specs,
        out_specs=pl.BlockSpec((B_TILE, C_pad), lambda i: (i, 0)),
        scratch_shapes=scratch_shapes,
        compiler_params=pltpu.CompilerParams(
            dimension_semantics=("parallel",),       # batch tiles across TCs
            vmem_limit_bytes=_pick_vmem_limit_bytes(),
        ),
    )(*inputs)
    return out[:B, :C]


def ref_forward(x_pos, x_grid, params, num_layers):
    H = params["emb_pos"].shape[1]
    xp = params["emb_pos"][x_pos]
    xg = params["emb_grid"][x_grid]
    x = jnp.concatenate([xp, xg], axis=-1)
    B, T, _ = x.shape
    inp = x
    h = jnp.zeros((B, H), jnp.float32)
    for l in range(num_layers):
        h = jnp.zeros((B, H), jnp.float32)
        c = jnp.zeros((B, H), jnp.float32)
        w_ih, w_hh, b = params["w_ih"][l], params["w_hh"][l], params["b"][l]
        outs = []
        for t in range(T):
            g = inp[:, t] @ w_ih + h @ w_hh + b
            i_ = jax.nn.sigmoid(g[:, :H])
            f_ = jax.nn.sigmoid(g[:, H:2 * H])
            gg = jnp.tanh(g[:, 2 * H:3 * H])
            o_ = jax.nn.sigmoid(g[:, 3 * H:])
            c = f_ * c + i_ * gg
            h = o_ * jnp.tanh(c)
            outs.append(h)
        inp = jnp.stack(outs, axis=1)
    z = jnp.maximum(h @ params["fc1_w"] + params["fc1_b"], 0.0)
    return z @ params["fc2_w"] + params["fc2_b"]


if __name__ == "__main__":
    num_classes = 16
    hidden_size = 32
    num_layers = 2
    B, T = 2, 8

    key = jax.random.PRNGKey(0)
    kp, kg, kw = jax.random.split(key, 3)
    x_pos = jax.random.randint(kp, (B, T), 0, num_classes, dtype=jnp.int32)
    x_grid = jax.random.randint(kg, (B, T), 0, num_classes, dtype=jnp.int32)

    params = init_params(kw, num_classes, hidden_size, num_layers)

    out = jax.block_until_ready(lstm_forward(x_pos, x_grid, params))
    ref = ref_forward(x_pos, x_grid, params, num_layers)

    assert out.shape == (B, num_classes)
    err = float(jnp.max(jnp.abs(out - ref)))
    # Kernel uses bf16 MXU matmuls / bf16 activation streaming with f32
    # accumulation vs the f32 reference.
    assert jnp.allclose(out, ref, atol=2e-2, rtol=2e-2), f"mismatch: max abs err {err}"
    print("KERNEL_OK")
</pallas_src>

<mosaic_0001>
module attributes {stable_mosaic.version = 11 : i64} {
  func.func @kernel(%arg0: i32, %arg1: memref<8x64x16xbf16, #tpu.memory_space<vmem>>, %arg2: memref<128x64xbf16, #tpu.memory_space<vmem>>, %arg3: memref<128x32xbf16, #tpu.memory_space<vmem>>, %arg4: memref<128x32xbf16, #tpu.memory_space<vmem>>, %arg5: memref<128x32xbf16, #tpu.memory_space<vmem>>, %arg6: memref<128x1xf32, #tpu.memory_space<vmem>>, %arg7: memref<128x1xf32, #tpu.memory_space<vmem>>, %arg8: memref<32x128xbf16, #tpu.memory_space<vmem>>, %arg9: memref<1x128xf32, #tpu.memory_space<vmem>>, %arg10: memref<128x128xbf16, #tpu.memory_space<vmem>>, %arg11: memref<1x128xf32, #tpu.memory_space<vmem>>, %arg12: memref<16x128xf32, #tpu.memory_space<vmem>>, %arg13: memref<8x128x16xf32, #tpu.memory_space<vmem>>, %arg14: memref<8x32x16xbf16, #tpu.memory_space<vmem>>) attributes {dimension_semantics = [#tpu.dimension_semantics<parallel>], iteration_bounds = array<i64: 1>, scalar_prefetch = 0 : i64, scratch_operands = 2 : i64, tpu.core_type = #tpu.core_type<tc>, window_params = [{transform_indices = @transform_0, window_bounds = array<i64: 8, 64, 16>}, {pipeline_mode = #tpu.pipeline_mode<synchronous>, transform_indices = @transform_1, window_bounds = array<i64: 128, 64>}, {pipeline_mode = #tpu.pipeline_mode<synchronous>, transform_indices = @transform_2, window_bounds = array<i64: 128, 32>}, {pipeline_mode = #tpu.pipeline_mode<synchronous>, transform_indices = @transform_3, window_bounds = array<i64: 128, 32>}, {pipeline_mode = #tpu.pipeline_mode<synchronous>, transform_indices = @transform_4, window_bounds = array<i64: 128, 32>}, {pipeline_mode = #tpu.pipeline_mode<synchronous>, transform_indices = @transform_5, window_bounds = array<i64: 128, 1>}, {pipeline_mode = #tpu.pipeline_mode<synchronous>, transform_indices = @transform_6, window_bounds = array<i64: 128, 1>}, {pipeline_mode = #tpu.pipeline_mode<synchronous>, transform_indices = @transform_7, window_bounds = array<i64: 32, 128>}, {pipeline_mode = #tpu.pipeline_mode<synchronous>, transform_indices = @transform_8, window_bounds = array<i64: 1, 128>}, {pipeline_mode = #tpu.pipeline_mode<synchronous>, transform_indices = @transform_9, window_bounds = array<i64: 128, 128>}, {pipeline_mode = #tpu.pipeline_mode<synchronous>, transform_indices = @transform_10, window_bounds = array<i64: 1, 128>}, {transform_indices = @transform_11, window_bounds = array<i64: 16, 128>}]} {
    %c0 = arith.constant 0 : index
    %c0_0 = arith.constant 0 : index
    %0 = vector.load %arg2[%c0, %c0_0] : memref<128x64xbf16, #tpu.memory_space<vmem>>, vector<128x64xbf16>
    %c0_1 = arith.constant 0 : index
    %c0_2 = arith.constant 0 : index
    %1 = vector.load %arg4[%c0_1, %c0_2] : memref<128x32xbf16, #tpu.memory_space<vmem>>, vector<128x32xbf16>
    %c0_3 = arith.constant 0 : index
    %c0_4 = arith.constant 0 : index
    %2 = vector.load %arg6[%c0_3, %c0_4] : memref<128x1xf32, #tpu.memory_space<vmem>>, vector<128x1xf32>
    %3 = vector.shape_cast %2 : vector<128x1xf32> to vector<128x1xf32>
    %4 = vector.broadcast %3 : vector<128x1xf32> to vector<128x16xf32>
    %c0_i32 = arith.constant 0 : i32
    %5 = arith.index_cast %c0_i32 : i32 to index
    %c0_5 = arith.constant 0 : index
    %c0_6 = arith.constant 0 : index
    %6 = vector.load %arg1[%5, %c0_5, %c0_6] : memref<8x64x16xbf16, #tpu.memory_space<vmem>>, vector<1x64x16xbf16>
    %7 = vector.shape_cast %6 : vector<1x64x16xbf16> to vector<64x16xbf16>
    %cst = arith.constant dense<0.000000e+00> : vector<128x16xf32>
    %8 = tpu.matmul %0, %7, %cst {dimension_numbers = #tpu.dot_dimension_numbers<[1], [0], [0], [1], [0, 0, 1, 1], [], []>} : vector<128x64xbf16>, vector<64x16xbf16>, vector<128x16xf32> -> vector<128x16xf32>
    %9 = arith.addf %8, %4 : vector<128x16xf32>
    %10 = arith.index_cast %c0_i32 : i32 to index
    %c0_7 = arith.constant 0 : index
    %c0_8 = arith.constant 0 : index
    %11 = vector.load %arg13[%10, %c0_7, %c0_8] : memref<8x128x16xf32, #tpu.memory_space<vmem>>, vector<1x128x16xf32>
    %12 = vector.shape_cast %11 : vector<1x128x16xf32> to vector<128x16xf32>
    %13 = vector.shape_cast %9 : vector<128x16xf32> to vector<1x128x16xf32>
    tpu.vector_store %arg13[%10, %c0_7, %c0_8], %13 {strides = array<i32>} : memref<8x128x16xf32, #tpu.memory_space<vmem>>, vector<1x128x16xf32>,
    %c1_i32 = arith.constant 1 : i32
    %14 = arith.index_cast %c1_i32 : i32 to index
    %c0_9 = arith.constant 0 : index
    %c0_10 = arith.constant 0 : index
    %15 = vector.load %arg1[%14, %c0_9, %c0_10] : memref<8x64x16xbf16, #tpu.memory_space<vmem>>, vector<1x64x16xbf16>
    %16 = vector.shape_cast %15 : vector<1x64x16xbf16> to vector<64x16xbf16>
    %cst_11 = arith.constant dense<0.000000e+00> : vector<128x16xf32>
    %17 = tpu.matmul %0, %16, %cst_11 {dimension_numbers = #tpu.dot_dimension_numbers<[1], [0], [0], [1], [0, 0, 1, 1], [], []>} : vector<128x64xbf16>, vector<64x16xbf16>, vector<128x16xf32> -> vector<128x16xf32>
    %18 = arith.addf %17, %4 : vector<128x16xf32>
    %19 = arith.index_cast %c1_i32 : i32 to index
    %c0_12 = arith.constant 0 : index
    %c0_13 = arith.constant 0 : index
    %20 = vector.load %arg13[%19, %c0_12, %c0_13] : memref<8x128x16xf32, #tpu.memory_space<vmem>>, vector<1x128x16xf32>
    %21 = vector.shape_cast %20 : vector<1x128x16xf32> to vector<128x16xf32>
    %22 = vector.shape_cast %18 : vector<128x16xf32> to vector<1x128x16xf32>
    tpu.vector_store %arg13[%19, %c0_12, %c0_13], %22 {strides = array<i32>} : memref<8x128x16xf32, #tpu.memory_space<vmem>>, vector<1x128x16xf32>,
    %c2_i32 = arith.constant 2 : i32
    %23 = arith.index_cast %c2_i32 : i32 to index
    %c0_14 = arith.constant 0 : index
    %c0_15 = arith.constant 0 : index
    %24 = vector.load %arg1[%23, %c0_14, %c0_15] : memref<8x64x16xbf16, #tpu.memory_space<vmem>>, vector<1x64x16xbf16>
    %25 = vector.shape_cast %24 : vector<1x64x16xbf16> to vector<64x16xbf16>
    %cst_16 = arith.constant dense<0.000000e+00> : vector<128x16xf32>
    %26 = tpu.matmul %0, %25, %cst_16 {dimension_numbers = #tpu.dot_dimension_numbers<[1], [0], [0], [1], [0, 0, 1, 1], [], []>} : vector<128x64xbf16>, vector<64x16xbf16>, vector<128x16xf32> -> vector<128x16xf32>
    %27 = arith.addf %26, %4 : vector<128x16xf32>
    %28 = arith.index_cast %c2_i32 : i32 to index
    %c0_17 = arith.constant 0 : index
    %c0_18 = arith.constant 0 : index
    %29 = vector.load %arg13[%28, %c0_17, %c0_18] : memref<8x128x16xf32, #tpu.memory_space<vmem>>, vector<1x128x16xf32>
    %30 = vector.shape_cast %29 : vector<1x128x16xf32> to vector<128x16xf32>
    %31 = vector.shape_cast %27 : vector<128x16xf32> to vector<1x128x16xf32>
    tpu.vector_store %arg13[%28, %c0_17, %c0_18], %31 {strides = array<i32>} : memref<8x128x16xf32, #tpu.memory_space<vmem>>, vector<1x128x16xf32>,
    %c3_i32 = arith.constant 3 : i32
    %32 = arith.index_cast %c3_i32 : i32 to index
    %c0_19 = arith.constant 0 : index
    %c0_20 = arith.constant 0 : index
    %33 = vector.load %arg1[%32, %c0_19, %c0_20] : memref<8x64x16xbf16, #tpu.memory_space<vmem>>, vector<1x64x16xbf16>
    %34 = vector.shape_cast %33 : vector<1x64x16xbf16> to vector<64x16xbf16>
    %cst_21 = arith.constant dense<0.000000e+00> : vector<128x16xf32>
    %35 = tpu.matmul %0, %34, %cst_21 {dimension_numbers = #tpu.dot_dimension_numbers<[1], [0], [0], [1], [0, 0, 1, 1], [], []>} : vector<128x64xbf16>, vector<64x16xbf16>, vector<128x16xf32> -> vector<128x16xf32>
    %36 = arith.addf %35, %4 : vector<128x16xf32>
    %37 = arith.index_cast %c3_i32 : i32 to index
    %c0_22 = arith.constant 0 : index
    %c0_23 = arith.constant 0 : index
    %38 = vector.load %arg13[%37, %c0_22, %c0_23] : memref<8x128x16xf32, #tpu.memory_space<vmem>>, vector<1x128x16xf32>
    %39 = vector.shape_cast %38 : vector<1x128x16xf32> to vector<128x16xf32>
    %40 = vector.shape_cast %36 : vector<128x16xf32> to vector<1x128x16xf32>
    tpu.vector_store %arg13[%37, %c0_22, %c0_23], %40 {strides = array<i32>} : memref<8x128x16xf32, #tpu.memory_space<vmem>>, vector<1x128x16xf32>,
    %c4_i32 = arith.constant 4 : i32
    %41 = arith.index_cast %c4_i32 : i32 to index
    %c0_24 = arith.constant 0 : index
    %c0_25 = arith.constant 0 : index
    %42 = vector.load %arg1[%41, %c0_24, %c0_25] : memref<8x64x16xbf16, #tpu.memory_space<vmem>>, vector<1x64x16xbf16>
    %43 = vector.shape_cast %42 : vector<1x64x16xbf16> to vector<64x16xbf16>
    %cst_26 = arith.constant dense<0.000000e+00> : vector<128x16xf32>
    %44 = tpu.matmul %0, %43, %cst_26 {dimension_numbers = #tpu.dot_dimension_numbers<[1], [0], [0], [1], [0, 0, 1, 1], [], []>} : vector<128x64xbf16>, vector<64x16xbf16>, vector<128x16xf32> -> vector<128x16xf32>
    %45 = arith.addf %44, %4 : vector<128x16xf32>
    %46 = arith.index_cast %c4_i32 : i32 to index
    %c0_27 = arith.constant 0 : index
    %c0_28 = arith.constant 0 : index
    %47 = vector.load %arg13[%46, %c0_27, %c0_28] : memref<8x128x16xf32, #tpu.memory_space<vmem>>, vector<1x128x16xf32>
    %48 = vector.shape_cast %47 : vector<1x128x16xf32> to vector<128x16xf32>
    %49 = vector.shape_cast %45 : vector<128x16xf32> to vector<1x128x16xf32>
    tpu.vector_store %arg13[%46, %c0_27, %c0_28], %49 {strides = array<i32>} : memref<8x128x16xf32, #tpu.memory_space<vmem>>, vector<1x128x16xf32>,
    %c5_i32 = arith.constant 5 : i32
    %50 = arith.index_cast %c5_i32 : i32 to index
    %c0_29 = arith.constant 0 : index
    %c0_30 = arith.constant 0 : index
    %51 = vector.load %arg1[%50, %c0_29, %c0_30] : memref<8x64x16xbf16, #tpu.memory_space<vmem>>, vector<1x64x16xbf16>
    %52 = vector.shape_cast %51 : vector<1x64x16xbf16> to vector<64x16xbf16>
    %cst_31 = arith.constant dense<0.000000e+00> : vector<128x16xf32>
    %53 = tpu.matmul %0, %52, %cst_31 {dimension_numbers = #tpu.dot_dimension_numbers<[1], [0], [0], [1], [0, 0, 1, 1], [], []>} : vector<128x64xbf16>, vector<64x16xbf16>, vector<128x16xf32> -> vector<128x16xf32>
    %54 = arith.addf %53, %4 : vector<128x16xf32>
    %55 = arith.index_cast %c5_i32 : i32 to index
    %c0_32 = arith.constant 0 : index
    %c0_33 = arith.constant 0 : index
    %56 = vector.load %arg13[%55, %c0_32, %c0_33] : memref<8x128x16xf32, #tpu.memory_space<vmem>>, vector<1x128x16xf32>
    %57 = vector.shape_cast %56 : vector<1x128x16xf32> to vector<128x16xf32>
    %58 = vector.shape_cast %54 : vector<128x16xf32> to vector<1x128x16xf32>
    tpu.vector_store %arg13[%55, %c0_32, %c0_33], %58 {strides = array<i32>} : memref<8x128x16xf32, #tpu.memory_space<vmem>>, vector<1x128x16xf32>,
    %c6_i32 = arith.constant 6 : i32
    %59 = arith.index_cast %c6_i32 : i32 to index
    %c0_34 = arith.constant 0 : index
    %c0_35 = arith.constant 0 : index
    %60 = vector.load %arg1[%59, %c0_34, %c0_35] : memref<8x64x16xbf16, #tpu.memory_space<vmem>>, vector<1x64x16xbf16>
    %61 = vector.shape_cast %60 : vector<1x64x16xbf16> to vector<64x16xbf16>
    %cst_36 = arith.constant dense<0.000000e+00> : vector<128x16xf32>
    %62 = tpu.matmul %0, %61, %cst_36 {dimension_numbers = #tpu.dot_dimension_numbers<[1], [0], [0], [1], [0, 0, 1, 1], [], []>} : vector<128x64xbf16>, vector<64x16xbf16>, vector<128x16xf32> -> vector<128x16xf32>
    %63 = arith.addf %62, %4 : vector<128x16xf32>
    %64 = arith.index_cast %c6_i32 : i32 to index
    %c0_37 = arith.constant 0 : index
    %c0_38 = arith.constant 0 : index
    %65 = vector.load %arg13[%64, %c0_37, %c0_38] : memref<8x128x16xf32, #tpu.memory_space<vmem>>, vector<1x128x16xf32>
    %66 = vector.shape_cast %65 : vector<1x128x16xf32> to vector<128x16xf32>
    %67 = vector.shape_cast %63 : vector<128x16xf32> to vector<1x128x16xf32>
    tpu.vector_store %arg13[%64, %c0_37, %c0_38], %67 {strides = array<i32>} : memref<8x128x16xf32, #tpu.memory_space<vmem>>, vector<1x128x16xf32>,
    %c7_i32 = arith.constant 7 : i32
    %68 = arith.index_cast %c7_i32 : i32 to index
    %c0_39 = arith.constant 0 : index
    %c0_40 = arith.constant 0 : index
    %69 = vector.load %arg1[%68, %c0_39, %c0_40] : memref<8x64x16xbf16, #tpu.memory_space<vmem>>, vector<1x64x16xbf16>
    %70 = vector.shape_cast %69 : vector<1x64x16xbf16> to vector<64x16xbf16>
    %cst_41 = arith.constant dense<0.000000e+00> : vector<128x16xf32>
    %71 = tpu.matmul %0, %70, %cst_41 {dimension_numbers = #tpu.dot_dimension_numbers<[1], [0], [0], [1], [0, 0, 1, 1], [], []>} : vector<128x64xbf16>, vector<64x16xbf16>, vector<128x16xf32> -> vector<128x16xf32>
    %72 = arith.addf %71, %4 : vector<128x16xf32>
    %73 = arith.index_cast %c7_i32 : i32 to index
    %c0_42 = arith.constant 0 : index
    %c0_43 = arith.constant 0 : index
    %74 = vector.load %arg13[%73, %c0_42, %c0_43] : memref<8x128x16xf32, #tpu.memory_space<vmem>>, vector<1x128x16xf32>
    %75 = vector.shape_cast %74 : vector<1x128x16xf32> to vector<128x16xf32>
    %76 = vector.shape_cast %72 : vector<128x16xf32> to vector<1x128x16xf32>
    tpu.vector_store %arg13[%73, %c0_42, %c0_43], %76 {strides = array<i32>} : memref<8x128x16xf32, #tpu.memory_space<vmem>>, vector<1x128x16xf32>,
    %c8_i32 = arith.constant 8 : i32
    %cst_44 = arith.constant 0.000000e+00 : f32
    %77 = vector.broadcast %cst_44 : f32 to vector<32x16xf32>
    %cst_45 = arith.constant 0.000000e+00 : f32
    %78 = vector.broadcast %cst_45 : f32 to vector<32x16xf32>
    %c0_i32_46 = arith.constant 0 : i32
    %79 = arith.index_cast %c0_i32_46 : i32 to index
    %c0_47 = arith.constant 0 : index
    %c0_48 = arith.constant 0 : index
    %80 = vector.load %arg13[%79, %c0_47, %c0_48] : memref<8x128x16xf32, #tpu.memory_space<vmem>>, vector<1x128x16xf32>
    %81 = vector.shape_cast %80 : vector<1x128x16xf32> to vector<128x16xf32>
    %82 = arith.truncf %77 : vector<32x16xf32> to vector<32x16xbf16>
    %cst_49 = arith.constant dense<0.000000e+00> : vector<128x16xf32>
    %83 = tpu.matmul %1, %82, %cst_49 {dimension_numbers = #tpu.dot_dimension_numbers<[1], [0], [0], [1], [0, 0, 1, 1], [], []>} : vector<128x32xbf16>, vector<32x16xbf16>, vector<128x16xf32> -> vector<128x16xf32>
    %84 = arith.addf %81, %83 : vector<128x16xf32>
    %85 = arith.negf %84 : vector<128x16xf32>
    %86 = math.exp %85 : vector<128x16xf32>
    %cst_50 = arith.constant 1.000000e+00 : f32
    %87 = vector.broadcast %cst_50 : f32 to vector<128x16xf32>
    %88 = arith.addf %87, %86 : vector<128x16xf32>
    %89 = arith.divf %87, %88 : vector<128x16xf32>
    %90 = math.tanh %84 : vector<128x16xf32>
    %91 = vector.extract_strided_slice %89 {offsets = [32, 0], sizes = [32, 16], strides = [1, 1]} : vector<128x16xf32> to vector<32x16xf32>
    %92 = arith.mulf %91, %78 : vector<32x16xf32>
    %93 = vector.extract_strided_slice %89 {offsets = [0, 0], sizes = [32, 16], strides = [1, 1]} : vector<128x16xf32> to vector<32x16xf32>
    %94 = vector.extract_strided_slice %90 {offsets = [64, 0], sizes = [32, 16], strides = [1, 1]} : vector<128x16xf32> to vector<32x16xf32>
    %95 = arith.mulf %93, %94 : vector<32x16xf32>
    %96 = arith.addf %92, %95 : vector<32x16xf32>
    %97 = vector.extract_strided_slice %89 {offsets = [96, 0], sizes = [32, 16], strides = [1, 1]} : vector<128x16xf32> to vector<32x16xf32>
    %98 = math.tanh %96 : vector<32x16xf32>
    %99 = arith.mulf %97, %98 : vector<32x16xf32>
    %100 = arith.truncf %99 : vector<32x16xf32> to vector<32x16xbf16>
    %101 = arith.index_cast %c0_i32_46 : i32 to index
    %c0_51 = arith.constant 0 : index
    %c0_52 = arith.constant 0 : index
    %102 = vector.load %arg14[%101, %c0_51, %c0_52] : memref<8x32x16xbf16, #tpu.memory_space<vmem>>, vector<1x32x16xbf16>
    %103 = vector.shape_cast %102 : vector<1x32x16xbf16> to vector<32x16xbf16>
    %104 = vector.shape_cast %100 : vector<32x16xbf16> to vector<1x32x16xbf16>
    tpu.vector_store %arg14[%101, %c0_51, %c0_52], %104 {strides = array<i32>} : memref<8x32x16xbf16, #tpu.memory_space<vmem>>, vector<1x32x16xbf16>,
    %c1_i32_53 = arith.constant 1 : i32
    %105 = arith.index_cast %c1_i32_53 : i32 to index
    %c0_54 = arith.constant 0 : index
    %c0_55 = arith.constant 0 : index
    %106 = vector.load %arg13[%105, %c0_54, %c0_55] : memref<8x128x16xf32, #tpu.memory_space<vmem>>, vector<1x128x16xf32>
    %107 = vector.shape_cast %106 : vector<1x128x16xf32> to vector<128x16xf32>
    %108 = arith.truncf %99 : vector<32x16xf32> to vector<32x16xbf16>
    %cst_56 = arith.constant dense<0.000000e+00> : vector<128x16xf32>
    %109 = tpu.matmul %1, %108, %cst_56 {dimension_numbers = #tpu.dot_dimension_numbers<[1], [0], [0], [1], [0, 0, 1, 1], [], []>} : vector<128x32xbf16>, vector<32x16xbf16>, vector<128x16xf32> -> vector<128x16xf32>
    %110 = arith.addf %107, %109 : vector<128x16xf32>
    %111 = arith.negf %110 : vector<128x16xf32>
    %112 = math.exp %111 : vector<128x16xf32>
    %cst_57 = arith.constant 1.000000e+00 : f32
    %113 = vector.broadcast %cst_57 : f32 to vector<128x16xf32>
    %114 = arith.addf %113, %112 : vector<128x16xf32>
    %115 = arith.divf %113, %114 : vector<128x16xf32>
    %116 = math.tanh %110 : vector<128x16xf32>
    %117 = vector.extract_strided_slice %115 {offsets = [32, 0], sizes = [32, 16], strides = [1, 1]} : vector<128x16xf32> to vector<32x16xf32>
    %118 = arith.mulf %117, %96 : vector<32x16xf32>
    %119 = vector.extract_strided_slice %115 {offsets = [0, 0], sizes = [32, 16], strides = [1, 1]} : vector<128x16xf32> to vector<32x16xf32>
    %120 = vector.extract_strided_slice %116 {offsets = [64, 0], sizes = [32, 16], strides = [1, 1]} : vector<128x16xf32> to vector<32x16xf32>
    %121 = arith.mulf %119, %120 : vector<32x16xf32>
    %122 = arith.addf %118, %121 : vector<32x16xf32>
    %123 = vector.extract_strided_slice %115 {offsets = [96, 0], sizes = [32, 16], strides = [1, 1]} : vector<128x16xf32> to vector<32x16xf32>
    %124 = math.tanh %122 : vector<32x16xf32>
    %125 = arith.mulf %123, %124 : vector<32x16xf32>
    %126 = arith.truncf %125 : vector<32x16xf32> to vector<32x16xbf16>
    %127 = arith.index_cast %c1_i32_53 : i32 to index
    %c0_58 = arith.constant 0 : index
    %c0_59 = arith.constant 0 : index
    %128 = vector.load %arg14[%127, %c0_58, %c0_59] : memref<8x32x16xbf16, #tpu.memory_space<vmem>>, vector<1x32x16xbf16>
    %129 = vector.shape_cast %128 : vector<1x32x16xbf16> to vector<32x16xbf16>
    %130 = vector.shape_cast %126 : vector<32x16xbf16> to vector<1x32x16xbf16>
    tpu.vector_store %arg14[%127, %c0_58, %c0_59], %130 {strides = array<i32>} : memref<8x32x16xbf16, #tpu.memory_space<vmem>>, vector<1x32x16xbf16>,
    %c2_i32_60 = arith.constant 2 : i32
    %131 = arith.index_cast %c2_i32_60 : i32 to index
    %c0_61 = arith.constant 0 : index
    %c0_62 = arith.constant 0 : index
    %132 = vector.load %arg13[%131, %c0_61, %c0_62] : memref<8x128x16xf32, #tpu.memory_space<vmem>>, vector<1x128x16xf32>
    %133 = vector.shape_cast %132 : vector<1x128x16xf32> to vector<128x16xf32>
    %134 = arith.truncf %125 : vector<32x16xf32> to vector<32x16xbf16>
    %cst_63 = arith.constant dense<0.000000e+00> : vector<128x16xf32>
    %135 = tpu.matmul %1, %134, %cst_63 {dimension_numbers = #tpu.dot_dimension_numbers<[1], [0], [0], [1], [0, 0, 1, 1], [], []>} : vector<128x32xbf16>, vector<32x16xbf16>, vector<128x16xf32> -> vector<128x16xf32>
    %136 = arith.addf %133, %135 : vector<128x16xf32>
    %137 = arith.negf %136 : vector<128x16xf32>
    %138 = math.exp %137 : vector<128x16xf32>
    %cst_64 = arith.constant 1.000000e+00 : f32
    %139 = vector.broadcast %cst_64 : f32 to vector<128x16xf32>
    %140 = arith.addf %139, %138 : vector<128x16xf32>
    %141 = arith.divf %139, %140 : vector<128x16xf32>
    %142 = math.tanh %136 : vector<128x16xf32>
    %143 = vector.extract_strided_slice %141 {offsets = [32, 0], sizes = [32, 16], strides = [1, 1]} : vector<128x16xf32> to vector<32x16xf32>
    %144 = arith.mulf %143, %122 : vector<32x16xf32>
    %145 = vector.extract_strided_slice %141 {offsets = [0, 0], sizes = [32, 16], strides = [1, 1]} : vector<128x16xf32> to vector<32x16xf32>
    %146 = vector.extract_strided_slice %142 {offsets = [64, 0], sizes = [32, 16], strides = [1, 1]} : vector<128x16xf32> to vector<32x16xf32>
    %147 = arith.mulf %145, %146 : vector<32x16xf32>
    %148 = arith.addf %144, %147 : vector<32x16xf32>
    %149 = vector.extract_strided_slice %141 {offsets = [96, 0], sizes = [32, 16], strides = [1, 1]} : vector<128x16xf32> to vector<32x16xf32>
    %150 = math.tanh %148 : vector<32x16xf32>
    %151 = arith.mulf %149, %150 : vector<32x16xf32>
    %152 = arith.truncf %151 : vector<32x16xf32> to vector<32x16xbf16>
    %153 = arith.index_cast %c2_i32_60 : i32 to index
    %c0_65 = arith.constant 0 : index
    %c0_66 = arith.constant 0 : index
    %154 = vector.load %arg14[%153, %c0_65, %c0_66] : memref<8x32x16xbf16, #tpu.memory_space<vmem>>, vector<1x32x16xbf16>
    %155 = vector.shape_cast %154 : vector<1x32x16xbf16> to vector<32x16xbf16>
    %156 = vector.shape_cast %152 : vector<32x16xbf16> to vector<1x32x16xbf16>
    tpu.vector_store %arg14[%153, %c0_65, %c0_66], %156 {strides = array<i32>} : memref<8x32x16xbf16, #tpu.memory_space<vmem>>, vector<1x32x16xbf16>,
    %c3_i32_67 = arith.constant 3 : i32
    %157 = arith.index_cast %c3_i32_67 : i32 to index
    %c0_68 = arith.constant 0 : index
    %c0_69 = arith.constant 0 : index
    %158 = vector.load %arg13[%157, %c0_68, %c0_69] : memref<8x128x16xf32, #tpu.memory_space<vmem>>, vector<1x128x16xf32>
    %159 = vector.shape_cast %158 : vector<1x128x16xf32> to vector<128x16xf32>
    %160 = arith.truncf %151 : vector<32x16xf32> to vector<32x16xbf16>
    %cst_70 = arith.constant dense<0.000000e+00> : vector<128x16xf32>
    %161 = tpu.matmul %1, %160, %cst_70 {dimension_numbers = #tpu.dot_dimension_numbers<[1], [0], [0], [1], [0, 0, 1, 1], [], []>} : vector<128x32xbf16>, vector<32x16xbf16>, vector<128x16xf32> -> vector<128x16xf32>
    %162 = arith.addf %159, %161 : vector<128x16xf32>
    %163 = arith.negf %162 : vector<128x16xf32>
    %164 = math.exp %163 : vector<128x16xf32>
    %cst_71 = arith.constant 1.000000e+00 : f32
    %165 = vector.broadcast %cst_71 : f32 to vector<128x16xf32>
    %166 = arith.addf %165, %164 : vector<128x16xf32>
    %167 = arith.divf %165, %166 : vector<128x16xf32>
    %168 = math.tanh %162 : vector<128x16xf32>
    %169 = vector.extract_strided_slice %167 {offsets = [32, 0], sizes = [32, 16], strides = [1, 1]} : vector<128x16xf32> to vector<32x16xf32>
    %170 = arith.mulf %169, %148 : vector<32x16xf32>
    %171 = vector.extract_strided_slice %167 {offsets = [0, 0], sizes = [32, 16], strides = [1, 1]} : vector<128x16xf32> to vector<32x16xf32>
    %172 = vector.extract_strided_slice %168 {offsets = [64, 0], sizes = [32, 16], strides = [1, 1]} : vector<128x16xf32> to vector<32x16xf32>
    %173 = arith.mulf %171, %172 : vector<32x16xf32>
    %174 = arith.addf %170, %173 : vector<32x16xf32>
    %175 = vector.extract_strided_slice %167 {offsets = [96, 0], sizes = [32, 16], strides = [1, 1]} : vector<128x16xf32> to vector<32x16xf32>
    %176 = math.tanh %174 : vector<32x16xf32>
    %177 = arith.mulf %175, %176 : vector<32x16xf32>
    %178 = arith.truncf %177 : vector<32x16xf32> to vector<32x16xbf16>
    %179 = arith.index_cast %c3_i32_67 : i32 to index
    %c0_72 = arith.constant 0 : index
    %c0_73 = arith.constant 0 : index
    %180 = vector.load %arg14[%179, %c0_72, %c0_73] : memref<8x32x16xbf16, #tpu.memory_space<vmem>>, vector<1x32x16xbf16>
    %181 = vector.shape_cast %180 : vector<1x32x16xbf16> to vector<32x16xbf16>
    %182 = vector.shape_cast %178 : vector<32x16xbf16> to vector<1x32x16xbf16>
    tpu.vector_store %arg14[%179, %c0_72, %c0_73], %182 {strides = array<i32>} : memref<8x32x16xbf16, #tpu.memory_space<vmem>>, vector<1x32x16xbf16>,
    %c4_i32_74 = arith.constant 4 : i32
    %183 = arith.index_cast %c4_i32_74 : i32 to index
    %c0_75 = arith.constant 0 : index
    %c0_76 = arith.constant 0 : index
    %184 = vector.load %arg13[%183, %c0_75, %c0_76] : memref<8x128x16xf32, #tpu.memory_space<vmem>>, vector<1x128x16xf32>
    %185 = vector.shape_cast %184 : vector<1x128x16xf32> to vector<128x16xf32>
    %186 = arith.truncf %177 : vector<32x16xf32> to vector<32x16xbf16>
    %cst_77 = arith.constant dense<0.000000e+00> : vector<128x16xf32>
    %187 = tpu.matmul %1, %186, %cst_77 {dimension_numbers = #tpu.dot_dimension_numbers<[1], [0], [0], [1], [0, 0, 1, 1], [], []>} : vector<128x32xbf16>, vector<32x16xbf16>, vector<128x16xf32> -> vector<128x16xf32>
    %188 = arith.addf %185, %187 : vector<128x16xf32>
    %189 = arith.negf %188 : vector<128x16xf32>
    %190 = math.exp %189 : vector<128x16xf32>
    %cst_78 = arith.constant 1.000000e+00 : f32
    %191 = vector.broadcast %cst_78 : f32 to vector<128x16xf32>
    %192 = arith.addf %191, %190 : vector<128x16xf32>
    %193 = arith.divf %191, %192 : vector<128x16xf32>
    %194 = math.tanh %188 : vector<128x16xf32>
    %195 = vector.extract_strided_slice %193 {offsets = [32, 0], sizes = [32, 16], strides = [1, 1]} : vector<128x16xf32> to vector<32x16xf32>
    %196 = arith.mulf %195, %174 : vector<32x16xf32>
    %197 = vector.extract_strided_slice %193 {offsets = [0, 0], sizes = [32, 16], strides = [1, 1]} : vector<128x16xf32> to vector<32x16xf32>
    %198 = vector.extract_strided_slice %194 {offsets = [64, 0], sizes = [32, 16], strides = [1, 1]} : vector<128x16xf32> to vector<32x16xf32>
    %199 = arith.mulf %197, %198 : vector<32x16xf32>
    %200 = arith.addf %196, %199 : vector<32x16xf32>
    %201 = vector.extract_strided_slice %193 {offsets = [96, 0], sizes = [32, 16], strides = [1, 1]} : vector<128x16xf32> to vector<32x16xf32>
    %202 = math.tanh %200 : vector<32x16xf32>
    %203 = arith.mulf %201, %202 : vector<32x16xf32>
    %204 = arith.truncf %203 : vector<32x16xf32> to vector<32x16xbf16>
    %205 = arith.index_cast %c4_i32_74 : i32 to index
    %c0_79 = arith.constant 0 : index
    %c0_80 = arith.constant 0 : index
    %206 = vector.load %arg14[%205, %c0_79, %c0_80] : memref<8x32x16xbf16, #tpu.memory_space<vmem>>, vector<1x32x16xbf16>
    %207 = vector.shape_cast %206 : vector<1x32x16xbf16> to vector<32x16xbf16>
    %208 = vector.shape_cast %204 : vector<32x16xbf16> to vector<1x32x16xbf16>
    tpu.vector_store %arg14[%205, %c0_79, %c0_80], %208 {strides = array<i32>} : memref<8x32x16xbf16, #tpu.memory_space<vmem>>, vector<1x32x16xbf16>,
    %c5_i32_81 = arith.constant 5 : i32
    %209 = arith.index_cast %c5_i32_81 : i32 to index
    %c0_82 = arith.constant 0 : index
    %c0_83 = arith.constant 0 : index
    %210 = vector.load %arg13[%209, %c0_82, %c0_83] : memref<8x128x16xf32, #tpu.memory_space<vmem>>, vector<1x128x16xf32>
    %211 = vector.shape_cast %210 : vector<1x128x16xf32> to vector<128x16xf32>
    %212 = arith.truncf %203 : vector<32x16xf32> to vector<32x16xbf16>
    %cst_84 = arith.constant dense<0.000000e+00> : vector<128x16xf32>
    %213 = tpu.matmul %1, %212, %cst_84 {dimension_numbers = #tpu.dot_dimension_numbers<[1], [0], [0], [1], [0, 0, 1, 1], [], []>} : vector<128x32xbf16>, vector<32x16xbf16>, vector<128x16xf32> -> vector<128x16xf32>
    %214 = arith.addf %211, %213 : vector<128x16xf32>
    %215 = arith.negf %214 : vector<128x16xf32>
    %216 = math.exp %215 : vector<128x16xf32>
    %cst_85 = arith.constant 1.000000e+00 : f32
    %217 = vector.broadcast %cst_85 : f32 to vector<128x16xf32>
    %218 = arith.addf %217, %216 : vector<128x16xf32>
    %219 = arith.divf %217, %218 : vector<128x16xf32>
    %220 = math.tanh %214 : vector<128x16xf32>
    %221 = vector.extract_strided_slice %219 {offsets = [32, 0], sizes = [32, 16], strides = [1, 1]} : vector<128x16xf32> to vector<32x16xf32>
    %222 = arith.mulf %221, %200 : vector<32x16xf32>
    %223 = vector.extract_strided_slice %219 {offsets = [0, 0], sizes = [32, 16], strides = [1, 1]} : vector<128x16xf32> to vector<32x16xf32>
    %224 = vector.extract_strided_slice %220 {offsets = [64, 0], sizes = [32, 16], strides = [1, 1]} : vector<128x16xf32> to vector<32x16xf32>
    %225 = arith.mulf %223, %224 : vector<32x16xf32>
    %226 = arith.addf %222, %225 : vector<32x16xf32>
    %227 = vector.extract_strided_slice %219 {offsets = [96, 0], sizes = [32, 16], strides = [1, 1]} : vector<128x16xf32> to vector<32x16xf32>
    %228 = math.tanh %226 : vector<32x16xf32>
    %229 = arith.mulf %227, %228 : vector<32x16xf32>
    %230 = arith.truncf %229 : vector<32x16xf32> to vector<32x16xbf16>
    %231 = arith.index_cast %c5_i32_81 : i32 to index
    %c0_86 = arith.constant 0 : index
    %c0_87 = arith.constant 0 : index
    %232 = vector.load %arg14[%231, %c0_86, %c0_87] : memref<8x32x16xbf16, #tpu.memory_space<vmem>>, vector<1x32x16xbf16>
    %233 = vector.shape_cast %232 : vector<1x32x16xbf16> to vector<32x16xbf16>
    %234 = vector.shape_cast %230 : vector<32x16xbf16> to vector<1x32x16xbf16>
    tpu.vector_store %arg14[%231, %c0_86, %c0_87], %234 {strides = array<i32>} : memref<8x32x16xbf16, #tpu.memory_space<vmem>>, vector<1x32x16xbf16>,
    %c6_i32_88 = arith.constant 6 : i32
    %235 = arith.index_cast %c6_i32_88 : i32 to index
    %c0_89 = arith.constant 0 : index
    %c0_90 = arith.constant 0 : index
    %236 = vector.load %arg13[%235, %c0_89, %c0_90] : memref<8x128x16xf32, #tpu.memory_space<vmem>>, vector<1x128x16xf32>
    %237 = vector.shape_cast %236 : vector<1x128x16xf32> to vector<128x16xf32>
    %238 = arith.truncf %229 : vector<32x16xf32> to vector<32x16xbf16>
    %cst_91 = arith.constant dense<0.000000e+00> : vector<128x16xf32>
    %239 = tpu.matmul %1, %238, %cst_91 {dimension_numbers = #tpu.dot_dimension_numbers<[1], [0], [0], [1], [0, 0, 1, 1], [], []>} : vector<128x32xbf16>, vector<32x16xbf16>, vector<128x16xf32> -> vector<128x16xf32>
    %240 = arith.addf %237, %239 : vector<128x16xf32>
    %241 = arith.negf %240 : vector<128x16xf32>
    %242 = math.exp %241 : vector<128x16xf32>
    %cst_92 = arith.constant 1.000000e+00 : f32
    %243 = vector.broadcast %cst_92 : f32 to vector<128x16xf32>
    %244 = arith.addf %243, %242 : vector<128x16xf32>
    %245 = arith.divf %243, %244 : vector<128x16xf32>
    %246 = math.tanh %240 : vector<128x16xf32>
    %247 = vector.extract_strided_slice %245 {offsets = [32, 0], sizes = [32, 16], strides = [1, 1]} : vector<128x16xf32> to vector<32x16xf32>
    %248 = arith.mulf %247, %226 : vector<32x16xf32>
    %249 = vector.extract_strided_slice %245 {offsets = [0, 0], sizes = [32, 16], strides = [1, 1]} : vector<128x16xf32> to vector<32x16xf32>
    %250 = vector.extract_strided_slice %246 {offsets = [64, 0], sizes = [32, 16], strides = [1, 1]} : vector<128x16xf32> to vector<32x16xf32>
    %251 = arith.mulf %249, %250 : vector<32x16xf32>
    %252 = arith.addf %248, %251 : vector<32x16xf32>
    %253 = vector.extract_strided_slice %245 {offsets = [96, 0], sizes = [32, 16], strides = [1, 1]} : vector<128x16xf32> to vector<32x16xf32>
    %254 = math.tanh %252 : vector<32x16xf32>
    %255 = arith.mulf %253, %254 : vector<32x16xf32>
    %256 = arith.truncf %255 : vector<32x16xf32> to vector<32x16xbf16>
    %257 = arith.index_cast %c6_i32_88 : i32 to index
    %c0_93 = arith.constant 0 : index
    %c0_94 = arith.constant 0 : index
    %258 = vector.load %arg14[%257, %c0_93, %c0_94] : memref<8x32x16xbf16, #tpu.memory_space<vmem>>, vector<1x32x16xbf16>
    %259 = vector.shape_cast %258 : vector<1x32x16xbf16> to vector<32x16xbf16>
    %260 = vector.shape_cast %256 : vector<32x16xbf16> to vector<1x32x16xbf16>
    tpu.vector_store %arg14[%257, %c0_93, %c0_94], %260 {strides = array<i32>} : memref<8x32x16xbf16, #tpu.memory_space<vmem>>, vector<1x32x16xbf16>,
    %c7_i32_95 = arith.constant 7 : i32
    %261 = arith.index_cast %c7_i32_95 : i32 to index
    %c0_96 = arith.constant 0 : index
    %c0_97 = arith.constant 0 : index
    %262 = vector.load %arg13[%261, %c0_96, %c0_97] : memref<8x128x16xf32, #tpu.memory_space<vmem>>, vector<1x128x16xf32>
    %263 = vector.shape_cast %262 : vector<1x128x16xf32> to vector<128x16xf32>
    %264 = arith.truncf %255 : vector<32x16xf32> to vector<32x16xbf16>
    %cst_98 = arith.constant dense<0.000000e+00> : vector<128x16xf32>
    %265 = tpu.matmul %1, %264, %cst_98 {dimension_numbers = #tpu.dot_dimension_numbers<[1], [0], [0], [1], [0, 0, 1, 1], [], []>} : vector<128x32xbf16>, vector<32x16xbf16>, vector<128x16xf32> -> vector<128x16xf32>
    %266 = arith.addf %263, %265 : vector<128x16xf32>
    %267 = arith.negf %266 : vector<128x16xf32>
    %268 = math.exp %267 : vector<128x16xf32>
    %cst_99 = arith.constant 1.000000e+00 : f32
    %269 = vector.broadcast %cst_99 : f32 to vector<128x16xf32>
    %270 = arith.addf %269, %268 : vector<128x16xf32>
    %271 = arith.divf %269, %270 : vector<128x16xf32>
    %272 = math.tanh %266 : vector<128x16xf32>
    %273 = vector.extract_strided_slice %271 {offsets = [32, 0], sizes = [32, 16], strides = [1, 1]} : vector<128x16xf32> to vector<32x16xf32>
    %274 = arith.mulf %273, %252 : vector<32x16xf32>
    %275 = vector.extract_strided_slice %271 {offsets = [0, 0], sizes = [32, 16], strides = [1, 1]} : vector<128x16xf32> to vector<32x16xf32>
    %276 = vector.extract_strided_slice %272 {offsets = [64, 0], sizes = [32, 16], strides = [1, 1]} : vector<128x16xf32> to vector<32x16xf32>
    %277 = arith.mulf %275, %276 : vector<32x16xf32>
    %278 = arith.addf %274, %277 : vector<32x16xf32>
    %279 = vector.extract_strided_slice %271 {offsets = [96, 0], sizes = [32, 16], strides = [1, 1]} : vector<128x16xf32> to vector<32x16xf32>
    %280 = math.tanh %278 : vector<32x16xf32>
    %281 = arith.mulf %279, %280 : vector<32x16xf32>
    %282 = arith.truncf %281 : vector<32x16xf32> to vector<32x16xbf16>
    %283 = arith.index_cast %c7_i32_95 : i32 to index
    %c0_100 = arith.constant 0 : index
    %c0_101 = arith.constant 0 : index
    %284 = vector.load %arg14[%283, %c0_100, %c0_101] : memref<8x32x16xbf16, #tpu.memory_space<vmem>>, vector<1x32x16xbf16>
    %285 = vector.shape_cast %284 : vector<1x32x16xbf16> to vector<32x16xbf16>
    %286 = vector.shape_cast %282 : vector<32x16xbf16> to vector<1x32x16xbf16>
    tpu.vector_store %arg14[%283, %c0_100, %c0_101], %286 {strides = array<i32>} : memref<8x32x16xbf16, #tpu.memory_space<vmem>>, vector<1x32x16xbf16>,
    %c8_i32_102 = arith.constant 8 : i32
    %c0_103 = arith.constant 0 : index
    %c0_104 = arith.constant 0 : index
    %287 = vector.load %arg3[%c0_103, %c0_104] : memref<128x32xbf16, #tpu.memory_space<vmem>>, vector<128x32xbf16>
    %c0_105 = arith.constant 0 : index
    %c0_106 = arith.constant 0 : index
    %288 = vector.load %arg5[%c0_105, %c0_106] : memref<128x32xbf16, #tpu.memory_space<vmem>>, vector<128x32xbf16>
    %c0_107 = arith.constant 0 : index
    %c0_108 = arith.constant 0 : index
    %289 = vector.load %arg7[%c0_107, %c0_108] : memref<128x1xf32, #tpu.memory_space<vmem>>, vector<128x1xf32>
    %290 = vector.shape_cast %289 : vector<128x1xf32> to vector<128x1xf32>
    %291 = vector.broadcast %290 : vector<128x1xf32> to vector<128x16xf32>
    %c0_i32_109 = arith.constant 0 : i32
    %292 = arith.index_cast %c0_i32_109 : i32 to index
    %c0_110 = arith.constant 0 : index
    %c0_111 = arith.constant 0 : index
    %293 = vector.load %arg14[%292, %c0_110, %c0_111] : memref<8x32x16xbf16, #tpu.memory_space<vmem>>, vector<1x32x16xbf16>
    %294 = vector.shape_cast %293 : vector<1x32x16xbf16> to vector<32x16xbf16>
    %cst_112 = arith.constant dense<0.000000e+00> : vector<128x16xf32>
    %295 = tpu.matmul %287, %294, %cst_112 {dimension_numbers = #tpu.dot_dimension_numbers<[1], [0], [0], [1], [0, 0, 1, 1], [], []>} : vector<128x32xbf16>, vector<32x16xbf16>, vector<128x16xf32> -> vector<128x16xf32>
    %296 = arith.addf %295, %291 : vector<128x16xf32>
    %297 = arith.index_cast %c0_i32_109 : i32 to index
    %c0_113 = arith.constant 0 : index
    %c0_114 = arith.constant 0 : index
    %298 = vector.load %arg13[%297, %c0_113, %c0_114] : memref<8x128x16xf32, #tpu.memory_space<vmem>>, vector<1x128x16xf32>
    %299 = vector.shape_cast %298 : vector<1x128x16xf32> to vector<128x16xf32>
    %300 = vector.shape_cast %296 : vector<128x16xf32> to vector<1x128x16xf32>
    tpu.vector_store %arg13[%297, %c0_113, %c0_114], %300 {strides = array<i32>} : memref<8x128x16xf32, #tpu.memory_space<vmem>>, vector<1x128x16xf32>,
    %c1_i32_115 = arith.constant 1 : i32
    %301 = arith.index_cast %c1_i32_115 : i32 to index
    %c0_116 = arith.constant 0 : index
    %c0_117 = arith.constant 0 : index
    %302 = vector.load %arg14[%301, %c0_116, %c0_117] : memref<8x32x16xbf16, #tpu.memory_space<vmem>>, vector<1x32x16xbf16>
    %303 = vector.shape_cast %302 : vector<1x32x16xbf16> to vector<32x16xbf16>
    %cst_118 = arith.constant dense<0.000000e+00> : vector<128x16xf32>
    %304 = tpu.matmul %287, %303, %cst_118 {dimension_numbers = #tpu.dot_dimension_numbers<[1], [0], [0], [1], [0, 0, 1, 1], [], []>} : vector<128x32xbf16>, vector<32x16xbf16>, vector<128x16xf32> -> vector<128x16xf32>
    %305 = arith.addf %304, %291 : vector<128x16xf32>
    %306 = arith.index_cast %c1_i32_115 : i32 to index
    %c0_119 = arith.constant 0 : index
    %c0_120 = arith.constant 0 : index
    %307 = vector.load %arg13[%306, %c0_119, %c0_120] : memref<8x128x16xf32, #tpu.memory_space<vmem>>, vector<1x128x16xf32>
    %308 = vector.shape_cast %307 : vector<1x128x16xf32> to vector<128x16xf32>
    %309 = vector.shape_cast %305 : vector<128x16xf32> to vector<1x128x16xf32>
    tpu.vector_store %arg13[%306, %c0_119, %c0_120], %309 {strides = array<i32>} : memref<8x128x16xf32, #tpu.memory_space<vmem>>, vector<1x128x16xf32>,
    %c2_i32_121 = arith.constant 2 : i32
    %310 = arith.index_cast %c2_i32_121 : i32 to index
    %c0_122 = arith.constant 0 : index
    %c0_123 = arith.constant 0 : index
    %311 = vector.load %arg14[%310, %c0_122, %c0_123] : memref<8x32x16xbf16, #tpu.memory_space<vmem>>, vector<1x32x16xbf16>
    %312 = vector.shape_cast %311 : vector<1x32x16xbf16> to vector<32x16xbf16>
    %cst_124 = arith.constant dense<0.000000e+00> : vector<128x16xf32>
    %313 = tpu.matmul %287, %312, %cst_124 {dimension_numbers = #tpu.dot_dimension_numbers<[1], [0], [0], [1], [0, 0, 1, 1], [], []>} : vector<128x32xbf16>, vector<32x16xbf16>, vector<128x16xf32> -> vector<128x16xf32>
    %314 = arith.addf %313, %291 : vector<128x16xf32>
    %315 = arith.index_cast %c2_i32_121 : i32 to index
    %c0_125 = arith.constant 0 : index
    %c0_126 = arith.constant 0 : index
    %316 = vector.load %arg13[%315, %c0_125, %c0_126] : memref<8x128x16xf32, #tpu.memory_space<vmem>>, vector<1x128x16xf32>
    %317 = vector.shape_cast %316 : vector<1x128x16xf32> to vector<128x16xf32>
    %318 = vector.shape_cast %314 : vector<128x16xf32> to vector<1x128x16xf32>
    tpu.vector_store %arg13[%315, %c0_125, %c0_126], %318 {strides = array<i32>} : memref<8x128x16xf32, #tpu.memory_space<vmem>>, vector<1x128x16xf32>,
    %c3_i32_127 = arith.constant 3 : i32
    %319 = arith.index_cast %c3_i32_127 : i32 to index
    %c0_128 = arith.constant 0 : index
    %c0_129 = arith.constant 0 : index
    %320 = vector.load %arg14[%319, %c0_128, %c0_129] : memref<8x32x16xbf16, #tpu.memory_space<vmem>>, vector<1x32x16xbf16>
    %321 = vector.shape_cast %320 : vector<1x32x16xbf16> to vector<32x16xbf16>
    %cst_130 = arith.constant dense<0.000000e+00> : vector<128x16xf32>
    %322 = tpu.matmul %287, %321, %cst_130 {dimension_numbers = #tpu.dot_dimension_numbers<[1], [0], [0], [1], [0, 0, 1, 1], [], []>} : vector<128x32xbf16>, vector<32x16xbf16>, vector<128x16xf32> -> vector<128x16xf32>
    %323 = arith.addf %322, %291 : vector<128x16xf32>
    %324 = arith.index_cast %c3_i32_127 : i32 to index
    %c0_131 = arith.constant 0 : index
    %c0_132 = arith.constant 0 : index
    %325 = vector.load %arg13[%324, %c0_131, %c0_132] : memref<8x128x16xf32, #tpu.memory_space<vmem>>, vector<1x128x16xf32>
    %326 = vector.shape_cast %325 : vector<1x128x16xf32> to vector<128x16xf32>
    %327 = vector.shape_cast %323 : vector<128x16xf32> to vector<1x128x16xf32>
    tpu.vector_store %arg13[%324, %c0_131, %c0_132], %327 {strides = array<i32>} : memref<8x128x16xf32, #tpu.memory_space<vmem>>, vector<1x128x16xf32>,
    %c4_i32_133 = arith.constant 4 : i32
    %328 = arith.index_cast %c4_i32_133 : i32 to index
    %c0_134 = arith.constant 0 : index
    %c0_135 = arith.constant 0 : index
    %329 = vector.load %arg14[%328, %c0_134, %c0_135] : memref<8x32x16xbf16, #tpu.memory_space<vmem>>, vector<1x32x16xbf16>
    %330 = vector.shape_cast %329 : vector<1x32x16xbf16> to vector<32x16xbf16>
    %cst_136 = arith.constant dense<0.000000e+00> : vector<128x16xf32>
    %331 = tpu.matmul %287, %330, %cst_136 {dimension_numbers = #tpu.dot_dimension_numbers<[1], [0], [0], [1], [0, 0, 1, 1], [], []>} : vector<128x32xbf16>, vector<32x16xbf16>, vector<128x16xf32> -> vector<128x16xf32>
    %332 = arith.addf %331, %291 : vector<128x16xf32>
    %333 = arith.index_cast %c4_i32_133 : i32 to index
    %c0_137 = arith.constant 0 : index
    %c0_138 = arith.constant 0 : index
    %334 = vector.load %arg13[%333, %c0_137, %c0_138] : memref<8x128x16xf32, #tpu.memory_space<vmem>>, vector<1x128x16xf32>
    %335 = vector.shape_cast %334 : vector<1x128x16xf32> to vector<128x16xf32>
    %336 = vector.shape_cast %332 : vector<128x16xf32> to vector<1x128x16xf32>
    tpu.vector_store %arg13[%333, %c0_137, %c0_138], %336 {strides = array<i32>} : memref<8x128x16xf32, #tpu.memory_space<vmem>>, vector<1x128x16xf32>,
    %c5_i32_139 = arith.constant 5 : i32
    %337 = arith.index_cast %c5_i32_139 : i32 to index
    %c0_140 = arith.constant 0 : index
    %c0_141 = arith.constant 0 : index
    %338 = vector.load %arg14[%337, %c0_140, %c0_141] : memref<8x32x16xbf16, #tpu.memory_space<vmem>>, vector<1x32x16xbf16>
    %339 = vector.shape_cast %338 : vector<1x32x16xbf16> to vector<32x16xbf16>
    %cst_142 = arith.constant dense<0.000000e+00> : vector<128x16xf32>
    %340 = tpu.matmul %287, %339, %cst_142 {dimension_numbers = #tpu.dot_dimension_numbers<[1], [0], [0], [1], [0, 0, 1, 1], [], []>} : vector<128x32xbf16>, vector<32x16xbf16>, vector<128x16xf32> -> vector<128x16xf32>
    %341 = arith.addf %340, %291 : vector<128x16xf32>
    %342 = arith.index_cast %c5_i32_139 : i32 to index
    %c0_143 = arith.constant 0 : index
    %c0_144 = arith.constant 0 : index
    %343 = vector.load %arg13[%342, %c0_143, %c0_144] : memref<8x128x16xf32, #tpu.memory_space<vmem>>, vector<1x128x16xf32>
    %344 = vector.shape_cast %343 : vector<1x128x16xf32> to vector<128x16xf32>
    %345 = vector.shape_cast %341 : vector<128x16xf32> to vector<1x128x16xf32>
    tpu.vector_store %arg13[%342, %c0_143, %c0_144], %345 {strides = array<i32>} : memref<8x128x16xf32, #tpu.memory_space<vmem>>, vector<1x128x16xf32>,
    %c6_i32_145 = arith.constant 6 : i32
    %346 = arith.index_cast %c6_i32_145 : i32 to index
    %c0_146 = arith.constant 0 : index
    %c0_147 = arith.constant 0 : index
    %347 = vector.load %arg14[%346, %c0_146, %c0_147] : memref<8x32x16xbf16, #tpu.memory_space<vmem>>, vector<1x32x16xbf16>
    %348 = vector.shape_cast %347 : vector<1x32x16xbf16> to vector<32x16xbf16>
    %cst_148 = arith.constant dense<0.000000e+00> : vector<128x16xf32>
    %349 = tpu.matmul %287, %348, %cst_148 {dimension_numbers = #tpu.dot_dimension_numbers<[1], [0], [0], [1], [0, 0, 1, 1], [], []>} : vector<128x32xbf16>, vector<32x16xbf16>, vector<128x16xf32> -> vector<128x16xf32>
    %350 = arith.addf %349, %291 : vector<128x16xf32>
    %351 = arith.index_cast %c6_i32_145 : i32 to index
    %c0_149 = arith.constant 0 : index
    %c0_150 = arith.constant 0 : index
    %352 = vector.load %arg13[%351, %c0_149, %c0_150] : memref<8x128x16xf32, #tpu.memory_space<vmem>>, vector<1x128x16xf32>
    %353 = vector.shape_cast %352 : vector<1x128x16xf32> to vector<128x16xf32>
    %354 = vector.shape_cast %350 : vector<128x16xf32> to vector<1x128x16xf32>
    tpu.vector_store %arg13[%351, %c0_149, %c0_150], %354 {strides = array<i32>} : memref<8x128x16xf32, #tpu.memory_space<vmem>>, vector<1x128x16xf32>,
    %c7_i32_151 = arith.constant 7 : i32
    %355 = arith.index_cast %c7_i32_151 : i32 to index
    %c0_152 = arith.constant 0 : index
    %c0_153 = arith.constant 0 : index
    %356 = vector.load %arg14[%355, %c0_152, %c0_153] : memref<8x32x16xbf16, #tpu.memory_space<vmem>>, vector<1x32x16xbf16>
    %357 = vector.shape_cast %356 : vector<1x32x16xbf16> to vector<32x16xbf16>
    %cst_154 = arith.constant dense<0.000000e+00> : vector<128x16xf32>
    %358 = tpu.matmul %287, %357, %cst_154 {dimension_numbers = #tpu.dot_dimension_numbers<[1], [0], [0], [1], [0, 0, 1, 1], [], []>} : vector<128x32xbf16>, vector<32x16xbf16>, vector<128x16xf32> -> vector<128x16xf32>
    %359 = arith.addf %358, %291 : vector<128x16xf32>
    %360 = arith.index_cast %c7_i32_151 : i32 to index
    %c0_155 = arith.constant 0 : index
    %c0_156 = arith.constant 0 : index
    %361 = vector.load %arg13[%360, %c0_155, %c0_156] : memref<8x128x16xf32, #tpu.memory_space<vmem>>, vector<1x128x16xf32>
    %362 = vector.shape_cast %361 : vector<1x128x16xf32> to vector<128x16xf32>
    %363 = vector.shape_cast %359 : vector<128x16xf32> to vector<1x128x16xf32>
    tpu.vector_store %arg13[%360, %c0_155, %c0_156], %363 {strides = array<i32>} : memref<8x128x16xf32, #tpu.memory_space<vmem>>, vector<1x128x16xf32>,
    %c8_i32_157 = arith.constant 8 : i32
    %cst_158 = arith.constant 0.000000e+00 : f32
    %364 = vector.broadcast %cst_158 : f32 to vector<32x16xf32>
    %cst_159 = arith.constant 0.000000e+00 : f32
    %365 = vector.broadcast %cst_159 : f32 to vector<32x16xf32>
    %c0_i32_160 = arith.constant 0 : i32
    %366 = arith.index_cast %c0_i32_160 : i32 to index
    %c0_161 = arith.constant 0 : index
    %c0_162 = arith.constant 0 : index
    %367 = vector.load %arg13[%366, %c0_161, %c0_162] : memref<8x128x16xf32, #tpu.memory_space<vmem>>, vector<1x128x16xf32>
    %368 = vector.shape_cast %367 : vector<1x128x16xf32> to vector<128x16xf32>
    %369 = arith.truncf %364 : vector<32x16xf32> to vector<32x16xbf16>
    %cst_163 = arith.constant dense<0.000000e+00> : vector<128x16xf32>
    %370 = tpu.matmul %288, %369, %cst_163 {dimension_numbers = #tpu.dot_dimension_numbers<[1], [0], [0], [1], [0, 0, 1, 1], [], []>} : vector<128x32xbf16>, vector<32x16xbf16>, vector<128x16xf32> -> vector<128x16xf32>
    %371 = arith.addf %368, %370 : vector<128x16xf32>
    %372 = arith.negf %371 : vector<128x16xf32>
    %373 = math.exp %372 : vector<128x16xf32>
    %cst_164 = arith.constant 1.000000e+00 : f32
    %374 = vector.broadcast %cst_164 : f32 to vector<128x16xf32>
    %375 = arith.addf %374, %373 : vector<128x16xf32>
    %376 = arith.divf %374, %375 : vector<128x16xf32>
    %377 = math.tanh %371 : vector<128x16xf32>
    %378 = vector.extract_strided_slice %376 {offsets = [32, 0], sizes = [32, 16], strides = [1, 1]} : vector<128x16xf32> to vector<32x16xf32>
    %379 = arith.mulf %378, %365 : vector<32x16xf32>
    %380 = vector.extract_strided_slice %376 {offsets = [0, 0], sizes = [32, 16], strides = [1, 1]} : vector<128x16xf32> to vector<32x16xf32>
    %381 = vector.extract_strided_slice %377 {offsets = [64, 0], sizes = [32, 16], strides = [1, 1]} : vector<128x16xf32> to vector<32x16xf32>
    %382 = arith.mulf %380, %381 : vector<32x16xf32>
    %383 = arith.addf %379, %382 : vector<32x16xf32>
    %384 = vector.extract_strided_slice %376 {offsets = [96, 0], sizes = [32, 16], strides = [1, 1]} : vector<128x16xf32> to vector<32x16xf32>
    %385 = math.tanh %383 : vector<32x16xf32>
    %386 = arith.mulf %384, %385 : vector<32x16xf32>
    %c1_i32_165 = arith.constant 1 : i32
    %387 = arith.index_cast %c1_i32_165 : i32 to index
    %c0_166 = arith.constant 0 : index
    %c0_167 = arith.constant 0 : index
    %388 = vector.load %arg13[%387, %c0_166, %c0_167] : memref<8x128x16xf32, #tpu.memory_space<vmem>>, vector<1x128x16xf32>
    %389 = vector.shape_cast %388 : vector<1x128x16xf32> to vector<128x16xf32>
    %390 = arith.truncf %386 : vector<32x16xf32> to vector<32x16xbf16>
    %cst_168 = arith.constant dense<0.000000e+00> : vector<128x16xf32>
    %391 = tpu.matmul %288, %390, %cst_168 {dimension_numbers = #tpu.dot_dimension_numbers<[1], [0], [0], [1], [0, 0, 1, 1], [], []>} : vector<128x32xbf16>, vector<32x16xbf16>, vector<128x16xf32> -> vector<128x16xf32>
    %392 = arith.addf %389, %391 : vector<128x16xf32>
    %393 = arith.negf %392 : vector<128x16xf32>
    %394 = math.exp %393 : vector<128x16xf32>
    %cst_169 = arith.constant 1.000000e+00 : f32
    %395 = vector.broadcast %cst_169 : f32 to vector<128x16xf32>
    %396 = arith.addf %395, %394 : vector<128x16xf32>
    %397 = arith.divf %395, %396 : vector<128x16xf32>
    %398 = math.tanh %392 : vector<128x16xf32>
    %399 = vector.extract_strided_slice %397 {offsets = [32, 0], sizes = [32, 16], strides = [1, 1]} : vector<128x16xf32> to vector<32x16xf32>
    %400 = arith.mulf %399, %383 : vector<32x16xf32>
    %401 = vector.extract_strided_slice %397 {offsets = [0, 0], sizes = [32, 16], strides = [1, 1]} : vector<128x16xf32> to vector<32x16xf32>
    %402 = vector.extract_strided_slice %398 {offsets = [64, 0], sizes = [32, 16], strides = [1, 1]} : vector<128x16xf32> to vector<32x16xf32>
    %403 = arith.mulf %401, %402 : vector<32x16xf32>
    %404 = arith.addf %400, %403 : vector<32x16xf32>
    %405 = vector.extract_strided_slice %397 {offsets = [96, 0], sizes = [32, 16], strides = [1, 1]} : vector<128x16xf32> to vector<32x16xf32>
    %406 = math.tanh %404 : vector<32x16xf32>
    %407 = arith.mulf %405, %406 : vector<32x16xf32>
    %c2_i32_170 = arith.constant 2 : i32
    %408 = arith.index_cast %c2_i32_170 : i32 to index
    %c0_171 = arith.constant 0 : index
    %c0_172 = arith.constant 0 : index
    %409 = vector.load %arg13[%408, %c0_171, %c0_172] : memref<8x128x16xf32, #tpu.memory_space<vmem>>, vector<1x128x16xf32>
    %410 = vector.shape_cast %409 : vector<1x128x16xf32> to vector<128x16xf32>
    %411 = arith.truncf %407 : vector<32x16xf32> to vector<32x16xbf16>
    %cst_173 = arith.constant dense<0.000000e+00> : vector<128x16xf32>
    %412 = tpu.matmul %288, %411, %cst_173 {dimension_numbers = #tpu.dot_dimension_numbers<[1], [0], [0], [1], [0, 0, 1, 1], [], []>} : vector<128x32xbf16>, vector<32x16xbf16>, vector<128x16xf32> -> vector<128x16xf32>
    %413 = arith.addf %410, %412 : vector<128x16xf32>
    %414 = arith.negf %413 : vector<128x16xf32>
    %415 = math.exp %414 : vector<128x16xf32>
    %cst_174 = arith.constant 1.000000e+00 : f32
    %416 = vector.broadcast %cst_174 : f32 to vector<128x16xf32>
    %417 = arith.addf %416, %415 : vector<128x16xf32>
    %418 = arith.divf %416, %417 : vector<128x16xf32>
    %419 = math.tanh %413 : vector<128x16xf32>
    %420 = vector.extract_strided_slice %418 {offsets = [32, 0], sizes = [32, 16], strides = [1, 1]} : vector<128x16xf32> to vector<32x16xf32>
    %421 = arith.mulf %420, %404 : vector<32x16xf32>
    %422 = vector.extract_strided_slice %418 {offsets = [0, 0], sizes = [32, 16], strides = [1, 1]} : vector<128x16xf32> to vector<32x16xf32>
    %423 = vector.extract_strided_slice %419 {offsets = [64, 0], sizes = [32, 16], strides = [1, 1]} : vector<128x16xf32> to vector<32x16xf32>
    %424 = arith.mulf %422, %423 : vector<32x16xf32>
    %425 = arith.addf %421, %424 : vector<32x16xf32>
    %426 = vector.extract_strided_slice %418 {offsets = [96, 0], sizes = [32, 16], strides = [1, 1]} : vector<128x16xf32> to vector<32x16xf32>
    %427 = math.tanh %425 : vector<32x16xf32>
    %428 = arith.mulf %426, %427 : vector<32x16xf32>
    %c3_i32_175 = arith.constant 3 : i32
    %429 = arith.index_cast %c3_i32_175 : i32 to index
    %c0_176 = arith.constant 0 : index
    %c0_177 = arith.constant 0 : index
    %430 = vector.load %arg13[%429, %c0_176, %c0_177] : memref<8x128x16xf32, #tpu.memory_space<vmem>>, vector<1x128x16xf32>
    %431 = vector.shape_cast %430 : vector<1x128x16xf32> to vector<128x16xf32>
    %432 = arith.truncf %428 : vector<32x16xf32> to vector<32x16xbf16>
    %cst_178 = arith.constant dense<0.000000e+00> : vector<128x16xf32>
    %433 = tpu.matmul %288, %432, %cst_178 {dimension_numbers = #tpu.dot_dimension_numbers<[1], [0], [0], [1], [0, 0, 1, 1], [], []>} : vector<128x32xbf16>, vector<32x16xbf16>, vector<128x16xf32> -> vector<128x16xf32>
    %434 = arith.addf %431, %433 : vector<128x16xf32>
    %435 = arith.negf %434 : vector<128x16xf32>
    %436 = math.exp %435 : vector<128x16xf32>
    %cst_179 = arith.constant 1.000000e+00 : f32
    %437 = vector.broadcast %cst_179 : f32 to vector<128x16xf32>
    %438 = arith.addf %437, %436 : vector<128x16xf32>
    %439 = arith.divf %437, %438 : vector<128x16xf32>
    %440 = math.tanh %434 : vector<128x16xf32>
    %441 = vector.extract_strided_slice %439 {offsets = [32, 0], sizes = [32, 16], strides = [1, 1]} : vector<128x16xf32> to vector<32x16xf32>
    %442 = arith.mulf %441, %425 : vector<32x16xf32>
    %443 = vector.extract_strided_slice %439 {offsets = [0, 0], sizes = [32, 16], strides = [1, 1]} : vector<128x16xf32> to vector<32x16xf32>
    %444 = vector.extract_strided_slice %440 {offsets = [64, 0], sizes = [32, 16], strides = [1, 1]} : vector<128x16xf32> to vector<32x16xf32>
    %445 = arith.mulf %443, %444 : vector<32x16xf32>
    %446 = arith.addf %442, %445 : vector<32x16xf32>
    %447 = vector.extract_strided_slice %439 {offsets = [96, 0], sizes = [32, 16], strides = [1, 1]} : vector<128x16xf32> to vector<32x16xf32>
    %448 = math.tanh %446 : vector<32x16xf32>
    %449 = arith.mulf %447, %448 : vector<32x16xf32>
    %c4_i32_180 = arith.constant 4 : i32
    %450 = arith.index_cast %c4_i32_180 : i32 to index
    %c0_181 = arith.constant 0 : index
    %c0_182 = arith.constant 0 : index
    %451 = vector.load %arg13[%450, %c0_181, %c0_182] : memref<8x128x16xf32, #tpu.memory_space<vmem>>, vector<1x128x16xf32>
    %452 = vector.shape_cast %451 : vector<1x128x16xf32> to vector<128x16xf32>
    %453 = arith.truncf %449 : vector<32x16xf32> to vector<32x16xbf16>
    %cst_183 = arith.constant dense<0.000000e+00> : vector<128x16xf32>
    %454 = tpu.matmul %288, %453, %cst_183 {dimension_numbers = #tpu.dot_dimension_numbers<[1], [0], [0], [1], [0, 0, 1, 1], [], []>} : vector<128x32xbf16>, vector<32x16xbf16>, vector<128x16xf32> -> vector<128x16xf32>
    %455 = arith.addf %452, %454 : vector<128x16xf32>
    %456 = arith.negf %455 : vector<128x16xf32>
    %457 = math.exp %456 : vector<128x16xf32>
    %cst_184 = arith.constant 1.000000e+00 : f32
    %458 = vector.broadcast %cst_184 : f32 to vector<128x16xf32>
    %459 = arith.addf %458, %457 : vector<128x16xf32>
    %460 = arith.divf %458, %459 : vector<128x16xf32>
    %461 = math.tanh %455 : vector<128x16xf32>
    %462 = vector.extract_strided_slice %460 {offsets = [32, 0], sizes = [32, 16], strides = [1, 1]} : vector<128x16xf32> to vector<32x16xf32>
    %463 = arith.mulf %462, %446 : vector<32x16xf32>
    %464 = vector.extract_strided_slice %460 {offsets = [0, 0], sizes = [32, 16], strides = [1, 1]} : vector<128x16xf32> to vector<32x16xf32>
    %465 = vector.extract_strided_slice %461 {offsets = [64, 0], sizes = [32, 16], strides = [1, 1]} : vector<128x16xf32> to vector<32x16xf32>
    %466 = arith.mulf %464, %465 : vector<32x16xf32>
    %467 = arith.addf %463, %466 : vector<32x16xf32>
    %468 = vector.extract_strided_slice %460 {offsets = [96, 0], sizes = [32, 16], strides = [1, 1]} : vector<128x16xf32> to vector<32x16xf32>
    %469 = math.tanh %467 : vector<32x16xf32>
    %470 = arith.mulf %468, %469 : vector<32x16xf32>
    %c5_i32_185 = arith.constant 5 : i32
    %471 = arith.index_cast %c5_i32_185 : i32 to index
    %c0_186 = arith.constant 0 : index
    %c0_187 = arith.constant 0 : index
    %472 = vector.load %arg13[%471, %c0_186, %c0_187] : memref<8x128x16xf32, #tpu.memory_space<vmem>>, vector<1x128x16xf32>
    %473 = vector.shape_cast %472 : vector<1x128x16xf32> to vector<128x16xf32>
    %474 = arith.truncf %470 : vector<32x16xf32> to vector<32x16xbf16>
    %cst_188 = arith.constant dense<0.000000e+00> : vector<128x16xf32>
    %475 = tpu.matmul %288, %474, %cst_188 {dimension_numbers = #tpu.dot_dimension_numbers<[1], [0], [0], [1], [0, 0, 1, 1], [], []>} : vector<128x32xbf16>, vector<32x16xbf16>, vector<128x16xf32> -> vector<128x16xf32>
    %476 = arith.addf %473, %475 : vector<128x16xf32>
    %477 = arith.negf %476 : vector<128x16xf32>
    %478 = math.exp %477 : vector<128x16xf32>
    %cst_189 = arith.constant 1.000000e+00 : f32
    %479 = vector.broadcast %cst_189 : f32 to vector<128x16xf32>
    %480 = arith.addf %479, %478 : vector<128x16xf32>
    %481 = arith.divf %479, %480 : vector<128x16xf32>
    %482 = math.tanh %476 : vector<128x16xf32>
    %483 = vector.extract_strided_slice %481 {offsets = [32, 0], sizes = [32, 16], strides = [1, 1]} : vector<128x16xf32> to vector<32x16xf32>
    %484 = arith.mulf %483, %467 : vector<32x16xf32>
    %485 = vector.extract_strided_slice %481 {offsets = [0, 0], sizes = [32, 16], strides = [1, 1]} : vector<128x16xf32> to vector<32x16xf32>
    %486 = vector.extract_strided_slice %482 {offsets = [64, 0], sizes = [32, 16], strides = [1, 1]} : vector<128x16xf32> to vector<32x16xf32>
    %487 = arith.mulf %485, %486 : vector<32x16xf32>
    %488 = arith.addf %484, %487 : vector<32x16xf32>
    %489 = vector.extract_strided_slice %481 {offsets = [96, 0], sizes = [32, 16], strides = [1, 1]} : vector<128x16xf32> to vector<32x16xf32>
    %490 = math.tanh %488 : vector<32x16xf32>
    %491 = arith.mulf %489, %490 : vector<32x16xf32>
    %c6_i32_190 = arith.constant 6 : i32
    %492 = arith.index_cast %c6_i32_190 : i32 to index
    %c0_191 = arith.constant 0 : index
    %c0_192 = arith.constant 0 : index
    %493 = vector.load %arg13[%492, %c0_191, %c0_192] : memref<8x128x16xf32, #tpu.memory_space<vmem>>, vector<1x128x16xf32>
    %494 = vector.shape_cast %493 : vector<1x128x16xf32> to vector<128x16xf32>
    %495 = arith.truncf %491 : vector<32x16xf32> to vector<32x16xbf16>
    %cst_193 = arith.constant dense<0.000000e+00> : vector<128x16xf32>
    %496 = tpu.matmul %288, %495, %cst_193 {dimension_numbers = #tpu.dot_dimension_numbers<[1], [0], [0], [1], [0, 0, 1, 1], [], []>} : vector<128x32xbf16>, vector<32x16xbf16>, vector<128x16xf32> -> vector<128x16xf32>
    %497 = arith.addf %494, %496 : vector<128x16xf32>
    %498 = arith.negf %497 : vector<128x16xf32>
    %499 = math.exp %498 : vector<128x16xf32>
    %cst_194 = arith.constant 1.000000e+00 : f32
    %500 = vector.broadcast %cst_194 : f32 to vector<128x16xf32>
    %501 = arith.addf %500, %499 : vector<128x16xf32>
    %502 = arith.divf %500, %501 : vector<128x16xf32>
    %503 = math.tanh %497 : vector<128x16xf32>
    %504 = vector.extract_strided_slice %502 {offsets = [32, 0], sizes = [32, 16], strides = [1, 1]} : vector<128x16xf32> to vector<32x16xf32>
    %505 = arith.mulf %504, %488 : vector<32x16xf32>
    %506 = vector.extract_strided_slice %502 {offsets = [0, 0], sizes = [32, 16], strides = [1, 1]} : vector<128x16xf32> to vector<32x16xf32>
    %507 = vector.extract_strided_slice %503 {offsets = [64, 0], sizes = [32, 16], strides = [1, 1]} : vector<128x16xf32> to vector<32x16xf32>
    %508 = arith.mulf %506, %507 : vector<32x16xf32>
    %509 = arith.addf %505, %508 : vector<32x16xf32>
    %510 = vector.extract_strided_slice %502 {offsets = [96, 0], sizes = [32, 16], strides = [1, 1]} : vector<128x16xf32> to vector<32x16xf32>
    %511 = math.tanh %509 : vector<32x16xf32>
    %512 = arith.mulf %510, %511 : vector<32x16xf32>
    %c7_i32_195 = arith.constant 7 : i32
    %513 = arith.index_cast %c7_i32_195 : i32 to index
    %c0_196 = arith.constant 0 : index
    %c0_197 = arith.constant 0 : index
    %514 = vector.load %arg13[%513, %c0_196, %c0_197] : memref<8x128x16xf32, #tpu.memory_space<vmem>>, vector<1x128x16xf32>
    %515 = vector.shape_cast %514 : vector<1x128x16xf32> to vector<128x16xf32>
    %516 = arith.truncf %512 : vector<32x16xf32> to vector<32x16xbf16>
    %cst_198 = arith.constant dense<0.000000e+00> : vector<128x16xf32>
    %517 = tpu.matmul %288, %516, %cst_198 {dimension_numbers = #tpu.dot_dimension_numbers<[1], [0], [0], [1], [0, 0, 1, 1], [], []>} : vector<128x32xbf16>, vector<32x16xbf16>, vector<128x16xf32> -> vector<128x16xf32>
    %518 = arith.addf %515, %517 : vector<128x16xf32>
    %519 = arith.negf %518 : vector<128x16xf32>
    %520 = math.exp %519 : vector<128x16xf32>
    %cst_199 = arith.constant 1.000000e+00 : f32
    %521 = vector.broadcast %cst_199 : f32 to vector<128x16xf32>
    %522 = arith.addf %521, %520 : vector<128x16xf32>
    %523 = arith.divf %521, %522 : vector<128x16xf32>
    %524 = math.tanh %518 : vector<128x16xf32>
    %525 = vector.extract_strided_slice %523 {offsets = [32, 0], sizes = [32, 16], strides = [1, 1]} : vector<128x16xf32> to vector<32x16xf32>
    %526 = arith.mulf %525, %509 : vector<32x16xf32>
    %527 = vector.extract_strided_slice %523 {offsets = [0, 0], sizes = [32, 16], strides = [1, 1]} : vector<128x16xf32> to vector<32x16xf32>
    %528 = vector.extract_strided_slice %524 {offsets = [64, 0], sizes = [32, 16], strides = [1, 1]} : vector<128x16xf32> to vector<32x16xf32>
    %529 = arith.mulf %527, %528 : vector<32x16xf32>
    %530 = arith.addf %526, %529 : vector<32x16xf32>
    %531 = vector.extract_strided_slice %523 {offsets = [96, 0], sizes = [32, 16], strides = [1, 1]} : vector<128x16xf32> to vector<32x16xf32>
    %532 = math.tanh %530 : vector<32x16xf32>
    %533 = arith.mulf %531, %532 : vector<32x16xf32>
    %c8_i32_200 = arith.constant 8 : i32
    %534 = tpu.transpose %533, [1, 0] : vector<32x16xf32> -> vector<16x32xf32>
    %535 = arith.truncf %534 : vector<16x32xf32> to vector<16x32xbf16>
    %c0_201 = arith.constant 0 : index
    %c0_202 = arith.constant 0 : index
    %536 = vector.load %arg8[%c0_201, %c0_202] : memref<32x128xbf16, #tpu.memory_space<vmem>>, vector<32x128xbf16>
    %cst_203 = arith.constant dense<0.000000e+00> : vector<16x128xf32>
    %537 = tpu.matmul %535, %536, %cst_203 {dimension_numbers = #tpu.dot_dimension_numbers<[1], [0], [0], [1], [0, 0, 1, 1], [], []>} : vector<16x32xbf16>, vector<32x128xbf16>, vector<16x128xf32> -> vector<16x128xf32>
    %c0_204 = arith.constant 0 : index
    %c0_205 = arith.constant 0 : index
    %538 = vector.load %arg9[%c0_204, %c0_205] : memref<1x128xf32, #tpu.memory_space<vmem>>, vector<1x128xf32>
    %539 = vector.broadcast %538 : vector<1x128xf32> to vector<16x128xf32>
    %540 = arith.addf %537, %539 : vector<16x128xf32>
    %cst_206 = arith.constant 0.000000e+00 : f32
    %541 = vector.broadcast %cst_206 : f32 to vector<16x128xf32>
    %542 = arith.maximumf %540, %541 : vector<16x128xf32>
    %543 = arith.truncf %542 : vector<16x128xf32> to vector<16x128xbf16>
    %c0_207 = arith.constant 0 : index
    %c0_208 = arith.constant 0 : index
    %544 = vector.load %arg10[%c0_207, %c0_208] : memref<128x128xbf16, #tpu.memory_space<vmem>>, vector<128x128xbf16>
    %cst_209 = arith.constant dense<0.000000e+00> : vector<16x128xf32>
    %545 = tpu.matmul %543, %544, %cst_209 {dimension_numbers = #tpu.dot_dimension_numbers<[1], [0], [0], [1], [0, 0, 1, 1], [], []>} : vector<16x128xbf16>, vector<128x128xbf16>, vector<16x128xf32> -> vector<16x128xf32>
    %c0_210 = arith.constant 0 : index
    %c0_211 = arith.constant 0 : index
    %546 = vector.load %arg11[%c0_210, %c0_211] : memref<1x128xf32, #tpu.memory_space<vmem>>, vector<1x128xf32>
    %547 = vector.broadcast %546 : vector<1x128xf32> to vector<16x128xf32>
    %548 = arith.addf %545, %547 : vector<16x128xf32>
    %c0_212 = arith.constant 0 : index
    %c0_213 = arith.constant 0 : index
    %549 = vector.load %arg12[%c0_212, %c0_213] : memref<16x128xf32, #tpu.memory_space<vmem>>, vector<16x128xf32>
    tpu.vector_store %arg12[%c0_212, %c0_213], %548 {strides = array<i32>} : memref<16x128xf32, #tpu.memory_space<vmem>>, vector<16x128xf32>,
    return
  }
  func.func @transform_0(%arg0: i32) -> (i32, i32, i32) {
    %c0_i32 = arith.constant 0 : i32
    %c0_i32_0 = arith.constant 0 : i32
    %c0_i32_1 = arith.constant 0 : i32
    return %c0_i32, %c0_i32_0, %arg0 : i32, i32, i32
  }
  func.func @transform_1(%arg0: i32) -> (i32, i32) {
    %c0_i32 = arith.constant 0 : i32
    %c0_i32_0 = arith.constant 0 : i32
    %c0_i32_1 = arith.constant 0 : i32
    return %c0_i32, %c0_i32_0 : i32, i32
  }
  func.func @transform_2(%arg0: i32) -> (i32, i32) {
    %c0_i32 = arith.constant 0 : i32
    %c0_i32_0 = arith.constant 0 : i32
    %c0_i32_1 = arith.constant 0 : i32
    return %c0_i32, %c0_i32_0 : i32, i32
  }
  func.func @transform_3(%arg0: i32) -> (i32, i32) {
    %c0_i32 = arith.constant 0 : i32
    %c0_i32_0 = arith.constant 0 : i32
    %c0_i32_1 = arith.constant 0 : i32
    return %c0_i32, %c0_i32_0 : i32, i32
  }
  func.func @transform_4(%arg0: i32) -> (i32, i32) {
    %c0_i32 = arith.constant 0 : i32
    %c0_i32_0 = arith.constant 0 : i32
    %c0_i32_1 = arith.constant 0 : i32
    return %c0_i32, %c0_i32_0 : i32, i32
  }
  func.func @transform_5(%arg0: i32) -> (i32, i32) {
    %c0_i32 = arith.constant 0 : i32
    %c0_i32_0 = arith.constant 0 : i32
    %c0_i32_1 = arith.constant 0 : i32
    return %c0_i32, %c0_i32_0 : i32, i32
  }
  func.func @transform_6(%arg0: i32) -> (i32, i32) {
    %c0_i32 = arith.constant 0 : i32
    %c0_i32_0 = arith.constant 0 : i32
    %c0_i32_1 = arith.constant 0 : i32
    return %c0_i32, %c0_i32_0 : i32, i32
  }
  func.func @transform_7(%arg0: i32) -> (i32, i32) {
    %c0_i32 = arith.constant 0 : i32
    %c0_i32_0 = arith.constant 0 : i32
    %c0_i32_1 = arith.constant 0 : i32
    return %c0_i32, %c0_i32_0 : i32, i32
  }
  func.func @transform_8(%arg0: i32) -> (i32, i32) {
    %c0_i32 = arith.constant 0 : i32
    %c0_i32_0 = arith.constant 0 : i32
    %c0_i32_1 = arith.constant 0 : i32
    return %c0_i32, %c0_i32_0 : i32, i32
  }
  func.func @transform_9(%arg0: i32) -> (i32, i32) {
    %c0_i32 = arith.constant 0 : i32
    %c0_i32_0 = arith.constant 0 : i32
    %c0_i32_1 = arith.constant 0 : i32
    return %c0_i32, %c0_i32_0 : i32, i32
  }
  func.func @transform_10(%arg0: i32) -> (i32, i32) {
    %c0_i32 = arith.constant 0 : i32
    %c0_i32_0 = arith.constant 0 : i32
    %c0_i32_1 = arith.constant 0 : i32
    return %c0_i32, %c0_i32_0 : i32, i32
  }
  func.func @transform_11(%arg0: i32) -> (i32, i32) {
    %c0_i32 = arith.constant 0 : i32
    %c0_i32_0 = arith.constant 0 : i32
    return %arg0, %c0_i32 : i32, i32
  }
}

</mosaic_0001>

<llo_original>
// kernel: tpu_custom_call.1
$region0: #{tpu_custom_call.1}
  #allocation0 [shape = 'u32[]', space=smem, size = 0x4, offset = 0x4, fixed_abs, tag = 'smem constant byte address 0x4 - core index']
  #allocation1 [shape = 'u32[144,128]{1,0:T(1,128)}', space=vmem, size = 0x12000, scoped, tag = 'internal scratch']
  #allocation2 [shape = 'f32[8,128,16]{2,1,0:T(8,128)}', space=vmem, size = 0x80000, scoped, tag = 'scratch operand']
  #allocation3 [shape = 'bf16[8,32,16]{2,1,0:T(16,128)(2,1)}', space=vmem, size = 0x10000, scoped, tag = 'scratch operand']
  %s0 = inlined_call_operand.hbm [shape: bf16[8,64,16], index: 0, kind: input, shape index: {}]
  %s1 = inlined_call_operand.hbm [shape: bf16[128,64], index: 1, kind: input, shape index: {}]
  %s2 = inlined_call_operand.hbm [shape: bf16[128,32], index: 2, kind: input, shape index: {}]
  %s3 = inlined_call_operand.hbm [shape: bf16[128,32], index: 3, kind: input, shape index: {}]
  %s4 = inlined_call_operand.hbm [shape: bf16[128,32], index: 4, kind: input, shape index: {}]
  %s5 = inlined_call_operand.hbm [shape: f32[128,1], index: 5, kind: input, shape index: {}]
  %s6 = inlined_call_operand.hbm [shape: f32[128,1], index: 6, kind: input, shape index: {}]
  %s7 = inlined_call_operand.hbm [shape: bf16[32,128], index: 7, kind: input, shape index: {}]
  %s8 = inlined_call_operand.hbm [shape: f32[1,128], index: 8, kind: input, shape index: {}]
  %s9 = inlined_call_operand.hbm [shape: bf16[128,128], index: 9, kind: input, shape index: {}]
  %s10 = inlined_call_operand.hbm [shape: f32[1,128], index: 10, kind: input, shape index: {}]
  %s11 = inlined_call_operand.hbm [shape: f32[16,128], index: 11, kind: output, shape index: {}]
  %s12 = sld [smem:[#allocation0]]
  $region98: #{tpu_custom_call.1} parent=0
    _
  %s14 = ssub.s32 1, %s12
  %s15 = scalar_select 0, %s14, %s12
  $region1: #{tpu_custom_call.1} parent=0
    #allocation4 [shape = 'u8[131072]{0}', space=vmem, size = 0x20000, scoped, tag = 'input window, operand 0, single buffered']
    #allocation5 [shape = 's32[1]{0}', space=sflag, size = 0x4, scoped, tag = 'scoped memory for tpu_custom_call.1']
    #allocation6 [shape = 's32[1]{0}', space=sflag, size = 0x4, scoped, tag = 'scoped memory for tpu_custom_call.1']
    #allocation7 [shape = 'u8[32768]{0}', space=vmem, size = 0x8000, scoped, tag = 'input window, operand 1, single buffered']
    #allocation8 [shape = 's32[1]{0}', space=sflag, size = 0x4, scoped, tag = 'scoped memory for tpu_custom_call.1']
    #allocation9 [shape = 'u8[32768]{0}', space=vmem, size = 0x8000, scoped, tag = 'input window, operand 2, single buffered']
    #allocation10 [shape = 'u8[32768]{0}', space=vmem, size = 0x8000, scoped, tag = 'input window, operand 3, single buffered']
    #allocation11 [shape = 's32[1]{0}', space=sflag, size = 0x4, scoped, tag = 'scoped memory for tpu_custom_call.1']
    #allocation12 [shape = 'u8[32768]{0}', space=vmem, size = 0x8000, scoped, tag = 'input window, operand 4, single buffered']
    #allocation13 [shape = 'u8[65536]{0}', space=vmem, size = 0x10000, scoped, tag = 'input window, operand 5, single buffered']
    #allocation14 [shape = 's32[1]{0}', space=sflag, size = 0x4, scoped, tag = 'scoped memory for tpu_custom_call.1']
    #allocation15 [shape = 'u8[65536]{0}', space=vmem, size = 0x10000, scoped, tag = 'input window, operand 6, single buffered']
    #allocation16 [shape = 'u8[8192]{0}', space=vmem, size = 0x2000, scoped, tag = 'input window, operand 7, single buffered']
    #allocation17 [shape = 's32[1]{0}', space=sflag, size = 0x4, scoped, tag = 'scoped memory for tpu_custom_call.1']
    #allocation18 [shape = 'u8[512]{0}', space=vmem, size = 0x400, scoped, tag = 'input window, operand 8, single buffered']
    #allocation19 [shape = 'u8[32768]{0}', space=vmem, size = 0x8000, scoped, tag = 'input window, operand 9, single buffered']
    #allocation20 [shape = 's32[1]{0}', space=sflag, size = 0x4, scoped, tag = 'scoped memory for tpu_custom_call.1']
    #allocation21 [shape = 'u8[512]{0}', space=vmem, size = 0x400, scoped, tag = 'input window, operand 10, single buffered']
    #allocation22 [shape = 'u8[8192]{0}', space=vmem, size = 0x2000, scoped, tag = 'output window, operand 0, single buffered']
    %16 = vsyncpa [#allocation5], 0
    %17 = vsyncpa [#allocation8], 0
    %18 = vsyncpa [#allocation11], 0
    %19 = vsyncpa [#allocation14], 0
    %20 = vsyncpa [#allocation17], 0
    %21 = vsyncpa [#allocation20], 0
    %22 = vsyncpa [#allocation6], 0
    // Predicated region
    $region2: #{tpu_custom_call.1} parent=1 // pred_check
      _
    $region3: #{tpu_custom_call.1} parent=1 // pred_check_branch
      %24 = sbr.rel (0) target = $region5
    $region4: #{tpu_custom_call.1} parent=1 // pred_region
      %s26 = ssub.s32 4096, 4096
      %27 = vsyncadd [#allocation5], %s26
      %s28 = sshll.u32 [#allocation4], 4
      %s29 = int_to_ptr.vmem [resolvable:$true] %s28
      %34 = dma.hbm_to_vmem [thread:$0]  %s0, 4096, %s29, [#allocation5], 64, 64, 4
    $region5: #{tpu_custom_call.1} parent=1 // pred_fallthru
      _
    // Predicated region
    $region6: #{tpu_custom_call.1} parent=1 // pred_check
      _
    $region7: #{tpu_custom_call.1} parent=1 // pred_check_branch
      %36 = sbr.rel (0) target = $region9
    $region8: #{tpu_custom_call.1} parent=1 // pred_region
      %s38 = ssub.s32 1024, 1024
      %39 = vsyncadd [#allocation8], %s38
      %s40 = sshll.u32 [#allocation7], 4
      %s41 = int_to_ptr.vmem [resolvable:$true] %s40
      %46 = dma.hbm_to_vmem [thread:$0]  %s1, 1024, %s41, [#allocation8], 64, 64, 4
    $region9: #{tpu_custom_call.1} parent=1 // pred_fallthru
      _
    // Predicated region
    $region10: #{tpu_custom_call.1} parent=1 // pred_check
      _
    $region11: #{tpu_custom_call.1} parent=1 // pred_check_branch
      %48 = sbr.rel (0) target = $region13
    $region12: #{tpu_custom_call.1} parent=1 // pred_region
      %s50 = ssub.s32 1024, 1024
      %51 = vsyncadd [#allocation8], %s50
      %s52 = sshll.u32 [#allocation9], 4
      %s53 = int_to_ptr.vmem [resolvable:$true] %s52
      %58 = dma.hbm_to_vmem [thread:$0]  %s2, 1024, %s53, [#allocation8], 64, 64, 4
    $region13: #{tpu_custom_call.1} parent=1 // pred_fallthru
      _
    // Predicated region
    $region14: #{tpu_custom_call.1} parent=1 // pred_check
      _
    $region15: #{tpu_custom_call.1} parent=1 // pred_check_branch
      %60 = sbr.rel (0) target = $region17
    $region16: #{tpu_custom_call.1} parent=1 // pred_region
      %s62 = ssub.s32 1024, 1024
      %63 = vsyncadd [#allocation11], %s62
      %s64 = sshll.u32 [#allocation10], 4
      %s65 = int_to_ptr.vmem [resolvable:$true] %s64
      %70 = dma.hbm_to_vmem [thread:$0]  %s3, 1024, %s65, [#allocation11], 64, 64, 4
    $region17: #{tpu_custom_call.1} parent=1 // pred_fallthru
      _
    // Predicated region
    $region18: #{tpu_custom_call.1} parent=1 // pred_check
      _
    $region19: #{tpu_custom_call.1} parent=1 // pred_check_branch
      %72 = sbr.rel (0) target = $region21
    $region20: #{tpu_custom_call.1} parent=1 // pred_region
      %s74 = ssub.s32 1024, 1024
      %75 = vsyncadd [#allocation11], %s74
      %s76 = sshll.u32 [#allocation12], 4
      %s77 = int_to_ptr.vmem [resolvable:$true] %s76
      %82 = dma.hbm_to_vmem [thread:$0]  %s4, 1024, %s77, [#allocation11], 64, 64, 4
    $region21: #{tpu_custom_call.1} parent=1 // pred_fallthru
      _
    // Predicated region
    $region22: #{tpu_custom_call.1} parent=1 // pred_check
      _
    $region23: #{tpu_custom_call.1} parent=1 // pred_check_branch
      %84 = sbr.rel (0) target = $region25
    $region24: #{tpu_custom_call.1} parent=1 // pred_region
      %s86 = ssub.s32 2048, 2048
      %87 = vsyncadd [#allocation14], %s86
      %s88 = sshll.u32 [#allocation13], 4
      %s89 = int_to_ptr.vmem [resolvable:$true] %s88
      %94 = dma.hbm_to_vmem [thread:$0]  %s5, 2048, %s89, [#allocation14], 128, 128, 8
    $region25: #{tpu_custom_call.1} parent=1 // pred_fallthru
      _
    // Predicated region
    $region26: #{tpu_custom_call.1} parent=1 // pred_check
      _
    $region27: #{tpu_custom_call.1} parent=1 // pred_check_branch
      %96 = sbr.rel (0) target = $region29
    $region28: #{tpu_custom_call.1} parent=1 // pred_region
      %s98 = ssub.s32 2048, 2048
      %99 = vsyncadd [#allocation14], %s98
      %s100 = sshll.u32 [#allocation15], 4
      %s101 = int_to_ptr.vmem [resolvable:$true] %s100
      %106 = dma.hbm_to_vmem [thread:$0]  %s6, 2048, %s101, [#allocation14], 128, 128, 8
    $region29: #{tpu_custom_call.1} parent=1 // pred_fallthru
      _
    // Predicated region
    $region30: #{tpu_custom_call.1} parent=1 // pred_check
      _
    $region31: #{tpu_custom_call.1} parent=1 // pred_check_branch
      %108 = sbr.rel (0) target = $region33
    $region32: #{tpu_custom_call.1} parent=1 // pred_region
      %s110 = ssub.s32 256, 256
      %111 = vsyncadd [#allocation17], %s110
      %s112 = sshll.u32 [#allocation16], 4
      %s113 = int_to_ptr.vmem [resolvable:$true] %s112
      %118 = dma.hbm_to_vmem [thread:$0]  %s7, 256, %s113, [#allocation17], 64, 64, 4
    $region33: #{tpu_custom_call.1} parent=1 // pred_fallthru
      _
    // Predicated region
    $region34: #{tpu_custom_call.1} parent=1 // pred_check
      _
    $region35: #{tpu_custom_call.1} parent=1 // pred_check_branch
      %120 = sbr.rel (0) target = $region37
    $region36: #{tpu_custom_call.1} parent=1 // pred_region
      %s122 = ssub.s32 16, 16
      %123 = vsyncadd [#allocation17], %s122
      %s125 = sshll.u32 [#allocation18], 4
      %s126 = int_to_ptr.vmem [resolvable:$true] %s125
      %128 = dma.hbm_to_vmem [thread:$0]  %s8, 16, %s126, [#allocation17]
    $region37: #{tpu_custom_call.1} parent=1 // pred_fallthru
      _
    // Predicated region
    $region38: #{tpu_custom_call.1} parent=1 // pred_check
      _
    $region39: #{tpu_custom_call.1} parent=1 // pred_check_branch
      %130 = sbr.rel (0) target = $region41
    $region40: #{tpu_custom_call.1} parent=1 // pred_region
      %s132 = ssub.s32 1024, 1024
      %133 = vsyncadd [#allocation20], %s132
      %s134 = sshll.u32 [#allocation19], 4
      %s135 = int_to_ptr.vmem [resolvable:$true] %s134
      %140 = dma.hbm_to_vmem [thread:$0]  %s9, 1024, %s135, [#allocation20], 64, 64, 4
    $region41: #{tpu_custom_call.1} parent=1 // pred_fallthru
      _
    // Predicated region
    $region42: #{tpu_custom_call.1} parent=1 // pred_check
      _
    $region43: #{tpu_custom_call.1} parent=1 // pred_check_branch
      %142 = sbr.rel (0) target = $region45
    $region44: #{tpu_custom_call.1} parent=1 // pred_region
      %s144 = ssub.s32 16, 16
      %145 = vsyncadd [#allocation20], %s144
      %s147 = sshll.u32 [#allocation21], 4
      %s148 = int_to_ptr.vmem [resolvable:$true] %s147
      %150 = dma.hbm_to_vmem [thread:$0]  %s10, 16, %s148, [#allocation20]
    $region45: #{tpu_custom_call.1} parent=1 // pred_fallthru
      _
    // Predicated region
    $region46: #{tpu_custom_call.1} parent=1 // pred_check
      _
    $region47: #{tpu_custom_call.1} parent=1 // pred_check_branch
      %152 = sbr.rel (0) target = $region49
    $region48: #{tpu_custom_call.1} parent=1 // pred_region
      %153 = dma.done [#allocation5], 4096
    $region49: #{tpu_custom_call.1} parent=1 // pred_fallthru
      _
    // Predicated region
    $region50: #{tpu_custom_call.1} parent=1 // pred_check
      _
    $region51: #{tpu_custom_call.1} parent=1 // pred_check_branch
      %155 = sbr.rel (0) target = $region53
    $region52: #{tpu_custom_call.1} parent=1 // pred_region
      %156 = dma.done [#allocation8], 1024
    $region53: #{tpu_custom_call.1} parent=1 // pred_fallthru
      _
    // Predicated region
    $region54: #{tpu_custom_call.1} parent=1 // pred_check
      _
    $region55: #{tpu_custom_call.1} parent=1 // pred_check_branch
      %158 = sbr.rel (0) target = $region57
    $region56: #{tpu_custom_call.1} parent=1 // pred_region
      %159 = dma.done [#allocation8], 1024
    $region57: #{tpu_custom_call.1} parent=1 // pred_fallthru
      _
    // Predicated region
    $region58: #{tpu_custom_call.1} parent=1 // pred_check
      _
    $region59: #{tpu_custom_call.1} parent=1 // pred_check_branch
      %161 = sbr.rel (0) target = $region61
    $region60: #{tpu_custom_call.1} parent=1 // pred_region
      %162 = dma.done [#allocation11], 1024
    $region61: #{tpu_custom_call.1} parent=1 // pred_fallthru
      _
    // Predicated region
    $region62: #{tpu_custom_call.1} parent=1 // pred_check
      _
    $region63: #{tpu_custom_call.1} parent=1 // pred_check_branch
      %164 = sbr.rel (0) target = $region65
    $region64: #{tpu_custom_call.1} parent=1 // pred_region
      %165 = dma.done [#allocation11], 1024
    $region65: #{tpu_custom_call.1} parent=1 // pred_fallthru
      _
    // Predicated region
    $region66: #{tpu_custom_call.1} parent=1 // pred_check
      _
    $region67: #{tpu_custom_call.1} parent=1 // pred_check_branch
      %167 = sbr.rel (0) target = $region69
    $region68: #{tpu_custom_call.1} parent=1 // pred_region
      %168 = dma.done [#allocation14], 2048
    $region69: #{tpu_custom_call.1} parent=1 // pred_fallthru
      _
    // Predicated region
    $region70: #{tpu_custom_call.1} parent=1 // pred_check
      _
    $region71: #{tpu_custom_call.1} parent=1 // pred_check_branch
      %170 = sbr.rel (0) target = $region73
    $region72: #{tpu_custom_call.1} parent=1 // pred_region
      %171 = dma.done [#allocation14], 2048
    $region73: #{tpu_custom_call.1} parent=1 // pred_fallthru
      _
    // Predicated region
    $region74: #{tpu_custom_call.1} parent=1 // pred_check
      _
    $region75: #{tpu_custom_call.1} parent=1 // pred_check_branch
      %173 = sbr.rel (0) target = $region77
    $region76: #{tpu_custom_call.1} parent=1 // pred_region
      %174 = dma.done [#allocation17], 256
    $region77: #{tpu_custom_call.1} parent=1 // pred_fallthru
      _
    // Predicated region
    $region78: #{tpu_custom_call.1} parent=1 // pred_check
      _
    $region79: #{tpu_custom_call.1} parent=1 // pred_check_branch
      %176 = sbr.rel (0) target = $region81
    $region80: #{tpu_custom_call.1} parent=1 // pred_region
      %177 = dma.done [#allocation17], 16
    $region81: #{tpu_custom_call.1} parent=1 // pred_fallthru
      _
    // Predicated region
    $region82: #{tpu_custom_call.1} parent=1 // pred_check
      _
    $region83: #{tpu_custom_call.1} parent=1 // pred_check_branch
      %179 = sbr.rel (0) target = $region85
    $region84: #{tpu_custom_call.1} parent=1 // pred_region
      %180 = dma.done [#allocation20], 1024
    $region85: #{tpu_custom_call.1} parent=1 // pred_fallthru
      _
    // Predicated region
    $region86: #{tpu_custom_call.1} parent=1 // pred_check
      _
    $region87: #{tpu_custom_call.1} parent=1 // pred_check_branch
      %182 = sbr.rel (0) target = $region89
    $region88: #{tpu_custom_call.1} parent=1 // pred_region
      %183 = dma.done [#allocation20], 16
    $region89: #{tpu_custom_call.1} parent=1 // pred_fallthru
      _
    %v185 = vld [vmem:[#allocation7] sm:$0xf]
    %v186 = vld [vmem:[#allocation7 + $0x4] sm:$0xf]
    %v187 = vld [vmem:[#allocation7 + $0x8] sm:$0xf]
    %v188 = vld [vmem:[#allocation7 + $0xc] sm:$0xf]
    %v189 = vld [vmem:[#allocation7 + $0x10] sm:$0xf]
    %v190 = vld [vmem:[#allocation7 + $0x14] sm:$0xf]
    %v191 = vld [vmem:[#allocation7 + $0x18] sm:$0xf]
    %v192 = vld [vmem:[#allocation7 + $0x1c] sm:$0xf]
    %v193 = vld [vmem:[#allocation7 + $0x20] sm:$0xf]
    %v194 = vld [vmem:[#allocation7 + $0x24] sm:$0xf]
    %v195 = vld [vmem:[#allocation7 + $0x28] sm:$0xf]
    %v196 = vld [vmem:[#allocation7 + $0x2c] sm:$0xf]
    %v197 = vld [vmem:[#allocation7 + $0x30] sm:$0xf]
    %v198 = vld [vmem:[#allocation7 + $0x34] sm:$0xf]
    %v199 = vld [vmem:[#allocation7 + $0x38] sm:$0xf]
    %v200 = vld [vmem:[#allocation7 + $0x3c] sm:$0xf]
    %v201 = vld [vmem:[#allocation10] sm:$0xf]
    %v202 = vld [vmem:[#allocation10 + $0x4] sm:$0xf]
    %v203 = vld [vmem:[#allocation10 + $0x8] sm:$0xf]
    %v204 = vld [vmem:[#allocation10 + $0xc] sm:$0xf]
    %v205 = vld [vmem:[#allocation10 + $0x10] sm:$0xf]
    %v206 = vld [vmem:[#allocation10 + $0x14] sm:$0xf]
    %v207 = vld [vmem:[#allocation10 + $0x18] sm:$0xf]
    %v208 = vld [vmem:[#allocation10 + $0x1c] sm:$0xf]
    %v209 = vld [vmem:[#allocation10 + $0x20] sm:$0xf]
    %v210 = vld [vmem:[#allocation10 + $0x24] sm:$0xf]
    %v211 = vld [vmem:[#allocation10 + $0x28] sm:$0xf]
    %v212 = vld [vmem:[#allocation10 + $0x2c] sm:$0xf]
    %v213 = vld [vmem:[#allocation10 + $0x30] sm:$0xf]
    %v214 = vld [vmem:[#allocation10 + $0x34] sm:$0xf]
    %v215 = vld [vmem:[#allocation10 + $0x38] sm:$0xf]
    %v216 = vld [vmem:[#allocation10 + $0x3c] sm:$0xf]
    %v217 = vld [vmem:[#allocation13] sm:$0xff]
    %v218 = vld [vmem:[#allocation13 + $0x8] sm:$0xff]
    %v219 = vld [vmem:[#allocation13 + $0x10] sm:$0xff]
    %v220 = vld [vmem:[#allocation13 + $0x18] sm:$0xff]
    %v221 = vld [vmem:[#allocation13 + $0x20] sm:$0xff]
    %v222 = vld [vmem:[#allocation13 + $0x28] sm:$0xff]
    %v223 = vld [vmem:[#allocation13 + $0x30] sm:$0xff]
    %v224 = vld [vmem:[#allocation13 + $0x38] sm:$0xff]
    %v225 = vld [vmem:[#allocation13 + $0x40] sm:$0xff]
    %v226 = vld [vmem:[#allocation13 + $0x48] sm:$0xff]
    %v227 = vld [vmem:[#allocation13 + $0x50] sm:$0xff]
    %v228 = vld [vmem:[#allocation13 + $0x58] sm:$0xff]
    %v229 = vld [vmem:[#allocation13 + $0x60] sm:$0xff]
    %v230 = vld [vmem:[#allocation13 + $0x68] sm:$0xff]
    %v231 = vld [vmem:[#allocation13 + $0x70] sm:$0xff]
    %v232 = vld [vmem:[#allocation13 + $0x78] sm:$0xff]
    %234 = vset.pattern.permute.xlu0 0
    %235 = vperm.xlu0 %234, %v217
    %v236 = vpop.permute.xlu0 %235
    %239 = vset.pattern.permute.xlu0 0
    %240 = vperm.xlu0 %239, %v218
    %v241 = vpop.permute.xlu0 %240
    %244 = vset.pattern.permute.xlu0 0
    %245 = vperm.xlu0 %244, %v219
    %v246 = vpop.permute.xlu0 %245
    %249 = vset.pattern.permute.xlu0 0
    %250 = vperm.xlu0 %249, %v220
    %v251 = vpop.permute.xlu0 %250
    %254 = vset.pattern.permute.xlu0 0
    %255 = vperm.xlu0 %254, %v221
    %v256 = vpop.permute.xlu0 %255
    %259 = vset.pattern.permute.xlu0 0
    %260 = vperm.xlu0 %259, %v222
    %v261 = vpop.permute.xlu0 %260
    %264 = vset.pattern.permute.xlu0 0
    %265 = vperm.xlu0 %264, %v223
    %v266 = vpop.permute.xlu0 %265
    %269 = vset.pattern.permute.xlu0 0
    %270 = vperm.xlu0 %269, %v224
    %v271 = vpop.permute.xlu0 %270
    %274 = vset.pattern.permute.xlu0 0
    %275 = vperm.xlu0 %274, %v225
    %v276 = vpop.permute.xlu0 %275
    %279 = vset.pattern.permute.xlu0 0
    %280 = vperm.xlu0 %279, %v226
    %v281 = vpop.permute.xlu0 %280
    %284 = vset.pattern.permute.xlu0 0
    %285 = vperm.xlu0 %284, %v227
    %v286 = vpop.permute.xlu0 %285
    %289 = vset.pattern.permute.xlu0 0
    %290 = vperm.xlu0 %289, %v228
    %v291 = vpop.permute.xlu0 %290
    %294 = vset.pattern.permute.xlu0 0
    %295 = vperm.xlu0 %294, %v229
    %v296 = vpop.permute.xlu0 %295
    %299 = vset.pattern.permute.xlu0 0
    %300 = vperm.xlu0 %299, %v230
    %v301 = vpop.permute.xlu0 %300
    %304 = vset.pattern.permute.xlu0 0
    %305 = vperm.xlu0 %304, %v231
    %v306 = vpop.permute.xlu0 %305
    %309 = vset.pattern.permute.xlu0 0
    %310 = vperm.xlu0 %309, %v232
    %v311 = vpop.permute.xlu0 %310
    %v313 = vld [vmem:[#allocation4] sm:$0xf]
    %v314 = vld [vmem:[#allocation4 + $0x4] sm:$0xf]
    %v315 = vld [vmem:[#allocation4 + $0x8] sm:$0xf]
    %v316 = vld [vmem:[#allocation4 + $0xc] sm:$0xf]
    %v317 = vld [vmem:[#allocation4 + $0x10] sm:$0xf]
    %v318 = vld [vmem:[#allocation4 + $0x14] sm:$0xf]
    %v319 = vld [vmem:[#allocation4 + $0x18] sm:$0xf]
    %v320 = vld [vmem:[#allocation4 + $0x1c] sm:$0xf]
    %v337 = vunpack.c.l.b16 %v185
    %v338 = vunpack.c.l.b16 %v186
    %v339 = vunpack.c.l.b16 %v187
    %v340 = vunpack.c.l.b16 %v188
    %v341 = vunpack.c.l.b16 %v189
    %v342 = vunpack.c.l.b16 %v190
    %v343 = vunpack.c.l.b16 %v191
    %v344 = vunpack.c.l.b16 %v192
    %v345 = vunpack.c.l.b16 %v193
    %v346 = vunpack.c.l.b16 %v194
    %v347 = vunpack.c.l.b16 %v195
    %v348 = vunpack.c.l.b16 %v196
    %v349 = vunpack.c.l.b16 %v197
    %v350 = vunpack.c.l.b16 %v198
    %v351 = vunpack.c.l.b16 %v199
    %v352 = vunpack.c.l.b16 %v200
    %v353 = vpack.c.b16 %v338, %v337
    %v354 = vpack.c.b16 %v340, %v339
    %v355 = vpack.c.b16 %v342, %v341
    %v356 = vpack.c.b16 %v344, %v343
    %v357 = vpack.c.b16 %v346, %v345
    %v358 = vpack.c.b16 %v348, %v347
    %v359 = vpack.c.b16 %v350, %v349
    %v360 = vpack.c.b16 %v352, %v351
    %v369 = vunpack.c.l.b16 %v313
    %v370 = vunpack.c.l.b16 %v314
    %v371 = vunpack.c.l.b16 %v315
    %v372 = vunpack.c.l.b16 %v316
    %v373 = vunpack.c.l.b16 %v317
    %v374 = vunpack.c.l.b16 %v318
    %v375 = vunpack.c.l.b16 %v319
    %v376 = vunpack.c.l.b16 %v320
    %v377 = vpack.c.b16 %v370, %v369
    %v378 = vpack.c.b16 %v372, %v371
    %v379 = vpack.c.b16 %v374, %v373
    %v380 = vpack.c.b16 %v376, %v375
    %vm385 = vcmask 523264
    %v387 = vsel %vm385, %v353, 0
    %v390 = vsel %vm385, %v354, 0
    %v393 = vsel %vm385, %v355, 0
    %v396 = vsel %vm385, %v356, 0
    %v399 = vsel %vm385, %v357, 0
    %v402 = vsel %vm385, %v358, 0
    %v405 = vsel %vm385, %v359, 0
    %v408 = vsel %vm385, %v360, 0
    %410 = vmatprep.subr.bf16.mxu0 0
    %411 = vmatpush1.bf16.msra.mxu0 %v377
    %412 = vmatprep.subr.bf16.mxu0 0
    %413 = vmatpush1.bf16.msra.mxu0 %v378
    %414 = vmatprep.subr.bf16.mxu0 0
    %415 = vmatpush1.bf16.msra.mxu0 %v379
    %416 = vmatprep.subr.bf16.mxu0 0
    %417 = vmatpush1.bf16.msra.mxu0 %v380
    %418 = vmatprep.subr.bf16.mxu0 0
    %419 = vmatpush1.bf16.msra.mxu0 0
    %420 = vmatprep.subr.bf16.mxu0 0
    %421 = vmatpush1.bf16.msra.mxu0 0
    %422 = vmatprep.subr.bf16.mxu0 0
    %423 = vmatpush1.bf16.msra.mxu0 0
    %424 = vmatprep.subr.bf16.mxu0 0
    %425 = vmatpush1.bf16.msra.mxu0 0
    %426 = vmatprep.subr.bf16.mxu0 0
    %427 = vmatpush1.bf16.msra.mxu0 0
    %428 = vmatprep.subr.bf16.mxu0 0
    %429 = vmatpush1.bf16.msra.mxu0 0
    %430 = vmatprep.subr.bf16.mxu0 0
    %431 = vmatpush1.bf16.msra.mxu0 0
    %432 = vmatprep.subr.bf16.mxu0 0
    %433 = vmatpush1.bf16.msra.mxu0 0
    %434 = vmatprep.subr.bf16.mxu0 0
    %435 = vmatpush1.bf16.msra.mxu0 0
    %436 = vmatprep.subr.bf16.mxu0 0
    %437 = vmatpush1.bf16.msra.mxu0 0
    %438 = vmatprep.subr.bf16.mxu0 0
    %439 = vmatpush1.bf16.msra.mxu0 0
    %440 = vmatprep.subr.bf16.mxu0 0
    %441 = vmatpush1.bf16.msra.mxu0 0
    %442 = vmatprep.mubr.bf16.mxu0 0
    %443 = vmatmul.mubr.bf16.gmra.mrb[0].mxu0 %v387
    %v444 = vpop.f32.mrb[0].mxu0
    %v445 = vadd.f32 %v236, %v444
    %v446 = vpop.f32.mrb[0].mxu0
    %v447 = vpop.f32.mrb[0].mxu0
    %v448 = vadd.f32 %v241, %v447
    %v449 = vpop.f32.mrb[0].mxu0
    %450 = vmatprep.mubr.bf16.mxu0 0
    %451 = vmatmul.mubr.bf16.gmra.mrb[0].mxu0 %v390
    %v452 = vpop.f32.mrb[0].mxu0
    %v453 = vadd.f32 %v246, %v452
    %v454 = vpop.f32.mrb[0].mxu0
    %v455 = vpop.f32.mrb[0].mxu0
    %v456 = vadd.f32 %v251, %v455
    %v457 = vpop.f32.mrb[0].mxu0
    %458 = vmatprep.mubr.bf16.mxu0 0
    %459 = vmatmul.mubr.bf16.gmra.mrb[0].mxu0 %v393
    %v460 = vpop.f32.mrb[0].mxu0
    %v461 = vadd.f32 %v256, %v460
    %v462 = vpop.f32.mrb[0].mxu0
    %v463 = vpop.f32.mrb[0].mxu0
    %v464 = vadd.f32 %v261, %v463
    %v465 = vpop.f32.mrb[0].mxu0
    %466 = vmatprep.mubr.bf16.mxu0 0
    %467 = vmatmul.mubr.bf16.gmra.mrb[0].mxu0 %v396
    %v468 = vpop.f32.mrb[0].mxu0
    %v469 = vadd.f32 %v266, %v468
    %v470 = vpop.f32.mrb[0].mxu0
    %v471 = vpop.f32.mrb[0].mxu0
    %v472 = vadd.f32 %v271, %v471
    %v473 = vpop.f32.mrb[0].mxu0
    %474 = vmatprep.mubr.bf16.mxu0 0
    %475 = vmatmul.mubr.bf16.gmra.mrb[0].mxu0 %v399
    %v476 = vpop.f32.mrb[0].mxu0
    %v477 = vadd.f32 %v276, %v476
    %v478 = vpop.f32.mrb[0].mxu0
    %v479 = vpop.f32.mrb[0].mxu0
    %v480 = vadd.f32 %v281, %v479
    %v481 = vpop.f32.mrb[0].mxu0
    %482 = vmatprep.mubr.bf16.mxu0 0
    %483 = vmatmul.mubr.bf16.gmra.mrb[0].mxu0 %v402
    %v484 = vpop.f32.mrb[0].mxu0
    %v485 = vadd.f32 %v286, %v484
    %v486 = vpop.f32.mrb[0].mxu0
    %v487 = vpop.f32.mrb[0].mxu0
    %v488 = vadd.f32 %v291, %v487
    %v489 = vpop.f32.mrb[0].mxu0
    %490 = vmatprep.mubr.bf16.mxu0 0
    %491 = vmatmul.mubr.bf16.gmra.mrb[0].mxu0 %v405
    %v492 = vpop.f32.mrb[0].mxu0
    %v493 = vadd.f32 %v296, %v492
    %v494 = vpop.f32.mrb[0].mxu0
    %v495 = vpop.f32.mrb[0].mxu0
    %v496 = vadd.f32 %v301, %v495
    %v497 = vpop.f32.mrb[0].mxu0
    %498 = vmatprep.mubr.bf16.mxu0 0
    %499 = vmatmul.mubr.bf16.gmra.mrb[0].mxu0 %v408
    %v500 = vpop.f32.mrb[0].mxu0
    %v501 = vadd.f32 %v306, %v500
    %v502 = vpop.f32.mrb[0].mxu0
    %v503 = vpop.f32.mrb[0].mxu0
    %v504 = vadd.f32 %v311, %v503
    %v505 = vpop.f32.mrb[0].mxu0
    %506 = vdwg.mxu0
    %vm507 = vcmask 130048
    %508 = vst.msk [vmem:[#allocation2] sm:$0xff] %vm507, %v445
    %509 = vst.msk [vmem:[#allocation2 + $0x8] sm:$0xff] %vm507, %v448
    %510 = vst.msk [vmem:[#allocation2 + $0x10] sm:$0xff] %vm507, %v453
    %511 = vst.msk [vmem:[#allocation2 + $0x18] sm:$0xff] %vm507, %v456
    %512 = vst.msk [vmem:[#allocation2 + $0x20] sm:$0xff] %vm507, %v461
    %513 = vst.msk [vmem:[#allocation2 + $0x28] sm:$0xff] %vm507, %v464
    %514 = vst.msk [vmem:[#allocation2 + $0x30] sm:$0xff] %vm507, %v469
    %515 = vst.msk [vmem:[#allocation2 + $0x38] sm:$0xff] %vm507, %v472
    %516 = vst.msk [vmem:[#allocation2 + $0x40] sm:$0xff] %vm507, %v477
    %517 = vst.msk [vmem:[#allocation2 + $0x48] sm:$0xff] %vm507, %v480
    %518 = vst.msk [vmem:[#allocation2 + $0x50] sm:$0xff] %vm507, %v485
    %519 = vst.msk [vmem:[#allocation2 + $0x58] sm:$0xff] %vm507, %v488
    %520 = vst.msk [vmem:[#allocation2 + $0x60] sm:$0xff] %vm507, %v493
    %521 = vst.msk [vmem:[#allocation2 + $0x68] sm:$0xff] %vm507, %v496
    %522 = vst.msk [vmem:[#allocation2 + $0x70] sm:$0xff] %vm507, %v501
    %523 = vst.msk [vmem:[#allocation2 + $0x78] sm:$0xff] %vm507, %v504
    %s524 = scalar_lea.vmem [#allocation4], 32
    %v525 = vld [vmem:[%s524] sm:$0xf]
    %v526 = vld [vmem:[%s524 + $0x4] sm:$0xf]
    %v527 = vld [vmem:[%s524 + $0x8] sm:$0xf]
    %v528 = vld [vmem:[%s524 + $0xc] sm:$0xf]
    %v529 = vld [vmem:[%s524 + $0x10] sm:$0xf]
    %v530 = vld [vmem:[%s524 + $0x14] sm:$0xf]
    %v531 = vld [vmem:[%s524 + $0x18] sm:$0xf]
    %v532 = vld [vmem:[%s524 + $0x1c] sm:$0xf]
    %v541 = vunpack.c.l.b16 %v525
    %v542 = vunpack.c.l.b16 %v526
    %v543 = vunpack.c.l.b16 %v527
    %v544 = vunpack.c.l.b16 %v528
    %v545 = vunpack.c.l.b16 %v529
    %v546 = vunpack.c.l.b16 %v530
    %v547 = vunpack.c.l.b16 %v531
    %v548 = vunpack.c.l.b16 %v532
    %v549 = vpack.c.b16 %v542, %v541
    %v550 = vpack.c.b16 %v544, %v543
    %v551 = vpack.c.b16 %v546, %v545
    %v552 = vpack.c.b16 %v548, %v547
    %557 = vmatprep.subr.bf16.mxu0 0
    %558 = vmatpush1.bf16.msra.mxu0 %v549
    %559 = vmatprep.subr.bf16.mxu0 0
    %560 = vmatpush1.bf16.msra.mxu0 %v550
    %561 = vmatprep.subr.bf16.mxu0 0
    %562 = vmatpush1.bf16.msra.mxu0 %v551
    %563 = vmatprep.subr.bf16.mxu0 0
    %564 = vmatpush1.bf16.msra.mxu0 %v552
    %565 = vmatprep.subr.bf16.mxu0 0
    %566 = vmatpush1.bf16.msra.mxu0 0
    %567 = vmatprep.subr.bf16.mxu0 0
    %568 = vmatpush1.bf16.msra.mxu0 0
    %569 = vmatprep.subr.bf16.mxu0 0
    %570 = vmatpush1.bf16.msra.mxu0 0
    %571 = vmatprep.subr.bf16.mxu0 0
    %572 = vmatpush1.bf16.msra.mxu0 0
    %573 = vmatprep.subr.bf16.mxu0 0
    %574 = vmatpush1.bf16.msra.mxu0 0
    %575 = vmatprep.subr.bf16.mxu0 0
    %576 = vmatpush1.bf16.msra.mxu0 0
    %577 = vmatprep.subr.bf16.mxu0 0
    %578 = vmatpush1.bf16.msra.mxu0 0
    %579 = vmatprep.subr.bf16.mxu0 0
    %580 = vmatpush1.bf16.msra.mxu0 0
    %581 = vmatprep.subr.bf16.mxu0 0
    %582 = vmatpush1.bf16.msra.mxu0 0
    %583 = vmatprep.subr.bf16.mxu0 0
    %584 = vmatpush1.bf16.msra.mxu0 0
    %585 = vmatprep.subr.bf16.mxu0 0
    %586 = vmatpush1.bf16.msra.mxu0 0
    %587 = vmatprep.subr.bf16.mxu0 0
    %588 = vmatpush1.bf16.msra.mxu0 0
    %589 = vmatprep.mubr.bf16.mxu0 0
    %590 = vmatmul.mubr.bf16.gmra.mrb[0].mxu0 %v387
    %v591 = vpop.f32.mrb[0].mxu0
    %v592 = vadd.f32 %v236, %v591
    %v593 = vpop.f32.mrb[0].mxu0
    %v594 = vpop.f32.mrb[0].mxu0
    %v595 = vadd.f32 %v241, %v594
    %v596 = vpop.f32.mrb[0].mxu0
    %597 = vmatprep.mubr.bf16.mxu0 0
    %598 = vmatmul.mubr.bf16.gmra.mrb[0].mxu0 %v390
    %v599 = vpop.f32.mrb[0].mxu0
    %v600 = vadd.f32 %v246, %v599
    %v601 = vpop.f32.mrb[0].mxu0
    %v602 = vpop.f32.mrb[0].mxu0
    %v603 = vadd.f32 %v251, %v602
    %v604 = vpop.f32.mrb[0].mxu0
    %605 = vmatprep.mubr.bf16.mxu0 0
    %606 = vmatmul.mubr.bf16.gmra.mrb[0].mxu0 %v393
    %v607 = vpop.f32.mrb[0].mxu0
    %v608 = vadd.f32 %v256, %v607
    %v609 = vpop.f32.mrb[0].mxu0
    %v610 = vpop.f32.mrb[0].mxu0
    %v611 = vadd.f32 %v261, %v610
    %v612 = vpop.f32.mrb[0].mxu0
    %613 = vmatprep.mubr.bf16.mxu0 0
    %614 = vmatmul.mubr.bf16.gmra.mrb[0].mxu0 %v396
    %v615 = vpop.f32.mrb[0].mxu0
    %v616 = vadd.f32 %v266, %v615
    %v617 = vpop.f32.mrb[0].mxu0
    %v618 = vpop.f32.mrb[0].mxu0
    %v619 = vadd.f32 %v271, %v618
    %v620 = vpop.f32.mrb[0].mxu0
    %621 = vmatprep.mubr.bf16.mxu0 0
    %622 = vmatmul.mubr.bf16.gmra.mrb[0].mxu0 %v399
    %v623 = vpop.f32.mrb[0].mxu0
    %v624 = vadd.f32 %v276, %v623
    %v625 = vpop.f32.mrb[0].mxu0
    %v626 = vpop.f32.mrb[0].mxu0
    %v627 = vadd.f32 %v281, %v626
    %v628 = vpop.f32.mrb[0].mxu0
    %629 = vmatprep.mubr.bf16.mxu0 0
    %630 = vmatmul.mubr.bf16.gmra.mrb[0].mxu0 %v402
    %v631 = vpop.f32.mrb[0].mxu0
    %v632 = vadd.f32 %v286, %v631
    %v633 = vpop.f32.mrb[0].mxu0
    %v634 = vpop.f32.mrb[0].mxu0
    %v635 = vadd.f32 %v291, %v634
    %v636 = vpop.f32.mrb[0].mxu0
    %637 = vmatprep.mubr.bf16.mxu0 0
    %638 = vmatmul.mubr.bf16.gmra.mrb[0].mxu0 %v405
    %v639 = vpop.f32.mrb[0].mxu0
    %v640 = vadd.f32 %v296, %v639
    %v641 = vpop.f32.mrb[0].mxu0
    %v642 = vpop.f32.mrb[0].mxu0
    %v643 = vadd.f32 %v301, %v642
    %v644 = vpop.f32.mrb[0].mxu0
    %645 = vmatprep.mubr.bf16.mxu0 0
    %646 = vmatmul.mubr.bf16.gmra.mrb[0].mxu0 %v408
    %v647 = vpop.f32.mrb[0].mxu0
    %v648 = vadd.f32 %v306, %v647
    %v649 = vpop.f32.mrb[0].mxu0
    %v650 = vpop.f32.mrb[0].mxu0
    %v651 = vadd.f32 %v311, %v650
    %v652 = vpop.f32.mrb[0].mxu0
    %653 = vdwg.mxu0
    %s654 = scalar_lea.vmem [#allocation2], 128
    %655 = vst.msk [vmem:[%s654] sm:$0xff] %vm507, %v592
    %656 = vst.msk [vmem:[%s654 + $0x8] sm:$0xff] %vm507, %v595
    %657 = vst.msk [vmem:[%s654 + $0x10] sm:$0xff] %vm507, %v600
    %658 = vst.msk [vmem:[%s654 + $0x18] sm:$0xff] %vm507, %v603
    %659 = vst.msk [vmem:[%s654 + $0x20] sm:$0xff] %vm507, %v608
    %660 = vst.msk [vmem:[%s654 + $0x28] sm:$0xff] %vm507, %v611
    %661 = vst.msk [vmem:[%s654 + $0x30] sm:$0xff] %vm507, %v616
    %662 = vst.msk [vmem:[%s654 + $0x38] sm:$0xff] %vm507, %v619
    %663 = vst.msk [vmem:[%s654 + $0x40] sm:$0xff] %vm507, %v624
    %664 = vst.msk [vmem:[%s654 + $0x48] sm:$0xff] %vm507, %v627
    %665 = vst.msk [vmem:[%s654 + $0x50] sm:$0xff] %vm507, %v632
    %666 = vst.msk [vmem:[%s654 + $0x58] sm:$0xff] %vm507, %v635
    %667 = vst.msk [vmem:[%s654 + $0x60] sm:$0xff] %vm507, %v640
    %668 = vst.msk [vmem:[%s654 + $0x68] sm:$0xff] %vm507, %v643
    %669 = vst.msk [vmem:[%s654 + $0x70] sm:$0xff] %vm507, %v648
    %670 = vst.msk [vmem:[%s654 + $0x78] sm:$0xff] %vm507, %v651
    %s671 = scalar_lea.vmem [#allocation4], 64
    %v672 = vld [vmem:[%s671] sm:$0xf]
    %v673 = vld [vmem:[%s671 + $0x4] sm:$0xf]
    %v674 = vld [vmem:[%s671 + $0x8] sm:$0xf]
    %v675 = vld [vmem:[%s671 + $0xc] sm:$0xf]
    %v676 = vld [vmem:[%s671 + $0x10] sm:$0xf]
    %v677 = vld [vmem:[%s671 + $0x14] sm:$0xf]
    %v678 = vld [vmem:[%s671 + $0x18] sm:$0xf]
    %v679 = vld [vmem:[%s671 + $0x1c] sm:$0xf]
    %v688 = vunpack.c.l.b16 %v672
    %v689 = vunpack.c.l.b16 %v673
    %v690 = vunpack.c.l.b16 %v674
    %v691 = vunpack.c.l.b16 %v675
    %v692 = vunpack.c.l.b16 %v676
    %v693 = vunpack.c.l.b16 %v677
    %v694 = vunpack.c.l.b16 %v678
    %v695 = vunpack.c.l.b16 %v679
    %v696 = vpack.c.b16 %v689, %v688
    %v697 = vpack.c.b16 %v691, %v690
    %v698 = vpack.c.b16 %v693, %v692
    %v699 = vpack.c.b16 %v695, %v694
    %704 = vmatprep.subr.bf16.mxu0 0
    %705 = vmatpush1.bf16.msra.mxu0 %v696
    %706 = vmatprep.subr.bf16.mxu0 0
    %707 = vmatpush1.bf16.msra.mxu0 %v697
    %708 = vmatprep.subr.bf16.mxu0 0
    %709 = vmatpush1.bf16.msra.mxu0 %v698
    %710 = vmatprep.subr.bf16.mxu0 0
    %711 = vmatpush1.bf16.msra.mxu0 %v699
    %712 = vmatprep.subr.bf16.mxu0 0
    %713 = vmatpush1.bf16.msra.mxu0 0
    %714 = vmatprep.subr.bf16.mxu0 0
    %715 = vmatpush1.bf16.msra.mxu0 0
    %716 = vmatprep.subr.bf16.mxu0 0
    %717 = vmatpush1.bf16.msra.mxu0 0
    %718 = vmatprep.subr.bf16.mxu0 0
    %719 = vmatpush1.bf16.msra.mxu0 0
    %720 = vmatprep.subr.bf16.mxu0 0
    %721 = vmatpush1.bf16.msra.mxu0 0
    %722 = vmatprep.subr.bf16.mxu0 0
    %723 = vmatpush1.bf16.msra.mxu0 0
    %724 = vmatprep.subr.bf16.mxu0 0
    %725 = vmatpush1.bf16.msra.mxu0 0
    %726 = vmatprep.subr.bf16.mxu0 0
    %727 = vmatpush1.bf16.msra.mxu0 0
    %728 = vmatprep.subr.bf16.mxu0 0
    %729 = vmatpush1.bf16.msra.mxu0 0
    %730 = vmatprep.subr.bf16.mxu0 0
    %731 = vmatpush1.bf16.msra.mxu0 0
    %732 = vmatprep.subr.bf16.mxu0 0
    %733 = vmatpush1.bf16.msra.mxu0 0
    %734 = vmatprep.subr.bf16.mxu0 0
    %735 = vmatpush1.bf16.msra.mxu0 0
    %736 = vmatprep.mubr.bf16.mxu0 0
    %737 = vmatmul.mubr.bf16.gmra.mrb[0].mxu0 %v387
    %v738 = vpop.f32.mrb[0].mxu0
    %v739 = vadd.f32 %v236, %v738
    %v740 = vpop.f32.mrb[0].mxu0
    %v741 = vpop.f32.mrb[0].mxu0
    %v742 = vadd.f32 %v241, %v741
    %v743 = vpop.f32.mrb[0].mxu0
    %744 = vmatprep.mubr.bf16.mxu0 0
    %745 = vmatmul.mubr.bf16.gmra.mrb[0].mxu0 %v390
    %v746 = vpop.f32.mrb[0].mxu0
    %v747 = vadd.f32 %v246, %v746
    %v748 = vpop.f32.mrb[0].mxu0
    %v749 = vpop.f32.mrb[0].mxu0
    %v750 = vadd.f32 %v251, %v749
    %v751 = vpop.f32.mrb[0].mxu0
    %752 = vmatprep.mubr.bf16.mxu0 0
    %753 = vmatmul.mubr.bf16.gmra.mrb[0].mxu0 %v393
    %v754 = vpop.f32.mrb[0].mxu0
    %v755 = vadd.f32 %v256, %v754
    %v756 = vpop.f32.mrb[0].mxu0
    %v757 = vpop.f32.mrb[0].mxu0
    %v758 = vadd.f32 %v261, %v757
    %v759 = vpop.f32.mrb[0].mxu0
    %760 = vmatprep.mubr.bf16.mxu0 0
    %761 = vmatmul.mubr.bf16.gmra.mrb[0].mxu0 %v396
    %v762 = vpop.f32.mrb[0].mxu0
    %v763 = vadd.f32 %v266, %v762
    %v764 = vpop.f32.mrb[0].mxu0
    %v765 = vpop.f32.mrb[0].mxu0
    %v766 = vadd.f32 %v271, %v765
    %v767 = vpop.f32.mrb[0].mxu0
    %768 = vmatprep.mubr.bf16.mxu0 0
    %769 = vmatmul.mubr.bf16.gmra.mrb[0].mxu0 %v399
    %v770 = vpop.f32.mrb[0].mxu0
    %v771 = vadd.f32 %v276, %v770
    %v772 = vpop.f32.mrb[0].mxu0
    %v773 = vpop.f32.mrb[0].mxu0
    %v774 = vadd.f32 %v281, %v773
    %v775 = vpop.f32.mrb[0].mxu0
    %776 = vmatprep.mubr.bf16.mxu0 0
    %777 = vmatmul.mubr.bf16.gmra.mrb[0].mxu0 %v402
    %v778 = vpop.f32.mrb[0].mxu0
    %v779 = vadd.f32 %v286, %v778
    %v780 = vpop.f32.mrb[0].mxu0
    %v781 = vpop.f32.mrb[0].mxu0
    %v782 = vadd.f32 %v291, %v781
    %v783 = vpop.f32.mrb[0].mxu0
    %784 = vmatprep.mubr.bf16.mxu0 0
    %785 = vmatmul.mubr.bf16.gmra.mrb[0].mxu0 %v405
    %v786 = vpop.f32.mrb[0].mxu0
    %v787 = vadd.f32 %v296, %v786
    %v788 = vpop.f32.mrb[0].mxu0
    %v789 = vpop.f32.mrb[0].mxu0
    %v790 = vadd.f32 %v301, %v789
    %v791 = vpop.f32.mrb[0].mxu0
    %792 = vmatprep.mubr.bf16.mxu0 0
    %793 = vmatmul.mubr.bf16.gmra.mrb[0].mxu0 %v408
    %v794 = vpop.f32.mrb[0].mxu0
    %v795 = vadd.f32 %v306, %v794
    %v796 = vpop.f32.mrb[0].mxu0
    %v797 = vpop.f32.mrb[0].mxu0
    %v798 = vadd.f32 %v311, %v797
    %v799 = vpop.f32.mrb[0].mxu0
    %800 = vdwg.mxu0
    %s801 = scalar_lea.vmem [#allocation2], 256
    %802 = vst.msk [vmem:[%s801] sm:$0xff] %vm507, %v739
    %803 = vst.msk [vmem:[%s801 + $0x8] sm:$0xff] %vm507, %v742
    %804 = vst.msk [vmem:[%s801 + $0x10] sm:$0xff] %vm507, %v747
    %805 = vst.msk [vmem:[%s801 + $0x18] sm:$0xff] %vm507, %v750
    %806 = vst.msk [vmem:[%s801 + $0x20] sm:$0xff] %vm507, %v755
    %807 = vst.msk [vmem:[%s801 + $0x28] sm:$0xff] %vm507, %v758
    %808 = vst.msk [vmem:[%s801 + $0x30] sm:$0xff] %vm507, %v763
    %809 = vst.msk [vmem:[%s801 + $0x38] sm:$0xff] %vm507, %v766
    %810 = vst.msk [vmem:[%s801 + $0x40] sm:$0xff] %vm507, %v771
    %811 = vst.msk [vmem:[%s801 + $0x48] sm:$0xff] %vm507, %v774
    %812 = vst.msk [vmem:[%s801 + $0x50] sm:$0xff] %vm507, %v779
    %813 = vst.msk [vmem:[%s801 + $0x58] sm:$0xff] %vm507, %v782
    %814 = vst.msk [vmem:[%s801 + $0x60] sm:$0xff] %vm507, %v787
    %815 = vst.msk [vmem:[%s801 + $0x68] sm:$0xff] %vm507, %v790
    %816 = vst.msk [vmem:[%s801 + $0x70] sm:$0xff] %vm507, %v795
    %817 = vst.msk [vmem:[%s801 + $0x78] sm:$0xff] %vm507, %v798
    %s818 = scalar_lea.vmem [#allocation4], 96
    %v819 = vld [vmem:[%s818] sm:$0xf]
    %v820 = vld [vmem:[%s818 + $0x4] sm:$0xf]
    %v821 = vld [vmem:[%s818 + $0x8] sm:$0xf]
    %v822 = vld [vmem:[%s818 + $0xc] sm:$0xf]
    %v823 = vld [vmem:[%s818 + $0x10] sm:$0xf]
    %v824 = vld [vmem:[%s818 + $0x14] sm:$0xf]
    %v825 = vld [vmem:[%s818 + $0x18] sm:$0xf]
    %v826 = vld [vmem:[%s818 + $0x1c] sm:$0xf]
    %v835 = vunpack.c.l.b16 %v819
    %v836 = vunpack.c.l.b16 %v820
    %v837 = vunpack.c.l.b16 %v821
    %v838 = vunpack.c.l.b16 %v822
    %v839 = vunpack.c.l.b16 %v823
    %v840 = vunpack.c.l.b16 %v824
    %v841 = vunpack.c.l.b16 %v825
    %v842 = vunpack.c.l.b16 %v826
    %v843 = vpack.c.b16 %v836, %v835
    %v844 = vpack.c.b16 %v838, %v837
    %v845 = vpack.c.b16 %v840, %v839
    %v846 = vpack.c.b16 %v842, %v841
    %851 = vmatprep.subr.bf16.mxu0 0
    %852 = vmatpush1.bf16.msra.mxu0 %v843
    %853 = vmatprep.subr.bf16.mxu0 0
    %854 = vmatpush1.bf16.msra.mxu0 %v844
    %855 = vmatprep.subr.bf16.mxu0 0
    %856 = vmatpush1.bf16.msra.mxu0 %v845
    %857 = vmatprep.subr.bf16.mxu0 0
    %858 = vmatpush1.bf16.msra.mxu0 %v846
    %859 = vmatprep.subr.bf16.mxu0 0
    %860 = vmatpush1.bf16.msra.mxu0 0
    %861 = vmatprep.subr.bf16.mxu0 0
    %862 = vmatpush1.bf16.msra.mxu0 0
    %863 = vmatprep.subr.bf16.mxu0 0
    %864 = vmatpush1.bf16.msra.mxu0 0
    %865 = vmatprep.subr.bf16.mxu0 0
    %866 = vmatpush1.bf16.msra.mxu0 0
    %867 = vmatprep.subr.bf16.mxu0 0
    %868 = vmatpush1.bf16.msra.mxu0 0
    %869 = vmatprep.subr.bf16.mxu0 0
    %870 = vmatpush1.bf16.msra.mxu0 0
    %871 = vmatprep.subr.bf16.mxu0 0
    %872 = vmatpush1.bf16.msra.mxu0 0
    %873 = vmatprep.subr.bf16.mxu0 0
    %874 = vmatpush1.bf16.msra.mxu0 0
    %875 = vmatprep.subr.bf16.mxu0 0
    %876 = vmatpush1.bf16.msra.mxu0 0
    %877 = vmatprep.subr.bf16.mxu0 0
    %878 = vmatpush1.bf16.msra.mxu0 0
    %879 = vmatprep.subr.bf16.mxu0 0
    %880 = vmatpush1.bf16.msra.mxu0 0
    %881 = vmatprep.subr.bf16.mxu0 0
    %882 = vmatpush1.bf16.msra.mxu0 0
    %883 = vmatprep.mubr.bf16.mxu0 0
    %884 = vmatmul.mubr.bf16.gmra.mrb[0].mxu0 %v387
    %v885 = vpop.f32.mrb[0].mxu0
    %v886 = vadd.f32 %v236, %v885
    %v887 = vpop.f32.mrb[0].mxu0
    %v888 = vpop.f32.mrb[0].mxu0
    %v889 = vadd.f32 %v241, %v888
    %v890 = vpop.f32.mrb[0].mxu0
    %891 = vmatprep.mubr.bf16.mxu0 0
    %892 = vmatmul.mubr.bf16.gmra.mrb[0].mxu0 %v390
    %v893 = vpop.f32.mrb[0].mxu0
    %v894 = vadd.f32 %v246, %v893
    %v895 = vpop.f32.mrb[0].mxu0
    %v896 = vpop.f32.mrb[0].mxu0
    %v897 = vadd.f32 %v251, %v896
    %v898 = vpop.f32.mrb[0].mxu0
    %899 = vmatprep.mubr.bf16.mxu0 0
    %900 = vmatmul.mubr.bf16.gmra.mrb[0].mxu0 %v393
    %v901 = vpop.f32.mrb[0].mxu0
    %v902 = vadd.f32 %v256, %v901
    %v903 = vpop.f32.mrb[0].mxu0
    %v904 = vpop.f32.mrb[0].mxu0
    %v905 = vadd.f32 %v261, %v904
    %v906 = vpop.f32.mrb[0].mxu0
    %907 = vmatprep.mubr.bf16.mxu0 0
    %908 = vmatmul.mubr.bf16.gmra.mrb[0].mxu0 %v396
    %v909 = vpop.f32.mrb[0].mxu0
    %v910 = vadd.f32 %v266, %v909
    %v911 = vpop.f32.mrb[0].mxu0
    %v912 = vpop.f32.mrb[0].mxu0
    %v913 = vadd.f32 %v271, %v912
    %v914 = vpop.f32.mrb[0].mxu0
    %915 = vmatprep.mubr.bf16.mxu0 0
    %916 = vmatmul.mubr.bf16.gmra.mrb[0].mxu0 %v399
    %v917 = vpop.f32.mrb[0].mxu0
    %v918 = vadd.f32 %v276, %v917
    %v919 = vpop.f32.mrb[0].mxu0
    %v920 = vpop.f32.mrb[0].mxu0
    %v921 = vadd.f32 %v281, %v920
    %v922 = vpop.f32.mrb[0].mxu0
    %923 = vmatprep.mubr.bf16.mxu0 0
    %924 = vmatmul.mubr.bf16.gmra.mrb[0].mxu0 %v402
    %v925 = vpop.f32.mrb[0].mxu0
    %v926 = vadd.f32 %v286, %v925
    %v927 = vpop.f32.mrb[0].mxu0
    %v928 = vpop.f32.mrb[0].mxu0
    %v929 = vadd.f32 %v291, %v928
    %v930 = vpop.f32.mrb[0].mxu0
    %931 = vmatprep.mubr.bf16.mxu0 0
    %932 = vmatmul.mubr.bf16.gmra.mrb[0].mxu0 %v405
    %v933 = vpop.f32.mrb[0].mxu0
    %v934 = vadd.f32 %v296, %v933
    %v935 = vpop.f32.mrb[0].mxu0
    %v936 = vpop.f32.mrb[0].mxu0
    %v937 = vadd.f32 %v301, %v936
    %v938 = vpop.f32.mrb[0].mxu0
    %939 = vmatprep.mubr.bf16.mxu0 0
    %940 = vmatmul.mubr.bf16.gmra.mrb[0].mxu0 %v408
    %v941 = vpop.f32.mrb[0].mxu0
    %v942 = vadd.f32 %v306, %v941
    %v943 = vpop.f32.mrb[0].mxu0
    %v944 = vpop.f32.mrb[0].mxu0
    %v945 = vadd.f32 %v311, %v944
    %v946 = vpop.f32.mrb[0].mxu0
    %947 = vdwg.mxu0
    %s948 = scalar_lea.vmem [#allocation2], 384
    %949 = vst.msk [vmem:[%s948] sm:$0xff] %vm507, %v886
    %950 = vst.msk [vmem:[%s948 + $0x8] sm:$0xff] %vm507, %v889
    %951 = vst.msk [vmem:[%s948 + $0x10] sm:$0xff] %vm507, %v894
    %952 = vst.msk [vmem:[%s948 + $0x18] sm:$0xff] %vm507, %v897
    %953 = vst.msk [vmem:[%s948 + $0x20] sm:$0xff] %vm507, %v902
    %954 = vst.msk [vmem:[%s948 + $0x28] sm:$0xff] %vm507, %v905
    %955 = vst.msk [vmem:[%s948 + $0x30] sm:$0xff] %vm507, %v910
    %956 = vst.msk [vmem:[%s948 + $0x38] sm:$0xff] %vm507, %v913
    %957 = vst.msk [vmem:[%s948 + $0x40] sm:$0xff] %vm507, %v918
    %958 = vst.msk [vmem:[%s948 + $0x48] sm:$0xff] %vm507, %v921
    %959 = vst.msk [vmem:[%s948 + $0x50] sm:$0xff] %vm507, %v926
    %960 = vst.msk [vmem:[%s948 + $0x58] sm:$0xff] %vm507, %v929
    %961 = vst.msk [vmem:[%s948 + $0x60] sm:$0xff] %vm507, %v934
    %962 = vst.msk [vmem:[%s948 + $0x68] sm:$0xff] %vm507, %v937
    %963 = vst.msk [vmem:[%s948 + $0x70] sm:$0xff] %vm507, %v942
    %964 = vst.msk [vmem:[%s948 + $0x78] sm:$0xff] %vm507, %v945
    %s965 = scalar_lea.vmem [#allocation4], 128
    %v966 = vld [vmem:[%s965] sm:$0xf]
    %v967 = vld [vmem:[%s965 + $0x4] sm:$0xf]
    %v968 = vld [vmem:[%s965 + $0x8] sm:$0xf]
    %v969 = vld [vmem:[%s965 + $0xc] sm:$0xf]
    %v970 = vld [vmem:[%s965 + $0x10] sm:$0xf]
    %v971 = vld [vmem:[%s965 + $0x14] sm:$0xf]
    %v972 = vld [vmem:[%s965 + $0x18] sm:$0xf]
    %v973 = vld [vmem:[%s965 + $0x1c] sm:$0xf]
    %v982 = vunpack.c.l.b16 %v966
    %v983 = vunpack.c.l.b16 %v967
    %v984 = vunpack.c.l.b16 %v968
    %v985 = vunpack.c.l.b16 %v969
    %v986 = vunpack.c.l.b16 %v970
    %v987 = vunpack.c.l.b16 %v971
    %v988 = vunpack.c.l.b16 %v972
    %v989 = vunpack.c.l.b16 %v973
    %v990 = vpack.c.b16 %v983, %v982
    %v991 = vpack.c.b16 %v985, %v984
    %v992 = vpack.c.b16 %v987, %v986
    %v993 = vpack.c.b16 %v989, %v988
    %998 = vmatprep.subr.bf16.mxu0 0
    %999 = vmatpush1.bf16.msra.mxu0 %v990
    %1000 = vmatprep.subr.bf16.mxu0 0
    %1001 = vmatpush1.bf16.msra.mxu0 %v991
    %1002 = vmatprep.subr.bf16.mxu0 0
    %1003 = vmatpush1.bf16.msra.mxu0 %v992
    %1004 = vmatprep.subr.bf16.mxu0 0
    %1005 = vmatpush1.bf16.msra.mxu0 %v993
    %1006 = vmatprep.subr.bf16.mxu0 0
    %1007 = vmatpush1.bf16.msra.mxu0 0
    %1008 = vmatprep.subr.bf16.mxu0 0
    %1009 = vmatpush1.bf16.msra.mxu0 0
    %1010 = vmatprep.subr.bf16.mxu0 0
    %1011 = vmatpush1.bf16.msra.mxu0 0
    %1012 = vmatprep.subr.bf16.mxu0 0
    %1013 = vmatpush1.bf16.msra.mxu0 0
    %1014 = vmatprep.subr.bf16.mxu0 0
    %1015 = vmatpush1.bf16.msra.mxu0 0
    %1016 = vmatprep.subr.bf16.mxu0 0
    %1017 = vmatpush1.bf16.msra.mxu0 0
    %1018 = vmatprep.subr.bf16.mxu0 0
    %1019 = vmatpush1.bf16.msra.mxu0 0
    %1020 = vmatprep.subr.bf16.mxu0 0
    %1021 = vmatpush1.bf16.msra.mxu0 0
    %1022 = vmatprep.subr.bf16.mxu0 0
    %1023 = vmatpush1.bf16.msra.mxu0 0
    %1024 = vmatprep.subr.bf16.mxu0 0
    %1025 = vmatpush1.bf16.msra.mxu0 0
    %1026 = vmatprep.subr.bf16.mxu0 0
    %1027 = vmatpush1.bf16.msra.mxu0 0
    %1028 = vmatprep.subr.bf16.mxu0 0
    %1029 = vmatpush1.bf16.msra.mxu0 0
    %1030 = vmatprep.mubr.bf16.mxu0 0
    %1031 = vmatmul.mubr.bf16.gmra.mrb[0].mxu0 %v387
    %v1032 = vpop.f32.mrb[0].mxu0
    %v1033 = vadd.f32 %v236, %v1032
    %v1034 = vpop.f32.mrb[0].mxu0
    %v1035 = vpop.f32.mrb[0].mxu0
    %v1036 = vadd.f32 %v241, %v1035
    %v1037 = vpop.f32.mrb[0].mxu0
    %1038 = vmatprep.mubr.bf16.mxu0 0
    %1039 = vmatmul.mubr.bf16.gmra.mrb[0].mxu0 %v390
    %v1040 = vpop.f32.mrb[0].mxu0
    %v1041 = vadd.f32 %v246, %v1040
    %v1042 = vpop.f32.mrb[0].mxu0
    %v1043 = vpop.f32.mrb[0].mxu0
    %v1044 = vadd.f32 %v251, %v1043
    %v1045 = vpop.f32.mrb[0].mxu0
    %1046 = vmatprep.mubr.bf16.mxu0 0
    %1047 = vmatmul.mubr.bf16.gmra.mrb[0].mxu0 %v393
    %v1048 = vpop.f32.mrb[0].mxu0
    %v1049 = vadd.f32 %v256, %v1048
    %v1050 = vpop.f32.mrb[0].mxu0
    %v1051 = vpop.f32.mrb[0].mxu0
    %v1052 = vadd.f32 %v261, %v1051
    %v1053 = vpop.f32.mrb[0].mxu0
    %1054 = vmatprep.mubr.bf16.mxu0 0
    %1055 = vmatmul.mubr.bf16.gmra.mrb[0].mxu0 %v396
    %v1056 = vpop.f32.mrb[0].mxu0
    %v1057 = vadd.f32 %v266, %v1056
    %v1058 = vpop.f32.mrb[0].mxu0
    %v1059 = vpop.f32.mrb[0].mxu0
    %v1060 = vadd.f32 %v271, %v1059
    %v1061 = vpop.f32.mrb[0].mxu0
    %1062 = vmatprep.mubr.bf16.mxu0 0
    %1063 = vmatmul.mubr.bf16.gmra.mrb[0].mxu0 %v399
    %v1064 = vpop.f32.mrb[0].mxu0
    %v1065 = vadd.f32 %v276, %v1064
    %v1066 = vpop.f32.mrb[0].mxu0
    %v1067 = vpop.f32.mrb[0].mxu0
    %v1068 = vadd.f32 %v281, %v1067
    %v1069 = vpop.f32.mrb[0].mxu0
    %1070 = vmatprep.mubr.bf16.mxu0 0
    %1071 = vmatmul.mubr.bf16.gmra.mrb[0].mxu0 %v402
    %v1072 = vpop.f32.mrb[0].mxu0
    %v1073 = vadd.f32 %v286, %v1072
    %v1074 = vpop.f32.mrb[0].mxu0
    %v1075 = vpop.f32.mrb[0].mxu0
    %v1076 = vadd.f32 %v291, %v1075
    %v1077 = vpop.f32.mrb[0].mxu0
    %1078 = vmatprep.mubr.bf16.mxu0 0
    %1079 = vmatmul.mubr.bf16.gmra.mrb[0].mxu0 %v405
    %v1080 = vpop.f32.mrb[0].mxu0
    %v1081 = vadd.f32 %v296, %v1080
    %v1082 = vpop.f32.mrb[0].mxu0
    %v1083 = vpop.f32.mrb[0].mxu0
    %v1084 = vadd.f32 %v301, %v1083
    %v1085 = vpop.f32.mrb[0].mxu0
    %1086 = vmatprep.mubr.bf16.mxu0 0
    %1087 = vmatmul.mubr.bf16.gmra.mrb[0].mxu0 %v408
    %v1088 = vpop.f32.mrb[0].mxu0
    %v1089 = vadd.f32 %v306, %v1088
    %v1090 = vpop.f32.mrb[0].mxu0
    %v1091 = vpop.f32.mrb[0].mxu0
    %v1092 = vadd.f32 %v311, %v1091
    %v1093 = vpop.f32.mrb[0].mxu0
    %1094 = vdwg.mxu0
    %s1095 = scalar_lea.vmem [#allocation2], 512
    %1096 = vst.msk [vmem:[%s1095] sm:$0xff] %vm507, %v1033
    %1097 = vst.msk [vmem:[%s1095 + $0x8] sm:$0xff] %vm507, %v1036
    %1098 = vst.msk [vmem:[%s1095 + $0x10] sm:$0xff] %vm507, %v1041
    %1099 = vst.msk [vmem:[%s1095 + $0x18] sm:$0xff] %vm507, %v1044
    %1100 = vst.msk [vmem:[%s1095 + $0x20] sm:$0xff] %vm507, %v1049
    %1101 = vst.msk [vmem:[%s1095 + $0x28] sm:$0xff] %vm507, %v1052
    %1102 = vst.msk [vmem:[%s1095 + $0x30] sm:$0xff] %vm507, %v1057
    %1103 = vst.msk [vmem:[%s1095 + $0x38] sm:$0xff] %vm507, %v1060
    %1104 = vst.msk [vmem:[%s1095 + $0x40] sm:$0xff] %vm507, %v1065
    %1105 = vst.msk [vmem:[%s1095 + $0x48] sm:$0xff] %vm507, %v1068
    %1106 = vst.msk [vmem:[%s1095 + $0x50] sm:$0xff] %vm507, %v1073
    %1107 = vst.msk [vmem:[%s1095 + $0x58] sm:$0xff] %vm507, %v1076
    %1108 = vst.msk [vmem:[%s1095 + $0x60] sm:$0xff] %vm507, %v1081
    %1109 = vst.msk [vmem:[%s1095 + $0x68] sm:$0xff] %vm507, %v1084
    %1110 = vst.msk [vmem:[%s1095 + $0x70] sm:$0xff] %vm507, %v1089
    %1111 = vst.msk [vmem:[%s1095 + $0x78] sm:$0xff] %vm507, %v1092
    %s1112 = scalar_lea.vmem [#allocation4], 160
    %v1113 = vld [vmem:[%s1112] sm:$0xf]
    %v1114 = vld [vmem:[%s1112 + $0x4] sm:$0xf]
    %v1115 = vld [vmem:[%s1112 + $0x8] sm:$0xf]
    %v1116 = vld [vmem:[%s1112 + $0xc] sm:$0xf]
    %v1117 = vld [vmem:[%s1112 + $0x10] sm:$0xf]
    %v1118 = vld [vmem:[%s1112 + $0x14] sm:$0xf]
    %v1119 = vld [vmem:[%s1112 + $0x18] sm:$0xf]
    %v1120 = vld [vmem:[%s1112 + $0x1c] sm:$0xf]
    %v1129 = vunpack.c.l.b16 %v1113
    %v1130 = vunpack.c.l.b16 %v1114
    %v1131 = vunpack.c.l.b16 %v1115
    %v1132 = vunpack.c.l.b16 %v1116
    %v1133 = vunpack.c.l.b16 %v1117
    %v1134 = vunpack.c.l.b16 %v1118
    %v1135 = vunpack.c.l.b16 %v1119
    %v1136 = vunpack.c.l.b16 %v1120
    %v1137 = vpack.c.b16 %v1130, %v1129
    %v1138 = vpack.c.b16 %v1132, %v1131
    %v1139 = vpack.c.b16 %v1134, %v1133
    %v1140 = vpack.c.b16 %v1136, %v1135
    %1145 = vmatprep.subr.bf16.mxu0 0
    %1146 = vmatpush1.bf16.msra.mxu0 %v1137
    %1147 = vmatprep.subr.bf16.mxu0 0
    %1148 = vmatpush1.bf16.msra.mxu0 %v1138
    %1149 = vmatprep.subr.bf16.mxu0 0
    %1150 = vmatpush1.bf16.msra.mxu0 %v1139
    %1151 = vmatprep.subr.bf16.mxu0 0
    %1152 = vmatpush1.bf16.msra.mxu0 %v1140
    %1153 = vmatprep.subr.bf16.mxu0 0
    %1154 = vmatpush1.bf16.msra.mxu0 0
    %1155 = vmatprep.subr.bf16.mxu0 0
    %1156 = vmatpush1.bf16.msra.mxu0 0
    %1157 = vmatprep.subr.bf16.mxu0 0
    %1158 = vmatpush1.bf16.msra.mxu0 0
    %1159 = vmatprep.subr.bf16.mxu0 0
    %1160 = vmatpush1.bf16.msra.mxu0 0
    %1161 = vmatprep.subr.bf16.mxu0 0
    %1162 = vmatpush1.bf16.msra.mxu0 0
    %1163 = vmatprep.subr.bf16.mxu0 0
    %1164 = vmatpush1.bf16.msra.mxu0 0
    %1165 = vmatprep.subr.bf16.mxu0 0
    %1166 = vmatpush1.bf16.msra.mxu0 0
    %1167 = vmatprep.subr.bf16.mxu0 0
    %1168 = vmatpush1.bf16.msra.mxu0 0
    %1169 = vmatprep.subr.bf16.mxu0 0
    %1170 = vmatpush1.bf16.msra.mxu0 0
    %1171 = vmatprep.subr.bf16.mxu0 0
    %1172 = vmatpush1.bf16.msra.mxu0 0
    %1173 = vmatprep.subr.bf16.mxu0 0
    %1174 = vmatpush1.bf16.msra.mxu0 0
    %1175 = vmatprep.subr.bf16.mxu0 0
    %1176 = vmatpush1.bf16.msra.mxu0 0
    %1177 = vmatprep.mubr.bf16.mxu0 0
    %1178 = vmatmul.mubr.bf16.gmra.mrb[0].mxu0 %v387
    %v1179 = vpop.f32.mrb[0].mxu0
    %v1180 = vadd.f32 %v236, %v1179
    %v1181 = vpop.f32.mrb[0].mxu0
    %v1182 = vpop.f32.mrb[0].mxu0
    %v1183 = vadd.f32 %v241, %v1182
    %v1184 = vpop.f32.mrb[0].mxu0
    %1185 = vmatprep.mubr.bf16.mxu0 0
    %1186 = vmatmul.mubr.bf16.gmra.mrb[0].mxu0 %v390
    %v1187 = vpop.f32.mrb[0].mxu0
    %v1188 = vadd.f32 %v246, %v1187
    %v1189 = vpop.f32.mrb[0].mxu0
    %v1190 = vpop.f32.mrb[0].mxu0
    %v1191 = vadd.f32 %v251, %v1190
    %v1192 = vpop.f32.mrb[0].mxu0
    %1193 = vmatprep.mubr.bf16.mxu0 0
    %1194 = vmatmul.mubr.bf16.gmra.mrb[0].mxu0 %v393
    %v1195 = vpop.f32.mrb[0].mxu0
    %v1196 = vadd.f32 %v256, %v1195
    %v1197 = vpop.f32.mrb[0].mxu0
    %v1198 = vpop.f32.mrb[0].mxu0
    %v1199 = vadd.f32 %v261, %v1198
    %v1200 = vpop.f32.mrb[0].mxu0
    %1201 = vmatprep.mubr.bf16.mxu0 0
    %1202 = vmatmul.mubr.bf16.gmra.mrb[0].mxu0 %v396
    %v1203 = vpop.f32.mrb[0].mxu0
    %v1204 = vadd.f32 %v266, %v1203
    %v1205 = vpop.f32.mrb[0].mxu0
    %v1206 = vpop.f32.mrb[0].mxu0
    %v1207 = vadd.f32 %v271, %v1206
    %v1208 = vpop.f32.mrb[0].mxu0
    %1209 = vmatprep.mubr.bf16.mxu0 0
    %1210 = vmatmul.mubr.bf16.gmra.mrb[0].mxu0 %v399
    %v1211 = vpop.f32.mrb[0].mxu0
    %v1212 = vadd.f32 %v276, %v1211
    %v1213 = vpop.f32.mrb[0].mxu0
    %v1214 = vpop.f32.mrb[0].mxu0
    %v1215 = vadd.f32 %v281, %v1214
    %v1216 = vpop.f32.mrb[0].mxu0
    %1217 = vmatprep.mubr.bf16.mxu0 0
    %1218 = vmatmul.mubr.bf16.gmra.mrb[0].mxu0 %v402
    %v1219 = vpop.f32.mrb[0].mxu0
    %v1220 = vadd.f32 %v286, %v1219
    %v1221 = vpop.f32.mrb[0].mxu0
    %v1222 = vpop.f32.mrb[0].mxu0
    %v1223 = vadd.f32 %v291, %v1222
    %v1224 = vpop.f32.mrb[0].mxu0
    %1225 = vmatprep.mubr.bf16.mxu0 0
    %1226 = vmatmul.mubr.bf16.gmra.mrb[0].mxu0 %v405
    %v1227 = vpop.f32.mrb[0].mxu0
    %v1228 = vadd.f32 %v296, %v1227
    %v1229 = vpop.f32.mrb[0].mxu0
    %v1230 = vpop.f32.mrb[0].mxu0
    %v1231 = vadd.f32 %v301, %v1230
    %v1232 = vpop.f32.mrb[0].mxu0
    %1233 = vmatprep.mubr.bf16.mxu0 0
    %1234 = vmatmul.mubr.bf16.gmra.mrb[0].mxu0 %v408
    %v1235 = vpop.f32.mrb[0].mxu0
    %v1236 = vadd.f32 %v306, %v1235
    %v1237 = vpop.f32.mrb[0].mxu0
    %v1238 = vpop.f32.mrb[0].mxu0
    %v1239 = vadd.f32 %v311, %v1238
    %v1240 = vpop.f32.mrb[0].mxu0
    %1241 = vdwg.mxu0
    %s1242 = scalar_lea.vmem [#allocation2], 640
    %1243 = vst.msk [vmem:[%s1242] sm:$0xff] %vm507, %v1180
    %1244 = vst.msk [vmem:[%s1242 + $0x8] sm:$0xff] %vm507, %v1183
    %1245 = vst.msk [vmem:[%s1242 + $0x10] sm:$0xff] %vm507, %v1188
    %1246 = vst.msk [vmem:[%s1242 + $0x18] sm:$0xff] %vm507, %v1191
    %1247 = vst.msk [vmem:[%s1242 + $0x20] sm:$0xff] %vm507, %v1196
    %1248 = vst.msk [vmem:[%s1242 + $0x28] sm:$0xff] %vm507, %v1199
    %1249 = vst.msk [vmem:[%s1242 + $0x30] sm:$0xff] %vm507, %v1204
    %1250 = vst.msk [vmem:[%s1242 + $0x38] sm:$0xff] %vm507, %v1207
    %1251 = vst.msk [vmem:[%s1242 + $0x40] sm:$0xff] %vm507, %v1212
    %1252 = vst.msk [vmem:[%s1242 + $0x48] sm:$0xff] %vm507, %v1215
    %1253 = vst.msk [vmem:[%s1242 + $0x50] sm:$0xff] %vm507, %v1220
    %1254 = vst.msk [vmem:[%s1242 + $0x58] sm:$0xff] %vm507, %v1223
    %1255 = vst.msk [vmem:[%s1242 + $0x60] sm:$0xff] %vm507, %v1228
    %1256 = vst.msk [vmem:[%s1242 + $0x68] sm:$0xff] %vm507, %v1231
    %1257 = vst.msk [vmem:[%s1242 + $0x70] sm:$0xff] %vm507, %v1236
    %1258 = vst.msk [vmem:[%s1242 + $0x78] sm:$0xff] %vm507, %v1239
    %s1259 = scalar_lea.vmem [#allocation4], 192
    %v1260 = vld [vmem:[%s1259] sm:$0xf]
    %v1261 = vld [vmem:[%s1259 + $0x4] sm:$0xf]
    %v1262 = vld [vmem:[%s1259 + $0x8] sm:$0xf]
    %v1263 = vld [vmem:[%s1259 + $0xc] sm:$0xf]
    %v1264 = vld [vmem:[%s1259 + $0x10] sm:$0xf]
    %v1265 = vld [vmem:[%s1259 + $0x14] sm:$0xf]
    %v1266 = vld [vmem:[%s1259 + $0x18] sm:$0xf]
    %v1267 = vld [vmem:[%s1259 + $0x1c] sm:$0xf]
    %v1276 = vunpack.c.l.b16 %v1260
    %v1277 = vunpack.c.l.b16 %v1261
    %v1278 = vunpack.c.l.b16 %v1262
    %v1279 = vunpack.c.l.b16 %v1263
    %v1280 = vunpack.c.l.b16 %v1264
    %v1281 = vunpack.c.l.b16 %v1265
    %v1282 = vunpack.c.l.b16 %v1266
    %v1283 = vunpack.c.l.b16 %v1267
    %v1284 = vpack.c.b16 %v1277, %v1276
    %v1285 = vpack.c.b16 %v1279, %v1278
    %v1286 = vpack.c.b16 %v1281, %v1280
    %v1287 = vpack.c.b16 %v1283, %v1282
    %1292 = vmatprep.subr.bf16.mxu0 0
    %1293 = vmatpush1.bf16.msra.mxu0 %v1284
    %1294 = vmatprep.subr.bf16.mxu0 0
    %1295 = vmatpush1.bf16.msra.mxu0 %v1285
    %1296 = vmatprep.subr.bf16.mxu0 0
    %1297 = vmatpush1.bf16.msra.mxu0 %v1286
    %1298 = vmatprep.subr.bf16.mxu0 0
    %1299 = vmatpush1.bf16.msra.mxu0 %v1287
    %1300 = vmatprep.subr.bf16.mxu0 0
    %1301 = vmatpush1.bf16.msra.mxu0 0
    %1302 = vmatprep.subr.bf16.mxu0 0
    %1303 = vmatpush1.bf16.msra.mxu0 0
    %1304 = vmatprep.subr.bf16.mxu0 0
    %1305 = vmatpush1.bf16.msra.mxu0 0
    %1306 = vmatprep.subr.bf16.mxu0 0
    %1307 = vmatpush1.bf16.msra.mxu0 0
    %1308 = vmatprep.subr.bf16.mxu0 0
    %1309 = vmatpush1.bf16.msra.mxu0 0
    %1310 = vmatprep.subr.bf16.mxu0 0
    %1311 = vmatpush1.bf16.msra.mxu0 0
    %1312 = vmatprep.subr.bf16.mxu0 0
    %1313 = vmatpush1.bf16.msra.mxu0 0
    %1314 = vmatprep.subr.bf16.mxu0 0
    %1315 = vmatpush1.bf16.msra.mxu0 0
    %1316 = vmatprep.subr.bf16.mxu0 0
    %1317 = vmatpush1.bf16.msra.mxu0 0
    %1318 = vmatprep.subr.bf16.mxu0 0
    %1319 = vmatpush1.bf16.msra.mxu0 0
    %1320 = vmatprep.subr.bf16.mxu0 0
    %1321 = vmatpush1.bf16.msra.mxu0 0
    %1322 = vmatprep.subr.bf16.mxu0 0
    %1323 = vmatpush1.bf16.msra.mxu0 0
    %1324 = vmatprep.mubr.bf16.mxu0 0
    %1325 = vmatmul.mubr.bf16.gmra.mrb[0].mxu0 %v387
    %v1326 = vpop.f32.mrb[0].mxu0
    %v1327 = vadd.f32 %v236, %v1326
    %v1328 = vpop.f32.mrb[0].mxu0
    %v1329 = vpop.f32.mrb[0].mxu0
    %v1330 = vadd.f32 %v241, %v1329
    %v1331 = vpop.f32.mrb[0].mxu0
    %1332 = vmatprep.mubr.bf16.mxu0 0
    %1333 = vmatmul.mubr.bf16.gmra.mrb[0].mxu0 %v390
    %v1334 = vpop.f32.mrb[0].mxu0
    %v1335 = vadd.f32 %v246, %v1334
    %v1336 = vpop.f32.mrb[0].mxu0
    %v1337 = vpop.f32.mrb[0].mxu0
    %v1338 = vadd.f32 %v251, %v1337
    %v1339 = vpop.f32.mrb[0].mxu0
    %1340 = vmatprep.mubr.bf16.mxu0 0
    %1341 = vmatmul.mubr.bf16.gmra.mrb[0].mxu0 %v393
    %v1342 = vpop.f32.mrb[0].mxu0
    %v1343 = vadd.f32 %v256, %v1342
    %v1344 = vpop.f32.mrb[0].mxu0
    %v1345 = vpop.f32.mrb[0].mxu0
    %v1346 = vadd.f32 %v261, %v1345
    %v1347 = vpop.f32.mrb[0].mxu0
    %1348 = vmatprep.mubr.bf16.mxu0 0
    %1349 = vmatmul.mubr.bf16.gmra.mrb[0].mxu0 %v396
    %v1350 = vpop.f32.mrb[0].mxu0
    %v1351 = vadd.f32 %v266, %v1350
    %v1352 = vpop.f32.mrb[0].mxu0
    %v1353 = vpop.f32.mrb[0].mxu0
    %v1354 = vadd.f32 %v271, %v1353
    %v1355 = vpop.f32.mrb[0].mxu0
    %1356 = vmatprep.mubr.bf16.mxu0 0
    %1357 = vmatmul.mubr.bf16.gmra.mrb[0].mxu0 %v399
    %v1358 = vpop.f32.mrb[0].mxu0
    %v1359 = vadd.f32 %v276, %v1358
    %v1360 = vpop.f32.mrb[0].mxu0
    %v1361 = vpop.f32.mrb[0].mxu0
    %v1362 = vadd.f32 %v281, %v1361
    %v1363 = vpop.f32.mrb[0].mxu0
    %1364 = vmatprep.mubr.bf16.mxu0 0
    %1365 = vmatmul.mubr.bf16.gmra.mrb[0].mxu0 %v402
    %v1366 = vpop.f32.mrb[0].mxu0
    %v1367 = vadd.f32 %v286, %v1366
    %v1368 = vpop.f32.mrb[0].mxu0
    %v1369 = vpop.f32.mrb[0].mxu0
    %v1370 = vadd.f32 %v291, %v1369
    %v1371 = vpop.f32.mrb[0].mxu0
    %1372 = vmatprep.mubr.bf16.mxu0 0
    %1373 = vmatmul.mubr.bf16.gmra.mrb[0].mxu0 %v405
    %v1374 = vpop.f32.mrb[0].mxu0
    %v1375 = vadd.f32 %v296, %v1374
    %v1376 = vpop.f32.mrb[0].mxu0
    %v1377 = vpop.f32.mrb[0].mxu0
    %v1378 = vadd.f32 %v301, %v1377
    %v1379 = vpop.f32.mrb[0].mxu0
    %1380 = vmatprep.mubr.bf16.mxu0 0
    %1381 = vmatmul.mubr.bf16.gmra.mrb[0].mxu0 %v408
    %v1382 = vpop.f32.mrb[0].mxu0
    %v1383 = vadd.f32 %v306, %v1382
    %v1384 = vpop.f32.mrb[0].mxu0
    %v1385 = vpop.f32.mrb[0].mxu0
    %v1386 = vadd.f32 %v311, %v1385
    %v1387 = vpop.f32.mrb[0].mxu0
    %1388 = vdwg.mxu0
    %s1389 = scalar_lea.vmem [#allocation2], 768
    %1390 = vst.msk [vmem:[%s1389] sm:$0xff] %vm507, %v1327
    %1391 = vst.msk [vmem:[%s1389 + $0x8] sm:$0xff] %vm507, %v1330
    %1392 = vst.msk [vmem:[%s1389 + $0x10] sm:$0xff] %vm507, %v1335
    %1393 = vst.msk [vmem:[%s1389 + $0x18] sm:$0xff] %vm507, %v1338
    %1394 = vst.msk [vmem:[%s1389 + $0x20] sm:$0xff] %vm507, %v1343
    %1395 = vst.msk [vmem:[%s1389 + $0x28] sm:$0xff] %vm507, %v1346
    %1396 = vst.msk [vmem:[%s1389 + $0x30] sm:$0xff] %vm507, %v1351
    %1397 = vst.msk [vmem:[%s1389 + $0x38] sm:$0xff] %vm507, %v1354
    %1398 = vst.msk [vmem:[%s1389 + $0x40] sm:$0xff] %vm507, %v1359
    %1399 = vst.msk [vmem:[%s1389 + $0x48] sm:$0xff] %vm507, %v1362
    %1400 = vst.msk [vmem:[%s1389 + $0x50] sm:$0xff] %vm507, %v1367
    %1401 = vst.msk [vmem:[%s1389 + $0x58] sm:$0xff] %vm507, %v1370
    %1402 = vst.msk [vmem:[%s1389 + $0x60] sm:$0xff] %vm507, %v1375
    %1403 = vst.msk [vmem:[%s1389 + $0x68] sm:$0xff] %vm507, %v1378
    %1404 = vst.msk [vmem:[%s1389 + $0x70] sm:$0xff] %vm507, %v1383
    %1405 = vst.msk [vmem:[%s1389 + $0x78] sm:$0xff] %vm507, %v1386
    %s1406 = scalar_lea.vmem [#allocation4], 224
    %v1407 = vld [vmem:[%s1406] sm:$0xf]
    %v1408 = vld [vmem:[%s1406 + $0x4] sm:$0xf]
    %v1409 = vld [vmem:[%s1406 + $0x8] sm:$0xf]
    %v1410 = vld [vmem:[%s1406 + $0xc] sm:$0xf]
    %v1411 = vld [vmem:[%s1406 + $0x10] sm:$0xf]
    %v1412 = vld [vmem:[%s1406 + $0x14] sm:$0xf]
    %v1413 = vld [vmem:[%s1406 + $0x18] sm:$0xf]
    %v1414 = vld [vmem:[%s1406 + $0x1c] sm:$0xf]
    %v1423 = vunpack.c.l.b16 %v1407
    %v1424 = vunpack.c.l.b16 %v1408
    %v1425 = vunpack.c.l.b16 %v1409
    %v1426 = vunpack.c.l.b16 %v1410
    %v1427 = vunpack.c.l.b16 %v1411
    %v1428 = vunpack.c.l.b16 %v1412
    %v1429 = vunpack.c.l.b16 %v1413
    %v1430 = vunpack.c.l.b16 %v1414
    %v1431 = vpack.c.b16 %v1424, %v1423
    %v1432 = vpack.c.b16 %v1426, %v1425
    %v1433 = vpack.c.b16 %v1428, %v1427
    %v1434 = vpack.c.b16 %v1430, %v1429
    %1439 = vmatprep.subr.bf16.mxu0 0
    %1440 = vmatpush1.bf16.msra.mxu0 %v1431
    %1441 = vmatprep.subr.bf16.mxu0 0
    %1442 = vmatpush1.bf16.msra.mxu0 %v1432
    %1443 = vmatprep.subr.bf16.mxu0 0
    %1444 = vmatpush1.bf16.msra.mxu0 %v1433
    %1445 = vmatprep.subr.bf16.mxu0 0
    %1446 = vmatpush1.bf16.msra.mxu0 %v1434
    %1447 = vmatprep.subr.bf16.mxu0 0
    %1448 = vmatpush1.bf16.msra.mxu0 0
    %1449 = vmatprep.subr.bf16.mxu0 0
    %1450 = vmatpush1.bf16.msra.mxu0 0
    %1451 = vmatprep.subr.bf16.mxu0 0
    %1452 = vmatpush1.bf16.msra.mxu0 0
    %1453 = vmatprep.subr.bf16.mxu0 0
    %1454 = vmatpush1.bf16.msra.mxu0 0
    %1455 = vmatprep.subr.bf16.mxu0 0
    %1456 = vmatpush1.bf16.msra.mxu0 0
    %1457 = vmatprep.subr.bf16.mxu0 0
    %1458 = vmatpush1.bf16.msra.mxu0 0
    %1459 = vmatprep.subr.bf16.mxu0 0
    %1460 = vmatpush1.bf16.msra.mxu0 0
    %1461 = vmatprep.subr.bf16.mxu0 0
    %1462 = vmatpush1.bf16.msra.mxu0 0
    %1463 = vmatprep.subr.bf16.mxu0 0
    %1464 = vmatpush1.bf16.msra.mxu0 0
    %1465 = vmatprep.subr.bf16.mxu0 0
    %1466 = vmatpush1.bf16.msra.mxu0 0
    %1467 = vmatprep.subr.bf16.mxu0 0
    %1468 = vmatpush1.bf16.msra.mxu0 0
    %1469 = vmatprep.subr.bf16.mxu0 0
    %1470 = vmatpush1.bf16.msra.mxu0 0
    %1471 = vmatprep.mubr.bf16.mxu0 0
    %1472 = vmatmul.mubr.bf16.gmra.mrb[0].mxu0 %v387
    %v1473 = vpop.f32.mrb[0].mxu0
    %v1474 = vadd.f32 %v236, %v1473
    %v1475 = vpop.f32.mrb[0].mxu0
    %v1476 = vpop.f32.mrb[0].mxu0
    %v1477 = vadd.f32 %v241, %v1476
    %v1478 = vpop.f32.mrb[0].mxu0
    %1479 = vmatprep.mubr.bf16.mxu0 0
    %1480 = vmatmul.mubr.bf16.gmra.mrb[0].mxu0 %v390
    %v1481 = vpop.f32.mrb[0].mxu0
    %v1482 = vadd.f32 %v246, %v1481
    %v1483 = vpop.f32.mrb[0].mxu0
    %v1484 = vpop.f32.mrb[0].mxu0
    %v1485 = vadd.f32 %v251, %v1484
    %v1486 = vpop.f32.mrb[0].mxu0
    %1487 = vmatprep.mubr.bf16.mxu0 0
    %1488 = vmatmul.mubr.bf16.gmra.mrb[0].mxu0 %v393
    %v1489 = vpop.f32.mrb[0].mxu0
    %v1490 = vadd.f32 %v256, %v1489
    %v1491 = vpop.f32.mrb[0].mxu0
    %v1492 = vpop.f32.mrb[0].mxu0
    %v1493 = vadd.f32 %v261, %v1492
    %v1494 = vpop.f32.mrb[0].mxu0
    %1495 = vmatprep.mubr.bf16.mxu0 0
    %1496 = vmatmul.mubr.bf16.gmra.mrb[0].mxu0 %v396
    %v1497 = vpop.f32.mrb[0].mxu0
    %v1498 = vadd.f32 %v266, %v1497
    %v1499 = vpop.f32.mrb[0].mxu0
    %v1500 = vpop.f32.mrb[0].mxu0
    %v1501 = vadd.f32 %v271, %v1500
    %v1502 = vpop.f32.mrb[0].mxu0
    %1503 = vmatprep.mubr.bf16.mxu0 0
    %1504 = vmatmul.mubr.bf16.gmra.mrb[0].mxu0 %v399
    %v1505 = vpop.f32.mrb[0].mxu0
    %v1506 = vadd.f32 %v276, %v1505
    %v1507 = vpop.f32.mrb[0].mxu0
    %v1508 = vpop.f32.mrb[0].mxu0
    %v1509 = vadd.f32 %v281, %v1508
    %v1510 = vpop.f32.mrb[0].mxu0
    %1511 = vmatprep.mubr.bf16.mxu0 0
    %1512 = vmatmul.mubr.bf16.gmra.mrb[0].mxu0 %v402
    %v1513 = vpop.f32.mrb[0].mxu0
    %v1514 = vadd.f32 %v286, %v1513
    %v1515 = vpop.f32.mrb[0].mxu0
    %v1516 = vpop.f32.mrb[0].mxu0
    %v1517 = vadd.f32 %v291, %v1516
    %v1518 = vpop.f32.mrb[0].mxu0
    %1519 = vmatprep.mubr.bf16.mxu0 0
    %1520 = vmatmul.mubr.bf16.gmra.mrb[0].mxu0 %v405
    %v1521 = vpop.f32.mrb[0].mxu0
    %v1522 = vadd.f32 %v296, %v1521
    %v1523 = vpop.f32.mrb[0].mxu0
    %v1524 = vpop.f32.mrb[0].mxu0
    %v1525 = vadd.f32 %v301, %v1524
    %v1526 = vpop.f32.mrb[0].mxu0
    %1527 = vmatprep.mubr.bf16.mxu0 0
    %1528 = vmatmul.mubr.bf16.gmra.mrb[0].mxu0 %v408
    %v1529 = vpop.f32.mrb[0].mxu0
    %v1530 = vadd.f32 %v306, %v1529
    %v1531 = vpop.f32.mrb[0].mxu0
    %v1532 = vpop.f32.mrb[0].mxu0
    %v1533 = vadd.f32 %v311, %v1532
    %v1534 = vpop.f32.mrb[0].mxu0
    %1535 = vdwg.mxu0
    %s1536 = scalar_lea.vmem [#allocation2], 896
    %1537 = vst.msk [vmem:[%s1536] sm:$0xff] %vm507, %v1474
    %1538 = vst.msk [vmem:[%s1536 + $0x8] sm:$0xff] %vm507, %v1477
    %1539 = vst.msk [vmem:[%s1536 + $0x10] sm:$0xff] %vm507, %v1482
    %1540 = vst.msk [vmem:[%s1536 + $0x18] sm:$0xff] %vm507, %v1485
    %1541 = vst.msk [vmem:[%s1536 + $0x20] sm:$0xff] %vm507, %v1490
    %1542 = vst.msk [vmem:[%s1536 + $0x28] sm:$0xff] %vm507, %v1493
    %1543 = vst.msk [vmem:[%s1536 + $0x30] sm:$0xff] %vm507, %v1498
    %1544 = vst.msk [vmem:[%s1536 + $0x38] sm:$0xff] %vm507, %v1501
    %1545 = vst.msk [vmem:[%s1536 + $0x40] sm:$0xff] %vm507, %v1506
    %1546 = vst.msk [vmem:[%s1536 + $0x48] sm:$0xff] %vm507, %v1509
    %1547 = vst.msk [vmem:[%s1536 + $0x50] sm:$0xff] %vm507, %v1514
    %1548 = vst.msk [vmem:[%s1536 + $0x58] sm:$0xff] %vm507, %v1517
    %1549 = vst.msk [vmem:[%s1536 + $0x60] sm:$0xff] %vm507, %v1522
    %1550 = vst.msk [vmem:[%s1536 + $0x68] sm:$0xff] %vm507, %v1525
    %1551 = vst.msk [vmem:[%s1536 + $0x70] sm:$0xff] %vm507, %v1530
    %1552 = vst.msk [vmem:[%s1536 + $0x78] sm:$0xff] %vm507, %v1533
    %v1553 = vld [vmem:[#allocation2] sm:$0xff]
    %v1554 = vld [vmem:[#allocation2 + $0x8] sm:$0xff]
    %v1555 = vld [vmem:[#allocation2 + $0x10] sm:$0xff]
    %v1556 = vld [vmem:[#allocation2 + $0x18] sm:$0xff]
    %v1557 = vld [vmem:[#allocation2 + $0x20] sm:$0xff]
    %v1558 = vld [vmem:[#allocation2 + $0x28] sm:$0xff]
    %v1559 = vld [vmem:[#allocation2 + $0x30] sm:$0xff]
    %v1560 = vld [vmem:[#allocation2 + $0x38] sm:$0xff]
    %v1561 = vld [vmem:[#allocation2 + $0x40] sm:$0xff]
    %v1562 = vld [vmem:[#allocation2 + $0x48] sm:$0xff]
    %v1563 = vld [vmem:[#allocation2 + $0x50] sm:$0xff]
    %v1564 = vld [vmem:[#allocation2 + $0x58] sm:$0xff]
    %v1565 = vld [vmem:[#allocation2 + $0x60] sm:$0xff]
    %v1566 = vld [vmem:[#allocation2 + $0x68] sm:$0xff]
    %v1567 = vld [vmem:[#allocation2 + $0x70] sm:$0xff]
    %v1568 = vld [vmem:[#allocation2 + $0x78] sm:$0xff]
    %v1585 = vunpack.c.l.b16 %v201
    %v1586 = vunpack.c.l.b16 %v202
    %v1587 = vunpack.c.l.b16 %v203
    %v1588 = vunpack.c.l.b16 %v204
    %v1589 = vunpack.c.l.b16 %v205
    %v1590 = vunpack.c.l.b16 %v206
    %v1591 = vunpack.c.l.b16 %v207
    %v1592 = vunpack.c.l.b16 %v208
    %v1593 = vunpack.c.l.b16 %v209
    %v1594 = vunpack.c.l.b16 %v210
    %v1595 = vunpack.c.l.b16 %v211
    %v1596 = vunpack.c.l.b16 %v212
    %v1597 = vunpack.c.l.b16 %v213
    %v1598 = vunpack.c.l.b16 %v214
    %v1599 = vunpack.c.l.b16 %v215
    %v1600 = vunpack.c.l.b16 %v216
    %v1601 = vpack.c.b16 %v1586, %v1585
    %v1602 = vpack.c.b16 %v1588, %v1587
    %v1603 = vpack.c.b16 %v1590, %v1589
    %v1604 = vpack.c.b16 %v1592, %v1591
    %v1605 = vpack.c.b16 %v1594, %v1593
    %v1606 = vpack.c.b16 %v1596, %v1595
    %v1607 = vpack.c.b16 %v1598, %v1597
    %v1608 = vpack.c.b16 %v1600, %v1599
    %vm1609 = vcmask 261120
    %v1611 = vsel %vm1609, %v1601, 0
    %v1614 = vsel %vm1609, %v1602, 0
    %v1617 = vsel %vm1609, %v1603, 0
    %v1620 = vsel %vm1609, %v1604, 0
    %v1623 = vsel %vm1609, %v1605, 0
    %v1626 = vsel %vm1609, %v1606, 0
    %v1629 = vsel %vm1609, %v1607, 0
    %v1632 = vsel %vm1609, %v1608, 0
    %1634 = vmatprep.subr.bf16.mxu0 0
    %1635 = vmatpush1.bf16.msra.mxu0 0
    %1636 = vmatprep.subr.bf16.mxu0 0
    %1637 = vmatpush1.bf16.msra.mxu0 0
    %1638 = vmatprep.subr.bf16.mxu0 0
    %1639 = vmatpush1.bf16.msra.mxu0 0
    %1640 = vmatprep.subr.bf16.mxu0 0
    %1641 = vmatpush1.bf16.msra.mxu0 0
    %1642 = vmatprep.subr.bf16.mxu0 0
    %1643 = vmatpush1.bf16.msra.mxu0 0
    %1644 = vmatprep.subr.bf16.mxu0 0
    %1645 = vmatpush1.bf16.msra.mxu0 0
    %1646 = vmatprep.subr.bf16.mxu0 0
    %1647 = vmatpush1.bf16.msra.mxu0 0
    %1648 = vmatprep.subr.bf16.mxu0 0
    %1649 = vmatpush1.bf16.msra.mxu0 0
    %1650 = vmatprep.subr.bf16.mxu0 0
    %1651 = vmatpush1.bf16.msra.mxu0 0
    %1652 = vmatprep.subr.bf16.mxu0 0
    %1653 = vmatpush1.bf16.msra.mxu0 0
    %1654 = vmatprep.subr.bf16.mxu0 0
    %1655 = vmatpush1.bf16.msra.mxu0 0
    %1656 = vmatprep.subr.bf16.mxu0 0
    %1657 = vmatpush1.bf16.msra.mxu0 0
    %1658 = vmatprep.subr.bf16.mxu0 0
    %1659 = vmatpush1.bf16.msra.mxu0 0
    %1660 = vmatprep.subr.bf16.mxu0 0
    %1661 = vmatpush1.bf16.msra.mxu0 0
    %1662 = vmatprep.subr.bf16.mxu0 0
    %1663 = vmatpush1.bf16.msra.mxu0 0
    %1664 = vmatprep.subr.bf16.mxu0 0
    %1665 = vmatpush1.bf16.msra.mxu0 0
    %1666 = vmatprep.mubr.bf16.mxu0 0
    %1667 = vmatmul.mubr.bf16.gmra.mrb[0].mxu0 %v1611
    %v1668 = vpop.f32.mrb[0].mxu0
    %v1669 = vadd.f32 0.0, %v1668
    %v1670 = vpop.f32.mrb[0].mxu0
    %v1671 = vpop.f32.mrb[0].mxu0
    %v1672 = vadd.f32 0.0, %v1671
    %v1673 = vpop.f32.mrb[0].mxu0
    %1674 = vmatprep.mubr.bf16.mxu0 0
    %1675 = vmatmul.mubr.bf16.gmra.mrb[0].mxu0 %v1614
    %v1676 = vpop.f32.mrb[0].mxu0
    %v1677 = vadd.f32 0.0, %v1676
    %v1678 = vpop.f32.mrb[0].mxu0
    %v1679 = vpop.f32.mrb[0].mxu0
    %v1680 = vadd.f32 0.0, %v1679
    %v1681 = vpop.f32.mrb[0].mxu0
    %1682 = vmatprep.mubr.bf16.mxu0 0
    %1683 = vmatmul.mubr.bf16.gmra.mrb[0].mxu0 %v1617
    %v1684 = vpop.f32.mrb[0].mxu0
    %v1685 = vadd.f32 0.0, %v1684
    %v1686 = vpop.f32.mrb[0].mxu0
    %v1687 = vpop.f32.mrb[0].mxu0
    %v1688 = vadd.f32 0.0, %v1687
    %v1689 = vpop.f32.mrb[0].mxu0
    %1690 = vmatprep.mubr.bf16.mxu0 0
    %1691 = vmatmul.mubr.bf16.gmra.mrb[0].mxu0 %v1620
    %v1692 = vpop.f32.mrb[0].mxu0
    %v1693 = vadd.f32 0.0, %v1692
    %v1694 = vpop.f32.mrb[0].mxu0
    %v1695 = vpop.f32.mrb[0].mxu0
    %v1696 = vadd.f32 0.0, %v1695
    %v1697 = vpop.f32.mrb[0].mxu0
    %1698 = vmatprep.mubr.bf16.mxu0 0
    %1699 = vmatmul.mubr.bf16.gmra.mrb[0].mxu0 %v1623
    %v1700 = vpop.f32.mrb[0].mxu0
    %v1701 = vadd.f32 0.0, %v1700
    %v1702 = vpop.f32.mrb[0].mxu0
    %v1703 = vpop.f32.mrb[0].mxu0
    %v1704 = vadd.f32 0.0, %v1703
    %v1705 = vpop.f32.mrb[0].mxu0
    %1706 = vmatprep.mubr.bf16.mxu0 0
    %1707 = vmatmul.mubr.bf16.gmra.mrb[0].mxu0 %v1626
    %v1708 = vpop.f32.mrb[0].mxu0
    %v1709 = vadd.f32 0.0, %v1708
    %v1710 = vpop.f32.mrb[0].mxu0
    %v1711 = vpop.f32.mrb[0].mxu0
    %v1712 = vadd.f32 0.0, %v1711
    %v1713 = vpop.f32.mrb[0].mxu0
    %1714 = vmatprep.mubr.bf16.mxu0 0
    %1715 = vmatmul.mubr.bf16.gmra.mrb[0].mxu0 %v1629
    %v1716 = vpop.f32.mrb[0].mxu0
    %v1717 = vadd.f32 0.0, %v1716
    %v1718 = vpop.f32.mrb[0].mxu0
    %v1719 = vpop.f32.mrb[0].mxu0
    %v1720 = vadd.f32 0.0, %v1719
    %v1721 = vpop.f32.mrb[0].mxu0
    %1722 = vmatprep.mubr.bf16.mxu0 0
    %1723 = vmatmul.mubr.bf16.gmra.mrb[0].mxu0 %v1632
    %v1724 = vpop.f32.mrb[0].mxu0
    %v1725 = vadd.f32 0.0, %v1724
    %v1726 = vpop.f32.mrb[0].mxu0
    %v1727 = vpop.f32.mrb[0].mxu0
    %v1728 = vadd.f32 0.0, %v1727
    %v1729 = vpop.f32.mrb[0].mxu0
    %1730 = vdwg.mxu0
    %v1731 = vadd.f32 %v1553, %v1669
    %v1732 = vadd.f32 %v1554, %v1672
    %v1733 = vadd.f32 %v1555, %v1677
    %v1734 = vadd.f32 %v1556, %v1680
    %v1735 = vadd.f32 %v1557, %v1685
    %v1736 = vadd.f32 %v1558, %v1688
    %v1737 = vadd.f32 %v1559, %v1693
    %v1738 = vadd.f32 %v1560, %v1696
    %v1739 = vadd.f32 %v1561, %v1701
    %v1740 = vadd.f32 %v1562, %v1704
    %v1741 = vadd.f32 %v1563, %v1709
    %v1742 = vadd.f32 %v1564, %v1712
    %v1743 = vadd.f32 %v1565, %v1717
    %v1744 = vadd.f32 %v1566, %v1720
    %v1745 = vadd.f32 %v1567, %v1725
    %v1746 = vadd.f32 %v1568, %v1728
    %v1747 = vxor.u32 %v1731, 2147483648
    %v1748 = vxor.u32 %v1732, 2147483648
    %v1749 = vxor.u32 %v1733, 2147483648
    %v1750 = vxor.u32 %v1734, 2147483648
    %v1751 = vxor.u32 %v1735, 2147483648
    %v1752 = vxor.u32 %v1736, 2147483648
    %v1753 = vxor.u32 %v1737, 2147483648
    %v1754 = vxor.u32 %v1738, 2147483648
    %v1755 = vxor.u32 %v1743, 2147483648
    %v1756 = vxor.u32 %v1744, 2147483648
    %v1757 = vxor.u32 %v1745, 2147483648
    %v1758 = vxor.u32 %v1746, 2147483648
    %v1759 = vmul.f32 %v1747, 1.442695
    %v1760 = vpow.pop %v1759
    %v1761 = vmul.f32 %v1748, 1.442695
    %v1762 = vpow.pop %v1761
    %v1763 = vmul.f32 %v1749, 1.442695
    %v1764 = vpow.pop %v1763
    %v1765 = vmul.f32 %v1750, 1.442695
    %v1766 = vpow.pop %v1765
    %v1767 = vmul.f32 %v1751, 1.442695
    %v1768 = vpow.pop %v1767
    %v1769 = vmul.f32 %v1752, 1.442695
    %v1770 = vpow.pop %v1769
    %v1771 = vmul.f32 %v1753, 1.442695
    %v1772 = vpow.pop %v1771
    %v1773 = vmul.f32 %v1754, 1.442695
    %v1774 = vpow.pop %v1773
    %v1775 = vmul.f32 %v1755, 1.442695
    %v1776 = vpow.pop %v1775
    %v1777 = vmul.f32 %v1756, 1.442695
    %v1778 = vpow.pop %v1777
    %v1779 = vmul.f32 %v1757, 1.442695
    %v1780 = vpow.pop %v1779
    %v1781 = vmul.f32 %v1758, 1.442695
    %v1782 = vpow.pop %v1781
    %v1783 = vadd.f32 %v1760, 1.0
    %v1784 = vadd.f32 %v1762, 1.0
    %v1785 = vadd.f32 %v1764, 1.0
    %v1786 = vadd.f32 %v1766, 1.0
    %v1787 = vadd.f32 %v1768, 1.0
    %v1788 = vadd.f32 %v1770, 1.0
    %v1789 = vadd.f32 %v1772, 1.0
    %v1790 = vadd.f32 %v1774, 1.0
    %v1791 = vadd.f32 %v1776, 1.0
    %v1792 = vadd.f32 %v1778, 1.0
    %v1793 = vadd.f32 %v1780, 1.0
    %v1794 = vadd.f32 %v1782, 1.0
    %v1795 = vrcp.pop %v1783
    %v1796 = vmul.f32 1.0, %v1795
    %v1797 = vrcp.pop %v1784
    %v1798 = vmul.f32 1.0, %v1797
    %v1799 = vrcp.pop %v1785
    %v1800 = vmul.f32 1.0, %v1799
    %v1801 = vrcp.pop %v1786
    %v1802 = vmul.f32 1.0, %v1801
    %v1803 = vrcp.pop %v1787
    %v1804 = vmul.f32 1.0, %v1803
    %v1805 = vrcp.pop %v1788
    %v1806 = vmul.f32 1.0, %v1805
    %v1807 = vrcp.pop %v1789
    %v1808 = vmul.f32 1.0, %v1807
    %v1809 = vrcp.pop %v1790
    %v1810 = vmul.f32 1.0, %v1809
    %v1811 = vrcp.pop %v1791
    %v1812 = vmul.f32 1.0, %v1811
    %v1813 = vrcp.pop %v1792
    %v1814 = vmul.f32 1.0, %v1813
    %v1815 = vrcp.pop %v1793
    %v1816 = vmul.f32 1.0, %v1815
    %v1817 = vrcp.pop %v1794
    %v1818 = vmul.f32 1.0, %v1817
    %v1819 = vtanh.pop %v1739
    %v1820 = vtanh.pop %v1740
    %v1821 = vtanh.pop %v1741
    %v1822 = vtanh.pop %v1742
    %v1823 = vmul.f32 %v1804, 0.0
    %v1824 = vmul.f32 %v1806, 0.0
    %v1825 = vmul.f32 %v1808, 0.0
    %v1826 = vmul.f32 %v1810, 0.0
    %v1827 = vmul.f32 %v1796, %v1819
    %v1828 = vmul.f32 %v1798, %v1820
    %v1829 = vmul.f32 %v1800, %v1821
    %v1830 = vmul.f32 %v1802, %v1822
    %v1831 = vadd.f32 %v1823, %v1827
    %v1832 = vadd.f32 %v1824, %v1828
    %v1833 = vadd.f32 %v1825, %v1829
    %v1834 = vadd.f32 %v1826, %v1830
    %v1835 = vtanh.pop %v1831
    %v1836 = vtanh.pop %v1832
    %v1837 = vtanh.pop %v1833
    %v1838 = vtanh.pop %v1834
    %v1839 = vmul.f32 %v1812, %v1835
    %v1840 = vmul.f32 %v1814, %v1836
    %v1841 = vmul.f32 %v1816, %v1837
    %v1842 = vmul.f32 %v1818, %v1838
    %v1843 = vpack.c.bf16 %v1840, %v1839
    %v1844 = vpack.c.bf16 %v1842, %v1841
    %1845 = vst.msk [vmem:[#allocation3] sm:$0xff] %vm507, %v1843
    %1846 = vst.msk [vmem:[#allocation3 + $0x8] sm:$0xff] %vm507, %v1844
    %v1847 = vld [vmem:[%s654] sm:$0xff]
    %v1848 = vld [vmem:[%s654 + $0x8] sm:$0xff]
    %v1849 = vld [vmem:[%s654 + $0x10] sm:$0xff]
    %v1850 = vld [vmem:[%s654 + $0x18] sm:$0xff]
    %v1851 = vld [vmem:[%s654 + $0x20] sm:$0xff]
    %v1852 = vld [vmem:[%s654 + $0x28] sm:$0xff]
    %v1853 = vld [vmem:[%s654 + $0x30] sm:$0xff]
    %v1854 = vld [vmem:[%s654 + $0x38] sm:$0xff]
    %v1855 = vld [vmem:[%s654 + $0x40] sm:$0xff]
    %v1856 = vld [vmem:[%s654 + $0x48] sm:$0xff]
    %v1857 = vld [vmem:[%s654 + $0x50] sm:$0xff]
    %v1858 = vld [vmem:[%s654 + $0x58] sm:$0xff]
    %v1859 = vld [vmem:[%s654 + $0x60] sm:$0xff]
    %v1860 = vld [vmem:[%s654 + $0x68] sm:$0xff]
    %v1861 = vld [vmem:[%s654 + $0x70] sm:$0xff]
    %v1862 = vld [vmem:[%s654 + $0x78] sm:$0xff]
    %1863 = vmatprep.subr.bf16.mxu0 0
    %1864 = vmatpush1.bf16.msra.mxu0 %v1843
    %1865 = vmatprep.subr.bf16.mxu0 0
    %1866 = vmatpush1.bf16.msra.mxu0 %v1844
    %1867 = vmatprep.subr.bf16.mxu0 0
    %1868 = vmatpush1.bf16.msra.mxu0 0
    %1869 = vmatprep.subr.bf16.mxu0 0
    %1870 = vmatpush1.bf16.msra.mxu0 0
    %1871 = vmatprep.subr.bf16.mxu0 0
    %1872 = vmatpush1.bf16.msra.mxu0 0
    %1873 = vmatprep.subr.bf16.mxu0 0
    %1874 = vmatpush1.bf16.msra.mxu0 0
    %1875 = vmatprep.subr.bf16.mxu0 0
    %1876 = vmatpush1.bf16.msra.mxu0 0
    %1877 = vmatprep.subr.bf16.mxu0 0
    %1878 = vmatpush1.bf16.msra.mxu0 0
    %1879 = vmatprep.subr.bf16.mxu0 0
    %1880 = vmatpush1.bf16.msra.mxu0 0
    %1881 = vmatprep.subr.bf16.mxu0 0
    %1882 = vmatpush1.bf16.msra.mxu0 0
    %1883 = vmatprep.subr.bf16.mxu0 0
    %1884 = vmatpush1.bf16.msra.mxu0 0
    %1885 = vmatprep.subr.bf16.mxu0 0
    %1886 = vmatpush1.bf16.msra.mxu0 0
    %1887 = vmatprep.subr.bf16.mxu0 0
    %1888 = vmatpush1.bf16.msra.mxu0 0
    %1889 = vmatprep.subr.bf16.mxu0 0
    %1890 = vmatpush1.bf16.msra.mxu0 0
    %1891 = vmatprep.subr.bf16.mxu0 0
    %1892 = vmatpush1.bf16.msra.mxu0 0
    %1893 = vmatprep.subr.bf16.mxu0 0
    %1894 = vmatpush1.bf16.msra.mxu0 0
    %1895 = vmatprep.mubr.bf16.mxu0 0
    %1896 = vmatmul.mubr.bf16.gmra.mrb[0].mxu0 %v1611
    %v1897 = vpop.f32.mrb[0].mxu0
    %v1898 = vadd.f32 0.0, %v1897
    %v1899 = vpop.f32.mrb[0].mxu0
    %v1900 = vpop.f32.mrb[0].mxu0
    %v1901 = vadd.f32 0.0, %v1900
    %v1902 = vpop.f32.mrb[0].mxu0
    %1903 = vmatprep.mubr.bf16.mxu0 0
    %1904 = vmatmul.mubr.bf16.gmra.mrb[0].mxu0 %v1614
    %v1905 = vpop.f32.mrb[0].mxu0
    %v1906 = vadd.f32 0.0, %v1905
    %v1907 = vpop.f32.mrb[0].mxu0
    %v1908 = vpop.f32.mrb[0].mxu0
    %v1909 = vadd.f32 0.0, %v1908
    %v1910 = vpop.f32.mrb[0].mxu0
    %1911 = vmatprep.mubr.bf16.mxu0 0
    %1912 = vmatmul.mubr.bf16.gmra.mrb[0].mxu0 %v1617
    %v1913 = vpop.f32.mrb[0].mxu0
    %v1914 = vadd.f32 0.0, %v1913
    %v1915 = vpop.f32.mrb[0].mxu0
    %v1916 = vpop.f32.mrb[0].mxu0
    %v1917 = vadd.f32 0.0, %v1916
    %v1918 = vpop.f32.mrb[0].mxu0
    %1919 = vmatprep.mubr.bf16.mxu0 0
    %1920 = vmatmul.mubr.bf16.gmra.mrb[0].mxu0 %v1620
    %v1921 = vpop.f32.mrb[0].mxu0
    %v1922 = vadd.f32 0.0, %v1921
    %v1923 = vpop.f32.mrb[0].mxu0
    %v1924 = vpop.f32.mrb[0].mxu0
    %v1925 = vadd.f32 0.0, %v1924
    %v1926 = vpop.f32.mrb[0].mxu0
    %1927 = vmatprep.mubr.bf16.mxu0 0
    %1928 = vmatmul.mubr.bf16.gmra.mrb[0].mxu0 %v1623
    %v1929 = vpop.f32.mrb[0].mxu0
    %v1930 = vadd.f32 0.0, %v1929
    %v1931 = vpop.f32.mrb[0].mxu0
    %v1932 = vpop.f32.mrb[0].mxu0
    %v1933 = vadd.f32 0.0, %v1932
    %v1934 = vpop.f32.mrb[0].mxu0
    %1935 = vmatprep.mubr.bf16.mxu0 0
    %1936 = vmatmul.mubr.bf16.gmra.mrb[0].mxu0 %v1626
    %v1937 = vpop.f32.mrb[0].mxu0
    %v1938 = vadd.f32 0.0, %v1937
    %v1939 = vpop.f32.mrb[0].mxu0
    %v1940 = vpop.f32.mrb[0].mxu0
    %v1941 = vadd.f32 0.0, %v1940
    %v1942 = vpop.f32.mrb[0].mxu0
    %1943 = vmatprep.mubr.bf16.mxu0 0
    %1944 = vmatmul.mubr.bf16.gmra.mrb[0].mxu0 %v1629
    %v1945 = vpop.f32.mrb[0].mxu0
    %v1946 = vadd.f32 0.0, %v1945
    %v1947 = vpop.f32.mrb[0].mxu0
    %v1948 = vpop.f32.mrb[0].mxu0
    %v1949 = vadd.f32 0.0, %v1948
    %v1950 = vpop.f32.mrb[0].mxu0
    %1951 = vmatprep.mubr.bf16.mxu0 0
    %1952 = vmatmul.mubr.bf16.gmra.mrb[0].mxu0 %v1632
    %v1953 = vpop.f32.mrb[0].mxu0
    %v1954 = vadd.f32 0.0, %v1953
    %v1955 = vpop.f32.mrb[0].mxu0
    %v1956 = vpop.f32.mrb[0].mxu0
    %v1957 = vadd.f32 0.0, %v1956
    %v1958 = vpop.f32.mrb[0].mxu0
    %1959 = vdwg.mxu0
    %v1960 = vadd.f32 %v1847, %v1898
    %v1961 = vadd.f32 %v1848, %v1901
    %v1962 = vadd.f32 %v1849, %v1906
    %v1963 = vadd.f32 %v1850, %v1909
    %v1964 = vadd.f32 %v1851, %v1914
    %v1965 = vadd.f32 %v1852, %v1917
    %v1966 = vadd.f32 %v1853, %v1922
    %v1967 = vadd.f32 %v1854, %v1925
    %v1968 = vadd.f32 %v1855, %v1930
    %v1969 = vadd.f32 %v1856, %v1933
    %v1970 = vadd.f32 %v1857, %v1938
    %v1971 = vadd.f32 %v1858, %v1941
    %v1972 = vadd.f32 %v1859, %v1946
    %v1973 = vadd.f32 %v1860, %v1949
    %v1974 = vadd.f32 %v1861, %v1954
    %v1975 = vadd.f32 %v1862, %v1957
    %v1976 = vxor.u32 %v1960, 2147483648
    %v1977 = vxor.u32 %v1961, 2147483648
    %v1978 = vxor.u32 %v1962, 2147483648
    %v1979 = vxor.u32 %v1963, 2147483648
    %v1980 = vxor.u32 %v1964, 2147483648
    %v1981 = vxor.u32 %v1965, 2147483648
    %v1982 = vxor.u32 %v1966, 2147483648
    %v1983 = vxor.u32 %v1967, 2147483648
    %v1984 = vxor.u32 %v1972, 2147483648
    %v1985 = vxor.u32 %v1973, 2147483648
    %v1986 = vxor.u32 %v1974, 2147483648
    %v1987 = vxor.u32 %v1975, 2147483648
    %v1988 = vmul.f32 %v1976, 1.442695
    %v1989 = vpow.pop %v1988
    %v1990 = vmul.f32 %v1977, 1.442695
    %v1991 = vpow.pop %v1990
    %v1992 = vmul.f32 %v1978, 1.442695
    %v1993 = vpow.pop %v1992
    %v1994 = vmul.f32 %v1979, 1.442695
    %v1995 = vpow.pop %v1994
    %v1996 = vmul.f32 %v1980, 1.442695
    %v1997 = vpow.pop %v1996
    %v1998 = vmul.f32 %v1981, 1.442695
    %v1999 = vpow.pop %v1998
    %v2000 = vmul.f32 %v1982, 1.442695
    %v2001 = vpow.pop %v2000
    %v2002 = vmul.f32 %v1983, 1.442695
    %v2003 = vpow.pop %v2002
    %v2004 = vmul.f32 %v1984, 1.442695
    %v2005 = vpow.pop %v2004
    %v2006 = vmul.f32 %v1985, 1.442695
    %v2007 = vpow.pop %v2006
    %v2008 = vmul.f32 %v1986, 1.442695
    %v2009 = vpow.pop %v2008
    %v2010 = vmul.f32 %v1987, 1.442695
    %v2011 = vpow.pop %v2010
    %v2012 = vadd.f32 %v1989, 1.0
    %v2013 = vadd.f32 %v1991, 1.0
    %v2014 = vadd.f32 %v1993, 1.0
    %v2015 = vadd.f32 %v1995, 1.0
    %v2016 = vadd.f32 %v1997, 1.0
    %v2017 = vadd.f32 %v1999, 1.0
    %v2018 = vadd.f32 %v2001, 1.0
    %v2019 = vadd.f32 %v2003, 1.0
    %v2020 = vadd.f32 %v2005, 1.0
    %v2021 = vadd.f32 %v2007, 1.0
    %v2022 = vadd.f32 %v2009, 1.0
    %v2023 = vadd.f32 %v2011, 1.0
    %v2024 = vrcp.pop %v2012
    %v2025 = vmul.f32 1.0, %v2024
    %v2026 = vrcp.pop %v2013
    %v2027 = vmul.f32 1.0, %v2026
    %v2028 = vrcp.pop %v2014
    %v2029 = vmul.f32 1.0, %v2028
    %v2030 = vrcp.pop %v2015
    %v2031 = vmul.f32 1.0, %v2030
    %v2032 = vrcp.pop %v2016
    %v2033 = vmul.f32 1.0, %v2032
    %v2034 = vrcp.pop %v2017
    %v2035 = vmul.f32 1.0, %v2034
    %v2036 = vrcp.pop %v2018
    %v2037 = vmul.f32 1.0, %v2036
    %v2038 = vrcp.pop %v2019
    %v2039 = vmul.f32 1.0, %v2038
    %v2040 = vrcp.pop %v2020
    %v2041 = vmul.f32 1.0, %v2040
    %v2042 = vrcp.pop %v2021
    %v2043 = vmul.f32 1.0, %v2042
    %v2044 = vrcp.pop %v2022
    %v2045 = vmul.f32 1.0, %v2044
    %v2046 = vrcp.pop %v2023
    %v2047 = vmul.f32 1.0, %v2046
    %v2048 = vtanh.pop %v1968
    %v2049 = vtanh.pop %v1969
    %v2050 = vtanh.pop %v1970
    %v2051 = vtanh.pop %v1971
    %v2052 = vmul.f32 %v2033, %v1831
    %v2053 = vmul.f32 %v2035, %v1832
    %v2054 = vmul.f32 %v2037, %v1833
    %v2055 = vmul.f32 %v2039, %v1834
    %v2056 = vmul.f32 %v2025, %v2048
    %v2057 = vmul.f32 %v2027, %v2049
    %v2058 = vmul.f32 %v2029, %v2050
    %v2059 = vmul.f32 %v2031, %v2051
    %v2060 = vadd.f32 %v2052, %v2056
    %v2061 = vadd.f32 %v2053, %v2057
    %v2062 = vadd.f32 %v2054, %v2058
    %v2063 = vadd.f32 %v2055, %v2059
    %v2064 = vtanh.pop %v2060
    %v2065 = vtanh.pop %v2061
    %v2066 = vtanh.pop %v2062
    %v2067 = vtanh.pop %v2063
    %v2068 = vmul.f32 %v2041, %v2064
    %v2069 = vmul.f32 %v2043, %v2065
    %v2070 = vmul.f32 %v2045, %v2066
    %v2071 = vmul.f32 %v2047, %v2067
    %v2072 = vpack.c.bf16 %v2069, %v2068
    %v2073 = vpack.c.bf16 %v2071, %v2070
    %s2074 = scalar_lea.vmem [#allocation3], 16
    %2075 = vst.msk [vmem:[%s2074] sm:$0xff] %vm507, %v2072
    %2076 = vst.msk [vmem:[%s2074 + $0x8] sm:$0xff] %vm507, %v2073
    %v2077 = vld [vmem:[%s801] sm:$0xff]
    %v2078 = vld [vmem:[%s801 + $0x8] sm:$0xff]
    %v2079 = vld [vmem:[%s801 + $0x10] sm:$0xff]
    %v2080 = vld [vmem:[%s801 + $0x18] sm:$0xff]
    %v2081 = vld [vmem:[%s801 + $0x20] sm:$0xff]
    %v2082 = vld [vmem:[%s801 + $0x28] sm:$0xff]
    %v2083 = vld [vmem:[%s801 + $0x30] sm:$0xff]
    %v2084 = vld [vmem:[%s801 + $0x38] sm:$0xff]
    %v2085 = vld [vmem:[%s801 + $0x40] sm:$0xff]
    %v2086 = vld [vmem:[%s801 + $0x48] sm:$0xff]
    %v2087 = vld [vmem:[%s801 + $0x50] sm:$0xff]
    %v2088 = vld [vmem:[%s801 + $0x58] sm:$0xff]
    %v2089 = vld [vmem:[%s801 + $0x60] sm:$0xff]
    %v2090 = vld [vmem:[%s801 + $0x68] sm:$0xff]
    %v2091 = vld [vmem:[%s801 + $0x70] sm:$0xff]
    %v2092 = vld [vmem:[%s801 + $0x78] sm:$0xff]
    %2093 = vmatprep.subr.bf16.mxu0 0
    %2094 = vmatpush1.bf16.msra.mxu0 %v2072
    %2095 = vmatprep.subr.bf16.mxu0 0
    %2096 = vmatpush1.bf16.msra.mxu0 %v2073
    %2097 = vmatprep.subr.bf16.mxu0 0
    %2098 = vmatpush1.bf16.msra.mxu0 0
    %2099 = vmatprep.subr.bf16.mxu0 0
    %2100 = vmatpush1.bf16.msra.mxu0 0
    %2101 = vmatprep.subr.bf16.mxu0 0
    %2102 = vmatpush1.bf16.msra.mxu0 0
    %2103 = vmatprep.subr.bf16.mxu0 0
    %2104 = vmatpush1.bf16.msra.mxu0 0
    %2105 = vmatprep.subr.bf16.mxu0 0
    %2106 = vmatpush1.bf16.msra.mxu0 0
    %2107 = vmatprep.subr.bf16.mxu0 0
    %2108 = vmatpush1.bf16.msra.mxu0 0
    %2109 = vmatprep.subr.bf16.mxu0 0
    %2110 = vmatpush1.bf16.msra.mxu0 0
    %2111 = vmatprep.subr.bf16.mxu0 0
    %2112 = vmatpush1.bf16.msra.mxu0 0
    %2113 = vmatprep.subr.bf16.mxu0 0
    %2114 = vmatpush1.bf16.msra.mxu0 0
    %2115 = vmatprep.subr.bf16.mxu0 0
    %2116 = vmatpush1.bf16.msra.mxu0 0
    %2117 = vmatprep.subr.bf16.mxu0 0
    %2118 = vmatpush1.bf16.msra.mxu0 0
    %2119 = vmatprep.subr.bf16.mxu0 0
    %2120 = vmatpush1.bf16.msra.mxu0 0
    %2121 = vmatprep.subr.bf16.mxu0 0
    %2122 = vmatpush1.bf16.msra.mxu0 0
    %2123 = vmatprep.subr.bf16.mxu0 0
    %2124 = vmatpush1.bf16.msra.mxu0 0
    %2125 = vmatprep.mubr.bf16.mxu0 0
    %2126 = vmatmul.mubr.bf16.gmra.mrb[0].mxu0 %v1611
    %v2127 = vpop.f32.mrb[0].mxu0
    %v2128 = vadd.f32 0.0, %v2127
    %v2129 = vpop.f32.mrb[0].mxu0
    %v2130 = vpop.f32.mrb[0].mxu0
    %v2131 = vadd.f32 0.0, %v2130
    %v2132 = vpop.f32.mrb[0].mxu0
    %2133 = vmatprep.mubr.bf16.mxu0 0
    %2134 = vmatmul.mubr.bf16.gmra.mrb[0].mxu0 %v1614
    %v2135 = vpop.f32.mrb[0].mxu0
    %v2136 = vadd.f32 0.0, %v2135
    %v2137 = vpop.f32.mrb[0].mxu0
    %v2138 = vpop.f32.mrb[0].mxu0
    %v2139 = vadd.f32 0.0, %v2138
    %v2140 = vpop.f32.mrb[0].mxu0
    %2141 = vmatprep.mubr.bf16.mxu0 0
    %2142 = vmatmul.mubr.bf16.gmra.mrb[0].mxu0 %v1617
    %v2143 = vpop.f32.mrb[0].mxu0
    %v2144 = vadd.f32 0.0, %v2143
    %v2145 = vpop.f32.mrb[0].mxu0
    %v2146 = vpop.f32.mrb[0].mxu0
    %v2147 = vadd.f32 0.0, %v2146
    %v2148 = vpop.f32.mrb[0].mxu0
    %2149 = vmatprep.mubr.bf16.mxu0 0
    %2150 = vmatmul.mubr.bf16.gmra.mrb[0].mxu0 %v1620
    %v2151 = vpop.f32.mrb[0].mxu0
    %v2152 = vadd.f32 0.0, %v2151
    %v2153 = vpop.f32.mrb[0].mxu0
    %v2154 = vpop.f32.mrb[0].mxu0
    %v2155 = vadd.f32 0.0, %v2154
    %v2156 = vpop.f32.mrb[0].mxu0
    %2157 = vmatprep.mubr.bf16.mxu0 0
    %2158 = vmatmul.mubr.bf16.gmra.mrb[0].mxu0 %v1623
    %v2159 = vpop.f32.mrb[0].mxu0
    %v2160 = vadd.f32 0.0, %v2159
    %v2161 = vpop.f32.mrb[0].mxu0
    %v2162 = vpop.f32.mrb[0].mxu0
    %v2163 = vadd.f32 0.0, %v2162
    %v2164 = vpop.f32.mrb[0].mxu0
    %2165 = vmatprep.mubr.bf16.mxu0 0
    %2166 = vmatmul.mubr.bf16.gmra.mrb[0].mxu0 %v1626
    %v2167 = vpop.f32.mrb[0].mxu0
    %v2168 = vadd.f32 0.0, %v2167
    %v2169 = vpop.f32.mrb[0].mxu0
    %v2170 = vpop.f32.mrb[0].mxu0
    %v2171 = vadd.f32 0.0, %v2170
    %v2172 = vpop.f32.mrb[0].mxu0
    %2173 = vmatprep.mubr.bf16.mxu0 0
    %2174 = vmatmul.mubr.bf16.gmra.mrb[0].mxu0 %v1629
    %v2175 = vpop.f32.mrb[0].mxu0
    %v2176 = vadd.f32 0.0, %v2175
    %v2177 = vpop.f32.mrb[0].mxu0
    %v2178 = vpop.f32.mrb[0].mxu0
    %v2179 = vadd.f32 0.0, %v2178
    %v2180 = vpop.f32.mrb[0].mxu0
    %2181 = vmatprep.mubr.bf16.mxu0 0
    %2182 = vmatmul.mubr.bf16.gmra.mrb[0].mxu0 %v1632
    %v2183 = vpop.f32.mrb[0].mxu0
    %v2184 = vadd.f32 0.0, %v2183
    %v2185 = vpop.f32.mrb[0].mxu0
    %v2186 = vpop.f32.mrb[0].mxu0
    %v2187 = vadd.f32 0.0, %v2186
    %v2188 = vpop.f32.mrb[0].mxu0
    %2189 = vdwg.mxu0
    %v2190 = vadd.f32 %v2077, %v2128
    %v2191 = vadd.f32 %v2078, %v2131
    %v2192 = vadd.f32 %v2079, %v2136
    %v2193 = vadd.f32 %v2080, %v2139
    %v2194 = vadd.f32 %v2081, %v2144
    %v2195 = vadd.f32 %v2082, %v2147
    %v2196 = vadd.f32 %v2083, %v2152
    %v2197 = vadd.f32 %v2084, %v2155
    %v2198 = vadd.f32 %v2085, %v2160
    %v2199 = vadd.f32 %v2086, %v2163
    %v2200 = vadd.f32 %v2087, %v2168
    %v2201 = vadd.f32 %v2088, %v2171
    %v2202 = vadd.f32 %v2089, %v2176
    %v2203 = vadd.f32 %v2090, %v2179
    %v2204 = vadd.f32 %v2091, %v2184
    %v2205 = vadd.f32 %v2092, %v2187
    %v2206 = vxor.u32 %v2190, 2147483648
    %v2207 = vxor.u32 %v2191, 2147483648
    %v2208 = vxor.u32 %v2192, 2147483648
    %v2209 = vxor.u32 %v2193, 2147483648
    %v2210 = vxor.u32 %v2194, 2147483648
    %v2211 = vxor.u32 %v2195, 2147483648
    %v2212 = vxor.u32 %v2196, 2147483648
    %v2213 = vxor.u32 %v2197, 2147483648
    %v2214 = vxor.u32 %v2202, 2147483648
    %v2215 = vxor.u32 %v2203, 2147483648
    %v2216 = vxor.u32 %v2204, 2147483648
    %v2217 = vxor.u32 %v2205, 2147483648
    %v2218 = vmul.f32 %v2206, 1.442695
    %v2219 = vpow.pop %v2218
    %v2220 = vmul.f32 %v2207, 1.442695
    %v2221 = vpow.pop %v2220
    %v2222 = vmul.f32 %v2208, 1.442695
    %v2223 = vpow.pop %v2222
    %v2224 = vmul.f32 %v2209, 1.442695
    %v2225 = vpow.pop %v2224
    %v2226 = vmul.f32 %v2210, 1.442695
    %v2227 = vpow.pop %v2226
    %v2228 = vmul.f32 %v2211, 1.442695
    %v2229 = vpow.pop %v2228
    %v2230 = vmul.f32 %v2212, 1.442695
    %v2231 = vpow.pop %v2230
    %v2232 = vmul.f32 %v2213, 1.442695
    %v2233 = vpow.pop %v2232
    %v2234 = vmul.f32 %v2214, 1.442695
    %v2235 = vpow.pop %v2234
    %v2236 = vmul.f32 %v2215, 1.442695
    %v2237 = vpow.pop %v2236
    %v2238 = vmul.f32 %v2216, 1.442695
    %v2239 = vpow.pop %v2238
    %v2240 = vmul.f32 %v2217, 1.442695
    %v2241 = vpow.pop %v2240
    %v2242 = vadd.f32 %v2219, 1.0
    %v2243 = vadd.f32 %v2221, 1.0
    %v2244 = vadd.f32 %v2223, 1.0
    %v2245 = vadd.f32 %v2225, 1.0
    %v2246 = vadd.f32 %v2227, 1.0
    %v2247 = vadd.f32 %v2229, 1.0
    %v2248 = vadd.f32 %v2231, 1.0
    %v2249 = vadd.f32 %v2233, 1.0
    %v2250 = vadd.f32 %v2235, 1.0
    %v2251 = vadd.f32 %v2237, 1.0
    %v2252 = vadd.f32 %v2239, 1.0
    %v2253 = vadd.f32 %v2241, 1.0
    %v2254 = vrcp.pop %v2242
    %v2255 = vmul.f32 1.0, %v2254
    %v2256 = vrcp.pop %v2243
    %v2257 = vmul.f32 1.0, %v2256
    %v2258 = vrcp.pop %v2244
    %v2259 = vmul.f32 1.0, %v2258
    %v2260 = vrcp.pop %v2245
    %v2261 = vmul.f32 1.0, %v2260
    %v2262 = vrcp.pop %v2246
    %v2263 = vmul.f32 1.0, %v2262
    %v2264 = vrcp.pop %v2247
    %v2265 = vmul.f32 1.0, %v2264
    %v2266 = vrcp.pop %v2248
    %v2267 = vmul.f32 1.0, %v2266
    %v2268 = vrcp.pop %v2249
    %v2269 = vmul.f32 1.0, %v2268
    %v2270 = vrcp.pop %v2250
    %v2271 = vmul.f32 1.0, %v2270
    %v2272 = vrcp.pop %v2251
    %v2273 = vmul.f32 1.0, %v2272
    %v2274 = vrcp.pop %v2252
    %v2275 = vmul.f32 1.0, %v2274
    %v2276 = vrcp.pop %v2253
    %v2277 = vmul.f32 1.0, %v2276
    %v2278 = vtanh.pop %v2198
    %v2279 = vtanh.pop %v2199
    %v2280 = vtanh.pop %v2200
    %v2281 = vtanh.pop %v2201
    %v2282 = vmul.f32 %v2263, %v2060
    %v2283 = vmul.f32 %v2265, %v2061
    %v2284 = vmul.f32 %v2267, %v2062
    %v2285 = vmul.f32 %v2269, %v2063
    %v2286 = vmul.f32 %v2255, %v2278
    %v2287 = vmul.f32 %v2257, %v2279
    %v2288 = vmul.f32 %v2259, %v2280
    %v2289 = vmul.f32 %v2261, %v2281
    %v2290 = vadd.f32 %v2282, %v2286
    %v2291 = vadd.f32 %v2283, %v2287
    %v2292 = vadd.f32 %v2284, %v2288
    %v2293 = vadd.f32 %v2285, %v2289
    %v2294 = vtanh.pop %v2290
    %v2295 = vtanh.pop %v2291
    %v2296 = vtanh.pop %v2292
    %v2297 = vtanh.pop %v2293
    %v2298 = vmul.f32 %v2271, %v2294
    %v2299 = vmul.f32 %v2273, %v2295
    %v2300 = vmul.f32 %v2275, %v2296
    %v2301 = vmul.f32 %v2277, %v2297
    %v2302 = vpack.c.bf16 %v2299, %v2298
    %v2303 = vpack.c.bf16 %v2301, %v2300
    %s2304 = scalar_lea.vmem [#allocation3], 32
    %2305 = vst.msk [vmem:[%s2304] sm:$0xff] %vm507, %v2302
    %2306 = vst.msk [vmem:[%s2304 + $0x8] sm:$0xff] %vm507, %v2303
    %v2307 = vld [vmem:[%s948] sm:$0xff]
    %v2308 = vld [vmem:[%s948 + $0x8] sm:$0xff]
    %v2309 = vld [vmem:[%s948 + $0x10] sm:$0xff]
    %v2310 = vld [vmem:[%s948 + $0x18] sm:$0xff]
    %v2311 = vld [vmem:[%s948 + $0x20] sm:$0xff]
    %v2312 = vld [vmem:[%s948 + $0x28] sm:$0xff]
    %v2313 = vld [vmem:[%s948 + $0x30] sm:$0xff]
    %v2314 = vld [vmem:[%s948 + $0x38] sm:$0xff]
    %v2315 = vld [vmem:[%s948 + $0x40] sm:$0xff]
    %v2316 = vld [vmem:[%s948 + $0x48] sm:$0xff]
    %v2317 = vld [vmem:[%s948 + $0x50] sm:$0xff]
    %v2318 = vld [vmem:[%s948 + $0x58] sm:$0xff]
    %v2319 = vld [vmem:[%s948 + $0x60] sm:$0xff]
    %v2320 = vld [vmem:[%s948 + $0x68] sm:$0xff]
    %v2321 = vld [vmem:[%s948 + $0x70] sm:$0xff]
    %v2322 = vld [vmem:[%s948 + $0x78] sm:$0xff]
    %2323 = vmatprep.subr.bf16.mxu0 0
    %2324 = vmatpush1.bf16.msra.mxu0 %v2302
    %2325 = vmatprep.subr.bf16.mxu0 0
    %2326 = vmatpush1.bf16.msra.mxu0 %v2303
    %2327 = vmatprep.subr.bf16.mxu0 0
    %2328 = vmatpush1.bf16.msra.mxu0 0
    %2329 = vmatprep.subr.bf16.mxu0 0
    %2330 = vmatpush1.bf16.msra.mxu0 0
    %2331 = vmatprep.subr.bf16.mxu0 0
    %2332 = vmatpush1.bf16.msra.mxu0 0
    %2333 = vmatprep.subr.bf16.mxu0 0
    %2334 = vmatpush1.bf16.msra.mxu0 0
    %2335 = vmatprep.subr.bf16.mxu0 0
    %2336 = vmatpush1.bf16.msra.mxu0 0
    %2337 = vmatprep.subr.bf16.mxu0 0
    %2338 = vmatpush1.bf16.msra.mxu0 0
    %2339 = vmatprep.subr.bf16.mxu0 0
    %2340 = vmatpush1.bf16.msra.mxu0 0
    %2341 = vmatprep.subr.bf16.mxu0 0
    %2342 = vmatpush1.bf16.msra.mxu0 0
    %2343 = vmatprep.subr.bf16.mxu0 0
    %2344 = vmatpush1.bf16.msra.mxu0 0
    %2345 = vmatprep.subr.bf16.mxu0 0
    %2346 = vmatpush1.bf16.msra.mxu0 0
    %2347 = vmatprep.subr.bf16.mxu0 0
    %2348 = vmatpush1.bf16.msra.mxu0 0
    %2349 = vmatprep.subr.bf16.mxu0 0
    %2350 = vmatpush1.bf16.msra.mxu0 0
    %2351 = vmatprep.subr.bf16.mxu0 0
    %2352 = vmatpush1.bf16.msra.mxu0 0
    %2353 = vmatprep.subr.bf16.mxu0 0
    %2354 = vmatpush1.bf16.msra.mxu0 0
    %2355 = vmatprep.mubr.bf16.mxu0 0
    %2356 = vmatmul.mubr.bf16.gmra.mrb[0].mxu0 %v1611
    %v2357 = vpop.f32.mrb[0].mxu0
    %v2358 = vadd.f32 0.0, %v2357
    %v2359 = vpop.f32.mrb[0].mxu0
    %v2360 = vpop.f32.mrb[0].mxu0
    %v2361 = vadd.f32 0.0, %v2360
    %v2362 = vpop.f32.mrb[0].mxu0
    %2363 = vmatprep.mubr.bf16.mxu0 0
    %2364 = vmatmul.mubr.bf16.gmra.mrb[0].mxu0 %v1614
    %v2365 = vpop.f32.mrb[0].mxu0
    %v2366 = vadd.f32 0.0, %v2365
    %v2367 = vpop.f32.mrb[0].mxu0
    %v2368 = vpop.f32.mrb[0].mxu0
    %v2369 = vadd.f32 0.0, %v2368
    %v2370 = vpop.f32.mrb[0].mxu0
    %2371 = vmatprep.mubr.bf16.mxu0 0
    %2372 = vmatmul.mubr.bf16.gmra.mrb[0].mxu0 %v1617
    %v2373 = vpop.f32.mrb[0].mxu0
    %v2374 = vadd.f32 0.0, %v2373
    %v2375 = vpop.f32.mrb[0].mxu0
    %v2376 = vpop.f32.mrb[0].mxu0
    %v2377 = vadd.f32 0.0, %v2376
    %v2378 = vpop.f32.mrb[0].mxu0
    %2379 = vmatprep.mubr.bf16.mxu0 0
    %2380 = vmatmul.mubr.bf16.gmra.mrb[0].mxu0 %v1620
    %v2381 = vpop.f32.mrb[0].mxu0
    %v2382 = vadd.f32 0.0, %v2381
    %v2383 = vpop.f32.mrb[0].mxu0
    %v2384 = vpop.f32.mrb[0].mxu0
    %v2385 = vadd.f32 0.0, %v2384
    %v2386 = vpop.f32.mrb[0].mxu0
    %2387 = vmatprep.mubr.bf16.mxu0 0
    %2388 = vmatmul.mubr.bf16.gmra.mrb[0].mxu0 %v1623
    %v2389 = vpop.f32.mrb[0].mxu0
    %v2390 = vadd.f32 0.0, %v2389
    %v2391 = vpop.f32.mrb[0].mxu0
    %v2392 = vpop.f32.mrb[0].mxu0
    %v2393 = vadd.f32 0.0, %v2392
    %v2394 = vpop.f32.mrb[0].mxu0
    %2395 = vmatprep.mubr.bf16.mxu0 0
    %2396 = vmatmul.mubr.bf16.gmra.mrb[0].mxu0 %v1626
    %v2397 = vpop.f32.mrb[0].mxu0
    %v2398 = vadd.f32 0.0, %v2397
    %v2399 = vpop.f32.mrb[0].mxu0
    %v2400 = vpop.f32.mrb[0].mxu0
    %v2401 = vadd.f32 0.0, %v2400
    %v2402 = vpop.f32.mrb[0].mxu0
    %2403 = vmatprep.mubr.bf16.mxu0 0
    %2404 = vmatmul.mubr.bf16.gmra.mrb[0].mxu0 %v1629
    %v2405 = vpop.f32.mrb[0].mxu0
    %v2406 = vadd.f32 0.0, %v2405
    %v2407 = vpop.f32.mrb[0].mxu0
    %v2408 = vpop.f32.mrb[0].mxu0
    %v2409 = vadd.f32 0.0, %v2408
    %v2410 = vpop.f32.mrb[0].mxu0
    %2411 = vmatprep.mubr.bf16.mxu0 0
    %2412 = vmatmul.mubr.bf16.gmra.mrb[0].mxu0 %v1632
    %v2413 = vpop.f32.mrb[0].mxu0
    %v2414 = vadd.f32 0.0, %v2413
    %v2415 = vpop.f32.mrb[0].mxu0
    %v2416 = vpop.f32.mrb[0].mxu0
    %v2417 = vadd.f32 0.0, %v2416
    %v2418 = vpop.f32.mrb[0].mxu0
    %2419 = vdwg.mxu0
    %v2420 = vadd.f32 %v2307, %v2358
    %v2421 = vadd.f32 %v2308, %v2361
    %v2422 = vadd.f32 %v2309, %v2366
    %v2423 = vadd.f32 %v2310, %v2369
    %v2424 = vadd.f32 %v2311, %v2374
    %v2425 = vadd.f32 %v2312, %v2377
    %v2426 = vadd.f32 %v2313, %v2382
    %v2427 = vadd.f32 %v2314, %v2385
    %v2428 = vadd.f32 %v2315, %v2390
    %v2429 = vadd.f32 %v2316, %v2393
    %v2430 = vadd.f32 %v2317, %v2398
    %v2431 = vadd.f32 %v2318, %v2401
    %v2432 = vadd.f32 %v2319, %v2406
    %v2433 = vadd.f32 %v2320, %v2409
    %v2434 = vadd.f32 %v2321, %v2414
    %v2435 = vadd.f32 %v2322, %v2417
    %v2436 = vxor.u32 %v2420, 2147483648
    %v2437 = vxor.u32 %v2421, 2147483648
    %v2438 = vxor.u32 %v2422, 2147483648
    %v2439 = vxor.u32 %v2423, 2147483648
    %v2440 = vxor.u32 %v2424, 2147483648
    %v2441 = vxor.u32 %v2425, 2147483648
    %v2442 = vxor.u32 %v2426, 2147483648
    %v2443 = vxor.u32 %v2427, 2147483648
    %v2444 = vxor.u32 %v2432, 2147483648
    %v2445 = vxor.u32 %v2433, 2147483648
    %v2446 = vxor.u32 %v2434, 2147483648
    %v2447 = vxor.u32 %v2435, 2147483648
    %v2448 = vmul.f32 %v2436, 1.442695
    %v2449 = vpow.pop %v2448
    %v2450 = vmul.f32 %v2437, 1.442695
    %v2451 = vpow.pop %v2450
    %v2452 = vmul.f32 %v2438, 1.442695
    %v2453 = vpow.pop %v2452
    %v2454 = vmul.f32 %v2439, 1.442695
    %v2455 = vpow.pop %v2454
    %v2456 = vmul.f32 %v2440, 1.442695
    %v2457 = vpow.pop %v2456
    %v2458 = vmul.f32 %v2441, 1.442695
    %v2459 = vpow.pop %v2458
    %v2460 = vmul.f32 %v2442, 1.442695
    %v2461 = vpow.pop %v2460
    %v2462 = vmul.f32 %v2443, 1.442695
    %v2463 = vpow.pop %v2462
    %v2464 = vmul.f32 %v2444, 1.442695
    %v2465 = vpow.pop %v2464
    %v2466 = vmul.f32 %v2445, 1.442695
    %v2467 = vpow.pop %v2466
    %v2468 = vmul.f32 %v2446, 1.442695
    %v2469 = vpow.pop %v2468
    %v2470 = vmul.f32 %v2447, 1.442695
    %v2471 = vpow.pop %v2470
    %v2472 = vadd.f32 %v2449, 1.0
    %v2473 = vadd.f32 %v2451, 1.0
    %v2474 = vadd.f32 %v2453, 1.0
    %v2475 = vadd.f32 %v2455, 1.0
    %v2476 = vadd.f32 %v2457, 1.0
    %v2477 = vadd.f32 %v2459, 1.0
    %v2478 = vadd.f32 %v2461, 1.0
    %v2479 = vadd.f32 %v2463, 1.0
    %v2480 = vadd.f32 %v2465, 1.0
    %v2481 = vadd.f32 %v2467, 1.0
    %v2482 = vadd.f32 %v2469, 1.0
    %v2483 = vadd.f32 %v2471, 1.0
    %v2484 = vrcp.pop %v2472
    %v2485 = vmul.f32 1.0, %v2484
    %v2486 = vrcp.pop %v2473
    %v2487 = vmul.f32 1.0, %v2486
    %v2488 = vrcp.pop %v2474
    %v2489 = vmul.f32 1.0, %v2488
    %v2490 = vrcp.pop %v2475
    %v2491 = vmul.f32 1.0, %v2490
    %v2492 = vrcp.pop %v2476
    %v2493 = vmul.f32 1.0, %v2492
    %v2494 = vrcp.pop %v2477
    %v2495 = vmul.f32 1.0, %v2494
    %v2496 = vrcp.pop %v2478
    %v2497 = vmul.f32 1.0, %v2496
    %v2498 = vrcp.pop %v2479
    %v2499 = vmul.f32 1.0, %v2498
    %v2500 = vrcp.pop %v2480
    %v2501 = vmul.f32 1.0, %v2500
    %v2502 = vrcp.pop %v2481
    %v2503 = vmul.f32 1.0, %v2502
    %v2504 = vrcp.pop %v2482
    %v2505 = vmul.f32 1.0, %v2504
    %v2506 = vrcp.pop %v2483
    %v2507 = vmul.f32 1.0, %v2506
    %v2508 = vtanh.pop %v2428
    %v2509 = vtanh.pop %v2429
    %v2510 = vtanh.pop %v2430
    %v2511 = vtanh.pop %v2431
    %v2512 = vmul.f32 %v2493, %v2290
    %v2513 = vmul.f32 %v2495, %v2291
    %v2514 = vmul.f32 %v2497, %v2292
    %v2515 = vmul.f32 %v2499, %v2293
    %v2516 = vmul.f32 %v2485, %v2508
    %v2517 = vmul.f32 %v2487, %v2509
    %v2518 = vmul.f32 %v2489, %v2510
    %v2519 = vmul.f32 %v2491, %v2511
    %v2520 = vadd.f32 %v2512, %v2516
    %v2521 = vadd.f32 %v2513, %v2517
    %v2522 = vadd.f32 %v2514, %v2518
    %v2523 = vadd.f32 %v2515, %v2519
    %v2524 = vtanh.pop %v2520
    %v2525 = vtanh.pop %v2521
    %v2526 = vtanh.pop %v2522
    %v2527 = vtanh.pop %v2523
    %v2528 = vmul.f32 %v2501, %v2524
    %v2529 = vmul.f32 %v2503, %v2525
    %v2530 = vmul.f32 %v2505, %v2526
    %v2531 = vmul.f32 %v2507, %v2527
    %v2532 = vpack.c.bf16 %v2529, %v2528
    %v2533 = vpack.c.bf16 %v2531, %v2530
    %s2534 = scalar_lea.vmem [#allocation3], 48
    %2535 = vst.msk [vmem:[%s2534] sm:$0xff] %vm507, %v2532
    %2536 = vst.msk [vmem:[%s2534 + $0x8] sm:$0xff] %vm507, %v2533
    %v2537 = vld [vmem:[%s1095] sm:$0xff]
    %v2538 = vld [vmem:[%s1095 + $0x8] sm:$0xff]
    %v2539 = vld [vmem:[%s1095 + $0x10] sm:$0xff]
    %v2540 = vld [vmem:[%s1095 + $0x18] sm:$0xff]
    %v2541 = vld [vmem:[%s1095 + $0x20] sm:$0xff]
    %v2542 = vld [vmem:[%s1095 + $0x28] sm:$0xff]
    %v2543 = vld [vmem:[%s1095 + $0x30] sm:$0xff]
    %v2544 = vld [vmem:[%s1095 + $0x38] sm:$0xff]
    %v2545 = vld [vmem:[%s1095 + $0x40] sm:$0xff]
    %v2546 = vld [vmem:[%s1095 + $0x48] sm:$0xff]
    %v2547 = vld [vmem:[%s1095 + $0x50] sm:$0xff]
    %v2548 = vld [vmem:[%s1095 + $0x58] sm:$0xff]
    %v2549 = vld [vmem:[%s1095 + $0x60] sm:$0xff]
    %v2550 = vld [vmem:[%s1095 + $0x68] sm:$0xff]
    %v2551 = vld [vmem:[%s1095 + $0x70] sm:$0xff]
    %v2552 = vld [vmem:[%s1095 + $0x78] sm:$0xff]
    %2553 = vmatprep.subr.bf16.mxu0 0
    %2554 = vmatpush1.bf16.msra.mxu0 %v2532
    %2555 = vmatprep.subr.bf16.mxu0 0
    %2556 = vmatpush1.bf16.msra.mxu0 %v2533
    %2557 = vmatprep.subr.bf16.mxu0 0
    %2558 = vmatpush1.bf16.msra.mxu0 0
    %2559 = vmatprep.subr.bf16.mxu0 0
    %2560 = vmatpush1.bf16.msra.mxu0 0
    %2561 = vmatprep.subr.bf16.mxu0 0
    %2562 = vmatpush1.bf16.msra.mxu0 0
    %2563 = vmatprep.subr.bf16.mxu0 0
    %2564 = vmatpush1.bf16.msra.mxu0 0
    %2565 = vmatprep.subr.bf16.mxu0 0
    %2566 = vmatpush1.bf16.msra.mxu0 0
    %2567 = vmatprep.subr.bf16.mxu0 0
    %2568 = vmatpush1.bf16.msra.mxu0 0
    %2569 = vmatprep.subr.bf16.mxu0 0
    %2570 = vmatpush1.bf16.msra.mxu0 0
    %2571 = vmatprep.subr.bf16.mxu0 0
    %2572 = vmatpush1.bf16.msra.mxu0 0
    %2573 = vmatprep.subr.bf16.mxu0 0
    %2574 = vmatpush1.bf16.msra.mxu0 0
    %2575 = vmatprep.subr.bf16.mxu0 0
    %2576 = vmatpush1.bf16.msra.mxu0 0
    %2577 = vmatprep.subr.bf16.mxu0 0
    %2578 = vmatpush1.bf16.msra.mxu0 0
    %2579 = vmatprep.subr.bf16.mxu0 0
    %2580 = vmatpush1.bf16.msra.mxu0 0
    %2581 = vmatprep.subr.bf16.mxu0 0
    %2582 = vmatpush1.bf16.msra.mxu0 0
    %2583 = vmatprep.subr.bf16.mxu0 0
    %2584 = vmatpush1.bf16.msra.mxu0 0
    %2585 = vmatprep.mubr.bf16.mxu0 0
    %2586 = vmatmul.mubr.bf16.gmra.mrb[0].mxu0 %v1611
    %v2587 = vpop.f32.mrb[0].mxu0
    %v2588 = vadd.f32 0.0, %v2587
    %v2589 = vpop.f32.mrb[0].mxu0
    %v2590 = vpop.f32.mrb[0].mxu0
    %v2591 = vadd.f32 0.0, %v2590
    %v2592 = vpop.f32.mrb[0].mxu0
    %2593 = vmatprep.mubr.bf16.mxu0 0
    %2594 = vmatmul.mubr.bf16.gmra.mrb[0].mxu0 %v1614
    %v2595 = vpop.f32.mrb[0].mxu0
    %v2596 = vadd.f32 0.0, %v2595
    %v2597 = vpop.f32.mrb[0].mxu0
    %v2598 = vpop.f32.mrb[0].mxu0
    %v2599 = vadd.f32 0.0, %v2598
    %v2600 = vpop.f32.mrb[0].mxu0
    %2601 = vmatprep.mubr.bf16.mxu0 0
    %2602 = vmatmul.mubr.bf16.gmra.mrb[0].mxu0 %v1617
    %v2603 = vpop.f32.mrb[0].mxu0
    %v2604 = vadd.f32 0.0, %v2603
    %v2605 = vpop.f32.mrb[0].mxu0
    %v2606 = vpop.f32.mrb[0].mxu0
    %v2607 = vadd.f32 0.0, %v2606
    %v2608 = vpop.f32.mrb[0].mxu0
    %2609 = vmatprep.mubr.bf16.mxu0 0
    %2610 = vmatmul.mubr.bf16.gmra.mrb[0].mxu0 %v1620
    %v2611 = vpop.f32.mrb[0].mxu0
    %v2612 = vadd.f32 0.0, %v2611
    %v2613 = vpop.f32.mrb[0].mxu0
    %v2614 = vpop.f32.mrb[0].mxu0
    %v2615 = vadd.f32 0.0, %v2614
    %v2616 = vpop.f32.mrb[0].mxu0
    %2617 = vmatprep.mubr.bf16.mxu0 0
    %2618 = vmatmul.mubr.bf16.gmra.mrb[0].mxu0 %v1623
    %v2619 = vpop.f32.mrb[0].mxu0
    %v2620 = vadd.f32 0.0, %v2619
    %v2621 = vpop.f32.mrb[0].mxu0
    %v2622 = vpop.f32.mrb[0].mxu0
    %v2623 = vadd.f32 0.0, %v2622
    %v2624 = vpop.f32.mrb[0].mxu0
    %2625 = vmatprep.mubr.bf16.mxu0 0
    %2626 = vmatmul.mubr.bf16.gmra.mrb[0].mxu0 %v1626
    %v2627 = vpop.f32.mrb[0].mxu0
    %v2628 = vadd.f32 0.0, %v2627
    %v2629 = vpop.f32.mrb[0].mxu0
    %v2630 = vpop.f32.mrb[0].mxu0
    %v2631 = vadd.f32 0.0, %v2630
    %v2632 = vpop.f32.mrb[0].mxu0
    %2633 = vmatprep.mubr.bf16.mxu0 0
    %2634 = vmatmul.mubr.bf16.gmra.mrb[0].mxu0 %v1629
    %v2635 = vpop.f32.mrb[0].mxu0
    %v2636 = vadd.f32 0.0, %v2635
    %v2637 = vpop.f32.mrb[0].mxu0
    %v2638 = vpop.f32.mrb[0].mxu0
    %v2639 = vadd.f32 0.0, %v2638
    %v2640 = vpop.f32.mrb[0].mxu0
    %2641 = vmatprep.mubr.bf16.mxu0 0
    %2642 = vmatmul.mubr.bf16.gmra.mrb[0].mxu0 %v1632
    %v2643 = vpop.f32.mrb[0].mxu0
    %v2644 = vadd.f32 0.0, %v2643
    %v2645 = vpop.f32.mrb[0].mxu0
    %v2646 = vpop.f32.mrb[0].mxu0
    %v2647 = vadd.f32 0.0, %v2646
    %v2648 = vpop.f32.mrb[0].mxu0
    %2649 = vdwg.mxu0
    %v2650 = vadd.f32 %v2537, %v2588
    %v2651 = vadd.f32 %v2538, %v2591
    %v2652 = vadd.f32 %v2539, %v2596
    %v2653 = vadd.f32 %v2540, %v2599
    %v2654 = vadd.f32 %v2541, %v2604
    %v2655 = vadd.f32 %v2542, %v2607
    %v2656 = vadd.f32 %v2543, %v2612
    %v2657 = vadd.f32 %v2544, %v2615
    %v2658 = vadd.f32 %v2545, %v2620
    %v2659 = vadd.f32 %v2546, %v2623
    %v2660 = vadd.f32 %v2547, %v2628
    %v2661 = vadd.f32 %v2548, %v2631
    %v2662 = vadd.f32 %v2549, %v2636
    %v2663 = vadd.f32 %v2550, %v2639
    %v2664 = vadd.f32 %v2551, %v2644
    %v2665 = vadd.f32 %v2552, %v2647
    %v2666 = vxor.u32 %v2650, 2147483648
    %v2667 = vxor.u32 %v2651, 2147483648
    %v2668 = vxor.u32 %v2652, 2147483648
    %v2669 = vxor.u32 %v2653, 2147483648
    %v2670 = vxor.u32 %v2654, 2147483648
    %v2671 = vxor.u32 %v2655, 2147483648
    %v2672 = vxor.u32 %v2656, 2147483648
    %v2673 = vxor.u32 %v2657, 2147483648
    %v2674 = vxor.u32 %v2662, 2147483648
    %v2675 = vxor.u32 %v2663, 2147483648
    %v2676 = vxor.u32 %v2664, 2147483648
    %v2677 = vxor.u32 %v2665, 2147483648
    %v2678 = vmul.f32 %v2666, 1.442695
    %v2679 = vpow.pop %v2678
    %v2680 = vmul.f32 %v2667, 1.442695
    %v2681 = vpow.pop %v2680
    %v2682 = vmul.f32 %v2668, 1.442695
    %v2683 = vpow.pop %v2682
    %v2684 = vmul.f32 %v2669, 1.442695
    %v2685 = vpow.pop %v2684
    %v2686 = vmul.f32 %v2670, 1.442695
    %v2687 = vpow.pop %v2686
    %v2688 = vmul.f32 %v2671, 1.442695
    %v2689 = vpow.pop %v2688
    %v2690 = vmul.f32 %v2672, 1.442695
    %v2691 = vpow.pop %v2690
    %v2692 = vmul.f32 %v2673, 1.442695
    %v2693 = vpow.pop %v2692
    %v2694 = vmul.f32 %v2674, 1.442695
    %v2695 = vpow.pop %v2694
    %v2696 = vmul.f32 %v2675, 1.442695
    %v2697 = vpow.pop %v2696
    %v2698 = vmul.f32 %v2676, 1.442695
    %v2699 = vpow.pop %v2698
    %v2700 = vmul.f32 %v2677, 1.442695
    %v2701 = vpow.pop %v2700
    %v2702 = vadd.f32 %v2679, 1.0
    %v2703 = vadd.f32 %v2681, 1.0
    %v2704 = vadd.f32 %v2683, 1.0
    %v2705 = vadd.f32 %v2685, 1.0
    %v2706 = vadd.f32 %v2687, 1.0
    %v2707 = vadd.f32 %v2689, 1.0
    %v2708 = vadd.f32 %v2691, 1.0
    %v2709 = vadd.f32 %v2693, 1.0
    %v2710 = vadd.f32 %v2695, 1.0
    %v2711 = vadd.f32 %v2697, 1.0
    %v2712 = vadd.f32 %v2699, 1.0
    %v2713 = vadd.f32 %v2701, 1.0
    %v2714 = vrcp.pop %v2702
    %v2715 = vmul.f32 1.0, %v2714
    %v2716 = vrcp.pop %v2703
    %v2717 = vmul.f32 1.0, %v2716
    %v2718 = vrcp.pop %v2704
    %v2719 = vmul.f32 1.0, %v2718
    %v2720 = vrcp.pop %v2705
    %v2721 = vmul.f32 1.0, %v2720
    %v2722 = vrcp.pop %v2706
    %v2723 = vmul.f32 1.0, %v2722
    %v2724 = vrcp.pop %v2707
    %v2725 = vmul.f32 1.0, %v2724
    %v2726 = vrcp.pop %v2708
    %v2727 = vmul.f32 1.0, %v2726
    %v2728 = vrcp.pop %v2709
    %v2729 = vmul.f32 1.0, %v2728
    %v2730 = vrcp.pop %v2710
    %v2731 = vmul.f32 1.0, %v2730
    %v2732 = vrcp.pop %v2711
    %v2733 = vmul.f32 1.0, %v2732
    %v2734 = vrcp.pop %v2712
    %v2735 = vmul.f32 1.0, %v2734
    %v2736 = vrcp.pop %v2713
    %v2737 = vmul.f32 1.0, %v2736
    %v2738 = vtanh.pop %v2658
    %v2739 = vtanh.pop %v2659
    %v2740 = vtanh.pop %v2660
    %v2741 = vtanh.pop %v2661
    %v2742 = vmul.f32 %v2723, %v2520
    %v2743 = vmul.f32 %v2725, %v2521
    %v2744 = vmul.f32 %v2727, %v2522
    %v2745 = vmul.f32 %v2729, %v2523
    %v2746 = vmul.f32 %v2715, %v2738
    %v2747 = vmul.f32 %v2717, %v2739
    %v2748 = vmul.f32 %v2719, %v2740
    %v2749 = vmul.f32 %v2721, %v2741
    %v2750 = vadd.f32 %v2742, %v2746
    %v2751 = vadd.f32 %v2743, %v2747
    %v2752 = vadd.f32 %v2744, %v2748
    %v2753 = vadd.f32 %v2745, %v2749
    %v2754 = vtanh.pop %v2750
    %v2755 = vtanh.pop %v2751
    %v2756 = vtanh.pop %v2752
    %v2757 = vtanh.pop %v2753
    %v2758 = vmul.f32 %v2731, %v2754
    %v2759 = vmul.f32 %v2733, %v2755
    %v2760 = vmul.f32 %v2735, %v2756
    %v2761 = vmul.f32 %v2737, %v2757
    %v2762 = vpack.c.bf16 %v2759, %v2758
    %v2763 = vpack.c.bf16 %v2761, %v2760
    %s2764 = scalar_lea.vmem [#allocation3], 64
    %2765 = vst.msk [vmem:[%s2764] sm:$0xff] %vm507, %v2762
    %2766 = vst.msk [vmem:[%s2764 + $0x8] sm:$0xff] %vm507, %v2763
    %v2767 = vld [vmem:[%s1242] sm:$0xff]
    %v2768 = vld [vmem:[%s1242 + $0x8] sm:$0xff]
    %v2769 = vld [vmem:[%s1242 + $0x10] sm:$0xff]
    %v2770 = vld [vmem:[%s1242 + $0x18] sm:$0xff]
    %v2771 = vld [vmem:[%s1242 + $0x20] sm:$0xff]
    %v2772 = vld [vmem:[%s1242 + $0x28] sm:$0xff]
    %v2773 = vld [vmem:[%s1242 + $0x30] sm:$0xff]
    %v2774 = vld [vmem:[%s1242 + $0x38] sm:$0xff]
    %v2775 = vld [vmem:[%s1242 + $0x40] sm:$0xff]
    %v2776 = vld [vmem:[%s1242 + $0x48] sm:$0xff]
    %v2777 = vld [vmem:[%s1242 + $0x50] sm:$0xff]
    %v2778 = vld [vmem:[%s1242 + $0x58] sm:$0xff]
    %v2779 = vld [vmem:[%s1242 + $0x60] sm:$0xff]
    %v2780 = vld [vmem:[%s1242 + $0x68] sm:$0xff]
    %v2781 = vld [vmem:[%s1242 + $0x70] sm:$0xff]
    %v2782 = vld [vmem:[%s1242 + $0x78] sm:$0xff]
    %2783 = vmatprep.subr.bf16.mxu0 0
    %2784 = vmatpush1.bf16.msra.mxu0 %v2762
    %2785 = vmatprep.subr.bf16.mxu0 0
    %2786 = vmatpush1.bf16.msra.mxu0 %v2763
    %2787 = vmatprep.subr.bf16.mxu0 0
    %2788 = vmatpush1.bf16.msra.mxu0 0
    %2789 = vmatprep.subr.bf16.mxu0 0
    %2790 = vmatpush1.bf16.msra.mxu0 0
    %2791 = vmatprep.subr.bf16.mxu0 0
    %2792 = vmatpush1.bf16.msra.mxu0 0
    %2793 = vmatprep.subr.bf16.mxu0 0
    %2794 = vmatpush1.bf16.msra.mxu0 0
    %2795 = vmatprep.subr.bf16.mxu0 0
    %2796 = vmatpush1.bf16.msra.mxu0 0
    %2797 = vmatprep.subr.bf16.mxu0 0
    %2798 = vmatpush1.bf16.msra.mxu0 0
    %2799 = vmatprep.subr.bf16.mxu0 0
    %2800 = vmatpush1.bf16.msra.mxu0 0
    %2801 = vmatprep.subr.bf16.mxu0 0
    %2802 = vmatpush1.bf16.msra.mxu0 0
    %2803 = vmatprep.subr.bf16.mxu0 0
    %2804 = vmatpush1.bf16.msra.mxu0 0
    %2805 = vmatprep.subr.bf16.mxu0 0
    %2806 = vmatpush1.bf16.msra.mxu0 0
    %2807 = vmatprep.subr.bf16.mxu0 0
    %2808 = vmatpush1.bf16.msra.mxu0 0
    %2809 = vmatprep.subr.bf16.mxu0 0
    %2810 = vmatpush1.bf16.msra.mxu0 0
    %2811 = vmatprep.subr.bf16.mxu0 0
    %2812 = vmatpush1.bf16.msra.mxu0 0
    %2813 = vmatprep.subr.bf16.mxu0 0
    %2814 = vmatpush1.bf16.msra.mxu0 0
    %2815 = vmatprep.mubr.bf16.mxu0 0
    %2816 = vmatmul.mubr.bf16.gmra.mrb[0].mxu0 %v1611
    %v2817 = vpop.f32.mrb[0].mxu0
    %v2818 = vadd.f32 0.0, %v2817
    %v2819 = vpop.f32.mrb[0].mxu0
    %v2820 = vpop.f32.mrb[0].mxu0
    %v2821 = vadd.f32 0.0, %v2820
    %v2822 = vpop.f32.mrb[0].mxu0
    %2823 = vmatprep.mubr.bf16.mxu0 0
    %2824 = vmatmul.mubr.bf16.gmra.mrb[0].mxu0 %v1614
    %v2825 = vpop.f32.mrb[0].mxu0
    %v2826 = vadd.f32 0.0, %v2825
    %v2827 = vpop.f32.mrb[0].mxu0
    %v2828 = vpop.f32.mrb[0].mxu0
    %v2829 = vadd.f32 0.0, %v2828
    %v2830 = vpop.f32.mrb[0].mxu0
    %2831 = vmatprep.mubr.bf16.mxu0 0
    %2832 = vmatmul.mubr.bf16.gmra.mrb[0].mxu0 %v1617
    %v2833 = vpop.f32.mrb[0].mxu0
    %v2834 = vadd.f32 0.0, %v2833
    %v2835 = vpop.f32.mrb[0].mxu0
    %v2836 = vpop.f32.mrb[0].mxu0
    %v2837 = vadd.f32 0.0, %v2836
    %v2838 = vpop.f32.mrb[0].mxu0
    %2839 = vmatprep.mubr.bf16.mxu0 0
    %2840 = vmatmul.mubr.bf16.gmra.mrb[0].mxu0 %v1620
    %v2841 = vpop.f32.mrb[0].mxu0
    %v2842 = vadd.f32 0.0, %v2841
    %v2843 = vpop.f32.mrb[0].mxu0
    %v2844 = vpop.f32.mrb[0].mxu0
    %v2845 = vadd.f32 0.0, %v2844
    %v2846 = vpop.f32.mrb[0].mxu0
    %2847 = vmatprep.mubr.bf16.mxu0 0
    %2848 = vmatmul.mubr.bf16.gmra.mrb[0].mxu0 %v1623
    %v2849 = vpop.f32.mrb[0].mxu0
    %v2850 = vadd.f32 0.0, %v2849
    %v2851 = vpop.f32.mrb[0].mxu0
    %v2852 = vpop.f32.mrb[0].mxu0
    %v2853 = vadd.f32 0.0, %v2852
    %v2854 = vpop.f32.mrb[0].mxu0
    %2855 = vmatprep.mubr.bf16.mxu0 0
    %2856 = vmatmul.mubr.bf16.gmra.mrb[0].mxu0 %v1626
    %v2857 = vpop.f32.mrb[0].mxu0
    %v2858 = vadd.f32 0.0, %v2857
    %v2859 = vpop.f32.mrb[0].mxu0
    %v2860 = vpop.f32.mrb[0].mxu0
    %v2861 = vadd.f32 0.0, %v2860
    %v2862 = vpop.f32.mrb[0].mxu0
    %2863 = vmatprep.mubr.bf16.mxu0 0
    %2864 = vmatmul.mubr.bf16.gmra.mrb[0].mxu0 %v1629
    %v2865 = vpop.f32.mrb[0].mxu0
    %v2866 = vadd.f32 0.0, %v2865
    %v2867 = vpop.f32.mrb[0].mxu0
    %v2868 = vpop.f32.mrb[0].mxu0
    %v2869 = vadd.f32 0.0, %v2868
    %v2870 = vpop.f32.mrb[0].mxu0
    %2871 = vmatprep.mubr.bf16.mxu0 0
    %2872 = vmatmul.mubr.bf16.gmra.mrb[0].mxu0 %v1632
    %v2873 = vpop.f32.mrb[0].mxu0
    %v2874 = vadd.f32 0.0, %v2873
    %v2875 = vpop.f32.mrb[0].mxu0
    %v2876 = vpop.f32.mrb[0].mxu0
    %v2877 = vadd.f32 0.0, %v2876
    %v2878 = vpop.f32.mrb[0].mxu0
    %2879 = vdwg.mxu0
    %v2880 = vadd.f32 %v2767, %v2818
    %v2881 = vadd.f32 %v2768, %v2821
    %v2882 = vadd.f32 %v2769, %v2826
    %v2883 = vadd.f32 %v2770, %v2829
    %v2884 = vadd.f32 %v2771, %v2834
    %v2885 = vadd.f32 %v2772, %v2837
    %v2886 = vadd.f32 %v2773, %v2842
    %v2887 = vadd.f32 %v2774, %v2845
    %v2888 = vadd.f32 %v2775, %v2850
    %v2889 = vadd.f32 %v2776, %v2853
    %v2890 = vadd.f32 %v2777, %v2858
    %v2891 = vadd.f32 %v2778, %v2861
    %v2892 = vadd.f32 %v2779, %v2866
    %v2893 = vadd.f32 %v2780, %v2869
    %v2894 = vadd.f32 %v2781, %v2874
    %v2895 = vadd.f32 %v2782, %v2877
    %v2896 = vxor.u32 %v2880, 2147483648
    %v2897 = vxor.u32 %v2881, 2147483648
    %v2898 = vxor.u32 %v2882, 2147483648
    %v2899 = vxor.u32 %v2883, 2147483648
    %v2900 = vxor.u32 %v2884, 2147483648
    %v2901 = vxor.u32 %v2885, 2147483648
    %v2902 = vxor.u32 %v2886, 2147483648
    %v2903 = vxor.u32 %v2887, 2147483648
    %v2904 = vxor.u32 %v2892, 2147483648
    %v2905 = vxor.u32 %v2893, 2147483648
    %v2906 = vxor.u32 %v2894, 2147483648
    %v2907 = vxor.u32 %v2895, 2147483648
    %v2908 = vmul.f32 %v2896, 1.442695
    %v2909 = vpow.pop %v2908
    %v2910 = vmul.f32 %v2897, 1.442695
    %v2911 = vpow.pop %v2910
    %v2912 = vmul.f32 %v2898, 1.442695
    %v2913 = vpow.pop %v2912
    %v2914 = vmul.f32 %v2899, 1.442695
    %v2915 = vpow.pop %v2914
    %v2916 = vmul.f32 %v2900, 1.442695
    %v2917 = vpow.pop %v2916
    %v2918 = vmul.f32 %v2901, 1.442695
    %v2919 = vpow.pop %v2918
    %v2920 = vmul.f32 %v2902, 1.442695
    %v2921 = vpow.pop %v2920
    %v2922 = vmul.f32 %v2903, 1.442695
    %v2923 = vpow.pop %v2922
    %v2924 = vmul.f32 %v2904, 1.442695
    %v2925 = vpow.pop %v2924
    %v2926 = vmul.f32 %v2905, 1.442695
    %v2927 = vpow.pop %v2926
    %v2928 = vmul.f32 %v2906, 1.442695
    %v2929 = vpow.pop %v2928
    %v2930 = vmul.f32 %v2907, 1.442695
    %v2931 = vpow.pop %v2930
    %v2932 = vadd.f32 %v2909, 1.0
    %v2933 = vadd.f32 %v2911, 1.0
    %v2934 = vadd.f32 %v2913, 1.0
    %v2935 = vadd.f32 %v2915, 1.0
    %v2936 = vadd.f32 %v2917, 1.0
    %v2937 = vadd.f32 %v2919, 1.0
    %v2938 = vadd.f32 %v2921, 1.0
    %v2939 = vadd.f32 %v2923, 1.0
    %v2940 = vadd.f32 %v2925, 1.0
    %v2941 = vadd.f32 %v2927, 1.0
    %v2942 = vadd.f32 %v2929, 1.0
    %v2943 = vadd.f32 %v2931, 1.0
    %v2944 = vrcp.pop %v2932
    %v2945 = vmul.f32 1.0, %v2944
    %v2946 = vrcp.pop %v2933
    %v2947 = vmul.f32 1.0, %v2946
    %v2948 = vrcp.pop %v2934
    %v2949 = vmul.f32 1.0, %v2948
    %v2950 = vrcp.pop %v2935
    %v2951 = vmul.f32 1.0, %v2950
    %v2952 = vrcp.pop %v2936
    %v2953 = vmul.f32 1.0, %v2952
    %v2954 = vrcp.pop %v2937
    %v2955 = vmul.f32 1.0, %v2954
    %v2956 = vrcp.pop %v2938
    %v2957 = vmul.f32 1.0, %v2956
    %v2958 = vrcp.pop %v2939
    %v2959 = vmul.f32 1.0, %v2958
    %v2960 = vrcp.pop %v2940
    %v2961 = vmul.f32 1.0, %v2960
    %v2962 = vrcp.pop %v2941
    %v2963 = vmul.f32 1.0, %v2962
    %v2964 = vrcp.pop %v2942
    %v2965 = vmul.f32 1.0, %v2964
    %v2966 = vrcp.pop %v2943
    %v2967 = vmul.f32 1.0, %v2966
    %v2968 = vtanh.pop %v2888
    %v2969 = vtanh.pop %v2889
    %v2970 = vtanh.pop %v2890
    %v2971 = vtanh.pop %v2891
    %v2972 = vmul.f32 %v2953, %v2750
    %v2973 = vmul.f32 %v2955, %v2751
    %v2974 = vmul.f32 %v2957, %v2752
    %v2975 = vmul.f32 %v2959, %v2753
    %v2976 = vmul.f32 %v2945, %v2968
    %v2977 = vmul.f32 %v2947, %v2969
    %v2978 = vmul.f32 %v2949, %v2970
    %v2979 = vmul.f32 %v2951, %v2971
    %v2980 = vadd.f32 %v2972, %v2976
    %v2981 = vadd.f32 %v2973, %v2977
    %v2982 = vadd.f32 %v2974, %v2978
    %v2983 = vadd.f32 %v2975, %v2979
    %v2984 = vtanh.pop %v2980
    %v2985 = vtanh.pop %v2981
    %v2986 = vtanh.pop %v2982
    %v2987 = vtanh.pop %v2983
    %v2988 = vmul.f32 %v2961, %v2984
    %v2989 = vmul.f32 %v2963, %v2985
    %v2990 = vmul.f32 %v2965, %v2986
    %v2991 = vmul.f32 %v2967, %v2987
    %v2992 = vpack.c.bf16 %v2989, %v2988
    %v2993 = vpack.c.bf16 %v2991, %v2990
    %s2994 = scalar_lea.vmem [#allocation3], 80
    %2995 = vst.msk [vmem:[%s2994] sm:$0xff] %vm507, %v2992
    %2996 = vst.msk [vmem:[%s2994 + $0x8] sm:$0xff] %vm507, %v2993
    %v2997 = vld [vmem:[%s1389] sm:$0xff]
    %v2998 = vld [vmem:[%s1389 + $0x8] sm:$0xff]
    %v2999 = vld [vmem:[%s1389 + $0x10] sm:$0xff]
    %v3000 = vld [vmem:[%s1389 + $0x18] sm:$0xff]
    %v3001 = vld [vmem:[%s1389 + $0x20] sm:$0xff]
    %v3002 = vld [vmem:[%s1389 + $0x28] sm:$0xff]
    %v3003 = vld [vmem:[%s1389 + $0x30] sm:$0xff]
    %v3004 = vld [vmem:[%s1389 + $0x38] sm:$0xff]
    %v3005 = vld [vmem:[%s1389 + $0x40] sm:$0xff]
    %v3006 = vld [vmem:[%s1389 + $0x48] sm:$0xff]
    %v3007 = vld [vmem:[%s1389 + $0x50] sm:$0xff]
    %v3008 = vld [vmem:[%s1389 + $0x58] sm:$0xff]
    %v3009 = vld [vmem:[%s1389 + $0x60] sm:$0xff]
    %v3010 = vld [vmem:[%s1389 + $0x68] sm:$0xff]
    %v3011 = vld [vmem:[%s1389 + $0x70] sm:$0xff]
    %v3012 = vld [vmem:[%s1389 + $0x78] sm:$0xff]
    %3013 = vmatprep.subr.bf16.mxu0 0
    %3014 = vmatpush1.bf16.msra.mxu0 %v2992
    %3015 = vmatprep.subr.bf16.mxu0 0
    %3016 = vmatpush1.bf16.msra.mxu0 %v2993
    %3017 = vmatprep.subr.bf16.mxu0 0
    %3018 = vmatpush1.bf16.msra.mxu0 0
    %3019 = vmatprep.subr.bf16.mxu0 0
    %3020 = vmatpush1.bf16.msra.mxu0 0
    %3021 = vmatprep.subr.bf16.mxu0 0
    %3022 = vmatpush1.bf16.msra.mxu0 0
    %3023 = vmatprep.subr.bf16.mxu0 0
    %3024 = vmatpush1.bf16.msra.mxu0 0
    %3025 = vmatprep.subr.bf16.mxu0 0
    %3026 = vmatpush1.bf16.msra.mxu0 0
    %3027 = vmatprep.subr.bf16.mxu0 0
    %3028 = vmatpush1.bf16.msra.mxu0 0
    %3029 = vmatprep.subr.bf16.mxu0 0
    %3030 = vmatpush1.bf16.msra.mxu0 0
    %3031 = vmatprep.subr.bf16.mxu0 0
    %3032 = vmatpush1.bf16.msra.mxu0 0
    %3033 = vmatprep.subr.bf16.mxu0 0
    %3034 = vmatpush1.bf16.msra.mxu0 0
    %3035 = vmatprep.subr.bf16.mxu0 0
    %3036 = vmatpush1.bf16.msra.mxu0 0
    %3037 = vmatprep.subr.bf16.mxu0 0
    %3038 = vmatpush1.bf16.msra.mxu0 0
    %3039 = vmatprep.subr.bf16.mxu0 0
    %3040 = vmatpush1.bf16.msra.mxu0 0
    %3041 = vmatprep.subr.bf16.mxu0 0
    %3042 = vmatpush1.bf16.msra.mxu0 0
    %3043 = vmatprep.subr.bf16.mxu0 0
    %3044 = vmatpush1.bf16.msra.mxu0 0
    %3045 = vmatprep.mubr.bf16.mxu0 0
    %3046 = vmatmul.mubr.bf16.gmra.mrb[0].mxu0 %v1611
    %v3047 = vpop.f32.mrb[0].mxu0
    %v3048 = vadd.f32 0.0, %v3047
    %v3049 = vpop.f32.mrb[0].mxu0
    %v3050 = vpop.f32.mrb[0].mxu0
    %v3051 = vadd.f32 0.0, %v3050
    %v3052 = vpop.f32.mrb[0].mxu0
    %3053 = vmatprep.mubr.bf16.mxu0 0
    %3054 = vmatmul.mubr.bf16.gmra.mrb[0].mxu0 %v1614
    %v3055 = vpop.f32.mrb[0].mxu0
    %v3056 = vadd.f32 0.0, %v3055
    %v3057 = vpop.f32.mrb[0].mxu0
    %v3058 = vpop.f32.mrb[0].mxu0
    %v3059 = vadd.f32 0.0, %v3058
    %v3060 = vpop.f32.mrb[0].mxu0
    %3061 = vmatprep.mubr.bf16.mxu0 0
    %3062 = vmatmul.mubr.bf16.gmra.mrb[0].mxu0 %v1617
    %v3063 = vpop.f32.mrb[0].mxu0
    %v3064 = vadd.f32 0.0, %v3063
    %v3065 = vpop.f32.mrb[0].mxu0
    %v3066 = vpop.f32.mrb[0].mxu0
    %v3067 = vadd.f32 0.0, %v3066
    %v3068 = vpop.f32.mrb[0].mxu0
    %3069 = vmatprep.mubr.bf16.mxu0 0
    %3070 = vmatmul.mubr.bf16.gmra.mrb[0].mxu0 %v1620
    %v3071 = vpop.f32.mrb[0].mxu0
    %v3072 = vadd.f32 0.0, %v3071
    %v3073 = vpop.f32.mrb[0].mxu0
    %v3074 = vpop.f32.mrb[0].mxu0
    %v3075 = vadd.f32 0.0, %v3074
    %v3076 = vpop.f32.mrb[0].mxu0
    %3077 = vmatprep.mubr.bf16.mxu0 0
    %3078 = vmatmul.mubr.bf16.gmra.mrb[0].mxu0 %v1623
    %v3079 = vpop.f32.mrb[0].mxu0
    %v3080 = vadd.f32 0.0, %v3079
    %v3081 = vpop.f32.mrb[0].mxu0
    %v3082 = vpop.f32.mrb[0].mxu0
    %v3083 = vadd.f32 0.0, %v3082
    %v3084 = vpop.f32.mrb[0].mxu0
    %3085 = vmatprep.mubr.bf16.mxu0 0
    %3086 = vmatmul.mubr.bf16.gmra.mrb[0].mxu0 %v1626
    %v3087 = vpop.f32.mrb[0].mxu0
    %v3088 = vadd.f32 0.0, %v3087
    %v3089 = vpop.f32.mrb[0].mxu0
    %v3090 = vpop.f32.mrb[0].mxu0
    %v3091 = vadd.f32 0.0, %v3090
    %v3092 = vpop.f32.mrb[0].mxu0
    %3093 = vmatprep.mubr.bf16.mxu0 0
    %3094 = vmatmul.mubr.bf16.gmra.mrb[0].mxu0 %v1629
    %v3095 = vpop.f32.mrb[0].mxu0
    %v3096 = vadd.f32 0.0, %v3095
    %v3097 = vpop.f32.mrb[0].mxu0
    %v3098 = vpop.f32.mrb[0].mxu0
    %v3099 = vadd.f32 0.0, %v3098
    %v3100 = vpop.f32.mrb[0].mxu0
    %3101 = vmatprep.mubr.bf16.mxu0 0
    %3102 = vmatmul.mubr.bf16.gmra.mrb[0].mxu0 %v1632
    %v3103 = vpop.f32.mrb[0].mxu0
    %v3104 = vadd.f32 0.0, %v3103
    %v3105 = vpop.f32.mrb[0].mxu0
    %v3106 = vpop.f32.mrb[0].mxu0
    %v3107 = vadd.f32 0.0, %v3106
    %v3108 = vpop.f32.mrb[0].mxu0
    %3109 = vdwg.mxu0
    %v3110 = vadd.f32 %v2997, %v3048
    %v3111 = vadd.f32 %v2998, %v3051
    %v3112 = vadd.f32 %v2999, %v3056
    %v3113 = vadd.f32 %v3000, %v3059
    %v3114 = vadd.f32 %v3001, %v3064
    %v3115 = vadd.f32 %v3002, %v3067
    %v3116 = vadd.f32 %v3003, %v3072
    %v3117 = vadd.f32 %v3004, %v3075
    %v3118 = vadd.f32 %v3005, %v3080
    %v3119 = vadd.f32 %v3006, %v3083
    %v3120 = vadd.f32 %v3007, %v3088
    %v3121 = vadd.f32 %v3008, %v3091
    %v3122 = vadd.f32 %v3009, %v3096
    %v3123 = vadd.f32 %v3010, %v3099
    %v3124 = vadd.f32 %v3011, %v3104
    %v3125 = vadd.f32 %v3012, %v3107
    %v3126 = vxor.u32 %v3110, 2147483648
    %v3127 = vxor.u32 %v3111, 2147483648
    %v3128 = vxor.u32 %v3112, 2147483648
    %v3129 = vxor.u32 %v3113, 2147483648
    %v3130 = vxor.u32 %v3114, 2147483648
    %v3131 = vxor.u32 %v3115, 2147483648
    %v3132 = vxor.u32 %v3116, 2147483648
    %v3133 = vxor.u32 %v3117, 2147483648
    %v3134 = vxor.u32 %v3122, 2147483648
    %v3135 = vxor.u32 %v3123, 2147483648
    %v3136 = vxor.u32 %v3124, 2147483648
    %v3137 = vxor.u32 %v3125, 2147483648
    %v3138 = vmul.f32 %v3126, 1.442695
    %v3139 = vpow.pop %v3138
    %v3140 = vmul.f32 %v3127, 1.442695
    %v3141 = vpow.pop %v3140
    %v3142 = vmul.f32 %v3128, 1.442695
    %v3143 = vpow.pop %v3142
    %v3144 = vmul.f32 %v3129, 1.442695
    %v3145 = vpow.pop %v3144
    %v3146 = vmul.f32 %v3130, 1.442695
    %v3147 = vpow.pop %v3146
    %v3148 = vmul.f32 %v3131, 1.442695
    %v3149 = vpow.pop %v3148
    %v3150 = vmul.f32 %v3132, 1.442695
    %v3151 = vpow.pop %v3150
    %v3152 = vmul.f32 %v3133, 1.442695
    %v3153 = vpow.pop %v3152
    %v3154 = vmul.f32 %v3134, 1.442695
    %v3155 = vpow.pop %v3154
    %v3156 = vmul.f32 %v3135, 1.442695
    %v3157 = vpow.pop %v3156
    %v3158 = vmul.f32 %v3136, 1.442695
    %v3159 = vpow.pop %v3158
    %v3160 = vmul.f32 %v3137, 1.442695
    %v3161 = vpow.pop %v3160
    %v3162 = vadd.f32 %v3139, 1.0
    %v3163 = vadd.f32 %v3141, 1.0
    %v3164 = vadd.f32 %v3143, 1.0
    %v3165 = vadd.f32 %v3145, 1.0
    %v3166 = vadd.f32 %v3147, 1.0
    %v3167 = vadd.f32 %v3149, 1.0
    %v3168 = vadd.f32 %v3151, 1.0
    %v3169 = vadd.f32 %v3153, 1.0
    %v3170 = vadd.f32 %v3155, 1.0
    %v3171 = vadd.f32 %v3157, 1.0
    %v3172 = vadd.f32 %v3159, 1.0
    %v3173 = vadd.f32 %v3161, 1.0
    %v3174 = vrcp.pop %v3162
    %v3175 = vmul.f32 1.0, %v3174
    %v3176 = vrcp.pop %v3163
    %v3177 = vmul.f32 1.0, %v3176
    %v3178 = vrcp.pop %v3164
    %v3179 = vmul.f32 1.0, %v3178
    %v3180 = vrcp.pop %v3165
    %v3181 = vmul.f32 1.0, %v3180
    %v3182 = vrcp.pop %v3166
    %v3183 = vmul.f32 1.0, %v3182
    %v3184 = vrcp.pop %v3167
    %v3185 = vmul.f32 1.0, %v3184
    %v3186 = vrcp.pop %v3168
    %v3187 = vmul.f32 1.0, %v3186
    %v3188 = vrcp.pop %v3169
    %v3189 = vmul.f32 1.0, %v3188
    %v3190 = vrcp.pop %v3170
    %v3191 = vmul.f32 1.0, %v3190
    %v3192 = vrcp.pop %v3171
    %v3193 = vmul.f32 1.0, %v3192
    %v3194 = vrcp.pop %v3172
    %v3195 = vmul.f32 1.0, %v3194
    %v3196 = vrcp.pop %v3173
    %v3197 = vmul.f32 1.0, %v3196
    %v3198 = vtanh.pop %v3118
    %v3199 = vtanh.pop %v3119
    %v3200 = vtanh.pop %v3120
    %v3201 = vtanh.pop %v3121
    %v3202 = vmul.f32 %v3183, %v2980
    %v3203 = vmul.f32 %v3185, %v2981
    %v3204 = vmul.f32 %v3187, %v2982
    %v3205 = vmul.f32 %v3189, %v2983
    %v3206 = vmul.f32 %v3175, %v3198
    %v3207 = vmul.f32 %v3177, %v3199
    %v3208 = vmul.f32 %v3179, %v3200
    %v3209 = vmul.f32 %v3181, %v3201
    %v3210 = vadd.f32 %v3202, %v3206
    %v3211 = vadd.f32 %v3203, %v3207
    %v3212 = vadd.f32 %v3204, %v3208
    %v3213 = vadd.f32 %v3205, %v3209
    %v3214 = vtanh.pop %v3210
    %v3215 = vtanh.pop %v3211
    %v3216 = vtanh.pop %v3212
    %v3217 = vtanh.pop %v3213
    %v3218 = vmul.f32 %v3191, %v3214
    %v3219 = vmul.f32 %v3193, %v3215
    %v3220 = vmul.f32 %v3195, %v3216
    %v3221 = vmul.f32 %v3197, %v3217
    %v3222 = vpack.c.bf16 %v3219, %v3218
    %v3223 = vpack.c.bf16 %v3221, %v3220
    %s3224 = scalar_lea.vmem [#allocation3], 96
    %3225 = vst.msk [vmem:[%s3224] sm:$0xff] %vm507, %v3222
    %3226 = vst.msk [vmem:[%s3224 + $0x8] sm:$0xff] %vm507, %v3223
    %v3227 = vld [vmem:[%s1536] sm:$0xff]
    %v3228 = vld [vmem:[%s1536 + $0x8] sm:$0xff]
    %v3229 = vld [vmem:[%s1536 + $0x10] sm:$0xff]
    %v3230 = vld [vmem:[%s1536 + $0x18] sm:$0xff]
    %v3231 = vld [vmem:[%s1536 + $0x20] sm:$0xff]
    %v3232 = vld [vmem:[%s1536 + $0x28] sm:$0xff]
    %v3233 = vld [vmem:[%s1536 + $0x30] sm:$0xff]
    %v3234 = vld [vmem:[%s1536 + $0x38] sm:$0xff]
    %v3235 = vld [vmem:[%s1536 + $0x40] sm:$0xff]
    %v3236 = vld [vmem:[%s1536 + $0x48] sm:$0xff]
    %v3237 = vld [vmem:[%s1536 + $0x50] sm:$0xff]
    %v3238 = vld [vmem:[%s1536 + $0x58] sm:$0xff]
    %v3239 = vld [vmem:[%s1536 + $0x60] sm:$0xff]
    %v3240 = vld [vmem:[%s1536 + $0x68] sm:$0xff]
    %v3241 = vld [vmem:[%s1536 + $0x70] sm:$0xff]
    %v3242 = vld [vmem:[%s1536 + $0x78] sm:$0xff]
    %3243 = vmatprep.subr.bf16.mxu0 0
    %3244 = vmatpush1.bf16.msra.mxu0 %v3222
    %3245 = vmatprep.subr.bf16.mxu0 0
    %3246 = vmatpush1.bf16.msra.mxu0 %v3223
    %3247 = vmatprep.subr.bf16.mxu0 0
    %3248 = vmatpush1.bf16.msra.mxu0 0
    %3249 = vmatprep.subr.bf16.mxu0 0
    %3250 = vmatpush1.bf16.msra.mxu0 0
    %3251 = vmatprep.subr.bf16.mxu0 0
    %3252 = vmatpush1.bf16.msra.mxu0 0
    %3253 = vmatprep.subr.bf16.mxu0 0
    %3254 = vmatpush1.bf16.msra.mxu0 0
    %3255 = vmatprep.subr.bf16.mxu0 0
    %3256 = vmatpush1.bf16.msra.mxu0 0
    %3257 = vmatprep.subr.bf16.mxu0 0
    %3258 = vmatpush1.bf16.msra.mxu0 0
    %3259 = vmatprep.subr.bf16.mxu0 0
    %3260 = vmatpush1.bf16.msra.mxu0 0
    %3261 = vmatprep.subr.bf16.mxu0 0
    %3262 = vmatpush1.bf16.msra.mxu0 0
    %3263 = vmatprep.subr.bf16.mxu0 0
    %3264 = vmatpush1.bf16.msra.mxu0 0
    %3265 = vmatprep.subr.bf16.mxu0 0
    %3266 = vmatpush1.bf16.msra.mxu0 0
    %3267 = vmatprep.subr.bf16.mxu0 0
    %3268 = vmatpush1.bf16.msra.mxu0 0
    %3269 = vmatprep.subr.bf16.mxu0 0
    %3270 = vmatpush1.bf16.msra.mxu0 0
    %3271 = vmatprep.subr.bf16.mxu0 0
    %3272 = vmatpush1.bf16.msra.mxu0 0
    %3273 = vmatprep.subr.bf16.mxu0 0
    %3274 = vmatpush1.bf16.msra.mxu0 0
    %3275 = vmatprep.mubr.bf16.mxu0 0
    %3276 = vmatmul.mubr.bf16.gmra.mrb[0].mxu0 %v1611
    %v3277 = vpop.f32.mrb[0].mxu0
    %v3278 = vadd.f32 0.0, %v3277
    %v3279 = vpop.f32.mrb[0].mxu0
    %v3280 = vpop.f32.mrb[0].mxu0
    %v3281 = vadd.f32 0.0, %v3280
    %v3282 = vpop.f32.mrb[0].mxu0
    %3283 = vmatprep.mubr.bf16.mxu0 0
    %3284 = vmatmul.mubr.bf16.gmra.mrb[0].mxu0 %v1614
    %v3285 = vpop.f32.mrb[0].mxu0
    %v3286 = vadd.f32 0.0, %v3285
    %v3287 = vpop.f32.mrb[0].mxu0
    %v3288 = vpop.f32.mrb[0].mxu0
    %v3289 = vadd.f32 0.0, %v3288
    %v3290 = vpop.f32.mrb[0].mxu0
    %3291 = vmatprep.mubr.bf16.mxu0 0
    %3292 = vmatmul.mubr.bf16.gmra.mrb[0].mxu0 %v1617
    %v3293 = vpop.f32.mrb[0].mxu0
    %v3294 = vadd.f32 0.0, %v3293
    %v3295 = vpop.f32.mrb[0].mxu0
    %v3296 = vpop.f32.mrb[0].mxu0
    %v3297 = vadd.f32 0.0, %v3296
    %v3298 = vpop.f32.mrb[0].mxu0
    %3299 = vmatprep.mubr.bf16.mxu0 0
    %3300 = vmatmul.mubr.bf16.gmra.mrb[0].mxu0 %v1620
    %v3301 = vpop.f32.mrb[0].mxu0
    %v3302 = vadd.f32 0.0, %v3301
    %v3303 = vpop.f32.mrb[0].mxu0
    %v3304 = vpop.f32.mrb[0].mxu0
    %v3305 = vadd.f32 0.0, %v3304
    %v3306 = vpop.f32.mrb[0].mxu0
    %3307 = vmatprep.mubr.bf16.mxu0 0
    %3308 = vmatmul.mubr.bf16.gmra.mrb[0].mxu0 %v1623
    %v3309 = vpop.f32.mrb[0].mxu0
    %v3310 = vadd.f32 0.0, %v3309
    %v3311 = vpop.f32.mrb[0].mxu0
    %v3312 = vpop.f32.mrb[0].mxu0
    %v3313 = vadd.f32 0.0, %v3312
    %v3314 = vpop.f32.mrb[0].mxu0
    %3315 = vmatprep.mubr.bf16.mxu0 0
    %3316 = vmatmul.mubr.bf16.gmra.mrb[0].mxu0 %v1626
    %v3317 = vpop.f32.mrb[0].mxu0
    %v3318 = vadd.f32 0.0, %v3317
    %v3319 = vpop.f32.mrb[0].mxu0
    %v3320 = vpop.f32.mrb[0].mxu0
    %v3321 = vadd.f32 0.0, %v3320
    %v3322 = vpop.f32.mrb[0].mxu0
    %3323 = vmatprep.mubr.bf16.mxu0 0
    %3324 = vmatmul.mubr.bf16.gmra.mrb[0].mxu0 %v1629
    %v3325 = vpop.f32.mrb[0].mxu0
    %v3326 = vadd.f32 0.0, %v3325
    %v3327 = vpop.f32.mrb[0].mxu0
    %v3328 = vpop.f32.mrb[0].mxu0
    %v3329 = vadd.f32 0.0, %v3328
    %v3330 = vpop.f32.mrb[0].mxu0
    %3331 = vmatprep.mubr.bf16.mxu0 0
    %3332 = vmatmul.mubr.bf16.gmra.mrb[0].mxu0 %v1632
    %v3333 = vpop.f32.mrb[0].mxu0
    %v3334 = vadd.f32 0.0, %v3333
    %v3335 = vpop.f32.mrb[0].mxu0
    %v3336 = vpop.f32.mrb[0].mxu0
    %v3337 = vadd.f32 0.0, %v3336
    %v3338 = vpop.f32.mrb[0].mxu0
    %3339 = vdwg.mxu0
    %v3340 = vadd.f32 %v3227, %v3278
    %v3341 = vadd.f32 %v3228, %v3281
    %v3342 = vadd.f32 %v3229, %v3286
    %v3343 = vadd.f32 %v3230, %v3289
    %v3344 = vadd.f32 %v3231, %v3294
    %v3345 = vadd.f32 %v3232, %v3297
    %v3346 = vadd.f32 %v3233, %v3302
    %v3347 = vadd.f32 %v3234, %v3305
    %v3348 = vadd.f32 %v3235, %v3310
    %v3349 = vadd.f32 %v3236, %v3313
    %v3350 = vadd.f32 %v3237, %v3318
    %v3351 = vadd.f32 %v3238, %v3321
    %v3352 = vadd.f32 %v3239, %v3326
    %v3353 = vadd.f32 %v3240, %v3329
    %v3354 = vadd.f32 %v3241, %v3334
    %v3355 = vadd.f32 %v3242, %v3337
    %v3356 = vxor.u32 %v3340, 2147483648
    %v3357 = vxor.u32 %v3341, 2147483648
    %v3358 = vxor.u32 %v3342, 2147483648
    %v3359 = vxor.u32 %v3343, 2147483648
    %v3360 = vxor.u32 %v3344, 2147483648
    %v3361 = vxor.u32 %v3345, 2147483648
    %v3362 = vxor.u32 %v3346, 2147483648
    %v3363 = vxor.u32 %v3347, 2147483648
    %v3364 = vxor.u32 %v3352, 2147483648
    %v3365 = vxor.u32 %v3353, 2147483648
    %v3366 = vxor.u32 %v3354, 2147483648
    %v3367 = vxor.u32 %v3355, 2147483648
    %v3368 = vmul.f32 %v3356, 1.442695
    %v3369 = vpow.pop %v3368
    %v3370 = vmul.f32 %v3357, 1.442695
    %v3371 = vpow.pop %v3370
    %v3372 = vmul.f32 %v3358, 1.442695
    %v3373 = vpow.pop %v3372
    %v3374 = vmul.f32 %v3359, 1.442695
    %v3375 = vpow.pop %v3374
    %v3376 = vmul.f32 %v3360, 1.442695
    %v3377 = vpow.pop %v3376
    %v3378 = vmul.f32 %v3361, 1.442695
    %v3379 = vpow.pop %v3378
    %v3380 = vmul.f32 %v3362, 1.442695
    %v3381 = vpow.pop %v3380
    %v3382 = vmul.f32 %v3363, 1.442695
    %v3383 = vpow.pop %v3382
    %v3384 = vmul.f32 %v3364, 1.442695
    %v3385 = vpow.pop %v3384
    %v3386 = vmul.f32 %v3365, 1.442695
    %v3387 = vpow.pop %v3386
    %v3388 = vmul.f32 %v3366, 1.442695
    %v3389 = vpow.pop %v3388
    %v3390 = vmul.f32 %v3367, 1.442695
    %v3391 = vpow.pop %v3390
    %v3392 = vadd.f32 %v3369, 1.0
    %v3393 = vadd.f32 %v3371, 1.0
    %v3394 = vadd.f32 %v3373, 1.0
    %v3395 = vadd.f32 %v3375, 1.0
    %v3396 = vadd.f32 %v3377, 1.0
    %v3397 = vadd.f32 %v3379, 1.0
    %v3398 = vadd.f32 %v3381, 1.0
    %v3399 = vadd.f32 %v3383, 1.0
    %v3400 = vadd.f32 %v3385, 1.0
    %v3401 = vadd.f32 %v3387, 1.0
    %v3402 = vadd.f32 %v3389, 1.0
    %v3403 = vadd.f32 %v3391, 1.0
    %v3404 = vrcp.pop %v3392
    %v3405 = vmul.f32 1.0, %v3404
    %v3406 = vrcp.pop %v3393
    %v3407 = vmul.f32 1.0, %v3406
    %v3408 = vrcp.pop %v3394
    %v3409 = vmul.f32 1.0, %v3408
    %v3410 = vrcp.pop %v3395
    %v3411 = vmul.f32 1.0, %v3410
    %v3412 = vrcp.pop %v3396
    %v3413 = vmul.f32 1.0, %v3412
    %v3414 = vrcp.pop %v3397
    %v3415 = vmul.f32 1.0, %v3414
    %v3416 = vrcp.pop %v3398
    %v3417 = vmul.f32 1.0, %v3416
    %v3418 = vrcp.pop %v3399
    %v3419 = vmul.f32 1.0, %v3418
    %v3420 = vrcp.pop %v3400
    %v3421 = vmul.f32 1.0, %v3420
    %v3422 = vrcp.pop %v3401
    %v3423 = vmul.f32 1.0, %v3422
    %v3424 = vrcp.pop %v3402
    %v3425 = vmul.f32 1.0, %v3424
    %v3426 = vrcp.pop %v3403
    %v3427 = vmul.f32 1.0, %v3426
    %v3428 = vtanh.pop %v3348
    %v3429 = vtanh.pop %v3349
    %v3430 = vtanh.pop %v3350
    %v3431 = vtanh.pop %v3351
    %v3432 = vmul.f32 %v3413, %v3210
    %v3433 = vmul.f32 %v3415, %v3211
    %v3434 = vmul.f32 %v3417, %v3212
    %v3435 = vmul.f32 %v3419, %v3213
    %v3436 = vmul.f32 %v3405, %v3428
    %v3437 = vmul.f32 %v3407, %v3429
    %v3438 = vmul.f32 %v3409, %v3430
    %v3439 = vmul.f32 %v3411, %v3431
    %v3440 = vadd.f32 %v3432, %v3436
    %v3441 = vadd.f32 %v3433, %v3437
    %v3442 = vadd.f32 %v3434, %v3438
    %v3443 = vadd.f32 %v3435, %v3439
    %v3444 = vtanh.pop %v3440
    %v3445 = vtanh.pop %v3441
    %v3446 = vtanh.pop %v3442
    %v3447 = vtanh.pop %v3443
    %v3448 = vmul.f32 %v3421, %v3444
    %v3449 = vmul.f32 %v3423, %v3445
    %v3450 = vmul.f32 %v3425, %v3446
    %v3451 = vmul.f32 %v3427, %v3447
    %v3452 = vpack.c.bf16 %v3449, %v3448
    %v3453 = vpack.c.bf16 %v3451, %v3450
    %s3454 = scalar_lea.vmem [#allocation3], 112
    %3455 = vst.msk [vmem:[%s3454] sm:$0xff] %vm507, %v3452
    %3456 = vst.msk [vmem:[%s3454 + $0x8] sm:$0xff] %vm507, %v3453
    %v3457 = vld [vmem:[#allocation9] sm:$0xf]
    %v3458 = vld [vmem:[#allocation9 + $0x4] sm:$0xf]
    %v3459 = vld [vmem:[#allocation9 + $0x8] sm:$0xf]
    %v3460 = vld [vmem:[#allocation9 + $0xc] sm:$0xf]
    %v3461 = vld [vmem:[#allocation9 + $0x10] sm:$0xf]
    %v3462 = vld [vmem:[#allocation9 + $0x14] sm:$0xf]
    %v3463 = vld [vmem:[#allocation9 + $0x18] sm:$0xf]
    %v3464 = vld [vmem:[#allocation9 + $0x1c] sm:$0xf]
    %v3465 = vld [vmem:[#allocation9 + $0x20] sm:$0xf]
    %v3466 = vld [vmem:[#allocation9 + $0x24] sm:$0xf]
    %v3467 = vld [vmem:[#allocation9 + $0x28] sm:$0xf]
    %v3468 = vld [vmem:[#allocation9 + $0x2c] sm:$0xf]
    %v3469 = vld [vmem:[#allocation9 + $0x30] sm:$0xf]
    %v3470 = vld [vmem:[#allocation9 + $0x34] sm:$0xf]
    %v3471 = vld [vmem:[#allocation9 + $0x38] sm:$0xf]
    %v3472 = vld [vmem:[#allocation9 + $0x3c] sm:$0xf]
    %v3473 = vld [vmem:[#allocation12] sm:$0xf]
    %v3474 = vld [vmem:[#allocation12 + $0x4] sm:$0xf]
    %v3475 = vld [vmem:[#allocation12 + $0x8] sm:$0xf]
    %v3476 = vld [vmem:[#allocation12 + $0xc] sm:$0xf]
    %v3477 = vld [vmem:[#allocation12 + $0x10] sm:$0xf]
    %v3478 = vld [vmem:[#allocation12 + $0x14] sm:$0xf]
    %v3479 = vld [vmem:[#allocation12 + $0x18] sm:$0xf]
    %v3480 = vld [vmem:[#allocation12 + $0x1c] sm:$0xf]
    %v3481 = vld [vmem:[#allocation12 + $0x20] sm:$0xf]
    %v3482 = vld [vmem:[#allocation12 + $0x24] sm:$0xf]
    %v3483 = vld [vmem:[#allocation12 + $0x28] sm:$0xf]
    %v3484 = vld [vmem:[#allocation12 + $0x2c] sm:$0xf]
    %v3485 = vld [vmem:[#allocation12 + $0x30] sm:$0xf]
    %v3486 = vld [vmem:[#allocation12 + $0x34] sm:$0xf]
    %v3487 = vld [vmem:[#allocation12 + $0x38] sm:$0xf]
    %v3488 = vld [vmem:[#allocation12 + $0x3c] sm:$0xf]
    %v3489 = vld [vmem:[#allocation15] sm:$0xff]
    %v3490 = vld [vmem:[#allocation15 + $0x8] sm:$0xff]
    %v3491 = vld [vmem:[#allocation15 + $0x10] sm:$0xff]
    %v3492 = vld [vmem:[#allocation15 + $0x18] sm:$0xff]
    %v3493 = vld [vmem:[#allocation15 + $0x20] sm:$0xff]
    %v3494 = vld [vmem:[#allocation15 + $0x28] sm:$0xff]
    %v3495 = vld [vmem:[#allocation15 + $0x30] sm:$0xff]
    %v3496 = vld [vmem:[#allocation15 + $0x38] sm:$0xff]
    %v3497 = vld [vmem:[#allocation15 + $0x40] sm:$0xff]
    %v3498 = vld [vmem:[#allocation15 + $0x48] sm:$0xff]
    %v3499 = vld [vmem:[#allocation15 + $0x50] sm:$0xff]
    %v3500 = vld [vmem:[#allocation15 + $0x58] sm:$0xff]
    %v3501 = vld [vmem:[#allocation15 + $0x60] sm:$0xff]
    %v3502 = vld [vmem:[#allocation15 + $0x68] sm:$0xff]
    %v3503 = vld [vmem:[#allocation15 + $0x70] sm:$0xff]
    %v3504 = vld [vmem:[#allocation15 + $0x78] sm:$0xff]
    %3506 = vset.pattern.permute.xlu0 0
    %3507 = vperm.xlu0 %3506, %v3489
    %v3508 = vpop.permute.xlu0 %3507
    %3511 = vset.pattern.permute.xlu0 0
    %3512 = vperm.xlu0 %3511, %v3490
    %v3513 = vpop.permute.xlu0 %3512
    %3516 = vset.pattern.permute.xlu0 0
    %3517 = vperm.xlu0 %3516, %v3491
    %v3518 = vpop.permute.xlu0 %3517
    %3521 = vset.pattern.permute.xlu0 0
    %3522 = vperm.xlu0 %3521, %v3492
    %v3523 = vpop.permute.xlu0 %3522
    %3526 = vset.pattern.permute.xlu0 0
    %3527 = vperm.xlu0 %3526, %v3493
    %v3528 = vpop.permute.xlu0 %3527
    %3531 = vset.pattern.permute.xlu0 0
    %3532 = vperm.xlu0 %3531, %v3494
    %v3533 = vpop.permute.xlu0 %3532
    %3536 = vset.pattern.permute.xlu0 0
    %3537 = vperm.xlu0 %3536, %v3495
    %v3538 = vpop.permute.xlu0 %3537
    %3541 = vset.pattern.permute.xlu0 0
    %3542 = vperm.xlu0 %3541, %v3496
    %v3543 = vpop.permute.xlu0 %3542
    %3546 = vset.pattern.permute.xlu0 0
    %3547 = vperm.xlu0 %3546, %v3497
    %v3548 = vpop.permute.xlu0 %3547
    %3551 = vset.pattern.permute.xlu0 0
    %3552 = vperm.xlu0 %3551, %v3498
    %v3553 = vpop.permute.xlu0 %3552
    %3556 = vset.pattern.permute.xlu0 0
    %3557 = vperm.xlu0 %3556, %v3499
    %v3558 = vpop.permute.xlu0 %3557
    %3561 = vset.pattern.permute.xlu0 0
    %3562 = vperm.xlu0 %3561, %v3500
    %v3563 = vpop.permute.xlu0 %3562
    %3566 = vset.pattern.permute.xlu0 0
    %3567 = vperm.xlu0 %3566, %v3501
    %v3568 = vpop.permute.xlu0 %3567
    %3571 = vset.pattern.permute.xlu0 0
    %3572 = vperm.xlu0 %3571, %v3502
    %v3573 = vpop.permute.xlu0 %3572
    %3576 = vset.pattern.permute.xlu0 0
    %3577 = vperm.xlu0 %3576, %v3503
    %v3578 = vpop.permute.xlu0 %3577
    %3581 = vset.pattern.permute.xlu0 0
    %3582 = vperm.xlu0 %3581, %v3504
    %v3583 = vpop.permute.xlu0 %3582
    %v3585 = vld [vmem:[#allocation3] sm:$0xff]
    %v3586 = vld [vmem:[#allocation3 + $0x8] sm:$0xff]
    %v3603 = vunpack.c.l.b16 %v3457
    %v3604 = vunpack.c.l.b16 %v3458
    %v3605 = vunpack.c.l.b16 %v3459
    %v3606 = vunpack.c.l.b16 %v3460
    %v3607 = vunpack.c.l.b16 %v3461
    %v3608 = vunpack.c.l.b16 %v3462
    %v3609 = vunpack.c.l.b16 %v3463
    %v3610 = vunpack.c.l.b16 %v3464
    %v3611 = vunpack.c.l.b16 %v3465
    %v3612 = vunpack.c.l.b16 %v3466
    %v3613 = vunpack.c.l.b16 %v3467
    %v3614 = vunpack.c.l.b16 %v3468
    %v3615 = vunpack.c.l.b16 %v3469
    %v3616 = vunpack.c.l.b16 %v3470
    %v3617 = vunpack.c.l.b16 %v3471
    %v3618 = vunpack.c.l.b16 %v3472
    %v3619 = vpack.c.b16 %v3604, %v3603
    %v3620 = vpack.c.b16 %v3606, %v3605
    %v3621 = vpack.c.b16 %v3608, %v3607
    %v3622 = vpack.c.b16 %v3610, %v3609
    %v3623 = vpack.c.b16 %v3612, %v3611
    %v3624 = vpack.c.b16 %v3614, %v3613
    %v3625 = vpack.c.b16 %v3616, %v3615
    %v3626 = vpack.c.b16 %v3618, %v3617
    %v3628 = vsel %vm1609, %v3619, 0
    %v3631 = vsel %vm1609, %v3620, 0
    %v3634 = vsel %vm1609, %v3621, 0
    %v3637 = vsel %vm1609, %v3622, 0
    %v3640 = vsel %vm1609, %v3623, 0
    %v3643 = vsel %vm1609, %v3624, 0
    %v3646 = vsel %vm1609, %v3625, 0
    %v3649 = vsel %vm1609, %v3626, 0
    %3651 = vmatprep.subr.bf16.mxu0 0
    %3652 = vmatpush1.bf16.msra.mxu0 %v3585
    %3653 = vmatprep.subr.bf16.mxu0 0
    %3654 = vmatpush1.bf16.msra.mxu0 %v3586
    %3655 = vmatprep.subr.bf16.mxu0 0
    %3656 = vmatpush1.bf16.msra.mxu0 0
    %3657 = vmatprep.subr.bf16.mxu0 0
    %3658 = vmatpush1.bf16.msra.mxu0 0
    %3659 = vmatprep.subr.bf16.mxu0 0
    %3660 = vmatpush1.bf16.msra.mxu0 0
    %3661 = vmatprep.subr.bf16.mxu0 0
    %3662 = vmatpush1.bf16.msra.mxu0 0
    %3663 = vmatprep.subr.bf16.mxu0 0
    %3664 = vmatpush1.bf16.msra.mxu0 0
    %3665 = vmatprep.subr.bf16.mxu0 0
    %3666 = vmatpush1.bf16.msra.mxu0 0
    %3667 = vmatprep.subr.bf16.mxu0 0
    %3668 = vmatpush1.bf16.msra.mxu0 0
    %3669 = vmatprep.subr.bf16.mxu0 0
    %3670 = vmatpush1.bf16.msra.mxu0 0
    %3671 = vmatprep.subr.bf16.mxu0 0
    %3672 = vmatpush1.bf16.msra.mxu0 0
    %3673 = vmatprep.subr.bf16.mxu0 0
    %3674 = vmatpush1.bf16.msra.mxu0 0
    %3675 = vmatprep.subr.bf16.mxu0 0
    %3676 = vmatpush1.bf16.msra.mxu0 0
    %3677 = vmatprep.subr.bf16.mxu0 0
    %3678 = vmatpush1.bf16.msra.mxu0 0
    %3679 = vmatprep.subr.bf16.mxu0 0
    %3680 = vmatpush1.bf16.msra.mxu0 0
    %3681 = vmatprep.subr.bf16.mxu0 0
    %3682 = vmatpush1.bf16.msra.mxu0 0
    %3683 = vmatprep.mubr.bf16.mxu0 0
    %3684 = vmatmul.mubr.bf16.gmra.mrb[0].mxu0 %v3628
    %v3685 = vpop.f32.mrb[0].mxu0
    %v3686 = vadd.f32 %v3508, %v3685
    %v3687 = vpop.f32.mrb[0].mxu0
    %v3688 = vpop.f32.mrb[0].mxu0
    %v3689 = vadd.f32 %v3513, %v3688
    %v3690 = vpop.f32.mrb[0].mxu0
    %3691 = vmatprep.mubr.bf16.mxu0 0
    %3692 = vmatmul.mubr.bf16.gmra.mrb[0].mxu0 %v3631
    %v3693 = vpop.f32.mrb[0].mxu0
    %v3694 = vadd.f32 %v3518, %v3693
    %v3695 = vpop.f32.mrb[0].mxu0
    %v3696 = vpop.f32.mrb[0].mxu0
    %v3697 = vadd.f32 %v3523, %v3696
    %v3698 = vpop.f32.mrb[0].mxu0
    %3699 = vmatprep.mubr.bf16.mxu0 0
    %3700 = vmatmul.mubr.bf16.gmra.mrb[0].mxu0 %v3634
    %v3701 = vpop.f32.mrb[0].mxu0
    %v3702 = vadd.f32 %v3528, %v3701
    %v3703 = vpop.f32.mrb[0].mxu0
    %v3704 = vpop.f32.mrb[0].mxu0
    %v3705 = vadd.f32 %v3533, %v3704
    %v3706 = vpop.f32.mrb[0].mxu0
    %3707 = vmatprep.mubr.bf16.mxu0 0
    %3708 = vmatmul.mubr.bf16.gmra.mrb[0].mxu0 %v3637
    %v3709 = vpop.f32.mrb[0].mxu0
    %v3710 = vadd.f32 %v3538, %v3709
    %v3711 = vpop.f32.mrb[0].mxu0
    %v3712 = vpop.f32.mrb[0].mxu0
    %v3713 = vadd.f32 %v3543, %v3712
    %v3714 = vpop.f32.mrb[0].mxu0
    %3715 = vmatprep.mubr.bf16.mxu0 0
    %3716 = vmatmul.mubr.bf16.gmra.mrb[0].mxu0 %v3640
    %v3717 = vpop.f32.mrb[0].mxu0
    %v3718 = vadd.f32 %v3548, %v3717
    %v3719 = vpop.f32.mrb[0].mxu0
    %v3720 = vpop.f32.mrb[0].mxu0
    %v3721 = vadd.f32 %v3553, %v3720
    %v3722 = vpop.f32.mrb[0].mxu0
    %3723 = vmatprep.mubr.bf16.mxu0 0
    %3724 = vmatmul.mubr.bf16.gmra.mrb[0].mxu0 %v3643
    %v3725 = vpop.f32.mrb[0].mxu0
    %v3726 = vadd.f32 %v3558, %v3725
    %v3727 = vpop.f32.mrb[0].mxu0
    %v3728 = vpop.f32.mrb[0].mxu0
    %v3729 = vadd.f32 %v3563, %v3728
    %v3730 = vpop.f32.mrb[0].mxu0
    %3731 = vmatprep.mubr.bf16.mxu0 0
    %3732 = vmatmul.mubr.bf16.gmra.mrb[0].mxu0 %v3646
    %v3733 = vpop.f32.mrb[0].mxu0
    %v3734 = vadd.f32 %v3568, %v3733
    %v3735 = vpop.f32.mrb[0].mxu0
    %v3736 = vpop.f32.mrb[0].mxu0
    %v3737 = vadd.f32 %v3573, %v3736
    %v3738 = vpop.f32.mrb[0].mxu0
    %3739 = vmatprep.mubr.bf16.mxu0 0
    %3740 = vmatmul.mubr.bf16.gmra.mrb[0].mxu0 %v3649
    %v3741 = vpop.f32.mrb[0].mxu0
    %v3742 = vadd.f32 %v3578, %v3741
    %v3743 = vpop.f32.mrb[0].mxu0
    %v3744 = vpop.f32.mrb[0].mxu0
    %v3745 = vadd.f32 %v3583, %v3744
    %v3746 = vpop.f32.mrb[0].mxu0
    %3747 = vdwg.mxu0
    %3748 = vst.msk [vmem:[#allocation2] sm:$0xff] %vm507, %v3686
    %3749 = vst.msk [vmem:[#allocation2 + $0x8] sm:$0xff] %vm507, %v3689
    %3750 = vst.msk [vmem:[#allocation2 + $0x10] sm:$0xff] %vm507, %v3694
    %3751 = vst.msk [vmem:[#allocation2 + $0x18] sm:$0xff] %vm507, %v3697
    %3752 = vst.msk [vmem:[#allocation2 + $0x20] sm:$0xff] %vm507, %v3702
    %3753 = vst.msk [vmem:[#allocation2 + $0x28] sm:$0xff] %vm507, %v3705
    %3754 = vst.msk [vmem:[#allocation2 + $0x30] sm:$0xff] %vm507, %v3710
    %3755 = vst.msk [vmem:[#allocation2 + $0x38] sm:$0xff] %vm507, %v3713
    %3756 = vst.msk [vmem:[#allocation2 + $0x40] sm:$0xff] %vm507, %v3718
    %3757 = vst.msk [vmem:[#allocation2 + $0x48] sm:$0xff] %vm507, %v3721
    %3758 = vst.msk [vmem:[#allocation2 + $0x50] sm:$0xff] %vm507, %v3726
    %3759 = vst.msk [vmem:[#allocation2 + $0x58] sm:$0xff] %vm507, %v3729
    %3760 = vst.msk [vmem:[#allocation2 + $0x60] sm:$0xff] %vm507, %v3734
    %3761 = vst.msk [vmem:[#allocation2 + $0x68] sm:$0xff] %vm507, %v3737
    %3762 = vst.msk [vmem:[#allocation2 + $0x70] sm:$0xff] %vm507, %v3742
    %3763 = vst.msk [vmem:[#allocation2 + $0x78] sm:$0xff] %vm507, %v3745
    %v3764 = vld [vmem:[%s2074] sm:$0xff]
    %v3765 = vld [vmem:[%s2074 + $0x8] sm:$0xff]
    %3766 = vmatprep.subr.bf16.mxu0 0
    %3767 = vmatpush1.bf16.msra.mxu0 %v3764
    %3768 = vmatprep.subr.bf16.mxu0 0
    %3769 = vmatpush1.bf16.msra.mxu0 %v3765
    %3770 = vmatprep.subr.bf16.mxu0 0
    %3771 = vmatpush1.bf16.msra.mxu0 0
    %3772 = vmatprep.subr.bf16.mxu0 0
    %3773 = vmatpush1.bf16.msra.mxu0 0
    %3774 = vmatprep.subr.bf16.mxu0 0
    %3775 = vmatpush1.bf16.msra.mxu0 0
    %3776 = vmatprep.subr.bf16.mxu0 0
    %3777 = vmatpush1.bf16.msra.mxu0 0
    %3778 = vmatprep.subr.bf16.mxu0 0
    %3779 = vmatpush1.bf16.msra.mxu0 0
    %3780 = vmatprep.subr.bf16.mxu0 0
    %3781 = vmatpush1.bf16.msra.mxu0 0
    %3782 = vmatprep.subr.bf16.mxu0 0
    %3783 = vmatpush1.bf16.msra.mxu0 0
    %3784 = vmatprep.subr.bf16.mxu0 0
    %3785 = vmatpush1.bf16.msra.mxu0 0
    %3786 = vmatprep.subr.bf16.mxu0 0
    %3787 = vmatpush1.bf16.msra.mxu0 0
    %3788 = vmatprep.subr.bf16.mxu0 0
    %3789 = vmatpush1.bf16.msra.mxu0 0
    %3790 = vmatprep.subr.bf16.mxu0 0
    %3791 = vmatpush1.bf16.msra.mxu0 0
    %3792 = vmatprep.subr.bf16.mxu0 0
    %3793 = vmatpush1.bf16.msra.mxu0 0
    %3794 = vmatprep.subr.bf16.mxu0 0
    %3795 = vmatpush1.bf16.msra.mxu0 0
    %3796 = vmatprep.subr.bf16.mxu0 0
    %3797 = vmatpush1.bf16.msra.mxu0 0
    %3798 = vmatprep.mubr.bf16.mxu0 0
    %3799 = vmatmul.mubr.bf16.gmra.mrb[0].mxu0 %v3628
    %v3800 = vpop.f32.mrb[0].mxu0
    %v3801 = vadd.f32 %v3508, %v3800
    %v3802 = vpop.f32.mrb[0].mxu0
    %v3803 = vpop.f32.mrb[0].mxu0
    %v3804 = vadd.f32 %v3513, %v3803
    %v3805 = vpop.f32.mrb[0].mxu0
    %3806 = vmatprep.mubr.bf16.mxu0 0
    %3807 = vmatmul.mubr.bf16.gmra.mrb[0].mxu0 %v3631
    %v3808 = vpop.f32.mrb[0].mxu0
    %v3809 = vadd.f32 %v3518, %v3808
    %v3810 = vpop.f32.mrb[0].mxu0
    %v3811 = vpop.f32.mrb[0].mxu0
    %v3812 = vadd.f32 %v3523, %v3811
    %v3813 = vpop.f32.mrb[0].mxu0
    %3814 = vmatprep.mubr.bf16.mxu0 0
    %3815 = vmatmul.mubr.bf16.gmra.mrb[0].mxu0 %v3634
    %v3816 = vpop.f32.mrb[0].mxu0
    %v3817 = vadd.f32 %v3528, %v3816
    %v3818 = vpop.f32.mrb[0].mxu0
    %v3819 = vpop.f32.mrb[0].mxu0
    %v3820 = vadd.f32 %v3533, %v3819
    %v3821 = vpop.f32.mrb[0].mxu0
    %3822 = vmatprep.mubr.bf16.mxu0 0
    %3823 = vmatmul.mubr.bf16.gmra.mrb[0].mxu0 %v3637
    %v3824 = vpop.f32.mrb[0].mxu0
    %v3825 = vadd.f32 %v3538, %v3824
    %v3826 = vpop.f32.mrb[0].mxu0
    %v3827 = vpop.f32.mrb[0].mxu0
    %v3828 = vadd.f32 %v3543, %v3827
    %v3829 = vpop.f32.mrb[0].mxu0
    %3830 = vmatprep.mubr.bf16.mxu0 0
    %3831 = vmatmul.mubr.bf16.gmra.mrb[0].mxu0 %v3640
    %v3832 = vpop.f32.mrb[0].mxu0
    %v3833 = vadd.f32 %v3548, %v3832
    %v3834 = vpop.f32.mrb[0].mxu0
    %v3835 = vpop.f32.mrb[0].mxu0
    %v3836 = vadd.f32 %v3553, %v3835
    %v3837 = vpop.f32.mrb[0].mxu0
    %3838 = vmatprep.mubr.bf16.mxu0 0
    %3839 = vmatmul.mubr.bf16.gmra.mrb[0].mxu0 %v3643
    %v3840 = vpop.f32.mrb[0].mxu0
    %v3841 = vadd.f32 %v3558, %v3840
    %v3842 = vpop.f32.mrb[0].mxu0
    %v3843 = vpop.f32.mrb[0].mxu0
    %v3844 = vadd.f32 %v3563, %v3843
    %v3845 = vpop.f32.mrb[0].mxu0
    %3846 = vmatprep.mubr.bf16.mxu0 0
    %3847 = vmatmul.mubr.bf16.gmra.mrb[0].mxu0 %v3646
    %v3848 = vpop.f32.mrb[0].mxu0
    %v3849 = vadd.f32 %v3568, %v3848
    %v3850 = vpop.f32.mrb[0].mxu0
    %v3851 = vpop.f32.mrb[0].mxu0
    %v3852 = vadd.f32 %v3573, %v3851
    %v3853 = vpop.f32.mrb[0].mxu0
    %3854 = vmatprep.mubr.bf16.mxu0 0
    %3855 = vmatmul.mubr.bf16.gmra.mrb[0].mxu0 %v3649
    %v3856 = vpop.f32.mrb[0].mxu0
    %v3857 = vadd.f32 %v3578, %v3856
    %v3858 = vpop.f32.mrb[0].mxu0
    %v3859 = vpop.f32.mrb[0].mxu0
    %v3860 = vadd.f32 %v3583, %v3859
    %v3861 = vpop.f32.mrb[0].mxu0
    %3862 = vdwg.mxu0
    %3863 = vst.msk [vmem:[%s654] sm:$0xff] %vm507, %v3801
    %3864 = vst.msk [vmem:[%s654 + $0x8] sm:$0xff] %vm507, %v3804
    %3865 = vst.msk [vmem:[%s654 + $0x10] sm:$0xff] %vm507, %v3809
    %3866 = vst.msk [vmem:[%s654 + $0x18] sm:$0xff] %vm507, %v3812
    %3867 = vst.msk [vmem:[%s654 + $0x20] sm:$0xff] %vm507, %v3817
    %3868 = vst.msk [vmem:[%s654 + $0x28] sm:$0xff] %vm507, %v3820
    %3869 = vst.msk [vmem:[%s654 + $0x30] sm:$0xff] %vm507, %v3825
    %3870 = vst.msk [vmem:[%s654 + $0x38] sm:$0xff] %vm507, %v3828
    %3871 = vst.msk [vmem:[%s654 + $0x40] sm:$0xff] %vm507, %v3833
    %3872 = vst.msk [vmem:[%s654 + $0x48] sm:$0xff] %vm507, %v3836
    %3873 = vst.msk [vmem:[%s654 + $0x50] sm:$0xff] %vm507, %v3841
    %3874 = vst.msk [vmem:[%s654 + $0x58] sm:$0xff] %vm507, %v3844
    %3875 = vst.msk [vmem:[%s654 + $0x60] sm:$0xff] %vm507, %v3849
    %3876 = vst.msk [vmem:[%s654 + $0x68] sm:$0xff] %vm507, %v3852
    %3877 = vst.msk [vmem:[%s654 + $0x70] sm:$0xff] %vm507, %v3857
    %3878 = vst.msk [vmem:[%s654 + $0x78] sm:$0xff] %vm507, %v3860
    %v3879 = vld [vmem:[%s2304] sm:$0xff]
    %v3880 = vld [vmem:[%s2304 + $0x8] sm:$0xff]
    %3881 = vmatprep.subr.bf16.mxu0 0
    %3882 = vmatpush1.bf16.msra.mxu0 %v3879
    %3883 = vmatprep.subr.bf16.mxu0 0
    %3884 = vmatpush1.bf16.msra.mxu0 %v3880
    %3885 = vmatprep.subr.bf16.mxu0 0
    %3886 = vmatpush1.bf16.msra.mxu0 0
    %3887 = vmatprep.subr.bf16.mxu0 0
    %3888 = vmatpush1.bf16.msra.mxu0 0
    %3889 = vmatprep.subr.bf16.mxu0 0
    %3890 = vmatpush1.bf16.msra.mxu0 0
    %3891 = vmatprep.subr.bf16.mxu0 0
    %3892 = vmatpush1.bf16.msra.mxu0 0
    %3893 = vmatprep.subr.bf16.mxu0 0
    %3894 = vmatpush1.bf16.msra.mxu0 0
    %3895 = vmatprep.subr.bf16.mxu0 0
    %3896 = vmatpush1.bf16.msra.mxu0 0
    %3897 = vmatprep.subr.bf16.mxu0 0
    %3898 = vmatpush1.bf16.msra.mxu0 0
    %3899 = vmatprep.subr.bf16.mxu0 0
    %3900 = vmatpush1.bf16.msra.mxu0 0
    %3901 = vmatprep.subr.bf16.mxu0 0
    %3902 = vmatpush1.bf16.msra.mxu0 0
    %3903 = vmatprep.subr.bf16.mxu0 0
    %3904 = vmatpush1.bf16.msra.mxu0 0
    %3905 = vmatprep.subr.bf16.mxu0 0
    %3906 = vmatpush1.bf16.msra.mxu0 0
    %3907 = vmatprep.subr.bf16.mxu0 0
    %3908 = vmatpush1.bf16.msra.mxu0 0
    %3909 = vmatprep.subr.bf16.mxu0 0
    %3910 = vmatpush1.bf16.msra.mxu0 0
    %3911 = vmatprep.subr.bf16.mxu0 0
    %3912 = vmatpush1.bf16.msra.mxu0 0
    %3913 = vmatprep.mubr.bf16.mxu0 0
    %3914 = vmatmul.mubr.bf16.gmra.mrb[0].mxu0 %v3628
    %v3915 = vpop.f32.mrb[0].mxu0
    %v3916 = vadd.f32 %v3508, %v3915
    %v3917 = vpop.f32.mrb[0].mxu0
    %v3918 = vpop.f32.mrb[0].mxu0
    %v3919 = vadd.f32 %v3513, %v3918
    %v3920 = vpop.f32.mrb[0].mxu0
    %3921 = vmatprep.mubr.bf16.mxu0 0
    %3922 = vmatmul.mubr.bf16.gmra.mrb[0].mxu0 %v3631
    %v3923 = vpop.f32.mrb[0].mxu0
    %v3924 = vadd.f32 %v3518, %v3923
    %v3925 = vpop.f32.mrb[0].mxu0
    %v3926 = vpop.f32.mrb[0].mxu0
    %v3927 = vadd.f32 %v3523, %v3926
    %v3928 = vpop.f32.mrb[0].mxu0
    %3929 = vmatprep.mubr.bf16.mxu0 0
    %3930 = vmatmul.mubr.bf16.gmra.mrb[0].mxu0 %v3634
    %v3931 = vpop.f32.mrb[0].mxu0
    %v3932 = vadd.f32 %v3528, %v3931
    %v3933 = vpop.f32.mrb[0].mxu0
    %v3934 = vpop.f32.mrb[0].mxu0
    %v3935 = vadd.f32 %v3533, %v3934
    %v3936 = vpop.f32.mrb[0].mxu0
    %3937 = vmatprep.mubr.bf16.mxu0 0
    %3938 = vmatmul.mubr.bf16.gmra.mrb[0].mxu0 %v3637
    %v3939 = vpop.f32.mrb[0].mxu0
    %v3940 = vadd.f32 %v3538, %v3939
    %v3941 = vpop.f32.mrb[0].mxu0
    %v3942 = vpop.f32.mrb[0].mxu0
    %v3943 = vadd.f32 %v3543, %v3942
    %v3944 = vpop.f32.mrb[0].mxu0
    %3945 = vmatprep.mubr.bf16.mxu0 0
    %3946 = vmatmul.mubr.bf16.gmra.mrb[0].mxu0 %v3640
    %v3947 = vpop.f32.mrb[0].mxu0
    %v3948 = vadd.f32 %v3548, %v3947
    %v3949 = vpop.f32.mrb[0].mxu0
    %v3950 = vpop.f32.mrb[0].mxu0
    %v3951 = vadd.f32 %v3553, %v3950
    %v3952 = vpop.f32.mrb[0].mxu0
    %3953 = vmatprep.mubr.bf16.mxu0 0
    %3954 = vmatmul.mubr.bf16.gmra.mrb[0].mxu0 %v3643
    %v3955 = vpop.f32.mrb[0].mxu0
    %v3956 = vadd.f32 %v3558, %v3955
    %v3957 = vpop.f32.mrb[0].mxu0
    %v3958 = vpop.f32.mrb[0].mxu0
    %v3959 = vadd.f32 %v3563, %v3958
    %v3960 = vpop.f32.mrb[0].mxu0
    %3961 = vmatprep.mubr.bf16.mxu0 0
    %3962 = vmatmul.mubr.bf16.gmra.mrb[0].mxu0 %v3646
    %v3963 = vpop.f32.mrb[0].mxu0
    %v3964 = vadd.f32 %v3568, %v3963
    %v3965 = vpop.f32.mrb[0].mxu0
    %v3966 = vpop.f32.mrb[0].mxu0
    %v3967 = vadd.f32 %v3573, %v3966
    %v3968 = vpop.f32.mrb[0].mxu0
    %3969 = vmatprep.mubr.bf16.mxu0 0
    %3970 = vmatmul.mubr.bf16.gmra.mrb[0].mxu0 %v3649
    %v3971 = vpop.f32.mrb[0].mxu0
    %v3972 = vadd.f32 %v3578, %v3971
    %v3973 = vpop.f32.mrb[0].mxu0
    %v3974 = vpop.f32.mrb[0].mxu0
    %v3975 = vadd.f32 %v3583, %v3974
    %v3976 = vpop.f32.mrb[0].mxu0
    %3977 = vdwg.mxu0
    %3978 = vst.msk [vmem:[%s801] sm:$0xff] %vm507, %v3916
    %3979 = vst.msk [vmem:[%s801 + $0x8] sm:$0xff] %vm507, %v3919
    %3980 = vst.msk [vmem:[%s801 + $0x10] sm:$0xff] %vm507, %v3924
    %3981 = vst.msk [vmem:[%s801 + $0x18] sm:$0xff] %vm507, %v3927
    %3982 = vst.msk [vmem:[%s801 + $0x20] sm:$0xff] %vm507, %v3932
    %3983 = vst.msk [vmem:[%s801 + $0x28] sm:$0xff] %vm507, %v3935
    %3984 = vst.msk [vmem:[%s801 + $0x30] sm:$0xff] %vm507, %v3940
    %3985 = vst.msk [vmem:[%s801 + $0x38] sm:$0xff] %vm507, %v3943
    %3986 = vst.msk [vmem:[%s801 + $0x40] sm:$0xff] %vm507, %v3948
    %3987 = vst.msk [vmem:[%s801 + $0x48] sm:$0xff] %vm507, %v3951
    %3988 = vst.msk [vmem:[%s801 + $0x50] sm:$0xff] %vm507, %v3956
    %3989 = vst.msk [vmem:[%s801 + $0x58] sm:$0xff] %vm507, %v3959
    %3990 = vst.msk [vmem:[%s801 + $0x60] sm:$0xff] %vm507, %v3964
    %3991 = vst.msk [vmem:[%s801 + $0x68] sm:$0xff] %vm507, %v3967
    %3992 = vst.msk [vmem:[%s801 + $0x70] sm:$0xff] %vm507, %v3972
    %3993 = vst.msk [vmem:[%s801 + $0x78] sm:$0xff] %vm507, %v3975
    %v3994 = vld [vmem:[%s2534] sm:$0xff]
    %v3995 = vld [vmem:[%s2534 + $0x8] sm:$0xff]
    %3996 = vmatprep.subr.bf16.mxu0 0
    %3997 = vmatpush1.bf16.msra.mxu0 %v3994
    %3998 = vmatprep.subr.bf16.mxu0 0
    %3999 = vmatpush1.bf16.msra.mxu0 %v3995
    %4000 = vmatprep.subr.bf16.mxu0 0
    %4001 = vmatpush1.bf16.msra.mxu0 0
    %4002 = vmatprep.subr.bf16.mxu0 0
    %4003 = vmatpush1.bf16.msra.mxu0 0
    %4004 = vmatprep.subr.bf16.mxu0 0
    %4005 = vmatpush1.bf16.msra.mxu0 0
    %4006 = vmatprep.subr.bf16.mxu0 0
    %4007 = vmatpush1.bf16.msra.mxu0 0
    %4008 = vmatprep.subr.bf16.mxu0 0
    %4009 = vmatpush1.bf16.msra.mxu0 0
    %4010 = vmatprep.subr.bf16.mxu0 0
    %4011 = vmatpush1.bf16.msra.mxu0 0
    %4012 = vmatprep.subr.bf16.mxu0 0
    %4013 = vmatpush1.bf16.msra.mxu0 0
    %4014 = vmatprep.subr.bf16.mxu0 0
    %4015 = vmatpush1.bf16.msra.mxu0 0
    %4016 = vmatprep.subr.bf16.mxu0 0
    %4017 = vmatpush1.bf16.msra.mxu0 0
    %4018 = vmatprep.subr.bf16.mxu0 0
    %4019 = vmatpush1.bf16.msra.mxu0 0
    %4020 = vmatprep.subr.bf16.mxu0 0
    %4021 = vmatpush1.bf16.msra.mxu0 0
    %4022 = vmatprep.subr.bf16.mxu0 0
    %4023 = vmatpush1.bf16.msra.mxu0 0
    %4024 = vmatprep.subr.bf16.mxu0 0
    %4025 = vmatpush1.bf16.msra.mxu0 0
    %4026 = vmatprep.subr.bf16.mxu0 0
    %4027 = vmatpush1.bf16.msra.mxu0 0
    %4028 = vmatprep.mubr.bf16.mxu0 0
    %4029 = vmatmul.mubr.bf16.gmra.mrb[0].mxu0 %v3628
    %v4030 = vpop.f32.mrb[0].mxu0
    %v4031 = vadd.f32 %v3508, %v4030
    %v4032 = vpop.f32.mrb[0].mxu0
    %v4033 = vpop.f32.mrb[0].mxu0
    %v4034 = vadd.f32 %v3513, %v4033
    %v4035 = vpop.f32.mrb[0].mxu0
    %4036 = vmatprep.mubr.bf16.mxu0 0
    %4037 = vmatmul.mubr.bf16.gmra.mrb[0].mxu0 %v3631
    %v4038 = vpop.f32.mrb[0].mxu0
    %v4039 = vadd.f32 %v3518, %v4038
    %v4040 = vpop.f32.mrb[0].mxu0
    %v4041 = vpop.f32.mrb[0].mxu0
    %v4042 = vadd.f32 %v3523, %v4041
    %v4043 = vpop.f32.mrb[0].mxu0
    %4044 = vmatprep.mubr.bf16.mxu0 0
    %4045 = vmatmul.mubr.bf16.gmra.mrb[0].mxu0 %v3634
    %v4046 = vpop.f32.mrb[0].mxu0
    %v4047 = vadd.f32 %v3528, %v4046
    %v4048 = vpop.f32.mrb[0].mxu0
    %v4049 = vpop.f32.mrb[0].mxu0
    %v4050 = vadd.f32 %v3533, %v4049
    %v4051 = vpop.f32.mrb[0].mxu0
    %4052 = vmatprep.mubr.bf16.mxu0 0
    %4053 = vmatmul.mubr.bf16.gmra.mrb[0].mxu0 %v3637
    %v4054 = vpop.f32.mrb[0].mxu0
    %v4055 = vadd.f32 %v3538, %v4054
    %v4056 = vpop.f32.mrb[0].mxu0
    %v4057 = vpop.f32.mrb[0].mxu0
    %v4058 = vadd.f32 %v3543, %v4057
    %v4059 = vpop.f32.mrb[0].mxu0
    %4060 = vmatprep.mubr.bf16.mxu0 0
    %4061 = vmatmul.mubr.bf16.gmra.mrb[0].mxu0 %v3640
    %v4062 = vpop.f32.mrb[0].mxu0
    %v4063 = vadd.f32 %v3548, %v4062
    %v4064 = vpop.f32.mrb[0].mxu0
    %v4065 = vpop.f32.mrb[0].mxu0
    %v4066 = vadd.f32 %v3553, %v4065
    %v4067 = vpop.f32.mrb[0].mxu0
    %4068 = vmatprep.mubr.bf16.mxu0 0
    %4069 = vmatmul.mubr.bf16.gmra.mrb[0].mxu0 %v3643
    %v4070 = vpop.f32.mrb[0].mxu0
    %v4071 = vadd.f32 %v3558, %v4070
    %v4072 = vpop.f32.mrb[0].mxu0
    %v4073 = vpop.f32.mrb[0].mxu0
    %v4074 = vadd.f32 %v3563, %v4073
    %v4075 = vpop.f32.mrb[0].mxu0
    %4076 = vmatprep.mubr.bf16.mxu0 0
    %4077 = vmatmul.mubr.bf16.gmra.mrb[0].mxu0 %v3646
    %v4078 = vpop.f32.mrb[0].mxu0
    %v4079 = vadd.f32 %v3568, %v4078
    %v4080 = vpop.f32.mrb[0].mxu0
    %v4081 = vpop.f32.mrb[0].mxu0
    %v4082 = vadd.f32 %v3573, %v4081
    %v4083 = vpop.f32.mrb[0].mxu0
    %4084 = vmatprep.mubr.bf16.mxu0 0
    %4085 = vmatmul.mubr.bf16.gmra.mrb[0].mxu0 %v3649
    %v4086 = vpop.f32.mrb[0].mxu0
    %v4087 = vadd.f32 %v3578, %v4086
    %v4088 = vpop.f32.mrb[0].mxu0
    %v4089 = vpop.f32.mrb[0].mxu0
    %v4090 = vadd.f32 %v3583, %v4089
    %v4091 = vpop.f32.mrb[0].mxu0
    %4092 = vdwg.mxu0
    %4093 = vst.msk [vmem:[%s948] sm:$0xff] %vm507, %v4031
    %4094 = vst.msk [vmem:[%s948 + $0x8] sm:$0xff] %vm507, %v4034
    %4095 = vst.msk [vmem:[%s948 + $0x10] sm:$0xff] %vm507, %v4039
    %4096 = vst.msk [vmem:[%s948 + $0x18] sm:$0xff] %vm507, %v4042
    %4097 = vst.msk [vmem:[%s948 + $0x20] sm:$0xff] %vm507, %v4047
    %4098 = vst.msk [vmem:[%s948 + $0x28] sm:$0xff] %vm507, %v4050
    %4099 = vst.msk [vmem:[%s948 + $0x30] sm:$0xff] %vm507, %v4055
    %4100 = vst.msk [vmem:[%s948 + $0x38] sm:$0xff] %vm507, %v4058
    %4101 = vst.msk [vmem:[%s948 + $0x40] sm:$0xff] %vm507, %v4063
    %4102 = vst.msk [vmem:[%s948 + $0x48] sm:$0xff] %vm507, %v4066
    %4103 = vst.msk [vmem:[%s948 + $0x50] sm:$0xff] %vm507, %v4071
    %4104 = vst.msk [vmem:[%s948 + $0x58] sm:$0xff] %vm507, %v4074
    %4105 = vst.msk [vmem:[%s948 + $0x60] sm:$0xff] %vm507, %v4079
    %4106 = vst.msk [vmem:[%s948 + $0x68] sm:$0xff] %vm507, %v4082
    %4107 = vst.msk [vmem:[%s948 + $0x70] sm:$0xff] %vm507, %v4087
    %4108 = vst.msk [vmem:[%s948 + $0x78] sm:$0xff] %vm507, %v4090
    %v4109 = vld [vmem:[%s2764] sm:$0xff]
    %v4110 = vld [vmem:[%s2764 + $0x8] sm:$0xff]
    %4111 = vmatprep.subr.bf16.mxu0 0
    %4112 = vmatpush1.bf16.msra.mxu0 %v4109
    %4113 = vmatprep.subr.bf16.mxu0 0
    %4114 = vmatpush1.bf16.msra.mxu0 %v4110
    %4115 = vmatprep.subr.bf16.mxu0 0
    %4116 = vmatpush1.bf16.msra.mxu0 0
    %4117 = vmatprep.subr.bf16.mxu0 0
    %4118 = vmatpush1.bf16.msra.mxu0 0
    %4119 = vmatprep.subr.bf16.mxu0 0
    %4120 = vmatpush1.bf16.msra.mxu0 0
    %4121 = vmatprep.subr.bf16.mxu0 0
    %4122 = vmatpush1.bf16.msra.mxu0 0
    %4123 = vmatprep.subr.bf16.mxu0 0
    %4124 = vmatpush1.bf16.msra.mxu0 0
    %4125 = vmatprep.subr.bf16.mxu0 0
    %4126 = vmatpush1.bf16.msra.mxu0 0
    %4127 = vmatprep.subr.bf16.mxu0 0
    %4128 = vmatpush1.bf16.msra.mxu0 0
    %4129 = vmatprep.subr.bf16.mxu0 0
    %4130 = vmatpush1.bf16.msra.mxu0 0
    %4131 = vmatprep.subr.bf16.mxu0 0
    %4132 = vmatpush1.bf16.msra.mxu0 0
    %4133 = vmatprep.subr.bf16.mxu0 0
    %4134 = vmatpush1.bf16.msra.mxu0 0
    %4135 = vmatprep.subr.bf16.mxu0 0
    %4136 = vmatpush1.bf16.msra.mxu0 0
    %4137 = vmatprep.subr.bf16.mxu0 0
    %4138 = vmatpush1.bf16.msra.mxu0 0
    %4139 = vmatprep.subr.bf16.mxu0 0
    %4140 = vmatpush1.bf16.msra.mxu0 0
    %4141 = vmatprep.subr.bf16.mxu0 0
    %4142 = vmatpush1.bf16.msra.mxu0 0
    %4143 = vmatprep.mubr.bf16.mxu0 0
    %4144 = vmatmul.mubr.bf16.gmra.mrb[0].mxu0 %v3628
    %v4145 = vpop.f32.mrb[0].mxu0
    %v4146 = vadd.f32 %v3508, %v4145
    %v4147 = vpop.f32.mrb[0].mxu0
    %v4148 = vpop.f32.mrb[0].mxu0
    %v4149 = vadd.f32 %v3513, %v4148
    %v4150 = vpop.f32.mrb[0].mxu0
    %4151 = vmatprep.mubr.bf16.mxu0 0
    %4152 = vmatmul.mubr.bf16.gmra.mrb[0].mxu0 %v3631
    %v4153 = vpop.f32.mrb[0].mxu0
    %v4154 = vadd.f32 %v3518, %v4153
    %v4155 = vpop.f32.mrb[0].mxu0
    %v4156 = vpop.f32.mrb[0].mxu0
    %v4157 = vadd.f32 %v3523, %v4156
    %v4158 = vpop.f32.mrb[0].mxu0
    %4159 = vmatprep.mubr.bf16.mxu0 0
    %4160 = vmatmul.mubr.bf16.gmra.mrb[0].mxu0 %v3634
    %v4161 = vpop.f32.mrb[0].mxu0
    %v4162 = vadd.f32 %v3528, %v4161
    %v4163 = vpop.f32.mrb[0].mxu0
    %v4164 = vpop.f32.mrb[0].mxu0
    %v4165 = vadd.f32 %v3533, %v4164
    %v4166 = vpop.f32.mrb[0].mxu0
    %4167 = vmatprep.mubr.bf16.mxu0 0
    %4168 = vmatmul.mubr.bf16.gmra.mrb[0].mxu0 %v3637
    %v4169 = vpop.f32.mrb[0].mxu0
    %v4170 = vadd.f32 %v3538, %v4169
    %v4171 = vpop.f32.mrb[0].mxu0
    %v4172 = vpop.f32.mrb[0].mxu0
    %v4173 = vadd.f32 %v3543, %v4172
    %v4174 = vpop.f32.mrb[0].mxu0
    %4175 = vmatprep.mubr.bf16.mxu0 0
    %4176 = vmatmul.mubr.bf16.gmra.mrb[0].mxu0 %v3640
    %v4177 = vpop.f32.mrb[0].mxu0
    %v4178 = vadd.f32 %v3548, %v4177
    %v4179 = vpop.f32.mrb[0].mxu0
    %v4180 = vpop.f32.mrb[0].mxu0
    %v4181 = vadd.f32 %v3553, %v4180
    %v4182 = vpop.f32.mrb[0].mxu0
    %4183 = vmatprep.mubr.bf16.mxu0 0
    %4184 = vmatmul.mubr.bf16.gmra.mrb[0].mxu0 %v3643
    %v4185 = vpop.f32.mrb[0].mxu0
    %v4186 = vadd.f32 %v3558, %v4185
    %v4187 = vpop.f32.mrb[0].mxu0
    %v4188 = vpop.f32.mrb[0].mxu0
    %v4189 = vadd.f32 %v3563, %v4188
    %v4190 = vpop.f32.mrb[0].mxu0
    %4191 = vmatprep.mubr.bf16.mxu0 0
    %4192 = vmatmul.mubr.bf16.gmra.mrb[0].mxu0 %v3646
    %v4193 = vpop.f32.mrb[0].mxu0
    %v4194 = vadd.f32 %v3568, %v4193
    %v4195 = vpop.f32.mrb[0].mxu0
    %v4196 = vpop.f32.mrb[0].mxu0
    %v4197 = vadd.f32 %v3573, %v4196
    %v4198 = vpop.f32.mrb[0].mxu0
    %4199 = vmatprep.mubr.bf16.mxu0 0
    %4200 = vmatmul.mubr.bf16.gmra.mrb[0].mxu0 %v3649
    %v4201 = vpop.f32.mrb[0].mxu0
    %v4202 = vadd.f32 %v3578, %v4201
    %v4203 = vpop.f32.mrb[0].mxu0
    %v4204 = vpop.f32.mrb[0].mxu0
    %v4205 = vadd.f32 %v3583, %v4204
    %v4206 = vpop.f32.mrb[0].mxu0
    %4207 = vdwg.mxu0
    %4208 = vst.msk [vmem:[%s1095] sm:$0xff] %vm507, %v4146
    %4209 = vst.msk [vmem:[%s1095 + $0x8] sm:$0xff] %vm507, %v4149
    %4210 = vst.msk [vmem:[%s1095 + $0x10] sm:$0xff] %vm507, %v4154
    %4211 = vst.msk [vmem:[%s1095 + $0x18] sm:$0xff] %vm507, %v4157
    %4212 = vst.msk [vmem:[%s1095 + $0x20] sm:$0xff] %vm507, %v4162
    %4213 = vst.msk [vmem:[%s1095 + $0x28] sm:$0xff] %vm507, %v4165
    %4214 = vst.msk [vmem:[%s1095 + $0x30] sm:$0xff] %vm507, %v4170
    %4215 = vst.msk [vmem:[%s1095 + $0x38] sm:$0xff] %vm507, %v4173
    %4216 = vst.msk [vmem:[%s1095 + $0x40] sm:$0xff] %vm507, %v4178
    %4217 = vst.msk [vmem:[%s1095 + $0x48] sm:$0xff] %vm507, %v4181
    %4218 = vst.msk [vmem:[%s1095 + $0x50] sm:$0xff] %vm507, %v4186
    %4219 = vst.msk [vmem:[%s1095 + $0x58] sm:$0xff] %vm507, %v4189
    %4220 = vst.msk [vmem:[%s1095 + $0x60] sm:$0xff] %vm507, %v4194
    %4221 = vst.msk [vmem:[%s1095 + $0x68] sm:$0xff] %vm507, %v4197
    %4222 = vst.msk [vmem:[%s1095 + $0x70] sm:$0xff] %vm507, %v4202
    %4223 = vst.msk [vmem:[%s1095 + $0x78] sm:$0xff] %vm507, %v4205
    %v4224 = vld [vmem:[%s2994] sm:$0xff]
    %v4225 = vld [vmem:[%s2994 + $0x8] sm:$0xff]
    %4226 = vmatprep.subr.bf16.mxu0 0
    %4227 = vmatpush1.bf16.msra.mxu0 %v4224
    %4228 = vmatprep.subr.bf16.mxu0 0
    %4229 = vmatpush1.bf16.msra.mxu0 %v4225
    %4230 = vmatprep.subr.bf16.mxu0 0
    %4231 = vmatpush1.bf16.msra.mxu0 0
    %4232 = vmatprep.subr.bf16.mxu0 0
    %4233 = vmatpush1.bf16.msra.mxu0 0
    %4234 = vmatprep.subr.bf16.mxu0 0
    %4235 = vmatpush1.bf16.msra.mxu0 0
    %4236 = vmatprep.subr.bf16.mxu0 0
    %4237 = vmatpush1.bf16.msra.mxu0 0
    %4238 = vmatprep.subr.bf16.mxu0 0
    %4239 = vmatpush1.bf16.msra.mxu0 0
    %4240 = vmatprep.subr.bf16.mxu0 0
    %4241 = vmatpush1.bf16.msra.mxu0 0
    %4242 = vmatprep.subr.bf16.mxu0 0
    %4243 = vmatpush1.bf16.msra.mxu0 0
    %4244 = vmatprep.subr.bf16.mxu0 0
    %4245 = vmatpush1.bf16.msra.mxu0 0
    %4246 = vmatprep.subr.bf16.mxu0 0
    %4247 = vmatpush1.bf16.msra.mxu0 0
    %4248 = vmatprep.subr.bf16.mxu0 0
    %4249 = vmatpush1.bf16.msra.mxu0 0
    %4250 = vmatprep.subr.bf16.mxu0 0
    %4251 = vmatpush1.bf16.msra.mxu0 0
    %4252 = vmatprep.subr.bf16.mxu0 0
    %4253 = vmatpush1.bf16.msra.mxu0 0
    %4254 = vmatprep.subr.bf16.mxu0 0
    %4255 = vmatpush1.bf16.msra.mxu0 0
    %4256 = vmatprep.subr.bf16.mxu0 0
    %4257 = vmatpush1.bf16.msra.mxu0 0
    %4258 = vmatprep.mubr.bf16.mxu0 0
    %4259 = vmatmul.mubr.bf16.gmra.mrb[0].mxu0 %v3628
    %v4260 = vpop.f32.mrb[0].mxu0
    %v4261 = vadd.f32 %v3508, %v4260
    %v4262 = vpop.f32.mrb[0].mxu0
    %v4263 = vpop.f32.mrb[0].mxu0
    %v4264 = vadd.f32 %v3513, %v4263
    %v4265 = vpop.f32.mrb[0].mxu0
    %4266 = vmatprep.mubr.bf16.mxu0 0
    %4267 = vmatmul.mubr.bf16.gmra.mrb[0].mxu0 %v3631
    %v4268 = vpop.f32.mrb[0].mxu0
    %v4269 = vadd.f32 %v3518, %v4268
    %v4270 = vpop.f32.mrb[0].mxu0
    %v4271 = vpop.f32.mrb[0].mxu0
    %v4272 = vadd.f32 %v3523, %v4271
    %v4273 = vpop.f32.mrb[0].mxu0
    %4274 = vmatprep.mubr.bf16.mxu0 0
    %4275 = vmatmul.mubr.bf16.gmra.mrb[0].mxu0 %v3634
    %v4276 = vpop.f32.mrb[0].mxu0
    %v4277 = vadd.f32 %v3528, %v4276
    %v4278 = vpop.f32.mrb[0].mxu0
    %v4279 = vpop.f32.mrb[0].mxu0
    %v4280 = vadd.f32 %v3533, %v4279
    %v4281 = vpop.f32.mrb[0].mxu0
    %4282 = vmatprep.mubr.bf16.mxu0 0
    %4283 = vmatmul.mubr.bf16.gmra.mrb[0].mxu0 %v3637
    %v4284 = vpop.f32.mrb[0].mxu0
    %v4285 = vadd.f32 %v3538, %v4284
    %v4286 = vpop.f32.mrb[0].mxu0
    %v4287 = vpop.f32.mrb[0].mxu0
    %v4288 = vadd.f32 %v3543, %v4287
    %v4289 = vpop.f32.mrb[0].mxu0
    %4290 = vmatprep.mubr.bf16.mxu0 0
    %4291 = vmatmul.mubr.bf16.gmra.mrb[0].mxu0 %v3640
    %v4292 = vpop.f32.mrb[0].mxu0
    %v4293 = vadd.f32 %v3548, %v4292
    %v4294 = vpop.f32.mrb[0].mxu0
    %v4295 = vpop.f32.mrb[0].mxu0
    %v4296 = vadd.f32 %v3553, %v4295
    %v4297 = vpop.f32.mrb[0].mxu0
    %4298 = vmatprep.mubr.bf16.mxu0 0
    %4299 = vmatmul.mubr.bf16.gmra.mrb[0].mxu0 %v3643
    %v4300 = vpop.f32.mrb[0].mxu0
    %v4301 = vadd.f32 %v3558, %v4300
    %v4302 = vpop.f32.mrb[0].mxu0
    %v4303 = vpop.f32.mrb[0].mxu0
    %v4304 = vadd.f32 %v3563, %v4303
    %v4305 = vpop.f32.mrb[0].mxu0
    %4306 = vmatprep.mubr.bf16.mxu0 0
    %4307 = vmatmul.mubr.bf16.gmra.mrb[0].mxu0 %v3646
    %v4308 = vpop.f32.mrb[0].mxu0
    %v4309 = vadd.f32 %v3568, %v4308
    %v4310 = vpop.f32.mrb[0].mxu0
    %v4311 = vpop.f32.mrb[0].mxu0
    %v4312 = vadd.f32 %v3573, %v4311
    %v4313 = vpop.f32.mrb[0].mxu0
    %4314 = vmatprep.mubr.bf16.mxu0 0
    %4315 = vmatmul.mubr.bf16.gmra.mrb[0].mxu0 %v3649
    %v4316 = vpop.f32.mrb[0].mxu0
    %v4317 = vadd.f32 %v3578, %v4316
    %v4318 = vpop.f32.mrb[0].mxu0
    %v4319 = vpop.f32.mrb[0].mxu0
    %v4320 = vadd.f32 %v3583, %v4319
    %v4321 = vpop.f32.mrb[0].mxu0
    %4322 = vdwg.mxu0
    %4323 = vst.msk [vmem:[%s1242] sm:$0xff] %vm507, %v4261
    %4324 = vst.msk [vmem:[%s1242 + $0x8] sm:$0xff] %vm507, %v4264
    %4325 = vst.msk [vmem:[%s1242 + $0x10] sm:$0xff] %vm507, %v4269
    %4326 = vst.msk [vmem:[%s1242 + $0x18] sm:$0xff] %vm507, %v4272
    %4327 = vst.msk [vmem:[%s1242 + $0x20] sm:$0xff] %vm507, %v4277
    %4328 = vst.msk [vmem:[%s1242 + $0x28] sm:$0xff] %vm507, %v4280
    %4329 = vst.msk [vmem:[%s1242 + $0x30] sm:$0xff] %vm507, %v4285
    %4330 = vst.msk [vmem:[%s1242 + $0x38] sm:$0xff] %vm507, %v4288
    %4331 = vst.msk [vmem:[%s1242 + $0x40] sm:$0xff] %vm507, %v4293
    %4332 = vst.msk [vmem:[%s1242 + $0x48] sm:$0xff] %vm507, %v4296
    %4333 = vst.msk [vmem:[%s1242 + $0x50] sm:$0xff] %vm507, %v4301
    %4334 = vst.msk [vmem:[%s1242 + $0x58] sm:$0xff] %vm507, %v4304
    %4335 = vst.msk [vmem:[%s1242 + $0x60] sm:$0xff] %vm507, %v4309
    %4336 = vst.msk [vmem:[%s1242 + $0x68] sm:$0xff] %vm507, %v4312
    %4337 = vst.msk [vmem:[%s1242 + $0x70] sm:$0xff] %vm507, %v4317
    %4338 = vst.msk [vmem:[%s1242 + $0x78] sm:$0xff] %vm507, %v4320
    %v4339 = vld [vmem:[%s3224] sm:$0xff]
    %v4340 = vld [vmem:[%s3224 + $0x8] sm:$0xff]
    %4341 = vmatprep.subr.bf16.mxu0 0
    %4342 = vmatpush1.bf16.msra.mxu0 %v4339
    %4343 = vmatprep.subr.bf16.mxu0 0
    %4344 = vmatpush1.bf16.msra.mxu0 %v4340
    %4345 = vmatprep.subr.bf16.mxu0 0
    %4346 = vmatpush1.bf16.msra.mxu0 0
    %4347 = vmatprep.subr.bf16.mxu0 0
    %4348 = vmatpush1.bf16.msra.mxu0 0
    %4349 = vmatprep.subr.bf16.mxu0 0
    %4350 = vmatpush1.bf16.msra.mxu0 0
    %4351 = vmatprep.subr.bf16.mxu0 0
    %4352 = vmatpush1.bf16.msra.mxu0 0
    %4353 = vmatprep.subr.bf16.mxu0 0
    %4354 = vmatpush1.bf16.msra.mxu0 0
    %4355 = vmatprep.subr.bf16.mxu0 0
    %4356 = vmatpush1.bf16.msra.mxu0 0
    %4357 = vmatprep.subr.bf16.mxu0 0
    %4358 = vmatpush1.bf16.msra.mxu0 0
    %4359 = vmatprep.subr.bf16.mxu0 0
    %4360 = vmatpush1.bf16.msra.mxu0 0
    %4361 = vmatprep.subr.bf16.mxu0 0
    %4362 = vmatpush1.bf16.msra.mxu0 0
    %4363 = vmatprep.subr.bf16.mxu0 0
    %4364 = vmatpush1.bf16.msra.mxu0 0
    %4365 = vmatprep.subr.bf16.mxu0 0
    %4366 = vmatpush1.bf16.msra.mxu0 0
    %4367 = vmatprep.subr.bf16.mxu0 0
    %4368 = vmatpush1.bf16.msra.mxu0 0
    %4369 = vmatprep.subr.bf16.mxu0 0
    %4370 = vmatpush1.bf16.msra.mxu0 0
    %4371 = vmatprep.subr.bf16.mxu0 0
    %4372 = vmatpush1.bf16.msra.mxu0 0
    %4373 = vmatprep.mubr.bf16.mxu0 0
    %4374 = vmatmul.mubr.bf16.gmra.mrb[0].mxu0 %v3628
    %v4375 = vpop.f32.mrb[0].mxu0
    %v4376 = vadd.f32 %v3508, %v4375
    %v4377 = vpop.f32.mrb[0].mxu0
    %v4378 = vpop.f32.mrb[0].mxu0
    %v4379 = vadd.f32 %v3513, %v4378
    %v4380 = vpop.f32.mrb[0].mxu0
    %4381 = vmatprep.mubr.bf16.mxu0 0
    %4382 = vmatmul.mubr.bf16.gmra.mrb[0].mxu0 %v3631
    %v4383 = vpop.f32.mrb[0].mxu0
    %v4384 = vadd.f32 %v3518, %v4383
    %v4385 = vpop.f32.mrb[0].mxu0
    %v4386 = vpop.f32.mrb[0].mxu0
    %v4387 = vadd.f32 %v3523, %v4386
    %v4388 = vpop.f32.mrb[0].mxu0
    %4389 = vmatprep.mubr.bf16.mxu0 0
    %4390 = vmatmul.mubr.bf16.gmra.mrb[0].mxu0 %v3634
    %v4391 = vpop.f32.mrb[0].mxu0
    %v4392 = vadd.f32 %v3528, %v4391
    %v4393 = vpop.f32.mrb[0].mxu0
    %v4394 = vpop.f32.mrb[0].mxu0
    %v4395 = vadd.f32 %v3533, %v4394
    %v4396 = vpop.f32.mrb[0].mxu0
    %4397 = vmatprep.mubr.bf16.mxu0 0
    %4398 = vmatmul.mubr.bf16.gmra.mrb[0].mxu0 %v3637
    %v4399 = vpop.f32.mrb[0].mxu0
    %v4400 = vadd.f32 %v3538, %v4399
    %v4401 = vpop.f32.mrb[0].mxu0
    %v4402 = vpop.f32.mrb[0].mxu0
    %v4403 = vadd.f32 %v3543, %v4402
    %v4404 = vpop.f32.mrb[0].mxu0
    %4405 = vmatprep.mubr.bf16.mxu0 0
    %4406 = vmatmul.mubr.bf16.gmra.mrb[0].mxu0 %v3640
    %v4407 = vpop.f32.mrb[0].mxu0
    %v4408 = vadd.f32 %v3548, %v4407
    %v4409 = vpop.f32.mrb[0].mxu0
    %v4410 = vpop.f32.mrb[0].mxu0
    %v4411 = vadd.f32 %v3553, %v4410
    %v4412 = vpop.f32.mrb[0].mxu0
    %4413 = vmatprep.mubr.bf16.mxu0 0
    %4414 = vmatmul.mubr.bf16.gmra.mrb[0].mxu0 %v3643
    %v4415 = vpop.f32.mrb[0].mxu0
    %v4416 = vadd.f32 %v3558, %v4415
    %v4417 = vpop.f32.mrb[0].mxu0
    %v4418 = vpop.f32.mrb[0].mxu0
    %v4419 = vadd.f32 %v3563, %v4418
    %v4420 = vpop.f32.mrb[0].mxu0
    %4421 = vmatprep.mubr.bf16.mxu0 0
    %4422 = vmatmul.mubr.bf16.gmra.mrb[0].mxu0 %v3646
    %v4423 = vpop.f32.mrb[0].mxu0
    %v4424 = vadd.f32 %v3568, %v4423
    %v4425 = vpop.f32.mrb[0].mxu0
    %v4426 = vpop.f32.mrb[0].mxu0
    %v4427 = vadd.f32 %v3573, %v4426
    %v4428 = vpop.f32.mrb[0].mxu0
    %4429 = vmatprep.mubr.bf16.mxu0 0
    %4430 = vmatmul.mubr.bf16.gmra.mrb[0].mxu0 %v3649
    %v4431 = vpop.f32.mrb[0].mxu0
    %v4432 = vadd.f32 %v3578, %v4431
    %v4433 = vpop.f32.mrb[0].mxu0
    %v4434 = vpop.f32.mrb[0].mxu0
    %v4435 = vadd.f32 %v3583, %v4434
    %v4436 = vpop.f32.mrb[0].mxu0
    %4437 = vdwg.mxu0
    %4438 = vst.msk [vmem:[%s1389] sm:$0xff] %vm507, %v4376
    %4439 = vst.msk [vmem:[%s1389 + $0x8] sm:$0xff] %vm507, %v4379
    %4440 = vst.msk [vmem:[%s1389 + $0x10] sm:$0xff] %vm507, %v4384
    %4441 = vst.msk [vmem:[%s1389 + $0x18] sm:$0xff] %vm507, %v4387
    %4442 = vst.msk [vmem:[%s1389 + $0x20] sm:$0xff] %vm507, %v4392
    %4443 = vst.msk [vmem:[%s1389 + $0x28] sm:$0xff] %vm507, %v4395
    %4444 = vst.msk [vmem:[%s1389 + $0x30] sm:$0xff] %vm507, %v4400
    %4445 = vst.msk [vmem:[%s1389 + $0x38] sm:$0xff] %vm507, %v4403
    %4446 = vst.msk [vmem:[%s1389 + $0x40] sm:$0xff] %vm507, %v4408
    %4447 = vst.msk [vmem:[%s1389 + $0x48] sm:$0xff] %vm507, %v4411
    %4448 = vst.msk [vmem:[%s1389 + $0x50] sm:$0xff] %vm507, %v4416
    %4449 = vst.msk [vmem:[%s1389 + $0x58] sm:$0xff] %vm507, %v4419
    %4450 = vst.msk [vmem:[%s1389 + $0x60] sm:$0xff] %vm507, %v4424
    %4451 = vst.msk [vmem:[%s1389 + $0x68] sm:$0xff] %vm507, %v4427
    %4452 = vst.msk [vmem:[%s1389 + $0x70] sm:$0xff] %vm507, %v4432
    %4453 = vst.msk [vmem:[%s1389 + $0x78] sm:$0xff] %vm507, %v4435
    %v4454 = vld [vmem:[%s3454] sm:$0xff]
    %v4455 = vld [vmem:[%s3454 + $0x8] sm:$0xff]
    %4456 = vmatprep.subr.bf16.mxu0 0
    %4457 = vmatpush1.bf16.msra.mxu0 %v4454
    %4458 = vmatprep.subr.bf16.mxu0 0
    %4459 = vmatpush1.bf16.msra.mxu0 %v4455
    %4460 = vmatprep.subr.bf16.mxu0 0
    %4461 = vmatpush1.bf16.msra.mxu0 0
    %4462 = vmatprep.subr.bf16.mxu0 0
    %4463 = vmatpush1.bf16.msra.mxu0 0
    %4464 = vmatprep.subr.bf16.mxu0 0
    %4465 = vmatpush1.bf16.msra.mxu0 0
    %4466 = vmatprep.subr.bf16.mxu0 0
    %4467 = vmatpush1.bf16.msra.mxu0 0
    %4468 = vmatprep.subr.bf16.mxu0 0
    %4469 = vmatpush1.bf16.msra.mxu0 0
    %4470 = vmatprep.subr.bf16.mxu0 0
    %4471 = vmatpush1.bf16.msra.mxu0 0
    %4472 = vmatprep.subr.bf16.mxu0 0
    %4473 = vmatpush1.bf16.msra.mxu0 0
    %4474 = vmatprep.subr.bf16.mxu0 0
    %4475 = vmatpush1.bf16.msra.mxu0 0
    %4476 = vmatprep.subr.bf16.mxu0 0
    %4477 = vmatpush1.bf16.msra.mxu0 0
    %4478 = vmatprep.subr.bf16.mxu0 0
    %4479 = vmatpush1.bf16.msra.mxu0 0
    %4480 = vmatprep.subr.bf16.mxu0 0
    %4481 = vmatpush1.bf16.msra.mxu0 0
    %4482 = vmatprep.subr.bf16.mxu0 0
    %4483 = vmatpush1.bf16.msra.mxu0 0
    %4484 = vmatprep.subr.bf16.mxu0 0
    %4485 = vmatpush1.bf16.msra.mxu0 0
    %4486 = vmatprep.subr.bf16.mxu0 0
    %4487 = vmatpush1.bf16.msra.mxu0 0
    %4488 = vmatprep.mubr.bf16.mxu0 0
    %4489 = vmatmul.mubr.bf16.gmra.mrb[0].mxu0 %v3628
    %v4490 = vpop.f32.mrb[0].mxu0
    %v4491 = vadd.f32 %v3508, %v4490
    %v4492 = vpop.f32.mrb[0].mxu0
    %v4493 = vpop.f32.mrb[0].mxu0
    %v4494 = vadd.f32 %v3513, %v4493
    %v4495 = vpop.f32.mrb[0].mxu0
    %4496 = vmatprep.mubr.bf16.mxu0 0
    %4497 = vmatmul.mubr.bf16.gmra.mrb[0].mxu0 %v3631
    %v4498 = vpop.f32.mrb[0].mxu0
    %v4499 = vadd.f32 %v3518, %v4498
    %v4500 = vpop.f32.mrb[0].mxu0
    %v4501 = vpop.f32.mrb[0].mxu0
    %v4502 = vadd.f32 %v3523, %v4501
    %v4503 = vpop.f32.mrb[0].mxu0
    %4504 = vmatprep.mubr.bf16.mxu0 0
    %4505 = vmatmul.mubr.bf16.gmra.mrb[0].mxu0 %v3634
    %v4506 = vpop.f32.mrb[0].mxu0
    %v4507 = vadd.f32 %v3528, %v4506
    %v4508 = vpop.f32.mrb[0].mxu0
    %v4509 = vpop.f32.mrb[0].mxu0
    %v4510 = vadd.f32 %v3533, %v4509
    %v4511 = vpop.f32.mrb[0].mxu0
    %4512 = vmatprep.mubr.bf16.mxu0 0
    %4513 = vmatmul.mubr.bf16.gmra.mrb[0].mxu0 %v3637
    %v4514 = vpop.f32.mrb[0].mxu0
    %v4515 = vadd.f32 %v3538, %v4514
    %v4516 = vpop.f32.mrb[0].mxu0
    %v4517 = vpop.f32.mrb[0].mxu0
    %v4518 = vadd.f32 %v3543, %v4517
    %v4519 = vpop.f32.mrb[0].mxu0
    %4520 = vmatprep.mubr.bf16.mxu0 0
    %4521 = vmatmul.mubr.bf16.gmra.mrb[0].mxu0 %v3640
    %v4522 = vpop.f32.mrb[0].mxu0
    %v4523 = vadd.f32 %v3548, %v4522
    %v4524 = vpop.f32.mrb[0].mxu0
    %v4525 = vpop.f32.mrb[0].mxu0
    %v4526 = vadd.f32 %v3553, %v4525
    %v4527 = vpop.f32.mrb[0].mxu0
    %4528 = vmatprep.mubr.bf16.mxu0 0
    %4529 = vmatmul.mubr.bf16.gmra.mrb[0].mxu0 %v3643
    %v4530 = vpop.f32.mrb[0].mxu0
    %v4531 = vadd.f32 %v3558, %v4530
    %v4532 = vpop.f32.mrb[0].mxu0
    %v4533 = vpop.f32.mrb[0].mxu0
    %v4534 = vadd.f32 %v3563, %v4533
    %v4535 = vpop.f32.mrb[0].mxu0
    %4536 = vmatprep.mubr.bf16.mxu0 0
    %4537 = vmatmul.mubr.bf16.gmra.mrb[0].mxu0 %v3646
    %v4538 = vpop.f32.mrb[0].mxu0
    %v4539 = vadd.f32 %v3568, %v4538
    %v4540 = vpop.f32.mrb[0].mxu0
    %v4541 = vpop.f32.mrb[0].mxu0
    %v4542 = vadd.f32 %v3573, %v4541
    %v4543 = vpop.f32.mrb[0].mxu0
    %4544 = vmatprep.mubr.bf16.mxu0 0
    %4545 = vmatmul.mubr.bf16.gmra.mrb[0].mxu0 %v3649
    %v4546 = vpop.f32.mrb[0].mxu0
    %v4547 = vadd.f32 %v3578, %v4546
    %v4548 = vpop.f32.mrb[0].mxu0
    %v4549 = vpop.f32.mrb[0].mxu0
    %v4550 = vadd.f32 %v3583, %v4549
    %v4551 = vpop.f32.mrb[0].mxu0
    %4552 = vdwg.mxu0
    %4553 = vst.msk [vmem:[%s1536] sm:$0xff] %vm507, %v4491
    %4554 = vst.msk [vmem:[%s1536 + $0x8] sm:$0xff] %vm507, %v4494
    %4555 = vst.msk [vmem:[%s1536 + $0x10] sm:$0xff] %vm507, %v4499
    %4556 = vst.msk [vmem:[%s1536 + $0x18] sm:$0xff] %vm507, %v4502
    %4557 = vst.msk [vmem:[%s1536 + $0x20] sm:$0xff] %vm507, %v4507
    %4558 = vst.msk [vmem:[%s1536 + $0x28] sm:$0xff] %vm507, %v4510
    %4559 = vst.msk [vmem:[%s1536 + $0x30] sm:$0xff] %vm507, %v4515
    %4560 = vst.msk [vmem:[%s1536 + $0x38] sm:$0xff] %vm507, %v4518
    %4561 = vst.msk [vmem:[%s1536 + $0x40] sm:$0xff] %vm507, %v4523
    %4562 = vst.msk [vmem:[%s1536 + $0x48] sm:$0xff] %vm507, %v4526
    %4563 = vst.msk [vmem:[%s1536 + $0x50] sm:$0xff] %vm507, %v4531
    %4564 = vst.msk [vmem:[%s1536 + $0x58] sm:$0xff] %vm507, %v4534
    %4565 = vst.msk [vmem:[%s1536 + $0x60] sm:$0xff] %vm507, %v4539
    %4566 = vst.msk [vmem:[%s1536 + $0x68] sm:$0xff] %vm507, %v4542
    %4567 = vst.msk [vmem:[%s1536 + $0x70] sm:$0xff] %vm507, %v4547
    %4568 = vst.msk [vmem:[%s1536 + $0x78] sm:$0xff] %vm507, %v4550
    %v4569 = vld [vmem:[#allocation2] sm:$0xff]
    %v4570 = vld [vmem:[#allocation2 + $0x8] sm:$0xff]
    %v4571 = vld [vmem:[#allocation2 + $0x10] sm:$0xff]
    %v4572 = vld [vmem:[#allocation2 + $0x18] sm:$0xff]
    %v4573 = vld [vmem:[#allocation2 + $0x20] sm:$0xff]
    %v4574 = vld [vmem:[#allocation2 + $0x28] sm:$0xff]
    %v4575 = vld [vmem:[#allocation2 + $0x30] sm:$0xff]
    %v4576 = vld [vmem:[#allocation2 + $0x38] sm:$0xff]
    %v4577 = vld [vmem:[#allocation2 + $0x40] sm:$0xff]
    %v4578 = vld [vmem:[#allocation2 + $0x48] sm:$0xff]
    %v4579 = vld [vmem:[#allocation2 + $0x50] sm:$0xff]
    %v4580 = vld [vmem:[#allocation2 + $0x58] sm:$0xff]
    %v4581 = vld [vmem:[#allocation2 + $0x60] sm:$0xff]
    %v4582 = vld [vmem:[#allocation2 + $0x68] sm:$0xff]
    %v4583 = vld [vmem:[#allocation2 + $0x70] sm:$0xff]
    %v4584 = vld [vmem:[#allocation2 + $0x78] sm:$0xff]
    %v4601 = vunpack.c.l.b16 %v3473
    %v4602 = vunpack.c.l.b16 %v3474
    %v4603 = vunpack.c.l.b16 %v3475
    %v4604 = vunpack.c.l.b16 %v3476
    %v4605 = vunpack.c.l.b16 %v3477
    %v4606 = vunpack.c.l.b16 %v3478
    %v4607 = vunpack.c.l.b16 %v3479
    %v4608 = vunpack.c.l.b16 %v3480
    %v4609 = vunpack.c.l.b16 %v3481
    %v4610 = vunpack.c.l.b16 %v3482
    %v4611 = vunpack.c.l.b16 %v3483
    %v4612 = vunpack.c.l.b16 %v3484
    %v4613 = vunpack.c.l.b16 %v3485
    %v4614 = vunpack.c.l.b16 %v3486
    %v4615 = vunpack.c.l.b16 %v3487
    %v4616 = vunpack.c.l.b16 %v3488
    %v4617 = vpack.c.b16 %v4602, %v4601
    %v4618 = vpack.c.b16 %v4604, %v4603
    %v4619 = vpack.c.b16 %v4606, %v4605
    %v4620 = vpack.c.b16 %v4608, %v4607
    %v4621 = vpack.c.b16 %v4610, %v4609
    %v4622 = vpack.c.b16 %v4612, %v4611
    %v4623 = vpack.c.b16 %v4614, %v4613
    %v4624 = vpack.c.b16 %v4616, %v4615
    %v4626 = vsel %vm1609, %v4617, 0
    %v4629 = vsel %vm1609, %v4618, 0
    %v4632 = vsel %vm1609, %v4619, 0
    %v4635 = vsel %vm1609, %v4620, 0
    %v4638 = vsel %vm1609, %v4621, 0
    %v4641 = vsel %vm1609, %v4622, 0
    %v4644 = vsel %vm1609, %v4623, 0
    %v4647 = vsel %vm1609, %v4624, 0
    %4649 = vmatprep.subr.bf16.mxu0 0
    %4650 = vmatpush1.bf16.msra.mxu0 0
    %4651 = vmatprep.subr.bf16.mxu0 0
    %4652 = vmatpush1.bf16.msra.mxu0 0
    %4653 = vmatprep.subr.bf16.mxu0 0
    %4654 = vmatpush1.bf16.msra.mxu0 0
    %4655 = vmatprep.subr.bf16.mxu0 0
    %4656 = vmatpush1.bf16.msra.mxu0 0
    %4657 = vmatprep.subr.bf16.mxu0 0
    %4658 = vmatpush1.bf16.msra.mxu0 0
    %4659 = vmatprep.subr.bf16.mxu0 0
    %4660 = vmatpush1.bf16.msra.mxu0 0
    %4661 = vmatprep.subr.bf16.mxu0 0
    %4662 = vmatpush1.bf16.msra.mxu0 0
    %4663 = vmatprep.subr.bf16.mxu0 0
    %4664 = vmatpush1.bf16.msra.mxu0 0
    %4665 = vmatprep.subr.bf16.mxu0 0
    %4666 = vmatpush1.bf16.msra.mxu0 0
    %4667 = vmatprep.subr.bf16.mxu0 0
    %4668 = vmatpush1.bf16.msra.mxu0 0
    %4669 = vmatprep.subr.bf16.mxu0 0
    %4670 = vmatpush1.bf16.msra.mxu0 0
    %4671 = vmatprep.subr.bf16.mxu0 0
    %4672 = vmatpush1.bf16.msra.mxu0 0
    %4673 = vmatprep.subr.bf16.mxu0 0
    %4674 = vmatpush1.bf16.msra.mxu0 0
    %4675 = vmatprep.subr.bf16.mxu0 0
    %4676 = vmatpush1.bf16.msra.mxu0 0
    %4677 = vmatprep.subr.bf16.mxu0 0
    %4678 = vmatpush1.bf16.msra.mxu0 0
    %4679 = vmatprep.subr.bf16.mxu0 0
    %4680 = vmatpush1.bf16.msra.mxu0 0
    %4681 = vmatprep.mubr.bf16.mxu0 0
    %4682 = vmatmul.mubr.bf16.gmra.mrb[0].mxu0 %v4626
    %v4683 = vpop.f32.mrb[0].mxu0
    %v4684 = vadd.f32 0.0, %v4683
    %v4685 = vpop.f32.mrb[0].mxu0
    %v4686 = vpop.f32.mrb[0].mxu0
    %v4687 = vadd.f32 0.0, %v4686
    %v4688 = vpop.f32.mrb[0].mxu0
    %4689 = vmatprep.mubr.bf16.mxu0 0
    %4690 = vmatmul.mubr.bf16.gmra.mrb[0].mxu0 %v4629
    %v4691 = vpop.f32.mrb[0].mxu0
    %v4692 = vadd.f32 0.0, %v4691
    %v4693 = vpop.f32.mrb[0].mxu0
    %v4694 = vpop.f32.mrb[0].mxu0
    %v4695 = vadd.f32 0.0, %v4694
    %v4696 = vpop.f32.mrb[0].mxu0
    %4697 = vmatprep.mubr.bf16.mxu0 0
    %4698 = vmatmul.mubr.bf16.gmra.mrb[0].mxu0 %v4632
    %v4699 = vpop.f32.mrb[0].mxu0
    %v4700 = vadd.f32 0.0, %v4699
    %v4701 = vpop.f32.mrb[0].mxu0
    %v4702 = vpop.f32.mrb[0].mxu0
    %v4703 = vadd.f32 0.0, %v4702
    %v4704 = vpop.f32.mrb[0].mxu0
    %4705 = vmatprep.mubr.bf16.mxu0 0
    %4706 = vmatmul.mubr.bf16.gmra.mrb[0].mxu0 %v4635
    %v4707 = vpop.f32.mrb[0].mxu0
    %v4708 = vadd.f32 0.0, %v4707
    %v4709 = vpop.f32.mrb[0].mxu0
    %v4710 = vpop.f32.mrb[0].mxu0
    %v4711 = vadd.f32 0.0, %v4710
    %v4712 = vpop.f32.mrb[0].mxu0
    %4713 = vmatprep.mubr.bf16.mxu0 0
    %4714 = vmatmul.mubr.bf16.gmra.mrb[0].mxu0 %v4638
    %v4715 = vpop.f32.mrb[0].mxu0
    %v4716 = vadd.f32 0.0, %v4715
    %v4717 = vpop.f32.mrb[0].mxu0
    %v4718 = vpop.f32.mrb[0].mxu0
    %v4719 = vadd.f32 0.0, %v4718
    %v4720 = vpop.f32.mrb[0].mxu0
    %4721 = vmatprep.mubr.bf16.mxu0 0
    %4722 = vmatmul.mubr.bf16.gmra.mrb[0].mxu0 %v4641
    %v4723 = vpop.f32.mrb[0].mxu0
    %v4724 = vadd.f32 0.0, %v4723
    %v4725 = vpop.f32.mrb[0].mxu0
    %v4726 = vpop.f32.mrb[0].mxu0
    %v4727 = vadd.f32 0.0, %v4726
    %v4728 = vpop.f32.mrb[0].mxu0
    %4729 = vmatprep.mubr.bf16.mxu0 0
    %4730 = vmatmul.mubr.bf16.gmra.mrb[0].mxu0 %v4644
    %v4731 = vpop.f32.mrb[0].mxu0
    %v4732 = vadd.f32 0.0, %v4731
    %v4733 = vpop.f32.mrb[0].mxu0
    %v4734 = vpop.f32.mrb[0].mxu0
    %v4735 = vadd.f32 0.0, %v4734
    %v4736 = vpop.f32.mrb[0].mxu0
    %4737 = vmatprep.mubr.bf16.mxu0 0
    %4738 = vmatmul.mubr.bf16.gmra.mrb[0].mxu0 %v4647
    %v4739 = vpop.f32.mrb[0].mxu0
    %v4740 = vadd.f32 0.0, %v4739
    %v4741 = vpop.f32.mrb[0].mxu0
    %v4742 = vpop.f32.mrb[0].mxu0
    %v4743 = vadd.f32 0.0, %v4742
    %v4744 = vpop.f32.mrb[0].mxu0
    %4745 = vdwg.mxu0
    %v4746 = vadd.f32 %v4569, %v4684
    %v4747 = vadd.f32 %v4570, %v4687
    %v4748 = vadd.f32 %v4571, %v4692
    %v4749 = vadd.f32 %v4572, %v4695
    %v4750 = vadd.f32 %v4573, %v4700
    %v4751 = vadd.f32 %v4574, %v4703
    %v4752 = vadd.f32 %v4575, %v4708
    %v4753 = vadd.f32 %v4576, %v4711
    %v4754 = vadd.f32 %v4577, %v4716
    %v4755 = vadd.f32 %v4578, %v4719
    %v4756 = vadd.f32 %v4579, %v4724
    %v4757 = vadd.f32 %v4580, %v4727
    %v4758 = vadd.f32 %v4581, %v4732
    %v4759 = vadd.f32 %v4582, %v4735
    %v4760 = vadd.f32 %v4583, %v4740
    %v4761 = vadd.f32 %v4584, %v4743
    %v4762 = vxor.u32 %v4746, 2147483648
    %v4763 = vxor.u32 %v4747, 2147483648
    %v4764 = vxor.u32 %v4748, 2147483648
    %v4765 = vxor.u32 %v4749, 2147483648
    %v4766 = vxor.u32 %v4750, 2147483648
    %v4767 = vxor.u32 %v4751, 2147483648
    %v4768 = vxor.u32 %v4752, 2147483648
    %v4769 = vxor.u32 %v4753, 2147483648
    %v4770 = vxor.u32 %v4758, 2147483648
    %v4771 = vxor.u32 %v4759, 2147483648
    %v4772 = vxor.u32 %v4760, 2147483648
    %v4773 = vxor.u32 %v4761, 2147483648
    %v4774 = vmul.f32 %v4762, 1.442695
    %v4775 = vpow.pop %v4774
    %v4776 = vmul.f32 %v4763, 1.442695
    %v4777 = vpow.pop %v4776
    %v4778 = vmul.f32 %v4764, 1.442695
    %v4779 = vpow.pop %v4778
    %v4780 = vmul.f32 %v4765, 1.442695
    %v4781 = vpow.pop %v4780
    %v4782 = vmul.f32 %v4766, 1.442695
    %v4783 = vpow.pop %v4782
    %v4784 = vmul.f32 %v4767, 1.442695
    %v4785 = vpow.pop %v4784
    %v4786 = vmul.f32 %v4768, 1.442695
    %v4787 = vpow.pop %v4786
    %v4788 = vmul.f32 %v4769, 1.442695
    %v4789 = vpow.pop %v4788
    %v4790 = vmul.f32 %v4770, 1.442695
    %v4791 = vpow.pop %v4790
    %v4792 = vmul.f32 %v4771, 1.442695
    %v4793 = vpow.pop %v4792
    %v4794 = vmul.f32 %v4772, 1.442695
    %v4795 = vpow.pop %v4794
    %v4796 = vmul.f32 %v4773, 1.442695
    %v4797 = vpow.pop %v4796
    %v4798 = vadd.f32 %v4775, 1.0
    %v4799 = vadd.f32 %v4777, 1.0
    %v4800 = vadd.f32 %v4779, 1.0
    %v4801 = vadd.f32 %v4781, 1.0
    %v4802 = vadd.f32 %v4783, 1.0
    %v4803 = vadd.f32 %v4785, 1.0
    %v4804 = vadd.f32 %v4787, 1.0
    %v4805 = vadd.f32 %v4789, 1.0
    %v4806 = vadd.f32 %v4791, 1.0
    %v4807 = vadd.f32 %v4793, 1.0
    %v4808 = vadd.f32 %v4795, 1.0
    %v4809 = vadd.f32 %v4797, 1.0
    %v4810 = vrcp.pop %v4798
    %v4811 = vmul.f32 1.0, %v4810
    %v4812 = vrcp.pop %v4799
    %v4813 = vmul.f32 1.0, %v4812
    %v4814 = vrcp.pop %v4800
    %v4815 = vmul.f32 1.0, %v4814
    %v4816 = vrcp.pop %v4801
    %v4817 = vmul.f32 1.0, %v4816
    %v4818 = vrcp.pop %v4802
    %v4819 = vmul.f32 1.0, %v4818
    %v4820 = vrcp.pop %v4803
    %v4821 = vmul.f32 1.0, %v4820
    %v4822 = vrcp.pop %v4804
    %v4823 = vmul.f32 1.0, %v4822
    %v4824 = vrcp.pop %v4805
    %v4825 = vmul.f32 1.0, %v4824
    %v4826 = vrcp.pop %v4806
    %v4827 = vmul.f32 1.0, %v4826
    %v4828 = vrcp.pop %v4807
    %v4829 = vmul.f32 1.0, %v4828
    %v4830 = vrcp.pop %v4808
    %v4831 = vmul.f32 1.0, %v4830
    %v4832 = vrcp.pop %v4809
    %v4833 = vmul.f32 1.0, %v4832
    %v4834 = vtanh.pop %v4754
    %v4835 = vtanh.pop %v4755
    %v4836 = vtanh.pop %v4756
    %v4837 = vtanh.pop %v4757
    %v4838 = vmul.f32 %v4819, 0.0
    %v4839 = vmul.f32 %v4821, 0.0
    %v4840 = vmul.f32 %v4823, 0.0
    %v4841 = vmul.f32 %v4825, 0.0
    %v4842 = vmul.f32 %v4811, %v4834
    %v4843 = vmul.f32 %v4813, %v4835
    %v4844 = vmul.f32 %v4815, %v4836
    %v4845 = vmul.f32 %v4817, %v4837
    %v4846 = vadd.f32 %v4838, %v4842
    %v4847 = vadd.f32 %v4839, %v4843
    %v4848 = vadd.f32 %v4840, %v4844
    %v4849 = vadd.f32 %v4841, %v4845
    %v4850 = vtanh.pop %v4846
    %v4851 = vtanh.pop %v4847
    %v4852 = vtanh.pop %v4848
    %v4853 = vtanh.pop %v4849
    %v4854 = vmul.f32 %v4827, %v4850
    %v4855 = vmul.f32 %v4829, %v4851
    %v4856 = vmul.f32 %v4831, %v4852
    %v4857 = vmul.f32 %v4833, %v4853
    %v4858 = vld [vmem:[%s654] sm:$0xff]
    %v4859 = vld [vmem:[%s654 + $0x8] sm:$0xff]
    %v4860 = vld [vmem:[%s654 + $0x10] sm:$0xff]
    %v4861 = vld [vmem:[%s654 + $0x18] sm:$0xff]
    %v4862 = vld [vmem:[%s654 + $0x20] sm:$0xff]
    %v4863 = vld [vmem:[%s654 + $0x28] sm:$0xff]
    %v4864 = vld [vmem:[%s654 + $0x30] sm:$0xff]
    %v4865 = vld [vmem:[%s654 + $0x38] sm:$0xff]
    %v4866 = vld [vmem:[%s654 + $0x40] sm:$0xff]
    %v4867 = vld [vmem:[%s654 + $0x48] sm:$0xff]
    %v4868 = vld [vmem:[%s654 + $0x50] sm:$0xff]
    %v4869 = vld [vmem:[%s654 + $0x58] sm:$0xff]
    %v4870 = vld [vmem:[%s654 + $0x60] sm:$0xff]
    %v4871 = vld [vmem:[%s654 + $0x68] sm:$0xff]
    %v4872 = vld [vmem:[%s654 + $0x70] sm:$0xff]
    %v4873 = vld [vmem:[%s654 + $0x78] sm:$0xff]
    %v4874 = vpack.c.bf16 %v4855, %v4854
    %v4875 = vpack.c.bf16 %v4857, %v4856
    %4876 = vmatprep.subr.bf16.mxu0 0
    %4877 = vmatpush1.bf16.msra.mxu0 %v4874
    %4878 = vmatprep.subr.bf16.mxu0 0
    %4879 = vmatpush1.bf16.msra.mxu0 %v4875
    %4880 = vmatprep.subr.bf16.mxu0 0
    %4881 = vmatpush1.bf16.msra.mxu0 0
    %4882 = vmatprep.subr.bf16.mxu0 0
    %4883 = vmatpush1.bf16.msra.mxu0 0
    %4884 = vmatprep.subr.bf16.mxu0 0
    %4885 = vmatpush1.bf16.msra.mxu0 0
    %4886 = vmatprep.subr.bf16.mxu0 0
    %4887 = vmatpush1.bf16.msra.mxu0 0
    %4888 = vmatprep.subr.bf16.mxu0 0
    %4889 = vmatpush1.bf16.msra.mxu0 0
    %4890 = vmatprep.subr.bf16.mxu0 0
    %4891 = vmatpush1.bf16.msra.mxu0 0
    %4892 = vmatprep.subr.bf16.mxu0 0
    %4893 = vmatpush1.bf16.msra.mxu0 0
    %4894 = vmatprep.subr.bf16.mxu0 0
    %4895 = vmatpush1.bf16.msra.mxu0 0
    %4896 = vmatprep.subr.bf16.mxu0 0
    %4897 = vmatpush1.bf16.msra.mxu0 0
    %4898 = vmatprep.subr.bf16.mxu0 0
    %4899 = vmatpush1.bf16.msra.mxu0 0
    %4900 = vmatprep.subr.bf16.mxu0 0
    %4901 = vmatpush1.bf16.msra.mxu0 0
    %4902 = vmatprep.subr.bf16.mxu0 0
    %4903 = vmatpush1.bf16.msra.mxu0 0
    %4904 = vmatprep.subr.bf16.mxu0 0
    %4905 = vmatpush1.bf16.msra.mxu0 0
    %4906 = vmatprep.subr.bf16.mxu0 0
    %4907 = vmatpush1.bf16.msra.mxu0 0
    %4908 = vmatprep.mubr.bf16.mxu0 0
    %4909 = vmatmul.mubr.bf16.gmra.mrb[0].mxu0 %v4626
    %v4910 = vpop.f32.mrb[0].mxu0
    %v4911 = vadd.f32 0.0, %v4910
    %v4912 = vpop.f32.mrb[0].mxu0
    %v4913 = vpop.f32.mrb[0].mxu0
    %v4914 = vadd.f32 0.0, %v4913
    %v4915 = vpop.f32.mrb[0].mxu0
    %4916 = vmatprep.mubr.bf16.mxu0 0
    %4917 = vmatmul.mubr.bf16.gmra.mrb[0].mxu0 %v4629
    %v4918 = vpop.f32.mrb[0].mxu0
    %v4919 = vadd.f32 0.0, %v4918
    %v4920 = vpop.f32.mrb[0].mxu0
    %v4921 = vpop.f32.mrb[0].mxu0
    %v4922 = vadd.f32 0.0, %v4921
    %v4923 = vpop.f32.mrb[0].mxu0
    %4924 = vmatprep.mubr.bf16.mxu0 0
    %4925 = vmatmul.mubr.bf16.gmra.mrb[0].mxu0 %v4632
    %v4926 = vpop.f32.mrb[0].mxu0
    %v4927 = vadd.f32 0.0, %v4926
    %v4928 = vpop.f32.mrb[0].mxu0
    %v4929 = vpop.f32.mrb[0].mxu0
    %v4930 = vadd.f32 0.0, %v4929
    %v4931 = vpop.f32.mrb[0].mxu0
    %4932 = vmatprep.mubr.bf16.mxu0 0
    %4933 = vmatmul.mubr.bf16.gmra.mrb[0].mxu0 %v4635
    %v4934 = vpop.f32.mrb[0].mxu0
    %v4935 = vadd.f32 0.0, %v4934
    %v4936 = vpop.f32.mrb[0].mxu0
    %v4937 = vpop.f32.mrb[0].mxu0
    %v4938 = vadd.f32 0.0, %v4937
    %v4939 = vpop.f32.mrb[0].mxu0
    %4940 = vmatprep.mubr.bf16.mxu0 0
    %4941 = vmatmul.mubr.bf16.gmra.mrb[0].mxu0 %v4638
    %v4942 = vpop.f32.mrb[0].mxu0
    %v4943 = vadd.f32 0.0, %v4942
    %v4944 = vpop.f32.mrb[0].mxu0
    %v4945 = vpop.f32.mrb[0].mxu0
    %v4946 = vadd.f32 0.0, %v4945
    %v4947 = vpop.f32.mrb[0].mxu0
    %4948 = vmatprep.mubr.bf16.mxu0 0
    %4949 = vmatmul.mubr.bf16.gmra.mrb[0].mxu0 %v4641
    %v4950 = vpop.f32.mrb[0].mxu0
    %v4951 = vadd.f32 0.0, %v4950
    %v4952 = vpop.f32.mrb[0].mxu0
    %v4953 = vpop.f32.mrb[0].mxu0
    %v4954 = vadd.f32 0.0, %v4953
    %v4955 = vpop.f32.mrb[0].mxu0
    %4956 = vmatprep.mubr.bf16.mxu0 0
    %4957 = vmatmul.mubr.bf16.gmra.mrb[0].mxu0 %v4644
    %v4958 = vpop.f32.mrb[0].mxu0
    %v4959 = vadd.f32 0.0, %v4958
    %v4960 = vpop.f32.mrb[0].mxu0
    %v4961 = vpop.f32.mrb[0].mxu0
    %v4962 = vadd.f32 0.0, %v4961
    %v4963 = vpop.f32.mrb[0].mxu0
    %4964 = vmatprep.mubr.bf16.mxu0 0
    %4965 = vmatmul.mubr.bf16.gmra.mrb[0].mxu0 %v4647
    %v4966 = vpop.f32.mrb[0].mxu0
    %v4967 = vadd.f32 0.0, %v4966
    %v4968 = vpop.f32.mrb[0].mxu0
    %v4969 = vpop.f32.mrb[0].mxu0
    %v4970 = vadd.f32 0.0, %v4969
    %v4971 = vpop.f32.mrb[0].mxu0
    %4972 = vdwg.mxu0
    %v4973 = vadd.f32 %v4858, %v4911
    %v4974 = vadd.f32 %v4859, %v4914
    %v4975 = vadd.f32 %v4860, %v4919
    %v4976 = vadd.f32 %v4861, %v4922
    %v4977 = vadd.f32 %v4862, %v4927
    %v4978 = vadd.f32 %v4863, %v4930
    %v4979 = vadd.f32 %v4864, %v4935
    %v4980 = vadd.f32 %v4865, %v4938
    %v4981 = vadd.f32 %v4866, %v4943
    %v4982 = vadd.f32 %v4867, %v4946
    %v4983 = vadd.f32 %v4868, %v4951
    %v4984 = vadd.f32 %v4869, %v4954
    %v4985 = vadd.f32 %v4870, %v4959
    %v4986 = vadd.f32 %v4871, %v4962
    %v4987 = vadd.f32 %v4872, %v4967
    %v4988 = vadd.f32 %v4873, %v4970
    %v4989 = vxor.u32 %v4973, 2147483648
    %v4990 = vxor.u32 %v4974, 2147483648
    %v4991 = vxor.u32 %v4975, 2147483648
    %v4992 = vxor.u32 %v4976, 2147483648
    %v4993 = vxor.u32 %v4977, 2147483648
    %v4994 = vxor.u32 %v4978, 2147483648
    %v4995 = vxor.u32 %v4979, 2147483648
    %v4996 = vxor.u32 %v4980, 2147483648
    %v4997 = vxor.u32 %v4985, 2147483648
    %v4998 = vxor.u32 %v4986, 2147483648
    %v4999 = vxor.u32 %v4987, 2147483648
    %v5000 = vxor.u32 %v4988, 2147483648
    %v5001 = vmul.f32 %v4989, 1.442695
    %v5002 = vpow.pop %v5001
    %v5003 = vmul.f32 %v4990, 1.442695
    %v5004 = vpow.pop %v5003
    %v5005 = vmul.f32 %v4991, 1.442695
    %v5006 = vpow.pop %v5005
    %v5007 = vmul.f32 %v4992, 1.442695
    %v5008 = vpow.pop %v5007
    %v5009 = vmul.f32 %v4993, 1.442695
    %v5010 = vpow.pop %v5009
    %v5011 = vmul.f32 %v4994, 1.442695
    %v5012 = vpow.pop %v5011
    %v5013 = vmul.f32 %v4995, 1.442695
    %v5014 = vpow.pop %v5013
    %v5015 = vmul.f32 %v4996, 1.442695
    %v5016 = vpow.pop %v5015
    %v5017 = vmul.f32 %v4997, 1.442695
    %v5018 = vpow.pop %v5017
    %v5019 = vmul.f32 %v4998, 1.442695
    %v5020 = vpow.pop %v5019
    %v5021 = vmul.f32 %v4999, 1.442695
    %v5022 = vpow.pop %v5021
    %v5023 = vmul.f32 %v5000, 1.442695
    %v5024 = vpow.pop %v5023
    %v5025 = vadd.f32 %v5002, 1.0
    %v5026 = vadd.f32 %v5004, 1.0
    %v5027 = vadd.f32 %v5006, 1.0
    %v5028 = vadd.f32 %v5008, 1.0
    %v5029 = vadd.f32 %v5010, 1.0
    %v5030 = vadd.f32 %v5012, 1.0
    %v5031 = vadd.f32 %v5014, 1.0
    %v5032 = vadd.f32 %v5016, 1.0
    %v5033 = vadd.f32 %v5018, 1.0
    %v5034 = vadd.f32 %v5020, 1.0
    %v5035 = vadd.f32 %v5022, 1.0
    %v5036 = vadd.f32 %v5024, 1.0
    %v5037 = vrcp.pop %v5025
    %v5038 = vmul.f32 1.0, %v5037
    %v5039 = vrcp.pop %v5026
    %v5040 = vmul.f32 1.0, %v5039
    %v5041 = vrcp.pop %v5027
    %v5042 = vmul.f32 1.0, %v5041
    %v5043 = vrcp.pop %v5028
    %v5044 = vmul.f32 1.0, %v5043
    %v5045 = vrcp.pop %v5029
    %v5046 = vmul.f32 1.0, %v5045
    %v5047 = vrcp.pop %v5030
    %v5048 = vmul.f32 1.0, %v5047
    %v5049 = vrcp.pop %v5031
    %v5050 = vmul.f32 1.0, %v5049
    %v5051 = vrcp.pop %v5032
    %v5052 = vmul.f32 1.0, %v5051
    %v5053 = vrcp.pop %v5033
    %v5054 = vmul.f32 1.0, %v5053
    %v5055 = vrcp.pop %v5034
    %v5056 = vmul.f32 1.0, %v5055
    %v5057 = vrcp.pop %v5035
    %v5058 = vmul.f32 1.0, %v5057
    %v5059 = vrcp.pop %v5036
    %v5060 = vmul.f32 1.0, %v5059
    %v5061 = vtanh.pop %v4981
    %v5062 = vtanh.pop %v4982
    %v5063 = vtanh.pop %v4983
    %v5064 = vtanh.pop %v4984
    %v5065 = vmul.f32 %v5046, %v4846
    %v5066 = vmul.f32 %v5048, %v4847
    %v5067 = vmul.f32 %v5050, %v4848
    %v5068 = vmul.f32 %v5052, %v4849
    %v5069 = vmul.f32 %v5038, %v5061
    %v5070 = vmul.f32 %v5040, %v5062
    %v5071 = vmul.f32 %v5042, %v5063
    %v5072 = vmul.f32 %v5044, %v5064
    %v5073 = vadd.f32 %v5065, %v5069
    %v5074 = vadd.f32 %v5066, %v5070
    %v5075 = vadd.f32 %v5067, %v5071
    %v5076 = vadd.f32 %v5068, %v5072
    %v5077 = vtanh.pop %v5073
    %v5078 = vtanh.pop %v5074
    %v5079 = vtanh.pop %v5075
    %v5080 = vtanh.pop %v5076
    %v5081 = vmul.f32 %v5054, %v5077
    %v5082 = vmul.f32 %v5056, %v5078
    %v5083 = vmul.f32 %v5058, %v5079
    %v5084 = vmul.f32 %v5060, %v5080
    %v5085 = vld [vmem:[%s801] sm:$0xff]
    %v5086 = vld [vmem:[%s801 + $0x8] sm:$0xff]
    %v5087 = vld [vmem:[%s801 + $0x10] sm:$0xff]
    %v5088 = vld [vmem:[%s801 + $0x18] sm:$0xff]
    %v5089 = vld [vmem:[%s801 + $0x20] sm:$0xff]
    %v5090 = vld [vmem:[%s801 + $0x28] sm:$0xff]
    %v5091 = vld [vmem:[%s801 + $0x30] sm:$0xff]
    %v5092 = vld [vmem:[%s801 + $0x38] sm:$0xff]
    %v5093 = vld [vmem:[%s801 + $0x40] sm:$0xff]
    %v5094 = vld [vmem:[%s801 + $0x48] sm:$0xff]
    %v5095 = vld [vmem:[%s801 + $0x50] sm:$0xff]
    %v5096 = vld [vmem:[%s801 + $0x58] sm:$0xff]
    %v5097 = vld [vmem:[%s801 + $0x60] sm:$0xff]
    %v5098 = vld [vmem:[%s801 + $0x68] sm:$0xff]
    %v5099 = vld [vmem:[%s801 + $0x70] sm:$0xff]
    %v5100 = vld [vmem:[%s801 + $0x78] sm:$0xff]
    %v5101 = vpack.c.bf16 %v5082, %v5081
    %v5102 = vpack.c.bf16 %v5084, %v5083
    %5103 = vmatprep.subr.bf16.mxu0 0
    %5104 = vmatpush1.bf16.msra.mxu0 %v5101
    %5105 = vmatprep.subr.bf16.mxu0 0
    %5106 = vmatpush1.bf16.msra.mxu0 %v5102
    %5107 = vmatprep.subr.bf16.mxu0 0
    %5108 = vmatpush1.bf16.msra.mxu0 0
    %5109 = vmatprep.subr.bf16.mxu0 0
    %5110 = vmatpush1.bf16.msra.mxu0 0
    %5111 = vmatprep.subr.bf16.mxu0 0
    %5112 = vmatpush1.bf16.msra.mxu0 0
    %5113 = vmatprep.subr.bf16.mxu0 0
    %5114 = vmatpush1.bf16.msra.mxu0 0
    %5115 = vmatprep.subr.bf16.mxu0 0
    %5116 = vmatpush1.bf16.msra.mxu0 0
    %5117 = vmatprep.subr.bf16.mxu0 0
    %5118 = vmatpush1.bf16.msra.mxu0 0
    %5119 = vmatprep.subr.bf16.mxu0 0
    %5120 = vmatpush1.bf16.msra.mxu0 0
    %5121 = vmatprep.subr.bf16.mxu0 0
    %5122 = vmatpush1.bf16.msra.mxu0 0
    %5123 = vmatprep.subr.bf16.mxu0 0
    %5124 = vmatpush1.bf16.msra.mxu0 0
    %5125 = vmatprep.subr.bf16.mxu0 0
    %5126 = vmatpush1.bf16.msra.mxu0 0
    %5127 = vmatprep.subr.bf16.mxu0 0
    %5128 = vmatpush1.bf16.msra.mxu0 0
    %5129 = vmatprep.subr.bf16.mxu0 0
    %5130 = vmatpush1.bf16.msra.mxu0 0
    %5131 = vmatprep.subr.bf16.mxu0 0
    %5132 = vmatpush1.bf16.msra.mxu0 0
    %5133 = vmatprep.subr.bf16.mxu0 0
    %5134 = vmatpush1.bf16.msra.mxu0 0
    %5135 = vmatprep.mubr.bf16.mxu0 0
    %5136 = vmatmul.mubr.bf16.gmra.mrb[0].mxu0 %v4626
    %v5137 = vpop.f32.mrb[0].mxu0
    %v5138 = vadd.f32 0.0, %v5137
    %v5139 = vpop.f32.mrb[0].mxu0
    %v5140 = vpop.f32.mrb[0].mxu0
    %v5141 = vadd.f32 0.0, %v5140
    %v5142 = vpop.f32.mrb[0].mxu0
    %5143 = vmatprep.mubr.bf16.mxu0 0
    %5144 = vmatmul.mubr.bf16.gmra.mrb[0].mxu0 %v4629
    %v5145 = vpop.f32.mrb[0].mxu0
    %v5146 = vadd.f32 0.0, %v5145
    %v5147 = vpop.f32.mrb[0].mxu0
    %v5148 = vpop.f32.mrb[0].mxu0
    %v5149 = vadd.f32 0.0, %v5148
    %v5150 = vpop.f32.mrb[0].mxu0
    %5151 = vmatprep.mubr.bf16.mxu0 0
    %5152 = vmatmul.mubr.bf16.gmra.mrb[0].mxu0 %v4632
    %v5153 = vpop.f32.mrb[0].mxu0
    %v5154 = vadd.f32 0.0, %v5153
    %v5155 = vpop.f32.mrb[0].mxu0
    %v5156 = vpop.f32.mrb[0].mxu0
    %v5157 = vadd.f32 0.0, %v5156
    %v5158 = vpop.f32.mrb[0].mxu0
    %5159 = vmatprep.mubr.bf16.mxu0 0
    %5160 = vmatmul.mubr.bf16.gmra.mrb[0].mxu0 %v4635
    %v5161 = vpop.f32.mrb[0].mxu0
    %v5162 = vadd.f32 0.0, %v5161
    %v5163 = vpop.f32.mrb[0].mxu0
    %v5164 = vpop.f32.mrb[0].mxu0
    %v5165 = vadd.f32 0.0, %v5164
    %v5166 = vpop.f32.mrb[0].mxu0
    %5167 = vmatprep.mubr.bf16.mxu0 0
    %5168 = vmatmul.mubr.bf16.gmra.mrb[0].mxu0 %v4638
    %v5169 = vpop.f32.mrb[0].mxu0
    %v5170 = vadd.f32 0.0, %v5169
    %v5171 = vpop.f32.mrb[0].mxu0
    %v5172 = vpop.f32.mrb[0].mxu0
    %v5173 = vadd.f32 0.0, %v5172
    %v5174 = vpop.f32.mrb[0].mxu0
    %5175 = vmatprep.mubr.bf16.mxu0 0
    %5176 = vmatmul.mubr.bf16.gmra.mrb[0].mxu0 %v4641
    %v5177 = vpop.f32.mrb[0].mxu0
    %v5178 = vadd.f32 0.0, %v5177
    %v5179 = vpop.f32.mrb[0].mxu0
    %v5180 = vpop.f32.mrb[0].mxu0
    %v5181 = vadd.f32 0.0, %v5180
    %v5182 = vpop.f32.mrb[0].mxu0
    %5183 = vmatprep.mubr.bf16.mxu0 0
    %5184 = vmatmul.mubr.bf16.gmra.mrb[0].mxu0 %v4644
    %v5185 = vpop.f32.mrb[0].mxu0
    %v5186 = vadd.f32 0.0, %v5185
    %v5187 = vpop.f32.mrb[0].mxu0
    %v5188 = vpop.f32.mrb[0].mxu0
    %v5189 = vadd.f32 0.0, %v5188
    %v5190 = vpop.f32.mrb[0].mxu0
    %5191 = vmatprep.mubr.bf16.mxu0 0
    %5192 = vmatmul.mubr.bf16.gmra.mrb[0].mxu0 %v4647
    %v5193 = vpop.f32.mrb[0].mxu0
    %v5194 = vadd.f32 0.0, %v5193
    %v5195 = vpop.f32.mrb[0].mxu0
    %v5196 = vpop.f32.mrb[0].mxu0
    %v5197 = vadd.f32 0.0, %v5196
    %v5198 = vpop.f32.mrb[0].mxu0
    %5199 = vdwg.mxu0
    %v5200 = vadd.f32 %v5085, %v5138
    %v5201 = vadd.f32 %v5086, %v5141
    %v5202 = vadd.f32 %v5087, %v5146
    %v5203 = vadd.f32 %v5088, %v5149
    %v5204 = vadd.f32 %v5089, %v5154
    %v5205 = vadd.f32 %v5090, %v5157
    %v5206 = vadd.f32 %v5091, %v5162
    %v5207 = vadd.f32 %v5092, %v5165
    %v5208 = vadd.f32 %v5093, %v5170
    %v5209 = vadd.f32 %v5094, %v5173
    %v5210 = vadd.f32 %v5095, %v5178
    %v5211 = vadd.f32 %v5096, %v5181
    %v5212 = vadd.f32 %v5097, %v5186
    %v5213 = vadd.f32 %v5098, %v5189
    %v5214 = vadd.f32 %v5099, %v5194
    %v5215 = vadd.f32 %v5100, %v5197
    %v5216 = vxor.u32 %v5200, 2147483648
    %v5217 = vxor.u32 %v5201, 2147483648
    %v5218 = vxor.u32 %v5202, 2147483648
    %v5219 = vxor.u32 %v5203, 2147483648
    %v5220 = vxor.u32 %v5204, 2147483648
    %v5221 = vxor.u32 %v5205, 2147483648
    %v5222 = vxor.u32 %v5206, 2147483648
    %v5223 = vxor.u32 %v5207, 2147483648
    %v5224 = vxor.u32 %v5212, 2147483648
    %v5225 = vxor.u32 %v5213, 2147483648
    %v5226 = vxor.u32 %v5214, 2147483648
    %v5227 = vxor.u32 %v5215, 2147483648
    %v5228 = vmul.f32 %v5216, 1.442695
    %v5229 = vpow.pop %v5228
    %v5230 = vmul.f32 %v5217, 1.442695
    %v5231 = vpow.pop %v5230
    %v5232 = vmul.f32 %v5218, 1.442695
    %v5233 = vpow.pop %v5232
    %v5234 = vmul.f32 %v5219, 1.442695
    %v5235 = vpow.pop %v5234
    %v5236 = vmul.f32 %v5220, 1.442695
    %v5237 = vpow.pop %v5236
    %v5238 = vmul.f32 %v5221, 1.442695
    %v5239 = vpow.pop %v5238
    %v5240 = vmul.f32 %v5222, 1.442695
    %v5241 = vpow.pop %v5240
    %v5242 = vmul.f32 %v5223, 1.442695
    %v5243 = vpow.pop %v5242
    %v5244 = vmul.f32 %v5224, 1.442695
    %v5245 = vpow.pop %v5244
    %v5246 = vmul.f32 %v5225, 1.442695
    %v5247 = vpow.pop %v5246
    %v5248 = vmul.f32 %v5226, 1.442695
    %v5249 = vpow.pop %v5248
    %v5250 = vmul.f32 %v5227, 1.442695
    %v5251 = vpow.pop %v5250
    %v5252 = vadd.f32 %v5229, 1.0
    %v5253 = vadd.f32 %v5231, 1.0
    %v5254 = vadd.f32 %v5233, 1.0
    %v5255 = vadd.f32 %v5235, 1.0
    %v5256 = vadd.f32 %v5237, 1.0
    %v5257 = vadd.f32 %v5239, 1.0
    %v5258 = vadd.f32 %v5241, 1.0
    %v5259 = vadd.f32 %v5243, 1.0
    %v5260 = vadd.f32 %v5245, 1.0
    %v5261 = vadd.f32 %v5247, 1.0
    %v5262 = vadd.f32 %v5249, 1.0
    %v5263 = vadd.f32 %v5251, 1.0
    %v5264 = vrcp.pop %v5252
    %v5265 = vmul.f32 1.0, %v5264
    %v5266 = vrcp.pop %v5253
    %v5267 = vmul.f32 1.0, %v5266
    %v5268 = vrcp.pop %v5254
    %v5269 = vmul.f32 1.0, %v5268
    %v5270 = vrcp.pop %v5255
    %v5271 = vmul.f32 1.0, %v5270
    %v5272 = vrcp.pop %v5256
    %v5273 = vmul.f32 1.0, %v5272
    %v5274 = vrcp.pop %v5257
    %v5275 = vmul.f32 1.0, %v5274
    %v5276 = vrcp.pop %v5258
    %v5277 = vmul.f32 1.0, %v5276
    %v5278 = vrcp.pop %v5259
    %v5279 = vmul.f32 1.0, %v5278
    %v5280 = vrcp.pop %v5260
    %v5281 = vmul.f32 1.0, %v5280
    %v5282 = vrcp.pop %v5261
    %v5283 = vmul.f32 1.0, %v5282
    %v5284 = vrcp.pop %v5262
    %v5285 = vmul.f32 1.0, %v5284
    %v5286 = vrcp.pop %v5263
    %v5287 = vmul.f32 1.0, %v5286
    %v5288 = vtanh.pop %v5208
    %v5289 = vtanh.pop %v5209
    %v5290 = vtanh.pop %v5210
    %v5291 = vtanh.pop %v5211
    %v5292 = vmul.f32 %v5273, %v5073
    %v5293 = vmul.f32 %v5275, %v5074
    %v5294 = vmul.f32 %v5277, %v5075
    %v5295 = vmul.f32 %v5279, %v5076
    %v5296 = vmul.f32 %v5265, %v5288
    %v5297 = vmul.f32 %v5267, %v5289
    %v5298 = vmul.f32 %v5269, %v5290
    %v5299 = vmul.f32 %v5271, %v5291
    %v5300 = vadd.f32 %v5292, %v5296
    %v5301 = vadd.f32 %v5293, %v5297
    %v5302 = vadd.f32 %v5294, %v5298
    %v5303 = vadd.f32 %v5295, %v5299
    %v5304 = vtanh.pop %v5300
    %v5305 = vtanh.pop %v5301
    %v5306 = vtanh.pop %v5302
    %v5307 = vtanh.pop %v5303
    %v5308 = vmul.f32 %v5281, %v5304
    %v5309 = vmul.f32 %v5283, %v5305
    %v5310 = vmul.f32 %v5285, %v5306
    %v5311 = vmul.f32 %v5287, %v5307
    %v5312 = vld [vmem:[%s948] sm:$0xff]
    %v5313 = vld [vmem:[%s948 + $0x8] sm:$0xff]
    %v5314 = vld [vmem:[%s948 + $0x10] sm:$0xff]
    %v5315 = vld [vmem:[%s948 + $0x18] sm:$0xff]
    %v5316 = vld [vmem:[%s948 + $0x20] sm:$0xff]
    %v5317 = vld [vmem:[%s948 + $0x28] sm:$0xff]
    %v5318 = vld [vmem:[%s948 + $0x30] sm:$0xff]
    %v5319 = vld [vmem:[%s948 + $0x38] sm:$0xff]
    %v5320 = vld [vmem:[%s948 + $0x40] sm:$0xff]
    %v5321 = vld [vmem:[%s948 + $0x48] sm:$0xff]
    %v5322 = vld [vmem:[%s948 + $0x50] sm:$0xff]
    %v5323 = vld [vmem:[%s948 + $0x58] sm:$0xff]
    %v5324 = vld [vmem:[%s948 + $0x60] sm:$0xff]
    %v5325 = vld [vmem:[%s948 + $0x68] sm:$0xff]
    %v5326 = vld [vmem:[%s948 + $0x70] sm:$0xff]
    %v5327 = vld [vmem:[%s948 + $0x78] sm:$0xff]
    %v5328 = vpack.c.bf16 %v5309, %v5308
    %v5329 = vpack.c.bf16 %v5311, %v5310
    %5330 = vmatprep.subr.bf16.mxu0 0
    %5331 = vmatpush1.bf16.msra.mxu0 %v5328
    %5332 = vmatprep.subr.bf16.mxu0 0
    %5333 = vmatpush1.bf16.msra.mxu0 %v5329
    %5334 = vmatprep.subr.bf16.mxu0 0
    %5335 = vmatpush1.bf16.msra.mxu0 0
    %5336 = vmatprep.subr.bf16.mxu0 0
    %5337 = vmatpush1.bf16.msra.mxu0 0
    %5338 = vmatprep.subr.bf16.mxu0 0
    %5339 = vmatpush1.bf16.msra.mxu0 0
    %5340 = vmatprep.subr.bf16.mxu0 0
    %5341 = vmatpush1.bf16.msra.mxu0 0
    %5342 = vmatprep.subr.bf16.mxu0 0
    %5343 = vmatpush1.bf16.msra.mxu0 0
    %5344 = vmatprep.subr.bf16.mxu0 0
    %5345 = vmatpush1.bf16.msra.mxu0 0
    %5346 = vmatprep.subr.bf16.mxu0 0
    %5347 = vmatpush1.bf16.msra.mxu0 0
    %5348 = vmatprep.subr.bf16.mxu0 0
    %5349 = vmatpush1.bf16.msra.mxu0 0
    %5350 = vmatprep.subr.bf16.mxu0 0
    %5351 = vmatpush1.bf16.msra.mxu0 0
    %5352 = vmatprep.subr.bf16.mxu0 0
    %5353 = vmatpush1.bf16.msra.mxu0 0
    %5354 = vmatprep.subr.bf16.mxu0 0
    %5355 = vmatpush1.bf16.msra.mxu0 0
    %5356 = vmatprep.subr.bf16.mxu0 0
    %5357 = vmatpush1.bf16.msra.mxu0 0
    %5358 = vmatprep.subr.bf16.mxu0 0
    %5359 = vmatpush1.bf16.msra.mxu0 0
    %5360 = vmatprep.subr.bf16.mxu0 0
    %5361 = vmatpush1.bf16.msra.mxu0 0
    %5362 = vmatprep.mubr.bf16.mxu0 0
    %5363 = vmatmul.mubr.bf16.gmra.mrb[0].mxu0 %v4626
    %v5364 = vpop.f32.mrb[0].mxu0
    %v5365 = vadd.f32 0.0, %v5364
    %v5366 = vpop.f32.mrb[0].mxu0
    %v5367 = vpop.f32.mrb[0].mxu0
    %v5368 = vadd.f32 0.0, %v5367
    %v5369 = vpop.f32.mrb[0].mxu0
    %5370 = vmatprep.mubr.bf16.mxu0 0
    %5371 = vmatmul.mubr.bf16.gmra.mrb[0].mxu0 %v4629
    %v5372 = vpop.f32.mrb[0].mxu0
    %v5373 = vadd.f32 0.0, %v5372
    %v5374 = vpop.f32.mrb[0].mxu0
    %v5375 = vpop.f32.mrb[0].mxu0
    %v5376 = vadd.f32 0.0, %v5375
    %v5377 = vpop.f32.mrb[0].mxu0
    %5378 = vmatprep.mubr.bf16.mxu0 0
    %5379 = vmatmul.mubr.bf16.gmra.mrb[0].mxu0 %v4632
    %v5380 = vpop.f32.mrb[0].mxu0
    %v5381 = vadd.f32 0.0, %v5380
    %v5382 = vpop.f32.mrb[0].mxu0
    %v5383 = vpop.f32.mrb[0].mxu0
    %v5384 = vadd.f32 0.0, %v5383
    %v5385 = vpop.f32.mrb[0].mxu0
    %5386 = vmatprep.mubr.bf16.mxu0 0
    %5387 = vmatmul.mubr.bf16.gmra.mrb[0].mxu0 %v4635
    %v5388 = vpop.f32.mrb[0].mxu0
    %v5389 = vadd.f32 0.0, %v5388
    %v5390 = vpop.f32.mrb[0].mxu0
    %v5391 = vpop.f32.mrb[0].mxu0
    %v5392 = vadd.f32 0.0, %v5391
    %v5393 = vpop.f32.mrb[0].mxu0
    %5394 = vmatprep.mubr.bf16.mxu0 0
    %5395 = vmatmul.mubr.bf16.gmra.mrb[0].mxu0 %v4638
    %v5396 = vpop.f32.mrb[0].mxu0
    %v5397 = vadd.f32 0.0, %v5396
    %v5398 = vpop.f32.mrb[0].mxu0
    %v5399 = vpop.f32.mrb[0].mxu0
    %v5400 = vadd.f32 0.0, %v5399
    %v5401 = vpop.f32.mrb[0].mxu0
    %5402 = vmatprep.mubr.bf16.mxu0 0
    %5403 = vmatmul.mubr.bf16.gmra.mrb[0].mxu0 %v4641
    %v5404 = vpop.f32.mrb[0].mxu0
    %v5405 = vadd.f32 0.0, %v5404
    %v5406 = vpop.f32.mrb[0].mxu0
    %v5407 = vpop.f32.mrb[0].mxu0
    %v5408 = vadd.f32 0.0, %v5407
    %v5409 = vpop.f32.mrb[0].mxu0
    %5410 = vmatprep.mubr.bf16.mxu0 0
    %5411 = vmatmul.mubr.bf16.gmra.mrb[0].mxu0 %v4644
    %v5412 = vpop.f32.mrb[0].mxu0
    %v5413 = vadd.f32 0.0, %v5412
    %v5414 = vpop.f32.mrb[0].mxu0
    %v5415 = vpop.f32.mrb[0].mxu0
    %v5416 = vadd.f32 0.0, %v5415
    %v5417 = vpop.f32.mrb[0].mxu0
    %5418 = vmatprep.mubr.bf16.mxu0 0
    %5419 = vmatmul.mubr.bf16.gmra.mrb[0].mxu0 %v4647
    %v5420 = vpop.f32.mrb[0].mxu0
    %v5421 = vadd.f32 0.0, %v5420
    %v5422 = vpop.f32.mrb[0].mxu0
    %v5423 = vpop.f32.mrb[0].mxu0
    %v5424 = vadd.f32 0.0, %v5423
    %v5425 = vpop.f32.mrb[0].mxu0
    %5426 = vdwg.mxu0
    %v5427 = vadd.f32 %v5312, %v5365
    %v5428 = vadd.f32 %v5313, %v5368
    %v5429 = vadd.f32 %v5314, %v5373
    %v5430 = vadd.f32 %v5315, %v5376
    %v5431 = vadd.f32 %v5316, %v5381
    %v5432 = vadd.f32 %v5317, %v5384
    %v5433 = vadd.f32 %v5318, %v5389
    %v5434 = vadd.f32 %v5319, %v5392
    %v5435 = vadd.f32 %v5320, %v5397
    %v5436 = vadd.f32 %v5321, %v5400
    %v5437 = vadd.f32 %v5322, %v5405
    %v5438 = vadd.f32 %v5323, %v5408
    %v5439 = vadd.f32 %v5324, %v5413
    %v5440 = vadd.f32 %v5325, %v5416
    %v5441 = vadd.f32 %v5326, %v5421
    %v5442 = vadd.f32 %v5327, %v5424
    %v5443 = vxor.u32 %v5427, 2147483648
    %v5444 = vxor.u32 %v5428, 2147483648
    %v5445 = vxor.u32 %v5429, 2147483648
    %v5446 = vxor.u32 %v5430, 2147483648
    %v5447 = vxor.u32 %v5431, 2147483648
    %v5448 = vxor.u32 %v5432, 2147483648
    %v5449 = vxor.u32 %v5433, 2147483648
    %v5450 = vxor.u32 %v5434, 2147483648
    %v5451 = vxor.u32 %v5439, 2147483648
    %v5452 = vxor.u32 %v5440, 2147483648
    %v5453 = vxor.u32 %v5441, 2147483648
    %v5454 = vxor.u32 %v5442, 2147483648
    %v5455 = vmul.f32 %v5443, 1.442695
    %v5456 = vpow.pop %v5455
    %v5457 = vmul.f32 %v5444, 1.442695
    %v5458 = vpow.pop %v5457
    %v5459 = vmul.f32 %v5445, 1.442695
    %v5460 = vpow.pop %v5459
    %v5461 = vmul.f32 %v5446, 1.442695
    %v5462 = vpow.pop %v5461
    %v5463 = vmul.f32 %v5447, 1.442695
    %v5464 = vpow.pop %v5463
    %v5465 = vmul.f32 %v5448, 1.442695
    %v5466 = vpow.pop %v5465
    %v5467 = vmul.f32 %v5449, 1.442695
    %v5468 = vpow.pop %v5467
    %v5469 = vmul.f32 %v5450, 1.442695
    %v5470 = vpow.pop %v5469
    %v5471 = vmul.f32 %v5451, 1.442695
    %v5472 = vpow.pop %v5471
    %v5473 = vmul.f32 %v5452, 1.442695
    %v5474 = vpow.pop %v5473
    %v5475 = vmul.f32 %v5453, 1.442695
    %v5476 = vpow.pop %v5475
    %v5477 = vmul.f32 %v5454, 1.442695
    %v5478 = vpow.pop %v5477
    %v5479 = vadd.f32 %v5456, 1.0
    %v5480 = vadd.f32 %v5458, 1.0
    %v5481 = vadd.f32 %v5460, 1.0
    %v5482 = vadd.f32 %v5462, 1.0
    %v5483 = vadd.f32 %v5464, 1.0
    %v5484 = vadd.f32 %v5466, 1.0
    %v5485 = vadd.f32 %v5468, 1.0
    %v5486 = vadd.f32 %v5470, 1.0
    %v5487 = vadd.f32 %v5472, 1.0
    %v5488 = vadd.f32 %v5474, 1.0
    %v5489 = vadd.f32 %v5476, 1.0
    %v5490 = vadd.f32 %v5478, 1.0
    %v5491 = vrcp.pop %v5479
    %v5492 = vmul.f32 1.0, %v5491
    %v5493 = vrcp.pop %v5480
    %v5494 = vmul.f32 1.0, %v5493
    %v5495 = vrcp.pop %v5481
    %v5496 = vmul.f32 1.0, %v5495
    %v5497 = vrcp.pop %v5482
    %v5498 = vmul.f32 1.0, %v5497
    %v5499 = vrcp.pop %v5483
    %v5500 = vmul.f32 1.0, %v5499
    %v5501 = vrcp.pop %v5484
    %v5502 = vmul.f32 1.0, %v5501
    %v5503 = vrcp.pop %v5485
    %v5504 = vmul.f32 1.0, %v5503
    %v5505 = vrcp.pop %v5486
    %v5506 = vmul.f32 1.0, %v5505
    %v5507 = vrcp.pop %v5487
    %v5508 = vmul.f32 1.0, %v5507
    %v5509 = vrcp.pop %v5488
    %v5510 = vmul.f32 1.0, %v5509
    %v5511 = vrcp.pop %v5489
    %v5512 = vmul.f32 1.0, %v5511
    %v5513 = vrcp.pop %v5490
    %v5514 = vmul.f32 1.0, %v5513
    %v5515 = vtanh.pop %v5435
    %v5516 = vtanh.pop %v5436
    %v5517 = vtanh.pop %v5437
    %v5518 = vtanh.pop %v5438
    %v5519 = vmul.f32 %v5500, %v5300
    %v5520 = vmul.f32 %v5502, %v5301
    %v5521 = vmul.f32 %v5504, %v5302
    %v5522 = vmul.f32 %v5506, %v5303
    %v5523 = vmul.f32 %v5492, %v5515
    %v5524 = vmul.f32 %v5494, %v5516
    %v5525 = vmul.f32 %v5496, %v5517
    %v5526 = vmul.f32 %v5498, %v5518
    %v5527 = vadd.f32 %v5519, %v5523
    %v5528 = vadd.f32 %v5520, %v5524
    %v5529 = vadd.f32 %v5521, %v5525
    %v5530 = vadd.f32 %v5522, %v5526
    %v5531 = vtanh.pop %v5527
    %v5532 = vtanh.pop %v5528
    %v5533 = vtanh.pop %v5529
    %v5534 = vtanh.pop %v5530
    %v5535 = vmul.f32 %v5508, %v5531
    %v5536 = vmul.f32 %v5510, %v5532
    %v5537 = vmul.f32 %v5512, %v5533
    %v5538 = vmul.f32 %v5514, %v5534
    %v5539 = vld [vmem:[%s1095] sm:$0xff]
    %v5540 = vld [vmem:[%s1095 + $0x8] sm:$0xff]
    %v5541 = vld [vmem:[%s1095 + $0x10] sm:$0xff]
    %v5542 = vld [vmem:[%s1095 + $0x18] sm:$0xff]
    %v5543 = vld [vmem:[%s1095 + $0x20] sm:$0xff]
    %v5544 = vld [vmem:[%s1095 + $0x28] sm:$0xff]
    %v5545 = vld [vmem:[%s1095 + $0x30] sm:$0xff]
    %v5546 = vld [vmem:[%s1095 + $0x38] sm:$0xff]
    %v5547 = vld [vmem:[%s1095 + $0x40] sm:$0xff]
    %v5548 = vld [vmem:[%s1095 + $0x48] sm:$0xff]
    %v5549 = vld [vmem:[%s1095 + $0x50] sm:$0xff]
    %v5550 = vld [vmem:[%s1095 + $0x58] sm:$0xff]
    %v5551 = vld [vmem:[%s1095 + $0x60] sm:$0xff]
    %v5552 = vld [vmem:[%s1095 + $0x68] sm:$0xff]
    %v5553 = vld [vmem:[%s1095 + $0x70] sm:$0xff]
    %v5554 = vld [vmem:[%s1095 + $0x78] sm:$0xff]
    %v5555 = vpack.c.bf16 %v5536, %v5535
    %v5556 = vpack.c.bf16 %v5538, %v5537
    %5557 = vmatprep.subr.bf16.mxu0 0
    %5558 = vmatpush1.bf16.msra.mxu0 %v5555
    %5559 = vmatprep.subr.bf16.mxu0 0
    %5560 = vmatpush1.bf16.msra.mxu0 %v5556
    %5561 = vmatprep.subr.bf16.mxu0 0
    %5562 = vmatpush1.bf16.msra.mxu0 0
    %5563 = vmatprep.subr.bf16.mxu0 0
    %5564 = vmatpush1.bf16.msra.mxu0 0
    %5565 = vmatprep.subr.bf16.mxu0 0
    %5566 = vmatpush1.bf16.msra.mxu0 0
    %5567 = vmatprep.subr.bf16.mxu0 0
    %5568 = vmatpush1.bf16.msra.mxu0 0
    %5569 = vmatprep.subr.bf16.mxu0 0
    %5570 = vmatpush1.bf16.msra.mxu0 0
    %5571 = vmatprep.subr.bf16.mxu0 0
    %5572 = vmatpush1.bf16.msra.mxu0 0
    %5573 = vmatprep.subr.bf16.mxu0 0
    %5574 = vmatpush1.bf16.msra.mxu0 0
    %5575 = vmatprep.subr.bf16.mxu0 0
    %5576 = vmatpush1.bf16.msra.mxu0 0
    %5577 = vmatprep.subr.bf16.mxu0 0
    %5578 = vmatpush1.bf16.msra.mxu0 0
    %5579 = vmatprep.subr.bf16.mxu0 0
    %5580 = vmatpush1.bf16.msra.mxu0 0
    %5581 = vmatprep.subr.bf16.mxu0 0
    %5582 = vmatpush1.bf16.msra.mxu0 0
    %5583 = vmatprep.subr.bf16.mxu0 0
    %5584 = vmatpush1.bf16.msra.mxu0 0
    %5585 = vmatprep.subr.bf16.mxu0 0
    %5586 = vmatpush1.bf16.msra.mxu0 0
    %5587 = vmatprep.subr.bf16.mxu0 0
    %5588 = vmatpush1.bf16.msra.mxu0 0
    %5589 = vmatprep.mubr.bf16.mxu0 0
    %5590 = vmatmul.mubr.bf16.gmra.mrb[0].mxu0 %v4626
    %v5591 = vpop.f32.mrb[0].mxu0
    %v5592 = vadd.f32 0.0, %v5591
    %v5593 = vpop.f32.mrb[0].mxu0
    %v5594 = vpop.f32.mrb[0].mxu0
    %v5595 = vadd.f32 0.0, %v5594
    %v5596 = vpop.f32.mrb[0].mxu0
    %5597 = vmatprep.mubr.bf16.mxu0 0
    %5598 = vmatmul.mubr.bf16.gmra.mrb[0].mxu0 %v4629
    %v5599 = vpop.f32.mrb[0].mxu0
    %v5600 = vadd.f32 0.0, %v5599
    %v5601 = vpop.f32.mrb[0].mxu0
    %v5602 = vpop.f32.mrb[0].mxu0
    %v5603 = vadd.f32 0.0, %v5602
    %v5604 = vpop.f32.mrb[0].mxu0
    %5605 = vmatprep.mubr.bf16.mxu0 0
    %5606 = vmatmul.mubr.bf16.gmra.mrb[0].mxu0 %v4632
    %v5607 = vpop.f32.mrb[0].mxu0
    %v5608 = vadd.f32 0.0, %v5607
    %v5609 = vpop.f32.mrb[0].mxu0
    %v5610 = vpop.f32.mrb[0].mxu0
    %v5611 = vadd.f32 0.0, %v5610
    %v5612 = vpop.f32.mrb[0].mxu0
    %5613 = vmatprep.mubr.bf16.mxu0 0
    %5614 = vmatmul.mubr.bf16.gmra.mrb[0].mxu0 %v4635
    %v5615 = vpop.f32.mrb[0].mxu0
    %v5616 = vadd.f32 0.0, %v5615
    %v5617 = vpop.f32.mrb[0].mxu0
    %v5618 = vpop.f32.mrb[0].mxu0
    %v5619 = vadd.f32 0.0, %v5618
    %v5620 = vpop.f32.mrb[0].mxu0
    %5621 = vmatprep.mubr.bf16.mxu0 0
    %5622 = vmatmul.mubr.bf16.gmra.mrb[0].mxu0 %v4638
    %v5623 = vpop.f32.mrb[0].mxu0
    %v5624 = vadd.f32 0.0, %v5623
    %v5625 = vpop.f32.mrb[0].mxu0
    %v5626 = vpop.f32.mrb[0].mxu0
    %v5627 = vadd.f32 0.0, %v5626
    %v5628 = vpop.f32.mrb[0].mxu0
    %5629 = vmatprep.mubr.bf16.mxu0 0
    %5630 = vmatmul.mubr.bf16.gmra.mrb[0].mxu0 %v4641
    %v5631 = vpop.f32.mrb[0].mxu0
    %v5632 = vadd.f32 0.0, %v5631
    %v5633 = vpop.f32.mrb[0].mxu0
    %v5634 = vpop.f32.mrb[0].mxu0
    %v5635 = vadd.f32 0.0, %v5634
    %v5636 = vpop.f32.mrb[0].mxu0
    %5637 = vmatprep.mubr.bf16.mxu0 0
    %5638 = vmatmul.mubr.bf16.gmra.mrb[0].mxu0 %v4644
    %v5639 = vpop.f32.mrb[0].mxu0
    %v5640 = vadd.f32 0.0, %v5639
    %v5641 = vpop.f32.mrb[0].mxu0
    %v5642 = vpop.f32.mrb[0].mxu0
    %v5643 = vadd.f32 0.0, %v5642
    %v5644 = vpop.f32.mrb[0].mxu0
    %5645 = vmatprep.mubr.bf16.mxu0 0
    %5646 = vmatmul.mubr.bf16.gmra.mrb[0].mxu0 %v4647
    %v5647 = vpop.f32.mrb[0].mxu0
    %v5648 = vadd.f32 0.0, %v5647
    %v5649 = vpop.f32.mrb[0].mxu0
    %v5650 = vpop.f32.mrb[0].mxu0
    %v5651 = vadd.f32 0.0, %v5650
    %v5652 = vpop.f32.mrb[0].mxu0
    %5653 = vdwg.mxu0
    %v5654 = vadd.f32 %v5539, %v5592
    %v5655 = vadd.f32 %v5540, %v5595
    %v5656 = vadd.f32 %v5541, %v5600
    %v5657 = vadd.f32 %v5542, %v5603
    %v5658 = vadd.f32 %v5543, %v5608
    %v5659 = vadd.f32 %v5544, %v5611
    %v5660 = vadd.f32 %v5545, %v5616
    %v5661 = vadd.f32 %v5546, %v5619
    %v5662 = vadd.f32 %v5547, %v5624
    %v5663 = vadd.f32 %v5548, %v5627
    %v5664 = vadd.f32 %v5549, %v5632
    %v5665 = vadd.f32 %v5550, %v5635
    %v5666 = vadd.f32 %v5551, %v5640
    %v5667 = vadd.f32 %v5552, %v5643
    %v5668 = vadd.f32 %v5553, %v5648
    %v5669 = vadd.f32 %v5554, %v5651
    %v5670 = vxor.u32 %v5654, 2147483648
    %v5671 = vxor.u32 %v5655, 2147483648
    %v5672 = vxor.u32 %v5656, 2147483648
    %v5673 = vxor.u32 %v5657, 2147483648
    %v5674 = vxor.u32 %v5658, 2147483648
    %v5675 = vxor.u32 %v5659, 2147483648
    %v5676 = vxor.u32 %v5660, 2147483648
    %v5677 = vxor.u32 %v5661, 2147483648
    %v5678 = vxor.u32 %v5666, 2147483648
    %v5679 = vxor.u32 %v5667, 2147483648
    %v5680 = vxor.u32 %v5668, 2147483648
    %v5681 = vxor.u32 %v5669, 2147483648
    %v5682 = vmul.f32 %v5670, 1.442695
    %v5683 = vpow.pop %v5682
    %v5684 = vmul.f32 %v5671, 1.442695
    %v5685 = vpow.pop %v5684
    %v5686 = vmul.f32 %v5672, 1.442695
    %v5687 = vpow.pop %v5686
    %v5688 = vmul.f32 %v5673, 1.442695
    %v5689 = vpow.pop %v5688
    %v5690 = vmul.f32 %v5674, 1.442695
    %v5691 = vpow.pop %v5690
    %v5692 = vmul.f32 %v5675, 1.442695
    %v5693 = vpow.pop %v5692
    %v5694 = vmul.f32 %v5676, 1.442695
    %v5695 = vpow.pop %v5694
    %v5696 = vmul.f32 %v5677, 1.442695
    %v5697 = vpow.pop %v5696
    %v5698 = vmul.f32 %v5678, 1.442695
    %v5699 = vpow.pop %v5698
    %v5700 = vmul.f32 %v5679, 1.442695
    %v5701 = vpow.pop %v5700
    %v5702 = vmul.f32 %v5680, 1.442695
    %v5703 = vpow.pop %v5702
    %v5704 = vmul.f32 %v5681, 1.442695
    %v5705 = vpow.pop %v5704
    %v5706 = vadd.f32 %v5683, 1.0
    %v5707 = vadd.f32 %v5685, 1.0
    %v5708 = vadd.f32 %v5687, 1.0
    %v5709 = vadd.f32 %v5689, 1.0
    %v5710 = vadd.f32 %v5691, 1.0
    %v5711 = vadd.f32 %v5693, 1.0
    %v5712 = vadd.f32 %v5695, 1.0
    %v5713 = vadd.f32 %v5697, 1.0
    %v5714 = vadd.f32 %v5699, 1.0
    %v5715 = vadd.f32 %v5701, 1.0
    %v5716 = vadd.f32 %v5703, 1.0
    %v5717 = vadd.f32 %v5705, 1.0
    %v5718 = vrcp.pop %v5706
    %v5719 = vmul.f32 1.0, %v5718
    %v5720 = vrcp.pop %v5707
    %v5721 = vmul.f32 1.0, %v5720
    %v5722 = vrcp.pop %v5708
    %v5723 = vmul.f32 1.0, %v5722
    %v5724 = vrcp.pop %v5709
    %v5725 = vmul.f32 1.0, %v5724
    %v5726 = vrcp.pop %v5710
    %v5727 = vmul.f32 1.0, %v5726
    %v5728 = vrcp.pop %v5711
    %v5729 = vmul.f32 1.0, %v5728
    %v5730 = vrcp.pop %v5712
    %v5731 = vmul.f32 1.0, %v5730
    %v5732 = vrcp.pop %v5713
    %v5733 = vmul.f32 1.0, %v5732
    %v5734 = vrcp.pop %v5714
    %v5735 = vmul.f32 1.0, %v5734
    %v5736 = vrcp.pop %v5715
    %v5737 = vmul.f32 1.0, %v5736
    %v5738 = vrcp.pop %v5716
    %v5739 = vmul.f32 1.0, %v5738
    %v5740 = vrcp.pop %v5717
    %v5741 = vmul.f32 1.0, %v5740
    %v5742 = vtanh.pop %v5662
    %v5743 = vtanh.pop %v5663
    %v5744 = vtanh.pop %v5664
    %v5745 = vtanh.pop %v5665
    %v5746 = vmul.f32 %v5727, %v5527
    %v5747 = vmul.f32 %v5729, %v5528
    %v5748 = vmul.f32 %v5731, %v5529
    %v5749 = vmul.f32 %v5733, %v5530
    %v5750 = vmul.f32 %v5719, %v5742
    %v5751 = vmul.f32 %v5721, %v5743
    %v5752 = vmul.f32 %v5723, %v5744
    %v5753 = vmul.f32 %v5725, %v5745
    %v5754 = vadd.f32 %v5746, %v5750
    %v5755 = vadd.f32 %v5747, %v5751
    %v5756 = vadd.f32 %v5748, %v5752
    %v5757 = vadd.f32 %v5749, %v5753
    %v5758 = vtanh.pop %v5754
    %v5759 = vtanh.pop %v5755
    %v5760 = vtanh.pop %v5756
    %v5761 = vtanh.pop %v5757
    %v5762 = vmul.f32 %v5735, %v5758
    %v5763 = vmul.f32 %v5737, %v5759
    %v5764 = vmul.f32 %v5739, %v5760
    %v5765 = vmul.f32 %v5741, %v5761
    %v5766 = vld [vmem:[%s1242] sm:$0xff]
    %v5767 = vld [vmem:[%s1242 + $0x8] sm:$0xff]
    %v5768 = vld [vmem:[%s1242 + $0x10] sm:$0xff]
    %v5769 = vld [vmem:[%s1242 + $0x18] sm:$0xff]
    %v5770 = vld [vmem:[%s1242 + $0x20] sm:$0xff]
    %v5771 = vld [vmem:[%s1242 + $0x28] sm:$0xff]
    %v5772 = vld [vmem:[%s1242 + $0x30] sm:$0xff]
    %v5773 = vld [vmem:[%s1242 + $0x38] sm:$0xff]
    %v5774 = vld [vmem:[%s1242 + $0x40] sm:$0xff]
    %v5775 = vld [vmem:[%s1242 + $0x48] sm:$0xff]
    %v5776 = vld [vmem:[%s1242 + $0x50] sm:$0xff]
    %v5777 = vld [vmem:[%s1242 + $0x58] sm:$0xff]
    %v5778 = vld [vmem:[%s1242 + $0x60] sm:$0xff]
    %v5779 = vld [vmem:[%s1242 + $0x68] sm:$0xff]
    %v5780 = vld [vmem:[%s1242 + $0x70] sm:$0xff]
    %v5781 = vld [vmem:[%s1242 + $0x78] sm:$0xff]
    %v5782 = vpack.c.bf16 %v5763, %v5762
    %v5783 = vpack.c.bf16 %v5765, %v5764
    %5784 = vmatprep.subr.bf16.mxu0 0
    %5785 = vmatpush1.bf16.msra.mxu0 %v5782
    %5786 = vmatprep.subr.bf16.mxu0 0
    %5787 = vmatpush1.bf16.msra.mxu0 %v5783
    %5788 = vmatprep.subr.bf16.mxu0 0
    %5789 = vmatpush1.bf16.msra.mxu0 0
    %5790 = vmatprep.subr.bf16.mxu0 0
    %5791 = vmatpush1.bf16.msra.mxu0 0
    %5792 = vmatprep.subr.bf16.mxu0 0
    %5793 = vmatpush1.bf16.msra.mxu0 0
    %5794 = vmatprep.subr.bf16.mxu0 0
    %5795 = vmatpush1.bf16.msra.mxu0 0
    %5796 = vmatprep.subr.bf16.mxu0 0
    %5797 = vmatpush1.bf16.msra.mxu0 0
    %5798 = vmatprep.subr.bf16.mxu0 0
    %5799 = vmatpush1.bf16.msra.mxu0 0
    %5800 = vmatprep.subr.bf16.mxu0 0
    %5801 = vmatpush1.bf16.msra.mxu0 0
    %5802 = vmatprep.subr.bf16.mxu0 0
    %5803 = vmatpush1.bf16.msra.mxu0 0
    %5804 = vmatprep.subr.bf16.mxu0 0
    %5805 = vmatpush1.bf16.msra.mxu0 0
    %5806 = vmatprep.subr.bf16.mxu0 0
    %5807 = vmatpush1.bf16.msra.mxu0 0
    %5808 = vmatprep.subr.bf16.mxu0 0
    %5809 = vmatpush1.bf16.msra.mxu0 0
    %5810 = vmatprep.subr.bf16.mxu0 0
    %5811 = vmatpush1.bf16.msra.mxu0 0
    %5812 = vmatprep.subr.bf16.mxu0 0
    %5813 = vmatpush1.bf16.msra.mxu0 0
    %5814 = vmatprep.subr.bf16.mxu0 0
    %5815 = vmatpush1.bf16.msra.mxu0 0
    %5816 = vmatprep.mubr.bf16.mxu0 0
    %5817 = vmatmul.mubr.bf16.gmra.mrb[0].mxu0 %v4626
    %v5818 = vpop.f32.mrb[0].mxu0
    %v5819 = vadd.f32 0.0, %v5818
    %v5820 = vpop.f32.mrb[0].mxu0
    %v5821 = vpop.f32.mrb[0].mxu0
    %v5822 = vadd.f32 0.0, %v5821
    %v5823 = vpop.f32.mrb[0].mxu0
    %5824 = vmatprep.mubr.bf16.mxu0 0
    %5825 = vmatmul.mubr.bf16.gmra.mrb[0].mxu0 %v4629
    %v5826 = vpop.f32.mrb[0].mxu0
    %v5827 = vadd.f32 0.0, %v5826
    %v5828 = vpop.f32.mrb[0].mxu0
    %v5829 = vpop.f32.mrb[0].mxu0
    %v5830 = vadd.f32 0.0, %v5829
    %v5831 = vpop.f32.mrb[0].mxu0
    %5832 = vmatprep.mubr.bf16.mxu0 0
    %5833 = vmatmul.mubr.bf16.gmra.mrb[0].mxu0 %v4632
    %v5834 = vpop.f32.mrb[0].mxu0
    %v5835 = vadd.f32 0.0, %v5834
    %v5836 = vpop.f32.mrb[0].mxu0
    %v5837 = vpop.f32.mrb[0].mxu0
    %v5838 = vadd.f32 0.0, %v5837
    %v5839 = vpop.f32.mrb[0].mxu0
    %5840 = vmatprep.mubr.bf16.mxu0 0
    %5841 = vmatmul.mubr.bf16.gmra.mrb[0].mxu0 %v4635
    %v5842 = vpop.f32.mrb[0].mxu0
    %v5843 = vadd.f32 0.0, %v5842
    %v5844 = vpop.f32.mrb[0].mxu0
    %v5845 = vpop.f32.mrb[0].mxu0
    %v5846 = vadd.f32 0.0, %v5845
    %v5847 = vpop.f32.mrb[0].mxu0
    %5848 = vmatprep.mubr.bf16.mxu0 0
    %5849 = vmatmul.mubr.bf16.gmra.mrb[0].mxu0 %v4638
    %v5850 = vpop.f32.mrb[0].mxu0
    %v5851 = vadd.f32 0.0, %v5850
    %v5852 = vpop.f32.mrb[0].mxu0
    %v5853 = vpop.f32.mrb[0].mxu0
    %v5854 = vadd.f32 0.0, %v5853
    %v5855 = vpop.f32.mrb[0].mxu0
    %5856 = vmatprep.mubr.bf16.mxu0 0
    %5857 = vmatmul.mubr.bf16.gmra.mrb[0].mxu0 %v4641
    %v5858 = vpop.f32.mrb[0].mxu0
    %v5859 = vadd.f32 0.0, %v5858
    %v5860 = vpop.f32.mrb[0].mxu0
    %v5861 = vpop.f32.mrb[0].mxu0
    %v5862 = vadd.f32 0.0, %v5861
    %v5863 = vpop.f32.mrb[0].mxu0
    %5864 = vmatprep.mubr.bf16.mxu0 0
    %5865 = vmatmul.mubr.bf16.gmra.mrb[0].mxu0 %v4644
    %v5866 = vpop.f32.mrb[0].mxu0
    %v5867 = vadd.f32 0.0, %v5866
    %v5868 = vpop.f32.mrb[0].mxu0
    %v5869 = vpop.f32.mrb[0].mxu0
    %v5870 = vadd.f32 0.0, %v5869
    %v5871 = vpop.f32.mrb[0].mxu0
    %5872 = vmatprep.mubr.bf16.mxu0 0
    %5873 = vmatmul.mubr.bf16.gmra.mrb[0].mxu0 %v4647
    %v5874 = vpop.f32.mrb[0].mxu0
    %v5875 = vadd.f32 0.0, %v5874
    %v5876 = vpop.f32.mrb[0].mxu0
    %v5877 = vpop.f32.mrb[0].mxu0
    %v5878 = vadd.f32 0.0, %v5877
    %v5879 = vpop.f32.mrb[0].mxu0
    %5880 = vdwg.mxu0
    %v5881 = vadd.f32 %v5766, %v5819
    %v5882 = vadd.f32 %v5767, %v5822
    %v5883 = vadd.f32 %v5768, %v5827
    %v5884 = vadd.f32 %v5769, %v5830
    %v5885 = vadd.f32 %v5770, %v5835
    %v5886 = vadd.f32 %v5771, %v5838
    %v5887 = vadd.f32 %v5772, %v5843
    %v5888 = vadd.f32 %v5773, %v5846
    %v5889 = vadd.f32 %v5774, %v5851
    %v5890 = vadd.f32 %v5775, %v5854
    %v5891 = vadd.f32 %v5776, %v5859
    %v5892 = vadd.f32 %v5777, %v5862
    %v5893 = vadd.f32 %v5778, %v5867
    %v5894 = vadd.f32 %v5779, %v5870
    %v5895 = vadd.f32 %v5780, %v5875
    %v5896 = vadd.f32 %v5781, %v5878
    %v5897 = vxor.u32 %v5881, 2147483648
    %v5898 = vxor.u32 %v5882, 2147483648
    %v5899 = vxor.u32 %v5883, 2147483648
    %v5900 = vxor.u32 %v5884, 2147483648
    %v5901 = vxor.u32 %v5885, 2147483648
    %v5902 = vxor.u32 %v5886, 2147483648
    %v5903 = vxor.u32 %v5887, 2147483648
    %v5904 = vxor.u32 %v5888, 2147483648
    %v5905 = vxor.u32 %v5893, 2147483648
    %v5906 = vxor.u32 %v5894, 2147483648
    %v5907 = vxor.u32 %v5895, 2147483648
    %v5908 = vxor.u32 %v5896, 2147483648
    %v5909 = vmul.f32 %v5897, 1.442695
    %v5910 = vpow.pop %v5909
    %v5911 = vmul.f32 %v5898, 1.442695
    %v5912 = vpow.pop %v5911
    %v5913 = vmul.f32 %v5899, 1.442695
    %v5914 = vpow.pop %v5913
    %v5915 = vmul.f32 %v5900, 1.442695
    %v5916 = vpow.pop %v5915
    %v5917 = vmul.f32 %v5901, 1.442695
    %v5918 = vpow.pop %v5917
    %v5919 = vmul.f32 %v5902, 1.442695
    %v5920 = vpow.pop %v5919
    %v5921 = vmul.f32 %v5903, 1.442695
    %v5922 = vpow.pop %v5921
    %v5923 = vmul.f32 %v5904, 1.442695
    %v5924 = vpow.pop %v5923
    %v5925 = vmul.f32 %v5905, 1.442695
    %v5926 = vpow.pop %v5925
    %v5927 = vmul.f32 %v5906, 1.442695
    %v5928 = vpow.pop %v5927
    %v5929 = vmul.f32 %v5907, 1.442695
    %v5930 = vpow.pop %v5929
    %v5931 = vmul.f32 %v5908, 1.442695
    %v5932 = vpow.pop %v5931
    %v5933 = vadd.f32 %v5910, 1.0
    %v5934 = vadd.f32 %v5912, 1.0
    %v5935 = vadd.f32 %v5914, 1.0
    %v5936 = vadd.f32 %v5916, 1.0
    %v5937 = vadd.f32 %v5918, 1.0
    %v5938 = vadd.f32 %v5920, 1.0
    %v5939 = vadd.f32 %v5922, 1.0
    %v5940 = vadd.f32 %v5924, 1.0
    %v5941 = vadd.f32 %v5926, 1.0
    %v5942 = vadd.f32 %v5928, 1.0
    %v5943 = vadd.f32 %v5930, 1.0
    %v5944 = vadd.f32 %v5932, 1.0
    %v5945 = vrcp.pop %v5933
    %v5946 = vmul.f32 1.0, %v5945
    %v5947 = vrcp.pop %v5934
    %v5948 = vmul.f32 1.0, %v5947
    %v5949 = vrcp.pop %v5935
    %v5950 = vmul.f32 1.0, %v5949
    %v5951 = vrcp.pop %v5936
    %v5952 = vmul.f32 1.0, %v5951
    %v5953 = vrcp.pop %v5937
    %v5954 = vmul.f32 1.0, %v5953
    %v5955 = vrcp.pop %v5938
    %v5956 = vmul.f32 1.0, %v5955
    %v5957 = vrcp.pop %v5939
    %v5958 = vmul.f32 1.0, %v5957
    %v5959 = vrcp.pop %v5940
    %v5960 = vmul.f32 1.0, %v5959
    %v5961 = vrcp.pop %v5941
    %v5962 = vmul.f32 1.0, %v5961
    %v5963 = vrcp.pop %v5942
    %v5964 = vmul.f32 1.0, %v5963
    %v5965 = vrcp.pop %v5943
    %v5966 = vmul.f32 1.0, %v5965
    %v5967 = vrcp.pop %v5944
    %v5968 = vmul.f32 1.0, %v5967
    %v5969 = vtanh.pop %v5889
    %v5970 = vtanh.pop %v5890
    %v5971 = vtanh.pop %v5891
    %v5972 = vtanh.pop %v5892
    %v5973 = vmul.f32 %v5954, %v5754
    %v5974 = vmul.f32 %v5956, %v5755
    %v5975 = vmul.f32 %v5958, %v5756
    %v5976 = vmul.f32 %v5960, %v5757
    %v5977 = vmul.f32 %v5946, %v5969
    %v5978 = vmul.f32 %v5948, %v5970
    %v5979 = vmul.f32 %v5950, %v5971
    %v5980 = vmul.f32 %v5952, %v5972
    %v5981 = vadd.f32 %v5973, %v5977
    %v5982 = vadd.f32 %v5974, %v5978
    %v5983 = vadd.f32 %v5975, %v5979
    %v5984 = vadd.f32 %v5976, %v5980
    %v5985 = vtanh.pop %v5981
    %v5986 = vtanh.pop %v5982
    %v5987 = vtanh.pop %v5983
    %v5988 = vtanh.pop %v5984
    %v5989 = vmul.f32 %v5962, %v5985
    %v5990 = vmul.f32 %v5964, %v5986
    %v5991 = vmul.f32 %v5966, %v5987
    %v5992 = vmul.f32 %v5968, %v5988
    %v5993 = vld [vmem:[%s1389] sm:$0xff]
    %v5994 = vld [vmem:[%s1389 + $0x8] sm:$0xff]
    %v5995 = vld [vmem:[%s1389 + $0x10] sm:$0xff]
    %v5996 = vld [vmem:[%s1389 + $0x18] sm:$0xff]
    %v5997 = vld [vmem:[%s1389 + $0x20] sm:$0xff]
    %v5998 = vld [vmem:[%s1389 + $0x28] sm:$0xff]
    %v5999 = vld [vmem:[%s1389 + $0x30] sm:$0xff]
    %v6000 = vld [vmem:[%s1389 + $0x38] sm:$0xff]
    %v6001 = vld [vmem:[%s1389 + $0x40] sm:$0xff]
    %v6002 = vld [vmem:[%s1389 + $0x48] sm:$0xff]
    %v6003 = vld [vmem:[%s1389 + $0x50] sm:$0xff]
    %v6004 = vld [vmem:[%s1389 + $0x58] sm:$0xff]
    %v6005 = vld [vmem:[%s1389 + $0x60] sm:$0xff]
    %v6006 = vld [vmem:[%s1389 + $0x68] sm:$0xff]
    %v6007 = vld [vmem:[%s1389 + $0x70] sm:$0xff]
    %v6008 = vld [vmem:[%s1389 + $0x78] sm:$0xff]
    %v6009 = vpack.c.bf16 %v5990, %v5989
    %v6010 = vpack.c.bf16 %v5992, %v5991
    %6011 = vmatprep.subr.bf16.mxu0 0
    %6012 = vmatpush1.bf16.msra.mxu0 %v6009
    %6013 = vmatprep.subr.bf16.mxu0 0
    %6014 = vmatpush1.bf16.msra.mxu0 %v6010
    %6015 = vmatprep.subr.bf16.mxu0 0
    %6016 = vmatpush1.bf16.msra.mxu0 0
    %6017 = vmatprep.subr.bf16.mxu0 0
    %6018 = vmatpush1.bf16.msra.mxu0 0
    %6019 = vmatprep.subr.bf16.mxu0 0
    %6020 = vmatpush1.bf16.msra.mxu0 0
    %6021 = vmatprep.subr.bf16.mxu0 0
    %6022 = vmatpush1.bf16.msra.mxu0 0
    %6023 = vmatprep.subr.bf16.mxu0 0
    %6024 = vmatpush1.bf16.msra.mxu0 0
    %6025 = vmatprep.subr.bf16.mxu0 0
    %6026 = vmatpush1.bf16.msra.mxu0 0
    %6027 = vmatprep.subr.bf16.mxu0 0
    %6028 = vmatpush1.bf16.msra.mxu0 0
    %6029 = vmatprep.subr.bf16.mxu0 0
    %6030 = vmatpush1.bf16.msra.mxu0 0
    %6031 = vmatprep.subr.bf16.mxu0 0
    %6032 = vmatpush1.bf16.msra.mxu0 0
    %6033 = vmatprep.subr.bf16.mxu0 0
    %6034 = vmatpush1.bf16.msra.mxu0 0
    %6035 = vmatprep.subr.bf16.mxu0 0
    %6036 = vmatpush1.bf16.msra.mxu0 0
    %6037 = vmatprep.subr.bf16.mxu0 0
    %6038 = vmatpush1.bf16.msra.mxu0 0
    %6039 = vmatprep.subr.bf16.mxu0 0
    %6040 = vmatpush1.bf16.msra.mxu0 0
    %6041 = vmatprep.subr.bf16.mxu0 0
    %6042 = vmatpush1.bf16.msra.mxu0 0
    %6043 = vmatprep.mubr.bf16.mxu0 0
    %6044 = vmatmul.mubr.bf16.gmra.mrb[0].mxu0 %v4626
    %v6045 = vpop.f32.mrb[0].mxu0
    %v6046 = vadd.f32 0.0, %v6045
    %v6047 = vpop.f32.mrb[0].mxu0
    %v6048 = vpop.f32.mrb[0].mxu0
    %v6049 = vadd.f32 0.0, %v6048
    %v6050 = vpop.f32.mrb[0].mxu0
    %6051 = vmatprep.mubr.bf16.mxu0 0
    %6052 = vmatmul.mubr.bf16.gmra.mrb[0].mxu0 %v4629
    %v6053 = vpop.f32.mrb[0].mxu0
    %v6054 = vadd.f32 0.0, %v6053
    %v6055 = vpop.f32.mrb[0].mxu0
    %v6056 = vpop.f32.mrb[0].mxu0
    %v6057 = vadd.f32 0.0, %v6056
    %v6058 = vpop.f32.mrb[0].mxu0
    %6059 = vmatprep.mubr.bf16.mxu0 0
    %6060 = vmatmul.mubr.bf16.gmra.mrb[0].mxu0 %v4632
    %v6061 = vpop.f32.mrb[0].mxu0
    %v6062 = vadd.f32 0.0, %v6061
    %v6063 = vpop.f32.mrb[0].mxu0
    %v6064 = vpop.f32.mrb[0].mxu0
    %v6065 = vadd.f32 0.0, %v6064
    %v6066 = vpop.f32.mrb[0].mxu0
    %6067 = vmatprep.mubr.bf16.mxu0 0
    %6068 = vmatmul.mubr.bf16.gmra.mrb[0].mxu0 %v4635
    %v6069 = vpop.f32.mrb[0].mxu0
    %v6070 = vadd.f32 0.0, %v6069
    %v6071 = vpop.f32.mrb[0].mxu0
    %v6072 = vpop.f32.mrb[0].mxu0
    %v6073 = vadd.f32 0.0, %v6072
    %v6074 = vpop.f32.mrb[0].mxu0
    %6075 = vmatprep.mubr.bf16.mxu0 0
    %6076 = vmatmul.mubr.bf16.gmra.mrb[0].mxu0 %v4638
    %v6077 = vpop.f32.mrb[0].mxu0
    %v6078 = vadd.f32 0.0, %v6077
    %v6079 = vpop.f32.mrb[0].mxu0
    %v6080 = vpop.f32.mrb[0].mxu0
    %v6081 = vadd.f32 0.0, %v6080
    %v6082 = vpop.f32.mrb[0].mxu0
    %6083 = vmatprep.mubr.bf16.mxu0 0
    %6084 = vmatmul.mubr.bf16.gmra.mrb[0].mxu0 %v4641
    %v6085 = vpop.f32.mrb[0].mxu0
    %v6086 = vadd.f32 0.0, %v6085
    %v6087 = vpop.f32.mrb[0].mxu0
    %v6088 = vpop.f32.mrb[0].mxu0
    %v6089 = vadd.f32 0.0, %v6088
    %v6090 = vpop.f32.mrb[0].mxu0
    %6091 = vmatprep.mubr.bf16.mxu0 0
    %6092 = vmatmul.mubr.bf16.gmra.mrb[0].mxu0 %v4644
    %v6093 = vpop.f32.mrb[0].mxu0
    %v6094 = vadd.f32 0.0, %v6093
    %v6095 = vpop.f32.mrb[0].mxu0
    %v6096 = vpop.f32.mrb[0].mxu0
    %v6097 = vadd.f32 0.0, %v6096
    %v6098 = vpop.f32.mrb[0].mxu0
    %6099 = vmatprep.mubr.bf16.mxu0 0
    %6100 = vmatmul.mubr.bf16.gmra.mrb[0].mxu0 %v4647
    %v6101 = vpop.f32.mrb[0].mxu0
    %v6102 = vadd.f32 0.0, %v6101
    %v6103 = vpop.f32.mrb[0].mxu0
    %v6104 = vpop.f32.mrb[0].mxu0
    %v6105 = vadd.f32 0.0, %v6104
    %v6106 = vpop.f32.mrb[0].mxu0
    %6107 = vdwg.mxu0
    %v6108 = vadd.f32 %v5993, %v6046
    %v6109 = vadd.f32 %v5994, %v6049
    %v6110 = vadd.f32 %v5995, %v6054
    %v6111 = vadd.f32 %v5996, %v6057
    %v6112 = vadd.f32 %v5997, %v6062
    %v6113 = vadd.f32 %v5998, %v6065
    %v6114 = vadd.f32 %v5999, %v6070
    %v6115 = vadd.f32 %v6000, %v6073
    %v6116 = vadd.f32 %v6001, %v6078
    %v6117 = vadd.f32 %v6002, %v6081
    %v6118 = vadd.f32 %v6003, %v6086
    %v6119 = vadd.f32 %v6004, %v6089
    %v6120 = vadd.f32 %v6005, %v6094
    %v6121 = vadd.f32 %v6006, %v6097
    %v6122 = vadd.f32 %v6007, %v6102
    %v6123 = vadd.f32 %v6008, %v6105
    %v6124 = vxor.u32 %v6108, 2147483648
    %v6125 = vxor.u32 %v6109, 2147483648
    %v6126 = vxor.u32 %v6110, 2147483648
    %v6127 = vxor.u32 %v6111, 2147483648
    %v6128 = vxor.u32 %v6112, 2147483648
    %v6129 = vxor.u32 %v6113, 2147483648
    %v6130 = vxor.u32 %v6114, 2147483648
    %v6131 = vxor.u32 %v6115, 2147483648
    %v6132 = vxor.u32 %v6120, 2147483648
    %v6133 = vxor.u32 %v6121, 2147483648
    %v6134 = vxor.u32 %v6122, 2147483648
    %v6135 = vxor.u32 %v6123, 2147483648
    %v6136 = vmul.f32 %v6124, 1.442695
    %v6137 = vpow.pop %v6136
    %v6138 = vmul.f32 %v6125, 1.442695
    %v6139 = vpow.pop %v6138
    %v6140 = vmul.f32 %v6126, 1.442695
    %v6141 = vpow.pop %v6140
    %v6142 = vmul.f32 %v6127, 1.442695
    %v6143 = vpow.pop %v6142
    %v6144 = vmul.f32 %v6128, 1.442695
    %v6145 = vpow.pop %v6144
    %v6146 = vmul.f32 %v6129, 1.442695
    %v6147 = vpow.pop %v6146
    %v6148 = vmul.f32 %v6130, 1.442695
    %v6149 = vpow.pop %v6148
    %v6150 = vmul.f32 %v6131, 1.442695
    %v6151 = vpow.pop %v6150
    %v6152 = vmul.f32 %v6132, 1.442695
    %v6153 = vpow.pop %v6152
    %v6154 = vmul.f32 %v6133, 1.442695
    %v6155 = vpow.pop %v6154
    %v6156 = vmul.f32 %v6134, 1.442695
    %v6157 = vpow.pop %v6156
    %v6158 = vmul.f32 %v6135, 1.442695
    %v6159 = vpow.pop %v6158
    %v6160 = vadd.f32 %v6137, 1.0
    %v6161 = vadd.f32 %v6139, 1.0
    %v6162 = vadd.f32 %v6141, 1.0
    %v6163 = vadd.f32 %v6143, 1.0
    %v6164 = vadd.f32 %v6145, 1.0
    %v6165 = vadd.f32 %v6147, 1.0
    %v6166 = vadd.f32 %v6149, 1.0
    %v6167 = vadd.f32 %v6151, 1.0
    %v6168 = vadd.f32 %v6153, 1.0
    %v6169 = vadd.f32 %v6155, 1.0
    %v6170 = vadd.f32 %v6157, 1.0
    %v6171 = vadd.f32 %v6159, 1.0
    %v6172 = vrcp.pop %v6160
    %v6173 = vmul.f32 1.0, %v6172
    %v6174 = vrcp.pop %v6161
    %v6175 = vmul.f32 1.0, %v6174
    %v6176 = vrcp.pop %v6162
    %v6177 = vmul.f32 1.0, %v6176
    %v6178 = vrcp.pop %v6163
    %v6179 = vmul.f32 1.0, %v6178
    %v6180 = vrcp.pop %v6164
    %v6181 = vmul.f32 1.0, %v6180
    %v6182 = vrcp.pop %v6165
    %v6183 = vmul.f32 1.0, %v6182
    %v6184 = vrcp.pop %v6166
    %v6185 = vmul.f32 1.0, %v6184
    %v6186 = vrcp.pop %v6167
    %v6187 = vmul.f32 1.0, %v6186
    %v6188 = vrcp.pop %v6168
    %v6189 = vmul.f32 1.0, %v6188
    %v6190 = vrcp.pop %v6169
    %v6191 = vmul.f32 1.0, %v6190
    %v6192 = vrcp.pop %v6170
    %v6193 = vmul.f32 1.0, %v6192
    %v6194 = vrcp.pop %v6171
    %v6195 = vmul.f32 1.0, %v6194
    %v6196 = vtanh.pop %v6116
    %v6197 = vtanh.pop %v6117
    %v6198 = vtanh.pop %v6118
    %v6199 = vtanh.pop %v6119
    %v6200 = vmul.f32 %v6181, %v5981
    %v6201 = vmul.f32 %v6183, %v5982
    %v6202 = vmul.f32 %v6185, %v5983
    %v6203 = vmul.f32 %v6187, %v5984
    %v6204 = vmul.f32 %v6173, %v6196
    %v6205 = vmul.f32 %v6175, %v6197
    %v6206 = vmul.f32 %v6177, %v6198
    %v6207 = vmul.f32 %v6179, %v6199
    %v6208 = vadd.f32 %v6200, %v6204
    %v6209 = vadd.f32 %v6201, %v6205
    %v6210 = vadd.f32 %v6202, %v6206
    %v6211 = vadd.f32 %v6203, %v6207
    %v6212 = vtanh.pop %v6208
    %v6213 = vtanh.pop %v6209
    %v6214 = vtanh.pop %v6210
    %v6215 = vtanh.pop %v6211
    %v6216 = vmul.f32 %v6189, %v6212
    %v6217 = vmul.f32 %v6191, %v6213
    %v6218 = vmul.f32 %v6193, %v6214
    %v6219 = vmul.f32 %v6195, %v6215
    %v6220 = vld [vmem:[%s1536] sm:$0xff]
    %v6221 = vld [vmem:[%s1536 + $0x8] sm:$0xff]
    %v6222 = vld [vmem:[%s1536 + $0x10] sm:$0xff]
    %v6223 = vld [vmem:[%s1536 + $0x18] sm:$0xff]
    %v6224 = vld [vmem:[%s1536 + $0x20] sm:$0xff]
    %v6225 = vld [vmem:[%s1536 + $0x28] sm:$0xff]
    %v6226 = vld [vmem:[%s1536 + $0x30] sm:$0xff]
    %v6227 = vld [vmem:[%s1536 + $0x38] sm:$0xff]
    %v6228 = vld [vmem:[%s1536 + $0x40] sm:$0xff]
    %v6229 = vld [vmem:[%s1536 + $0x48] sm:$0xff]
    %v6230 = vld [vmem:[%s1536 + $0x50] sm:$0xff]
    %v6231 = vld [vmem:[%s1536 + $0x58] sm:$0xff]
    %v6232 = vld [vmem:[%s1536 + $0x60] sm:$0xff]
    %v6233 = vld [vmem:[%s1536 + $0x68] sm:$0xff]
    %v6234 = vld [vmem:[%s1536 + $0x70] sm:$0xff]
    %v6235 = vld [vmem:[%s1536 + $0x78] sm:$0xff]
    %v6236 = vpack.c.bf16 %v6217, %v6216
    %v6237 = vpack.c.bf16 %v6219, %v6218
    %6238 = vmatprep.subr.bf16.mxu0 0
    %6239 = vmatpush1.bf16.msra.mxu0 %v6236
    %6240 = vmatprep.subr.bf16.mxu0 0
    %6241 = vmatpush1.bf16.msra.mxu0 %v6237
    %6242 = vmatprep.subr.bf16.mxu0 0
    %6243 = vmatpush1.bf16.msra.mxu0 0
    %6244 = vmatprep.subr.bf16.mxu0 0
    %6245 = vmatpush1.bf16.msra.mxu0 0
    %6246 = vmatprep.subr.bf16.mxu0 0
    %6247 = vmatpush1.bf16.msra.mxu0 0
    %6248 = vmatprep.subr.bf16.mxu0 0
    %6249 = vmatpush1.bf16.msra.mxu0 0
    %6250 = vmatprep.subr.bf16.mxu0 0
    %6251 = vmatpush1.bf16.msra.mxu0 0
    %6252 = vmatprep.subr.bf16.mxu0 0
    %6253 = vmatpush1.bf16.msra.mxu0 0
    %6254 = vmatprep.subr.bf16.mxu0 0
    %6255 = vmatpush1.bf16.msra.mxu0 0
    %6256 = vmatprep.subr.bf16.mxu0 0
    %6257 = vmatpush1.bf16.msra.mxu0 0
    %6258 = vmatprep.subr.bf16.mxu0 0
    %6259 = vmatpush1.bf16.msra.mxu0 0
    %6260 = vmatprep.subr.bf16.mxu0 0
    %6261 = vmatpush1.bf16.msra.mxu0 0
    %6262 = vmatprep.subr.bf16.mxu0 0
    %6263 = vmatpush1.bf16.msra.mxu0 0
    %6264 = vmatprep.subr.bf16.mxu0 0
    %6265 = vmatpush1.bf16.msra.mxu0 0
    %6266 = vmatprep.subr.bf16.mxu0 0
    %6267 = vmatpush1.bf16.msra.mxu0 0
    %6268 = vmatprep.subr.bf16.mxu0 0
    %6269 = vmatpush1.bf16.msra.mxu0 0
    %6270 = vmatprep.mubr.bf16.mxu0 0
    %6271 = vmatmul.mubr.bf16.gmra.mrb[0].mxu0 %v4626
    %v6272 = vpop.f32.mrb[0].mxu0
    %v6273 = vadd.f32 0.0, %v6272
    %v6274 = vpop.f32.mrb[0].mxu0
    %v6275 = vpop.f32.mrb[0].mxu0
    %v6276 = vadd.f32 0.0, %v6275
    %v6277 = vpop.f32.mrb[0].mxu0
    %6278 = vmatprep.mubr.bf16.mxu0 0
    %6279 = vmatmul.mubr.bf16.gmra.mrb[0].mxu0 %v4629
    %v6280 = vpop.f32.mrb[0].mxu0
    %v6281 = vadd.f32 0.0, %v6280
    %v6282 = vpop.f32.mrb[0].mxu0
    %v6283 = vpop.f32.mrb[0].mxu0
    %v6284 = vadd.f32 0.0, %v6283
    %v6285 = vpop.f32.mrb[0].mxu0
    %6286 = vmatprep.mubr.bf16.mxu0 0
    %6287 = vmatmul.mubr.bf16.gmra.mrb[0].mxu0 %v4632
    %v6288 = vpop.f32.mrb[0].mxu0
    %v6289 = vadd.f32 0.0, %v6288
    %v6290 = vpop.f32.mrb[0].mxu0
    %v6291 = vpop.f32.mrb[0].mxu0
    %v6292 = vadd.f32 0.0, %v6291
    %v6293 = vpop.f32.mrb[0].mxu0
    %6294 = vmatprep.mubr.bf16.mxu0 0
    %6295 = vmatmul.mubr.bf16.gmra.mrb[0].mxu0 %v4635
    %v6296 = vpop.f32.mrb[0].mxu0
    %v6297 = vadd.f32 0.0, %v6296
    %v6298 = vpop.f32.mrb[0].mxu0
    %v6299 = vpop.f32.mrb[0].mxu0
    %v6300 = vadd.f32 0.0, %v6299
    %v6301 = vpop.f32.mrb[0].mxu0
    %6302 = vmatprep.mubr.bf16.mxu0 0
    %6303 = vmatmul.mubr.bf16.gmra.mrb[0].mxu0 %v4638
    %v6304 = vpop.f32.mrb[0].mxu0
    %v6305 = vadd.f32 0.0, %v6304
    %v6306 = vpop.f32.mrb[0].mxu0
    %v6307 = vpop.f32.mrb[0].mxu0
    %v6308 = vadd.f32 0.0, %v6307
    %v6309 = vpop.f32.mrb[0].mxu0
    %6310 = vmatprep.mubr.bf16.mxu0 0
    %6311 = vmatmul.mubr.bf16.gmra.mrb[0].mxu0 %v4641
    %v6312 = vpop.f32.mrb[0].mxu0
    %v6313 = vadd.f32 0.0, %v6312
    %v6314 = vpop.f32.mrb[0].mxu0
    %v6315 = vpop.f32.mrb[0].mxu0
    %v6316 = vadd.f32 0.0, %v6315
    %v6317 = vpop.f32.mrb[0].mxu0
    %6318 = vmatprep.mubr.bf16.mxu0 0
    %6319 = vmatmul.mubr.bf16.gmra.mrb[0].mxu0 %v4644
    %v6320 = vpop.f32.mrb[0].mxu0
    %v6321 = vadd.f32 0.0, %v6320
    %v6322 = vpop.f32.mrb[0].mxu0
    %v6323 = vpop.f32.mrb[0].mxu0
    %v6324 = vadd.f32 0.0, %v6323
    %v6325 = vpop.f32.mrb[0].mxu0
    %6326 = vmatprep.mubr.bf16.mxu0 0
    %6327 = vmatmul.mubr.bf16.gmra.mrb[0].mxu0 %v4647
    %v6328 = vpop.f32.mrb[0].mxu0
    %v6329 = vadd.f32 0.0, %v6328
    %v6330 = vpop.f32.mrb[0].mxu0
    %v6331 = vpop.f32.mrb[0].mxu0
    %v6332 = vadd.f32 0.0, %v6331
    %v6333 = vpop.f32.mrb[0].mxu0
    %6334 = vdwg.mxu0
    %v6335 = vadd.f32 %v6220, %v6273
    %v6336 = vadd.f32 %v6221, %v6276
    %v6337 = vadd.f32 %v6222, %v6281
    %v6338 = vadd.f32 %v6223, %v6284
    %v6339 = vadd.f32 %v6224, %v6289
    %v6340 = vadd.f32 %v6225, %v6292
    %v6341 = vadd.f32 %v6226, %v6297
    %v6342 = vadd.f32 %v6227, %v6300
    %v6343 = vadd.f32 %v6228, %v6305
    %v6344 = vadd.f32 %v6229, %v6308
    %v6345 = vadd.f32 %v6230, %v6313
    %v6346 = vadd.f32 %v6231, %v6316
    %v6347 = vadd.f32 %v6232, %v6321
    %v6348 = vadd.f32 %v6233, %v6324
    %v6349 = vadd.f32 %v6234, %v6329
    %v6350 = vadd.f32 %v6235, %v6332
    %v6351 = vxor.u32 %v6335, 2147483648
    %v6352 = vxor.u32 %v6336, 2147483648
    %v6353 = vxor.u32 %v6337, 2147483648
    %v6354 = vxor.u32 %v6338, 2147483648
    %v6355 = vxor.u32 %v6339, 2147483648
    %v6356 = vxor.u32 %v6340, 2147483648
    %v6357 = vxor.u32 %v6341, 2147483648
    %v6358 = vxor.u32 %v6342, 2147483648
    %v6359 = vxor.u32 %v6347, 2147483648
    %v6360 = vxor.u32 %v6348, 2147483648
    %v6361 = vxor.u32 %v6349, 2147483648
    %v6362 = vxor.u32 %v6350, 2147483648
    %v6363 = vmul.f32 %v6351, 1.442695
    %v6364 = vpow.pop %v6363
    %v6365 = vmul.f32 %v6352, 1.442695
    %v6366 = vpow.pop %v6365
    %v6367 = vmul.f32 %v6353, 1.442695
    %v6368 = vpow.pop %v6367
    %v6369 = vmul.f32 %v6354, 1.442695
    %v6370 = vpow.pop %v6369
    %v6371 = vmul.f32 %v6355, 1.442695
    %v6372 = vpow.pop %v6371
    %v6373 = vmul.f32 %v6356, 1.442695
    %v6374 = vpow.pop %v6373
    %v6375 = vmul.f32 %v6357, 1.442695
    %v6376 = vpow.pop %v6375
    %v6377 = vmul.f32 %v6358, 1.442695
    %v6378 = vpow.pop %v6377
    %v6379 = vmul.f32 %v6359, 1.442695
    %v6380 = vpow.pop %v6379
    %v6381 = vmul.f32 %v6360, 1.442695
    %v6382 = vpow.pop %v6381
    %v6383 = vmul.f32 %v6361, 1.442695
    %v6384 = vpow.pop %v6383
    %v6385 = vmul.f32 %v6362, 1.442695
    %v6386 = vpow.pop %v6385
    %v6387 = vadd.f32 %v6364, 1.0
    %v6388 = vadd.f32 %v6366, 1.0
    %v6389 = vadd.f32 %v6368, 1.0
    %v6390 = vadd.f32 %v6370, 1.0
    %v6391 = vadd.f32 %v6372, 1.0
    %v6392 = vadd.f32 %v6374, 1.0
    %v6393 = vadd.f32 %v6376, 1.0
    %v6394 = vadd.f32 %v6378, 1.0
    %v6395 = vadd.f32 %v6380, 1.0
    %v6396 = vadd.f32 %v6382, 1.0
    %v6397 = vadd.f32 %v6384, 1.0
    %v6398 = vadd.f32 %v6386, 1.0
    %v6399 = vrcp.pop %v6387
    %v6400 = vmul.f32 1.0, %v6399
    %v6401 = vrcp.pop %v6388
    %v6402 = vmul.f32 1.0, %v6401
    %v6403 = vrcp.pop %v6389
    %v6404 = vmul.f32 1.0, %v6403
    %v6405 = vrcp.pop %v6390
    %v6406 = vmul.f32 1.0, %v6405
    %v6407 = vrcp.pop %v6391
    %v6408 = vmul.f32 1.0, %v6407
    %v6409 = vrcp.pop %v6392
    %v6410 = vmul.f32 1.0, %v6409
    %v6411 = vrcp.pop %v6393
    %v6412 = vmul.f32 1.0, %v6411
    %v6413 = vrcp.pop %v6394
    %v6414 = vmul.f32 1.0, %v6413
    %v6415 = vrcp.pop %v6395
    %v6416 = vmul.f32 1.0, %v6415
    %v6417 = vrcp.pop %v6396
    %v6418 = vmul.f32 1.0, %v6417
    %v6419 = vrcp.pop %v6397
    %v6420 = vmul.f32 1.0, %v6419
    %v6421 = vrcp.pop %v6398
    %v6422 = vmul.f32 1.0, %v6421
    %v6423 = vtanh.pop %v6343
    %v6424 = vtanh.pop %v6344
    %v6425 = vtanh.pop %v6345
    %v6426 = vtanh.pop %v6346
    %v6427 = vmul.f32 %v6408, %v6208
    %v6428 = vmul.f32 %v6410, %v6209
    %v6429 = vmul.f32 %v6412, %v6210
    %v6430 = vmul.f32 %v6414, %v6211
    %v6431 = vmul.f32 %v6400, %v6423
    %v6432 = vmul.f32 %v6402, %v6424
    %v6433 = vmul.f32 %v6404, %v6425
    %v6434 = vmul.f32 %v6406, %v6426
    %v6435 = vadd.f32 %v6427, %v6431
    %v6436 = vadd.f32 %v6428, %v6432
    %v6437 = vadd.f32 %v6429, %v6433
    %v6438 = vadd.f32 %v6430, %v6434
    %v6439 = vtanh.pop %v6435
    %v6440 = vtanh.pop %v6436
    %v6441 = vtanh.pop %v6437
    %v6442 = vtanh.pop %v6438
    %v6443 = vmul.f32 %v6416, %v6439
    %v6444 = vmul.f32 %v6418, %v6440
    %v6445 = vmul.f32 %v6420, %v6441
    %v6446 = vmul.f32 %v6422, %v6442
    %6447 = vxpose.xlu0.b32.start [1/16] %v6443, 128
    %6448 = vxpose.xlu0.b32.cont [2/16] %v6444, 128
    %6449 = vxpose.xlu0.b32.cont [3/16] %v6445, 128
    %6450 = vxpose.xlu0.b32.cont [4/16] %v6446, 128
    %6451 = vxpose.xlu0.b32.cont [5/16] 0.0, 128
    %6452 = vxpose.xlu0.b32.cont [6/16] 0.0, 128
    %6453 = vxpose.xlu0.b32.cont [7/16] 0.0, 128
    %6454 = vxpose.xlu0.b32.cont [8/16] 0.0, 128
    %6455 = vxpose.xlu0.b32.cont [9/16] 0.0, 128
    %6456 = vxpose.xlu0.b32.cont [10/16] 0.0, 128
    %6457 = vxpose.xlu0.b32.cont [11/16] 0.0, 128
    %6458 = vxpose.xlu0.b32.cont [12/16] 0.0, 128
    %6459 = vxpose.xlu0.b32.cont [13/16] 0.0, 128
    %6460 = vxpose.xlu0.b32.cont [14/16] 0.0, 128
    %6461 = vxpose.xlu0.b32.cont [15/16] 0.0, 128
    %6462 = vxpose.xlu0.b32.end [16/16] 0.0, 128
    %v6463 = vpop.trf.xlu0
    %v6464 = vpop.trf.xlu0
    %v6465 = vpop.trf.xlu0
    %v6466 = vpop.trf.xlu0
    %v6467 = vpop.trf.xlu0
    %v6468 = vpop.trf.xlu0
    %v6469 = vpop.trf.xlu0
    %v6470 = vpop.trf.xlu0
    %v6471 = vpop.trf.xlu0
    %v6472 = vpop.trf.xlu0
    %v6473 = vpop.trf.xlu0
    %v6474 = vpop.trf.xlu0
    %v6475 = vpop.trf.xlu0
    %v6476 = vpop.trf.xlu0
    %v6477 = vpop.trf.xlu0
    %v6478 = vpop.trf.xlu0
    %v6479 = vpack.c.bf16 %v6464, %v6463
    %v6480 = vld [vmem:[#allocation16] sm:$0xf]
    %v6481 = vld [vmem:[#allocation16 + $0x4] sm:$0xf]
    %v6482 = vld [vmem:[#allocation16 + $0x8] sm:$0xf]
    %v6483 = vld [vmem:[#allocation16 + $0xc] sm:$0xf]
    %v6484 = vld [vmem:[#allocation18] sm:$0x1]
    %v6486 = vlaneseq
    %v6487 = vshrl.u32 %v6486, 7
    %v6488 = vsub.s32 0, %v6487
    %v6489 = vrot.slane %v6484, %v6488
    %v6495 = vunpack.c.l.b16 %v6480
    %v6496 = vunpack.c.l.b16 %v6481
    %v6497 = vunpack.c.l.b16 %v6482
    %v6498 = vunpack.c.l.b16 %v6483
    %v6499 = vpack.c.b16 %v6496, %v6495
    %v6500 = vpack.c.b16 %v6498, %v6497
    %v6504 = vsel %vm1609, %v6479, 0
    %6506 = vmatprep.subr.bf16.mxu0 0
    %6507 = vmatpush1.bf16.msra.mxu0 %v6499
    %6508 = vmatprep.subr.bf16.mxu0 0
    %6509 = vmatpush1.bf16.msra.mxu0 %v6500
    %6510 = vmatprep.subr.bf16.mxu0 0
    %6511 = vmatpush1.bf16.msra.mxu0 0
    %6512 = vmatprep.subr.bf16.mxu0 0
    %6513 = vmatpush1.bf16.msra.mxu0 0
    %6514 = vmatprep.subr.bf16.mxu0 0
    %6515 = vmatpush1.bf16.msra.mxu0 0
    %6516 = vmatprep.subr.bf16.mxu0 0
    %6517 = vmatpush1.bf16.msra.mxu0 0
    %6518 = vmatprep.subr.bf16.mxu0 0
    %6519 = vmatpush1.bf16.msra.mxu0 0
    %6520 = vmatprep.subr.bf16.mxu0 0
    %6521 = vmatpush1.bf16.msra.mxu0 0
    %6522 = vmatprep.subr.bf16.mxu0 0
    %6523 = vmatpush1.bf16.msra.mxu0 0
    %6524 = vmatprep.subr.bf16.mxu0 0
    %6525 = vmatpush1.bf16.msra.mxu0 0
    %6526 = vmatprep.subr.bf16.mxu0 0
    %6527 = vmatpush1.bf16.msra.mxu0 0
    %6528 = vmatprep.subr.bf16.mxu0 0
    %6529 = vmatpush1.bf16.msra.mxu0 0
    %6530 = vmatprep.subr.bf16.mxu0 0
    %6531 = vmatpush1.bf16.msra.mxu0 0
    %6532 = vmatprep.subr.bf16.mxu0 0
    %6533 = vmatpush1.bf16.msra.mxu0 0
    %6534 = vmatprep.subr.bf16.mxu0 0
    %6535 = vmatpush1.bf16.msra.mxu0 0
    %6536 = vmatprep.subr.bf16.mxu0 0
    %6537 = vmatpush1.bf16.msra.mxu0 0
    %6538 = vmatprep.mubr.bf16.mxu0 0
    %6539 = vmatmul.mubr.bf16.gmra.mrb[0].mxu0 %v6504
    %v6540 = vpop.f32.mrb[0].mxu0
    %v6541 = vadd.f32 %v6489, %v6540
    %v6542 = vpop.f32.mrb[0].mxu0
    %v6543 = vpop.f32.mrb[0].mxu0
    %v6544 = vadd.f32 %v6489, %v6543
    %v6545 = vpop.f32.mrb[0].mxu0
    %6546 = vdwg.mxu0
    %v6547 = vmax.f32 %v6541, 0.0
    %v6548 = vmax.f32 %v6544, 0.0
    %v6549 = vpack.c.bf16 %v6548, %v6547
    %v6550 = vld [vmem:[#allocation19] sm:$0xf]
    %v6551 = vld [vmem:[#allocation19 + $0x4] sm:$0xf]
    %v6552 = vld [vmem:[#allocation19 + $0x8] sm:$0xf]
    %v6553 = vld [vmem:[#allocation19 + $0xc] sm:$0xf]
    %v6554 = vld [vmem:[#allocation19 + $0x10] sm:$0xf]
    %v6555 = vld [vmem:[#allocation19 + $0x14] sm:$0xf]
    %v6556 = vld [vmem:[#allocation19 + $0x18] sm:$0xf]
    %v6557 = vld [vmem:[#allocation19 + $0x1c] sm:$0xf]
    %v6558 = vld [vmem:[#allocation19 + $0x20] sm:$0xf]
    %v6559 = vld [vmem:[#allocation19 + $0x24] sm:$0xf]
    %v6560 = vld [vmem:[#allocation19 + $0x28] sm:$0xf]
    %v6561 = vld [vmem:[#allocation19 + $0x2c] sm:$0xf]
    %v6562 = vld [vmem:[#allocation19 + $0x30] sm:$0xf]
    %v6563 = vld [vmem:[#allocation19 + $0x34] sm:$0xf]
    %v6564 = vld [vmem:[#allocation19 + $0x38] sm:$0xf]
    %v6565 = vld [vmem:[#allocation19 + $0x3c] sm:$0xf]
    %v6566 = vld [vmem:[#allocation21] sm:$0x1]
    %v6568 = vlaneseq
    %v6569 = vshrl.u32 %v6568, 7
    %v6570 = vsub.s32 0, %v6569
    %v6571 = vrot.slane %v6566, %v6570
    %v6589 = vunpack.c.l.b16 %v6550
    %v6590 = vunpack.c.l.b16 %v6551
    %v6591 = vunpack.c.l.b16 %v6552
    %v6592 = vunpack.c.l.b16 %v6553
    %v6593 = vunpack.c.l.b16 %v6554
    %v6594 = vunpack.c.l.b16 %v6555
    %v6595 = vunpack.c.l.b16 %v6556
    %v6596 = vunpack.c.l.b16 %v6557
    %v6597 = vunpack.c.l.b16 %v6558
    %v6598 = vunpack.c.l.b16 %v6559
    %v6599 = vunpack.c.l.b16 %v6560
    %v6600 = vunpack.c.l.b16 %v6561
    %v6601 = vunpack.c.l.b16 %v6562
    %v6602 = vunpack.c.l.b16 %v6563
    %v6603 = vunpack.c.l.b16 %v6564
    %v6604 = vunpack.c.l.b16 %v6565
    %v6605 = vpack.c.b16 %v6590, %v6589
    %v6606 = vpack.c.b16 %v6592, %v6591
    %v6607 = vpack.c.b16 %v6594, %v6593
    %v6608 = vpack.c.b16 %v6596, %v6595
    %v6609 = vpack.c.b16 %v6598, %v6597
    %v6610 = vpack.c.b16 %v6600, %v6599
    %v6611 = vpack.c.b16 %v6602, %v6601
    %v6612 = vpack.c.b16 %v6604, %v6603
    %6621 = vmatprep.subr.bf16.mxu0 0
    %6622 = vmatpush1.bf16.msra.mxu0 %v6605
    %6623 = vmatprep.subr.bf16.mxu0 0
    %6624 = vmatpush1.bf16.msra.mxu0 %v6606
    %6625 = vmatprep.subr.bf16.mxu0 0
    %6626 = vmatpush1.bf16.msra.mxu0 %v6607
    %6627 = vmatprep.subr.bf16.mxu0 0
    %6628 = vmatpush1.bf16.msra.mxu0 %v6608
    %6629 = vmatprep.subr.bf16.mxu0 0
    %6630 = vmatpush1.bf16.msra.mxu0 %v6609
    %6631 = vmatprep.subr.bf16.mxu0 0
    %6632 = vmatpush1.bf16.msra.mxu0 %v6610
    %6633 = vmatprep.subr.bf16.mxu0 0
    %6634 = vmatpush1.bf16.msra.mxu0 %v6611
    %6635 = vmatprep.subr.bf16.mxu0 0
    %6636 = vmatpush1.bf16.msra.mxu0 %v6612
    %6637 = vmatprep.subr.bf16.mxu0 0
    %6638 = vmatpush1.bf16.msra.mxu0 0
    %6639 = vmatprep.subr.bf16.mxu0 0
    %6640 = vmatpush1.bf16.msra.mxu0 0
    %6641 = vmatprep.subr.bf16.mxu0 0
    %6642 = vmatpush1.bf16.msra.mxu0 0
    %6643 = vmatprep.subr.bf16.mxu0 0
    %6644 = vmatpush1.bf16.msra.mxu0 0
    %6645 = vmatprep.subr.bf16.mxu0 0
    %6646 = vmatpush1.bf16.msra.mxu0 0
    %6647 = vmatprep.subr.bf16.mxu0 0
    %6648 = vmatpush1.bf16.msra.mxu0 0
    %6649 = vmatprep.subr.bf16.mxu0 0
    %6650 = vmatpush1.bf16.msra.mxu0 0
    %6651 = vmatprep.subr.bf16.mxu0 0
    %6652 = vmatpush1.bf16.msra.mxu0 0
    %6653 = vmatprep.mubr.bf16.mxu0 0
    %6654 = vmatmul.mubr.bf16.gmra.mrb[0].mxu0 %v6549
    %v6655 = vpop.f32.mrb[0].mxu0
    %v6656 = vadd.f32 %v6571, %v6655
    %v6657 = vpop.f32.mrb[0].mxu0
    %v6658 = vpop.f32.mrb[0].mxu0
    %v6659 = vadd.f32 %v6571, %v6658
    %v6660 = vpop.f32.mrb[0].mxu0
    %6661 = vdwg.mxu0
    %6662 = vst [vmem:[#allocation22] sm:$0xff] %v6656
    %6663 = vst [vmem:[#allocation22 + $0x8] sm:$0xff] %v6659
    // Predicated region
    $region90: #{tpu_custom_call.1} parent=1 // pred_check
      _
    $region91: #{tpu_custom_call.1} parent=1 // pred_check_branch
      %6665 = sbr.rel (0) target = $region93
    $region92: #{tpu_custom_call.1} parent=1 // pred_region
      %s6667 = ssub.s32 256, 256
      %6668 = vsyncadd [#allocation6], %s6667
      %s6669 = sshll.u32 [#allocation22], 4
      %s6670 = int_to_ptr.vmem [resolvable:$true] %s6669
      %6675 = dma.vmem_to_hbm [thread:$0]  %s6670, 256, %s11, [#allocation6], 128, 128, 8
    $region93: #{tpu_custom_call.1} parent=1 // pred_fallthru
      _
    // Predicated region
    $region94: #{tpu_custom_call.1} parent=1 // pred_check
      _
    $region95: #{tpu_custom_call.1} parent=1 // pred_check_branch
      %6677 = sbr.rel (0) target = $region97
    $region96: #{tpu_custom_call.1} parent=1 // pred_region
      %6678 = dma.done [#allocation6], 256
    $region97: #{tpu_custom_call.1} parent=1 // pred_fallthru
      _
    %6679 = vsyncpa [#allocation5], 1
    %6680 = vsyncpa [#allocation8], 1
    %6681 = vsyncpa [#allocation11], 1
    %6682 = vsyncpa [#allocation14], 1
    %6683 = vsyncpa [#allocation17], 1
    %6684 = vsyncpa [#allocation20], 1
    %6685 = vsyncpa [#allocation6], 1

</llo_original>
